<compile_context>
chip_gen: v5e
topology: v5e:2x2
jax: 0.10.0
libtpu: 0.0.40
codegen_flags: <defaults>
</compile_context>

<pallas_src>
import numpy as np
import jax
import jax.numpy as jnp
from jax.experimental import pallas as pl
from jax.experimental.pallas import tpu as pltpu

C1, C2 = 16, 32          # channel widths of the two stages (synthetic backbone)
H1, HP1 = 16, 18         # conv1 output grid / +1 halo (maxpool pad=1)
H2, HP2 = 8, 10          # maxpool & layer1 grid / +1 halo (3x3 pad=1)
H3, HP3 = 4, 6           # layer2 grid / +1 halo
G1, G2, G3 = 24, 16, 8   # guard rows per buffer (>= Wp+1, rounded up to 8)
K1 = 7 * 7 * 3           # conv1 im2col K


def _offsets3(wp):
    """Row offsets of the 9 taps of a 3x3 window in a row-flattened (h*wp + w) grid."""
    return [(di - 1) * wp + (dj - 1) for di in range(3) for dj in range(3)]


def _conv3x3_s1(buf, g, m, w_ref, wp):
    """3x3/s1 conv over a guard-padded, zero-haloed activation buffer.

    buf: VMEM ref (2*g + m, cin); rows [g, g+m) hold the activation flattened
    as (n, hp, wp); halo + guard rows are zero.  w_ref: (9, cin, cout).
    Returns the (m, cout) pre-bias conv output (halo rows are garbage; callers
    mask / select them away)."""
    acc = None
    for t, o in enumerate(_offsets3(wp)):
        a = buf[g + o:g + o + m, :]
        y = jnp.dot(a, w_ref[t], preferred_element_type=jnp.float32)
        acc = y if acc is None else acc + y
    return acc


def _resnet_fe_kernel(a1, w1, b1, msk1, s_pool,
                      w11, b11, w12, b12, msk2,
                      w21, b21, s_l2, msk3,
                      w22, b22, wd, bd, p_avg,
                      o_ref,
                      buf1, buf2a, buf2b, buf3):
    m1 = a1.shape[0]
    m2 = s_pool.shape[0]
    m3 = s_l2.shape[0]

    # Guards/halos must hold finite zeros: garbage rows would otherwise turn
    # into NaNs through the zero-mask selects / zero-weight selection matmuls.
    buf1[...] = jnp.zeros_like(buf1)
    buf2a[...] = jnp.zeros_like(buf2a)
    buf2b[...] = jnp.zeros_like(buf2b)
    buf3[...] = jnp.zeros_like(buf3)

    # ---- conv1 7x7/s2 + BN + ReLU (im2col matmul, output on the padded 18x18 grid)
    y = jnp.dot(a1[...], w1[...], preferred_element_type=jnp.float32) + b1[...]
    y = jnp.maximum(y, 0.0)
    y = jnp.where(msk1[...] > 0.5, y, 0.0)
    buf1[G1:G1 + m1, :] = y

    # ---- maxpool 3x3/s2 pad 1, fused: stride-1 max over 9 shifted row views,
    #      then a stride-2 row-selection matmul that re-embeds the result into
    #      the padded 10x10 layer1 grid (halo rows -> 0).  Zero padding ==
    #      -inf padding here because the pooled input is post-ReLU (>= 0).
    p = None
    for o in _offsets3(HP1):
        t = buf1[G1 + o:G1 + o + m1, :]
        p = t if p is None else jnp.maximum(p, t)
    x2 = jnp.dot(s_pool[...], p, preferred_element_type=jnp.float32)
    buf2a[G2:G2 + m2, :] = x2

    # ---- layer1 BasicBlock (16 -> 16, stride 1)
    h = _conv3x3_s1(buf2a, G2, m2, w11, HP2) + b11[...]
    h = jnp.maximum(h, 0.0)
    h = jnp.where(msk2[...] > 0.5, h, 0.0)
    buf2b[G2:G2 + m2, :] = h

    h = _conv3x3_s1(buf2b, G2, m2, w12, HP2) + b12[...] + buf2a[G2:G2 + m2, :]
    h = jnp.maximum(h, 0.0)
    h = jnp.where(msk2[...] > 0.5, h, 0.0)
    buf2a[G2:G2 + m2, :] = h          # layer1 output == layer2 block input

    # ---- layer2 BasicBlock (16 -> 32, stride 2, 1x1 downsample)
    # conv1 3x3/s2: stride-1 conv on the 10x10 grid, then stride-2 selection.
    hf = _conv3x3_s1(buf2a, G2, m2, w21, HP2)
    h2 = jnp.dot(s_l2[...], hf, preferred_element_type=jnp.float32) + b21[...]
    h2 = jnp.maximum(h2, 0.0)
    h2 = jnp.where(msk3[...] > 0.5, h2, 0.0)
    buf3[G3:G3 + m3, :] = h2

    # downsample: 1x1 conv + BN on the block input, stride 2 via the same selection.
    idn = jnp.dot(buf2a[G2:G2 + m2, :], wd[...], preferred_element_type=jnp.float32)
    idn = jnp.dot(s_l2[...], idn, preferred_element_type=jnp.float32) + bd[...]

    # conv2 3x3/s1 + BN, residual add, ReLU, then global average pool fused as
    # one (n_images x m3) matmul that ignores halo rows.
    h3 = _conv3x3_s1(buf3, G3, m3, w22, HP3) + b22[...] + idn
    h3 = jnp.maximum(h3, 0.0)
    o_ref[...] = jnp.dot(p_avg[...], h3, preferred_element_type=jnp.float32)


# ----------------------- wrapper / XLA glue ---------------------------------

def _make_grid_constants(n):
    """Halo masks, stride-2 row-selection matrices and the avgpool matrix for a
    batch of n images (built with numpy at trace time -> compile-time constants)."""
    def halo_mask(hp):
        m = np.zeros((hp, hp), np.float32)
        m[1:hp - 1, 1:hp - 1] = 1.0
        return np.tile(m.reshape(-1), n).reshape(n * hp * hp, 1)

    def stride2_select(hp_src, hp_dst):
        s = np.zeros((n * hp_dst * hp_dst, n * hp_src * hp_src), np.float32)
        for b in range(n):
            for i in range(1, hp_dst - 1):
                for j in range(1, hp_dst - 1):
                    dst = b * hp_dst * hp_dst + i * hp_dst + j
                    src = b * hp_src * hp_src + (2 * i - 1) * hp_src + (2 * j - 1)
                    s[dst, src] = 1.0
        return s

    p_avg = np.zeros((n, n * HP3 * HP3), np.float32)
    for b in range(n):
        for i in range(1, HP3 - 1):
            for j in range(1, HP3 - 1):
                p_avg[b, b * HP3 * HP3 + i * HP3 + j] = 1.0 / float(H3 * H3)

    return dict(
        msk1=jnp.asarray(halo_mask(HP1)),
        msk2=jnp.asarray(halo_mask(HP2)),
        msk3=jnp.asarray(halo_mask(HP3)),
        s_pool=jnp.asarray(stride2_select(HP1, HP2)),
        s_l2=jnp.asarray(stride2_select(HP2, HP3)),
        p_avg=jnp.asarray(p_avg),
    )


def _conv1_patches(x_nhwc):
    """im2col for the 7x7/s2/pad3 input conv (3 input channels -> tiny), laid
    out directly on the padded 18x18 conv1-output grid (halo rows are zero)."""
    # TODO(synk): the only remaining XLA glue; at real ResNet resolutions move
    # this tap gather into the kernel as well.
    n = x_nhwc.shape[0]
    xp = jnp.pad(x_nhwc, ((0, 0), (3, 3), (3, 3), (0, 0)))
    span = 2 * (H1 - 1) + 1
    cols = []
    for di in range(7):
        for dj in range(7):
            cols.append(xp[:, di:di + span:2, dj:dj + span:2, :])
    a = jnp.stack(cols, axis=3).reshape(n, H1, H1, K1)
    a = jnp.pad(a, ((0, 0), (1, 1), (1, 1), (0, 0)))
    return a.reshape(n * HP1 * HP1, K1)


def resnet_fe_forward(x_nchw, params):
    """Eval-mode forward of nn.Sequential(*resnet.children()[:-1]):
       conv1 -> bn1 -> relu -> maxpool -> layer1 -> layer2 -> avgpool."""
    n = x_nchw.shape[0]
    x = jnp.transpose(x_nchw, (0, 2, 3, 1)).astype(jnp.float32)   # NCHW -> NHWC
    a1 = _conv1_patches(x)
    c = _make_grid_constants(n)

    m1, m2, m3 = n * HP1 * HP1, n * HP2 * HP2, n * HP3 * HP3
    feats = pl.pallas_call(
        _resnet_fe_kernel,
        out_shape=jax.ShapeDtypeStruct((n, C2), jnp.float32),
        scratch_shapes=[
            pltpu.VMEM((2 * G1 + m1, C1), jnp.float32),   # conv1 output grid
            pltpu.VMEM((2 * G2 + m2, C1), jnp.float32),   # layer1 grid (A)
            pltpu.VMEM((2 * G2 + m2, C1), jnp.float32),   # layer1 grid (B)
            pltpu.VMEM((2 * G3 + m3, C2), jnp.float32),   # layer2 grid
        ],
    )(a1, params["w1"], params["b1"], c["msk1"], c["s_pool"],
      params["w11"], params["b11"], params["w12"], params["b12"], c["msk2"],
      params["w21"], params["b21"], c["s_l2"], c["msk3"],
      params["w22"], params["b22"], params["wd"], params["bd"], c["p_avg"])
    return feats[:, :, None, None]       # (N, C, 1, 1), as the torch FE output


# ----------------------- parameters (frozen, BN folded) ---------------------

def _fold_bn(gamma, beta, mean, var, eps=1e-5):
    inv = 1.0 / jnp.sqrt(var + eps)
    scale = gamma * inv
    return scale, beta - mean * scale


def _prep_im2col(w, scale, bias):
    """(cout, cin, kh, kw) conv weight, BN scale folded -> (kh*kw*cin, cout)."""
    w = w * scale[:, None, None, None]
    wc = jnp.transpose(w, (2, 3, 1, 0)).reshape(-1, w.shape[0])
    return wc.astype(jnp.float32), bias.reshape(1, -1).astype(jnp.float32)


def _prep_taps3x3(w, scale, bias):
    """(cout, cin, 3, 3) conv weight, BN folded -> (9, cin, cout) per-tap matrices."""
    w = w * scale[:, None, None, None]
    wt = jnp.transpose(w, (2, 3, 1, 0)).reshape(9, w.shape[1], w.shape[0])
    return wt.astype(jnp.float32), bias.reshape(1, -1).astype(jnp.float32)


def _prep_1x1(w, scale, bias):
    w = w * scale[:, None, None, None]
    return (jnp.transpose(w[:, :, 0, 0]).astype(jnp.float32),
            bias.reshape(1, -1).astype(jnp.float32))


def make_params(key):
    # TODO(synk): real ResNet_FE wraps a pretrained torchvision ResNet; weights
    # here are synthetic deterministic initializations (no checkpoint load).
    def conv(k, cout, cin, ksz):
        return 0.1 * jax.random.normal(k, (cout, cin, ksz, ksz), jnp.float32)

    def bn(k, c):
        k1, k2, k3, k4 = jax.random.split(k, 4)
        gamma = 1.0 + 0.1 * jax.random.normal(k1, (c,), jnp.float32)
        beta = 0.1 * jax.random.normal(k2, (c,), jnp.float32)
        mean = 0.1 * jax.random.normal(k3, (c,), jnp.float32)
        var = 1.0 + 0.1 * jnp.abs(jax.random.normal(k4, (c,), jnp.float32))
        return _fold_bn(gamma, beta, mean, var)

    ks = jax.random.split(key, 12)
    p = {}
    p["w1"], p["b1"] = _prep_im2col(conv(ks[0], C1, 3, 7), *bn(ks[1], C1))
    p["w11"], p["b11"] = _prep_taps3x3(conv(ks[2], C1, C1, 3), *bn(ks[3], C1))
    p["w12"], p["b12"] = _prep_taps3x3(conv(ks[4], C1, C1, 3), *bn(ks[5], C1))
    p["w21"], p["b21"] = _prep_taps3x3(conv(ks[6], C2, C1, 3), *bn(ks[7], C2))
    p["w22"], p["b22"] = _prep_taps3x3(conv(ks[8], C2, C2, 3), *bn(ks[9], C2))
    p["wd"], p["bd"] = _prep_1x1(conv(ks[10], C2, C1, 1), *bn(ks[11], C2))
    return p


if __name__ == "__main__":
    x = jax.random.normal(jax.random.PRNGKey(0), (2, 3, 32, 32), jnp.float32)
    params = make_params(jax.random.PRNGKey(1))
    fwd = jax.jit(resnet_fe_forward)
    out = fwd(x, params)
    jax.block_until_ready(out)
    assert out.shape == (2, C2, 1, 1) and out.dtype == jnp.float32
    assert bool(jnp.all(jnp.isfinite(out)))
    print("KERNEL_OK")
</pallas_src>

<mosaic_0001>
module attributes {stable_mosaic.version = 11 : i64} {
  func.func @_resnet_fe_kernel(%arg0: memref<648x147xf32, #tpu.memory_space<vmem>>, %arg1: memref<147x16xf32, #tpu.memory_space<vmem>>, %arg2: memref<1x16xf32, #tpu.memory_space<vmem>>, %arg3: memref<648x1xf32, #tpu.memory_space<vmem>>, %arg4: memref<200x648xf32, #tpu.memory_space<vmem>>, %arg5: memref<9x16x16xf32, #tpu.memory_space<vmem>>, %arg6: memref<1x16xf32, #tpu.memory_space<vmem>>, %arg7: memref<9x16x16xf32, #tpu.memory_space<vmem>>, %arg8: memref<1x16xf32, #tpu.memory_space<vmem>>, %arg9: memref<200x1xf32, #tpu.memory_space<vmem>>, %arg10: memref<9x16x32xf32, #tpu.memory_space<vmem>>, %arg11: memref<1x32xf32, #tpu.memory_space<vmem>>, %arg12: memref<72x200xf32, #tpu.memory_space<vmem>>, %arg13: memref<72x1xf32, #tpu.memory_space<vmem>>, %arg14: memref<9x32x32xf32, #tpu.memory_space<vmem>>, %arg15: memref<1x32xf32, #tpu.memory_space<vmem>>, %arg16: memref<16x32xf32, #tpu.memory_space<vmem>>, %arg17: memref<1x32xf32, #tpu.memory_space<vmem>>, %arg18: memref<2x72xf32, #tpu.memory_space<vmem>>, %arg19: memref<2x32xf32, #tpu.memory_space<vmem>>, %arg20: memref<696x16xf32, #tpu.memory_space<vmem>>, %arg21: memref<232x16xf32, #tpu.memory_space<vmem>>, %arg22: memref<232x16xf32, #tpu.memory_space<vmem>>, %arg23: memref<88x32xf32, #tpu.memory_space<vmem>>) attributes {dimension_semantics = [], scalar_prefetch = 0 : i64, scratch_operands = 4 : i64, tpu.core_type = #tpu.core_type<tc>} {
    %cst = arith.constant 0.000000e+00 : f32
    %0 = vector.broadcast %cst : f32 to vector<696x16xf32>
    %c0 = arith.constant 0 : index
    %c0_0 = arith.constant 0 : index
    %1 = vector.load %arg20[%c0, %c0_0] : memref<696x16xf32, #tpu.memory_space<vmem>>, vector<696x16xf32>
    tpu.vector_store %arg20[%c0, %c0_0], %0 {strides = array<i32>} : memref<696x16xf32, #tpu.memory_space<vmem>>, vector<696x16xf32>,
    %cst_1 = arith.constant 0.000000e+00 : f32
    %2 = vector.broadcast %cst_1 : f32 to vector<232x16xf32>
    %c0_2 = arith.constant 0 : index
    %c0_3 = arith.constant 0 : index
    %3 = vector.load %arg21[%c0_2, %c0_3] : memref<232x16xf32, #tpu.memory_space<vmem>>, vector<232x16xf32>
    tpu.vector_store %arg21[%c0_2, %c0_3], %2 {strides = array<i32>} : memref<232x16xf32, #tpu.memory_space<vmem>>, vector<232x16xf32>,
    %cst_4 = arith.constant 0.000000e+00 : f32
    %4 = vector.broadcast %cst_4 : f32 to vector<232x16xf32>
    %c0_5 = arith.constant 0 : index
    %c0_6 = arith.constant 0 : index
    %5 = vector.load %arg22[%c0_5, %c0_6] : memref<232x16xf32, #tpu.memory_space<vmem>>, vector<232x16xf32>
    tpu.vector_store %arg22[%c0_5, %c0_6], %4 {strides = array<i32>} : memref<232x16xf32, #tpu.memory_space<vmem>>, vector<232x16xf32>,
    %cst_7 = arith.constant 0.000000e+00 : f32
    %6 = vector.broadcast %cst_7 : f32 to vector<88x32xf32>
    %c0_8 = arith.constant 0 : index
    %c0_9 = arith.constant 0 : index
    %7 = vector.load %arg23[%c0_8, %c0_9] : memref<88x32xf32, #tpu.memory_space<vmem>>, vector<88x32xf32>
    tpu.vector_store %arg23[%c0_8, %c0_9], %6 {strides = array<i32>} : memref<88x32xf32, #tpu.memory_space<vmem>>, vector<88x32xf32>,
    %c0_10 = arith.constant 0 : index
    %c0_11 = arith.constant 0 : index
    %8 = vector.load %arg0[%c0_10, %c0_11] : memref<648x147xf32, #tpu.memory_space<vmem>>, vector<648x147xf32>
    %c0_12 = arith.constant 0 : index
    %c0_13 = arith.constant 0 : index
    %9 = vector.load %arg1[%c0_12, %c0_13] : memref<147x16xf32, #tpu.memory_space<vmem>>, vector<147x16xf32>
    %cst_14 = arith.constant dense<0.000000e+00> : vector<648x16xf32>
    %10 = tpu.matmul %8, %9, %cst_14 {dimension_numbers = #tpu.dot_dimension_numbers<[1], [0], [0], [1], [0, 0, 1, 1], [], []>} : vector<648x147xf32>, vector<147x16xf32>, vector<648x16xf32> -> vector<648x16xf32>
    %c0_15 = arith.constant 0 : index
    %c0_16 = arith.constant 0 : index
    %11 = vector.load %arg2[%c0_15, %c0_16] : memref<1x16xf32, #tpu.memory_space<vmem>>, vector<1x16xf32>
    %12 = vector.broadcast %11 : vector<1x16xf32> to vector<648x16xf32>
    %13 = arith.addf %10, %12 : vector<648x16xf32>
    %cst_17 = arith.constant 0.000000e+00 : f32
    %14 = vector.broadcast %cst_17 : f32 to vector<648x16xf32>
    %15 = arith.maximumf %13, %14 : vector<648x16xf32>
    %c0_18 = arith.constant 0 : index
    %c0_19 = arith.constant 0 : index
    %16 = vector.load %arg3[%c0_18, %c0_19] : memref<648x1xf32, #tpu.memory_space<vmem>>, vector<648x1xf32>
    %cst_20 = arith.constant 5.000000e-01 : f32
    %17 = vector.broadcast %cst_20 : f32 to vector<648x1xf32>
    %18 = arith.cmpf ogt, %16, %17 : vector<648x1xf32>
    %cst_21 = arith.constant 0.000000e+00 : f32
    %19 = vector.shape_cast %18 : vector<648x1xi1> to vector<648x1xi1>
    %20 = vector.broadcast %19 : vector<648x1xi1> to vector<648x16xi1>
    %21 = vector.broadcast %cst_21 : f32 to vector<648x16xf32>
    %22 = arith.select %20, %15, %21 : vector<648x16xi1>, vector<648x16xf32>
    %c24 = arith.constant 24 : index
    %c0_22 = arith.constant 0 : index
    %23 = vector.load %arg20[%c24, %c0_22] : memref<696x16xf32, #tpu.memory_space<vmem>>, vector<648x16xf32>
    tpu.vector_store %arg20[%c24, %c0_22], %22 {strides = array<i32>} : memref<696x16xf32, #tpu.memory_space<vmem>>, vector<648x16xf32>,
    %c5 = arith.constant 5 : index
    %c0_23 = arith.constant 0 : index
    %24 = vector.load %arg20[%c5, %c0_23] : memref<696x16xf32, #tpu.memory_space<vmem>>, vector<648x16xf32>
    %c6 = arith.constant 6 : index
    %c0_24 = arith.constant 0 : index
    %25 = vector.load %arg20[%c6, %c0_24] : memref<696x16xf32, #tpu.memory_space<vmem>>, vector<648x16xf32>
    %26 = arith.maximumf %24, %25 : vector<648x16xf32>
    %c7 = arith.constant 7 : index
    %c0_25 = arith.constant 0 : index
    %27 = vector.load %arg20[%c7, %c0_25] : memref<696x16xf32, #tpu.memory_space<vmem>>, vector<648x16xf32>
    %28 = arith.maximumf %26, %27 : vector<648x16xf32>
    %c23 = arith.constant 23 : index
    %c0_26 = arith.constant 0 : index
    %29 = vector.load %arg20[%c23, %c0_26] : memref<696x16xf32, #tpu.memory_space<vmem>>, vector<648x16xf32>
    %30 = arith.maximumf %28, %29 : vector<648x16xf32>
    %c24_27 = arith.constant 24 : index
    %c0_28 = arith.constant 0 : index
    %31 = vector.load %arg20[%c24_27, %c0_28] : memref<696x16xf32, #tpu.memory_space<vmem>>, vector<648x16xf32>
    %32 = arith.maximumf %30, %31 : vector<648x16xf32>
    %c25 = arith.constant 25 : index
    %c0_29 = arith.constant 0 : index
    %33 = vector.load %arg20[%c25, %c0_29] : memref<696x16xf32, #tpu.memory_space<vmem>>, vector<648x16xf32>
    %34 = arith.maximumf %32, %33 : vector<648x16xf32>
    %c41 = arith.constant 41 : index
    %c0_30 = arith.constant 0 : index
    %35 = vector.load %arg20[%c41, %c0_30] : memref<696x16xf32, #tpu.memory_space<vmem>>, vector<648x16xf32>
    %36 = arith.maximumf %34, %35 : vector<648x16xf32>
    %c42 = arith.constant 42 : index
    %c0_31 = arith.constant 0 : index
    %37 = vector.load %arg20[%c42, %c0_31] : memref<696x16xf32, #tpu.memory_space<vmem>>, vector<648x16xf32>
    %38 = arith.maximumf %36, %37 : vector<648x16xf32>
    %c43 = arith.constant 43 : index
    %c0_32 = arith.constant 0 : index
    %39 = vector.load %arg20[%c43, %c0_32] : memref<696x16xf32, #tpu.memory_space<vmem>>, vector<648x16xf32>
    %40 = arith.maximumf %38, %39 : vector<648x16xf32>
    %c0_33 = arith.constant 0 : index
    %c0_34 = arith.constant 0 : index
    %41 = vector.load %arg4[%c0_33, %c0_34] : memref<200x648xf32, #tpu.memory_space<vmem>>, vector<200x648xf32>
    %cst_35 = arith.constant dense<0.000000e+00> : vector<200x16xf32>
    %42 = tpu.matmul %41, %40, %cst_35 {dimension_numbers = #tpu.dot_dimension_numbers<[1], [0], [0], [1], [0, 0, 1, 1], [], []>} : vector<200x648xf32>, vector<648x16xf32>, vector<200x16xf32> -> vector<200x16xf32>
    %c16 = arith.constant 16 : index
    %c0_36 = arith.constant 0 : index
    %43 = vector.load %arg21[%c16, %c0_36] : memref<232x16xf32, #tpu.memory_space<vmem>>, vector<200x16xf32>
    tpu.vector_store %arg21[%c16, %c0_36], %42 {strides = array<i32>} : memref<232x16xf32, #tpu.memory_space<vmem>>, vector<200x16xf32>,
    %c5_37 = arith.constant 5 : index
    %c0_38 = arith.constant 0 : index
    %44 = vector.load %arg21[%c5_37, %c0_38] : memref<232x16xf32, #tpu.memory_space<vmem>>, vector<200x16xf32>
    %c0_39 = arith.constant 0 : index
    %c0_40 = arith.constant 0 : index
    %c0_41 = arith.constant 0 : index
    %45 = vector.load %arg5[%c0_39, %c0_40, %c0_41] : memref<9x16x16xf32, #tpu.memory_space<vmem>>, vector<1x16x16xf32>
    %46 = vector.shape_cast %45 : vector<1x16x16xf32> to vector<16x16xf32>
    %cst_42 = arith.constant dense<0.000000e+00> : vector<200x16xf32>
    %47 = tpu.matmul %44, %46, %cst_42 {dimension_numbers = #tpu.dot_dimension_numbers<[1], [0], [0], [1], [0, 0, 1, 1], [], []>} : vector<200x16xf32>, vector<16x16xf32>, vector<200x16xf32> -> vector<200x16xf32>
    %c6_43 = arith.constant 6 : index
    %c0_44 = arith.constant 0 : index
    %48 = vector.load %arg21[%c6_43, %c0_44] : memref<232x16xf32, #tpu.memory_space<vmem>>, vector<200x16xf32>
    %c1 = arith.constant 1 : index
    %c0_45 = arith.constant 0 : index
    %c0_46 = arith.constant 0 : index
    %49 = vector.load %arg5[%c1, %c0_45, %c0_46] : memref<9x16x16xf32, #tpu.memory_space<vmem>>, vector<1x16x16xf32>
    %50 = vector.shape_cast %49 : vector<1x16x16xf32> to vector<16x16xf32>
    %cst_47 = arith.constant dense<0.000000e+00> : vector<200x16xf32>
    %51 = tpu.matmul %48, %50, %cst_47 {dimension_numbers = #tpu.dot_dimension_numbers<[1], [0], [0], [1], [0, 0, 1, 1], [], []>} : vector<200x16xf32>, vector<16x16xf32>, vector<200x16xf32> -> vector<200x16xf32>
    %52 = arith.addf %47, %51 : vector<200x16xf32>
    %c7_48 = arith.constant 7 : index
    %c0_49 = arith.constant 0 : index
    %53 = vector.load %arg21[%c7_48, %c0_49] : memref<232x16xf32, #tpu.memory_space<vmem>>, vector<200x16xf32>
    %c2 = arith.constant 2 : index
    %c0_50 = arith.constant 0 : index
    %c0_51 = arith.constant 0 : index
    %54 = vector.load %arg5[%c2, %c0_50, %c0_51] : memref<9x16x16xf32, #tpu.memory_space<vmem>>, vector<1x16x16xf32>
    %55 = vector.shape_cast %54 : vector<1x16x16xf32> to vector<16x16xf32>
    %cst_52 = arith.constant dense<0.000000e+00> : vector<200x16xf32>
    %56 = tpu.matmul %53, %55, %cst_52 {dimension_numbers = #tpu.dot_dimension_numbers<[1], [0], [0], [1], [0, 0, 1, 1], [], []>} : vector<200x16xf32>, vector<16x16xf32>, vector<200x16xf32> -> vector<200x16xf32>
    %57 = arith.addf %52, %56 : vector<200x16xf32>
    %c15 = arith.constant 15 : index
    %c0_53 = arith.constant 0 : index
    %58 = vector.load %arg21[%c15, %c0_53] : memref<232x16xf32, #tpu.memory_space<vmem>>, vector<200x16xf32>
    %c3 = arith.constant 3 : index
    %c0_54 = arith.constant 0 : index
    %c0_55 = arith.constant 0 : index
    %59 = vector.load %arg5[%c3, %c0_54, %c0_55] : memref<9x16x16xf32, #tpu.memory_space<vmem>>, vector<1x16x16xf32>
    %60 = vector.shape_cast %59 : vector<1x16x16xf32> to vector<16x16xf32>
    %cst_56 = arith.constant dense<0.000000e+00> : vector<200x16xf32>
    %61 = tpu.matmul %58, %60, %cst_56 {dimension_numbers = #tpu.dot_dimension_numbers<[1], [0], [0], [1], [0, 0, 1, 1], [], []>} : vector<200x16xf32>, vector<16x16xf32>, vector<200x16xf32> -> vector<200x16xf32>
    %62 = arith.addf %57, %61 : vector<200x16xf32>
    %c16_57 = arith.constant 16 : index
    %c0_58 = arith.constant 0 : index
    %63 = vector.load %arg21[%c16_57, %c0_58] : memref<232x16xf32, #tpu.memory_space<vmem>>, vector<200x16xf32>
    %c4 = arith.constant 4 : index
    %c0_59 = arith.constant 0 : index
    %c0_60 = arith.constant 0 : index
    %64 = vector.load %arg5[%c4, %c0_59, %c0_60] : memref<9x16x16xf32, #tpu.memory_space<vmem>>, vector<1x16x16xf32>
    %65 = vector.shape_cast %64 : vector<1x16x16xf32> to vector<16x16xf32>
    %cst_61 = arith.constant dense<0.000000e+00> : vector<200x16xf32>
    %66 = tpu.matmul %63, %65, %cst_61 {dimension_numbers = #tpu.dot_dimension_numbers<[1], [0], [0], [1], [0, 0, 1, 1], [], []>} : vector<200x16xf32>, vector<16x16xf32>, vector<200x16xf32> -> vector<200x16xf32>
    %67 = arith.addf %62, %66 : vector<200x16xf32>
    %c17 = arith.constant 17 : index
    %c0_62 = arith.constant 0 : index
    %68 = vector.load %arg21[%c17, %c0_62] : memref<232x16xf32, #tpu.memory_space<vmem>>, vector<200x16xf32>
    %c5_63 = arith.constant 5 : index
    %c0_64 = arith.constant 0 : index
    %c0_65 = arith.constant 0 : index
    %69 = vector.load %arg5[%c5_63, %c0_64, %c0_65] : memref<9x16x16xf32, #tpu.memory_space<vmem>>, vector<1x16x16xf32>
    %70 = vector.shape_cast %69 : vector<1x16x16xf32> to vector<16x16xf32>
    %cst_66 = arith.constant dense<0.000000e+00> : vector<200x16xf32>
    %71 = tpu.matmul %68, %70, %cst_66 {dimension_numbers = #tpu.dot_dimension_numbers<[1], [0], [0], [1], [0, 0, 1, 1], [], []>} : vector<200x16xf32>, vector<16x16xf32>, vector<200x16xf32> -> vector<200x16xf32>
    %72 = arith.addf %67, %71 : vector<200x16xf32>
    %c25_67 = arith.constant 25 : index
    %c0_68 = arith.constant 0 : index
    %73 = vector.load %arg21[%c25_67, %c0_68] : memref<232x16xf32, #tpu.memory_space<vmem>>, vector<200x16xf32>
    %c6_69 = arith.constant 6 : index
    %c0_70 = arith.constant 0 : index
    %c0_71 = arith.constant 0 : index
    %74 = vector.load %arg5[%c6_69, %c0_70, %c0_71] : memref<9x16x16xf32, #tpu.memory_space<vmem>>, vector<1x16x16xf32>
    %75 = vector.shape_cast %74 : vector<1x16x16xf32> to vector<16x16xf32>
    %cst_72 = arith.constant dense<0.000000e+00> : vector<200x16xf32>
    %76 = tpu.matmul %73, %75, %cst_72 {dimension_numbers = #tpu.dot_dimension_numbers<[1], [0], [0], [1], [0, 0, 1, 1], [], []>} : vector<200x16xf32>, vector<16x16xf32>, vector<200x16xf32> -> vector<200x16xf32>
    %77 = arith.addf %72, %76 : vector<200x16xf32>
    %c26 = arith.constant 26 : index
    %c0_73 = arith.constant 0 : index
    %78 = vector.load %arg21[%c26, %c0_73] : memref<232x16xf32, #tpu.memory_space<vmem>>, vector<200x16xf32>
    %c7_74 = arith.constant 7 : index
    %c0_75 = arith.constant 0 : index
    %c0_76 = arith.constant 0 : index
    %79 = vector.load %arg5[%c7_74, %c0_75, %c0_76] : memref<9x16x16xf32, #tpu.memory_space<vmem>>, vector<1x16x16xf32>
    %80 = vector.shape_cast %79 : vector<1x16x16xf32> to vector<16x16xf32>
    %cst_77 = arith.constant dense<0.000000e+00> : vector<200x16xf32>
    %81 = tpu.matmul %78, %80, %cst_77 {dimension_numbers = #tpu.dot_dimension_numbers<[1], [0], [0], [1], [0, 0, 1, 1], [], []>} : vector<200x16xf32>, vector<16x16xf32>, vector<200x16xf32> -> vector<200x16xf32>
    %82 = arith.addf %77, %81 : vector<200x16xf32>
    %c27 = arith.constant 27 : index
    %c0_78 = arith.constant 0 : index
    %83 = vector.load %arg21[%c27, %c0_78] : memref<232x16xf32, #tpu.memory_space<vmem>>, vector<200x16xf32>
    %c8 = arith.constant 8 : index
    %c0_79 = arith.constant 0 : index
    %c0_80 = arith.constant 0 : index
    %84 = vector.load %arg5[%c8, %c0_79, %c0_80] : memref<9x16x16xf32, #tpu.memory_space<vmem>>, vector<1x16x16xf32>
    %85 = vector.shape_cast %84 : vector<1x16x16xf32> to vector<16x16xf32>
    %cst_81 = arith.constant dense<0.000000e+00> : vector<200x16xf32>
    %86 = tpu.matmul %83, %85, %cst_81 {dimension_numbers = #tpu.dot_dimension_numbers<[1], [0], [0], [1], [0, 0, 1, 1], [], []>} : vector<200x16xf32>, vector<16x16xf32>, vector<200x16xf32> -> vector<200x16xf32>
    %87 = arith.addf %82, %86 : vector<200x16xf32>
    %c0_82 = arith.constant 0 : index
    %c0_83 = arith.constant 0 : index
    %88 = vector.load %arg6[%c0_82, %c0_83] : memref<1x16xf32, #tpu.memory_space<vmem>>, vector<1x16xf32>
    %89 = vector.broadcast %88 : vector<1x16xf32> to vector<200x16xf32>
    %90 = arith.addf %87, %89 : vector<200x16xf32>
    %cst_84 = arith.constant 0.000000e+00 : f32
    %91 = vector.broadcast %cst_84 : f32 to vector<200x16xf32>
    %92 = arith.maximumf %90, %91 : vector<200x16xf32>
    %c0_85 = arith.constant 0 : index
    %c0_86 = arith.constant 0 : index
    %93 = vector.load %arg9[%c0_85, %c0_86] : memref<200x1xf32, #tpu.memory_space<vmem>>, vector<200x1xf32>
    %cst_87 = arith.constant 5.000000e-01 : f32
    %94 = vector.broadcast %cst_87 : f32 to vector<200x1xf32>
    %95 = arith.cmpf ogt, %93, %94 : vector<200x1xf32>
    %cst_88 = arith.constant 0.000000e+00 : f32
    %96 = vector.shape_cast %95 : vector<200x1xi1> to vector<200x1xi1>
    %97 = vector.broadcast %96 : vector<200x1xi1> to vector<200x16xi1>
    %98 = vector.broadcast %cst_88 : f32 to vector<200x16xf32>
    %99 = arith.select %97, %92, %98 : vector<200x16xi1>, vector<200x16xf32>
    %c16_89 = arith.constant 16 : index
    %c0_90 = arith.constant 0 : index
    %100 = vector.load %arg22[%c16_89, %c0_90] : memref<232x16xf32, #tpu.memory_space<vmem>>, vector<200x16xf32>
    tpu.vector_store %arg22[%c16_89, %c0_90], %99 {strides = array<i32>} : memref<232x16xf32, #tpu.memory_space<vmem>>, vector<200x16xf32>,
    %c5_91 = arith.constant 5 : index
    %c0_92 = arith.constant 0 : index
    %101 = vector.load %arg22[%c5_91, %c0_92] : memref<232x16xf32, #tpu.memory_space<vmem>>, vector<200x16xf32>
    %c0_93 = arith.constant 0 : index
    %c0_94 = arith.constant 0 : index
    %c0_95 = arith.constant 0 : index
    %102 = vector.load %arg7[%c0_93, %c0_94, %c0_95] : memref<9x16x16xf32, #tpu.memory_space<vmem>>, vector<1x16x16xf32>
    %103 = vector.shape_cast %102 : vector<1x16x16xf32> to vector<16x16xf32>
    %cst_96 = arith.constant dense<0.000000e+00> : vector<200x16xf32>
    %104 = tpu.matmul %101, %103, %cst_96 {dimension_numbers = #tpu.dot_dimension_numbers<[1], [0], [0], [1], [0, 0, 1, 1], [], []>} : vector<200x16xf32>, vector<16x16xf32>, vector<200x16xf32> -> vector<200x16xf32>
    %c6_97 = arith.constant 6 : index
    %c0_98 = arith.constant 0 : index
    %105 = vector.load %arg22[%c6_97, %c0_98] : memref<232x16xf32, #tpu.memory_space<vmem>>, vector<200x16xf32>
    %c1_99 = arith.constant 1 : index
    %c0_100 = arith.constant 0 : index
    %c0_101 = arith.constant 0 : index
    %106 = vector.load %arg7[%c1_99, %c0_100, %c0_101] : memref<9x16x16xf32, #tpu.memory_space<vmem>>, vector<1x16x16xf32>
    %107 = vector.shape_cast %106 : vector<1x16x16xf32> to vector<16x16xf32>
    %cst_102 = arith.constant dense<0.000000e+00> : vector<200x16xf32>
    %108 = tpu.matmul %105, %107, %cst_102 {dimension_numbers = #tpu.dot_dimension_numbers<[1], [0], [0], [1], [0, 0, 1, 1], [], []>} : vector<200x16xf32>, vector<16x16xf32>, vector<200x16xf32> -> vector<200x16xf32>
    %109 = arith.addf %104, %108 : vector<200x16xf32>
    %c7_103 = arith.constant 7 : index
    %c0_104 = arith.constant 0 : index
    %110 = vector.load %arg22[%c7_103, %c0_104] : memref<232x16xf32, #tpu.memory_space<vmem>>, vector<200x16xf32>
    %c2_105 = arith.constant 2 : index
    %c0_106 = arith.constant 0 : index
    %c0_107 = arith.constant 0 : index
    %111 = vector.load %arg7[%c2_105, %c0_106, %c0_107] : memref<9x16x16xf32, #tpu.memory_space<vmem>>, vector<1x16x16xf32>
    %112 = vector.shape_cast %111 : vector<1x16x16xf32> to vector<16x16xf32>
    %cst_108 = arith.constant dense<0.000000e+00> : vector<200x16xf32>
    %113 = tpu.matmul %110, %112, %cst_108 {dimension_numbers = #tpu.dot_dimension_numbers<[1], [0], [0], [1], [0, 0, 1, 1], [], []>} : vector<200x16xf32>, vector<16x16xf32>, vector<200x16xf32> -> vector<200x16xf32>
    %114 = arith.addf %109, %113 : vector<200x16xf32>
    %c15_109 = arith.constant 15 : index
    %c0_110 = arith.constant 0 : index
    %115 = vector.load %arg22[%c15_109, %c0_110] : memref<232x16xf32, #tpu.memory_space<vmem>>, vector<200x16xf32>
    %c3_111 = arith.constant 3 : index
    %c0_112 = arith.constant 0 : index
    %c0_113 = arith.constant 0 : index
    %116 = vector.load %arg7[%c3_111, %c0_112, %c0_113] : memref<9x16x16xf32, #tpu.memory_space<vmem>>, vector<1x16x16xf32>
    %117 = vector.shape_cast %116 : vector<1x16x16xf32> to vector<16x16xf32>
    %cst_114 = arith.constant dense<0.000000e+00> : vector<200x16xf32>
    %118 = tpu.matmul %115, %117, %cst_114 {dimension_numbers = #tpu.dot_dimension_numbers<[1], [0], [0], [1], [0, 0, 1, 1], [], []>} : vector<200x16xf32>, vector<16x16xf32>, vector<200x16xf32> -> vector<200x16xf32>
    %119 = arith.addf %114, %118 : vector<200x16xf32>
    %c16_115 = arith.constant 16 : index
    %c0_116 = arith.constant 0 : index
    %120 = vector.load %arg22[%c16_115, %c0_116] : memref<232x16xf32, #tpu.memory_space<vmem>>, vector<200x16xf32>
    %c4_117 = arith.constant 4 : index
    %c0_118 = arith.constant 0 : index
    %c0_119 = arith.constant 0 : index
    %121 = vector.load %arg7[%c4_117, %c0_118, %c0_119] : memref<9x16x16xf32, #tpu.memory_space<vmem>>, vector<1x16x16xf32>
    %122 = vector.shape_cast %121 : vector<1x16x16xf32> to vector<16x16xf32>
    %cst_120 = arith.constant dense<0.000000e+00> : vector<200x16xf32>
    %123 = tpu.matmul %120, %122, %cst_120 {dimension_numbers = #tpu.dot_dimension_numbers<[1], [0], [0], [1], [0, 0, 1, 1], [], []>} : vector<200x16xf32>, vector<16x16xf32>, vector<200x16xf32> -> vector<200x16xf32>
    %124 = arith.addf %119, %123 : vector<200x16xf32>
    %c17_121 = arith.constant 17 : index
    %c0_122 = arith.constant 0 : index
    %125 = vector.load %arg22[%c17_121, %c0_122] : memref<232x16xf32, #tpu.memory_space<vmem>>, vector<200x16xf32>
    %c5_123 = arith.constant 5 : index
    %c0_124 = arith.constant 0 : index
    %c0_125 = arith.constant 0 : index
    %126 = vector.load %arg7[%c5_123, %c0_124, %c0_125] : memref<9x16x16xf32, #tpu.memory_space<vmem>>, vector<1x16x16xf32>
    %127 = vector.shape_cast %126 : vector<1x16x16xf32> to vector<16x16xf32>
    %cst_126 = arith.constant dense<0.000000e+00> : vector<200x16xf32>
    %128 = tpu.matmul %125, %127, %cst_126 {dimension_numbers = #tpu.dot_dimension_numbers<[1], [0], [0], [1], [0, 0, 1, 1], [], []>} : vector<200x16xf32>, vector<16x16xf32>, vector<200x16xf32> -> vector<200x16xf32>
    %129 = arith.addf %124, %128 : vector<200x16xf32>
    %c25_127 = arith.constant 25 : index
    %c0_128 = arith.constant 0 : index
    %130 = vector.load %arg22[%c25_127, %c0_128] : memref<232x16xf32, #tpu.memory_space<vmem>>, vector<200x16xf32>
    %c6_129 = arith.constant 6 : index
    %c0_130 = arith.constant 0 : index
    %c0_131 = arith.constant 0 : index
    %131 = vector.load %arg7[%c6_129, %c0_130, %c0_131] : memref<9x16x16xf32, #tpu.memory_space<vmem>>, vector<1x16x16xf32>
    %132 = vector.shape_cast %131 : vector<1x16x16xf32> to vector<16x16xf32>
    %cst_132 = arith.constant dense<0.000000e+00> : vector<200x16xf32>
    %133 = tpu.matmul %130, %132, %cst_132 {dimension_numbers = #tpu.dot_dimension_numbers<[1], [0], [0], [1], [0, 0, 1, 1], [], []>} : vector<200x16xf32>, vector<16x16xf32>, vector<200x16xf32> -> vector<200x16xf32>
    %134 = arith.addf %129, %133 : vector<200x16xf32>
    %c26_133 = arith.constant 26 : index
    %c0_134 = arith.constant 0 : index
    %135 = vector.load %arg22[%c26_133, %c0_134] : memref<232x16xf32, #tpu.memory_space<vmem>>, vector<200x16xf32>
    %c7_135 = arith.constant 7 : index
    %c0_136 = arith.constant 0 : index
    %c0_137 = arith.constant 0 : index
    %136 = vector.load %arg7[%c7_135, %c0_136, %c0_137] : memref<9x16x16xf32, #tpu.memory_space<vmem>>, vector<1x16x16xf32>
    %137 = vector.shape_cast %136 : vector<1x16x16xf32> to vector<16x16xf32>
    %cst_138 = arith.constant dense<0.000000e+00> : vector<200x16xf32>
    %138 = tpu.matmul %135, %137, %cst_138 {dimension_numbers = #tpu.dot_dimension_numbers<[1], [0], [0], [1], [0, 0, 1, 1], [], []>} : vector<200x16xf32>, vector<16x16xf32>, vector<200x16xf32> -> vector<200x16xf32>
    %139 = arith.addf %134, %138 : vector<200x16xf32>
    %c27_139 = arith.constant 27 : index
    %c0_140 = arith.constant 0 : index
    %140 = vector.load %arg22[%c27_139, %c0_140] : memref<232x16xf32, #tpu.memory_space<vmem>>, vector<200x16xf32>
    %c8_141 = arith.constant 8 : index
    %c0_142 = arith.constant 0 : index
    %c0_143 = arith.constant 0 : index
    %141 = vector.load %arg7[%c8_141, %c0_142, %c0_143] : memref<9x16x16xf32, #tpu.memory_space<vmem>>, vector<1x16x16xf32>
    %142 = vector.shape_cast %141 : vector<1x16x16xf32> to vector<16x16xf32>
    %cst_144 = arith.constant dense<0.000000e+00> : vector<200x16xf32>
    %143 = tpu.matmul %140, %142, %cst_144 {dimension_numbers = #tpu.dot_dimension_numbers<[1], [0], [0], [1], [0, 0, 1, 1], [], []>} : vector<200x16xf32>, vector<16x16xf32>, vector<200x16xf32> -> vector<200x16xf32>
    %144 = arith.addf %139, %143 : vector<200x16xf32>
    %c0_145 = arith.constant 0 : index
    %c0_146 = arith.constant 0 : index
    %145 = vector.load %arg8[%c0_145, %c0_146] : memref<1x16xf32, #tpu.memory_space<vmem>>, vector<1x16xf32>
    %146 = vector.broadcast %145 : vector<1x16xf32> to vector<200x16xf32>
    %147 = arith.addf %144, %146 : vector<200x16xf32>
    %c16_147 = arith.constant 16 : index
    %c0_148 = arith.constant 0 : index
    %148 = vector.load %arg21[%c16_147, %c0_148] : memref<232x16xf32, #tpu.memory_space<vmem>>, vector<200x16xf32>
    %149 = arith.addf %147, %148 : vector<200x16xf32>
    %cst_149 = arith.constant 0.000000e+00 : f32
    %150 = vector.broadcast %cst_149 : f32 to vector<200x16xf32>
    %151 = arith.maximumf %149, %150 : vector<200x16xf32>
    %c0_150 = arith.constant 0 : index
    %c0_151 = arith.constant 0 : index
    %152 = vector.load %arg9[%c0_150, %c0_151] : memref<200x1xf32, #tpu.memory_space<vmem>>, vector<200x1xf32>
    %cst_152 = arith.constant 5.000000e-01 : f32
    %153 = vector.broadcast %cst_152 : f32 to vector<200x1xf32>
    %154 = arith.cmpf ogt, %152, %153 : vector<200x1xf32>
    %cst_153 = arith.constant 0.000000e+00 : f32
    %155 = vector.shape_cast %154 : vector<200x1xi1> to vector<200x1xi1>
    %156 = vector.broadcast %155 : vector<200x1xi1> to vector<200x16xi1>
    %157 = vector.broadcast %cst_153 : f32 to vector<200x16xf32>
    %158 = arith.select %156, %151, %157 : vector<200x16xi1>, vector<200x16xf32>
    %c16_154 = arith.constant 16 : index
    %c0_155 = arith.constant 0 : index
    %159 = vector.load %arg21[%c16_154, %c0_155] : memref<232x16xf32, #tpu.memory_space<vmem>>, vector<200x16xf32>
    tpu.vector_store %arg21[%c16_154, %c0_155], %158 {strides = array<i32>} : memref<232x16xf32, #tpu.memory_space<vmem>>, vector<200x16xf32>,
    %c5_156 = arith.constant 5 : index
    %c0_157 = arith.constant 0 : index
    %160 = vector.load %arg21[%c5_156, %c0_157] : memref<232x16xf32, #tpu.memory_space<vmem>>, vector<200x16xf32>
    %c0_158 = arith.constant 0 : index
    %c0_159 = arith.constant 0 : index
    %c0_160 = arith.constant 0 : index
    %161 = vector.load %arg10[%c0_158, %c0_159, %c0_160] : memref<9x16x32xf32, #tpu.memory_space<vmem>>, vector<1x16x32xf32>
    %162 = vector.shape_cast %161 : vector<1x16x32xf32> to vector<16x32xf32>
    %cst_161 = arith.constant dense<0.000000e+00> : vector<200x32xf32>
    %163 = tpu.matmul %160, %162, %cst_161 {dimension_numbers = #tpu.dot_dimension_numbers<[1], [0], [0], [1], [0, 0, 1, 1], [], []>} : vector<200x16xf32>, vector<16x32xf32>, vector<200x32xf32> -> vector<200x32xf32>
    %c6_162 = arith.constant 6 : index
    %c0_163 = arith.constant 0 : index
    %164 = vector.load %arg21[%c6_162, %c0_163] : memref<232x16xf32, #tpu.memory_space<vmem>>, vector<200x16xf32>
    %c1_164 = arith.constant 1 : index
    %c0_165 = arith.constant 0 : index
    %c0_166 = arith.constant 0 : index
    %165 = vector.load %arg10[%c1_164, %c0_165, %c0_166] : memref<9x16x32xf32, #tpu.memory_space<vmem>>, vector<1x16x32xf32>
    %166 = vector.shape_cast %165 : vector<1x16x32xf32> to vector<16x32xf32>
    %cst_167 = arith.constant dense<0.000000e+00> : vector<200x32xf32>
    %167 = tpu.matmul %164, %166, %cst_167 {dimension_numbers = #tpu.dot_dimension_numbers<[1], [0], [0], [1], [0, 0, 1, 1], [], []>} : vector<200x16xf32>, vector<16x32xf32>, vector<200x32xf32> -> vector<200x32xf32>
    %168 = arith.addf %163, %167 : vector<200x32xf32>
    %c7_168 = arith.constant 7 : index
    %c0_169 = arith.constant 0 : index
    %169 = vector.load %arg21[%c7_168, %c0_169] : memref<232x16xf32, #tpu.memory_space<vmem>>, vector<200x16xf32>
    %c2_170 = arith.constant 2 : index
    %c0_171 = arith.constant 0 : index
    %c0_172 = arith.constant 0 : index
    %170 = vector.load %arg10[%c2_170, %c0_171, %c0_172] : memref<9x16x32xf32, #tpu.memory_space<vmem>>, vector<1x16x32xf32>
    %171 = vector.shape_cast %170 : vector<1x16x32xf32> to vector<16x32xf32>
    %cst_173 = arith.constant dense<0.000000e+00> : vector<200x32xf32>
    %172 = tpu.matmul %169, %171, %cst_173 {dimension_numbers = #tpu.dot_dimension_numbers<[1], [0], [0], [1], [0, 0, 1, 1], [], []>} : vector<200x16xf32>, vector<16x32xf32>, vector<200x32xf32> -> vector<200x32xf32>
    %173 = arith.addf %168, %172 : vector<200x32xf32>
    %c15_174 = arith.constant 15 : index
    %c0_175 = arith.constant 0 : index
    %174 = vector.load %arg21[%c15_174, %c0_175] : memref<232x16xf32, #tpu.memory_space<vmem>>, vector<200x16xf32>
    %c3_176 = arith.constant 3 : index
    %c0_177 = arith.constant 0 : index
    %c0_178 = arith.constant 0 : index
    %175 = vector.load %arg10[%c3_176, %c0_177, %c0_178] : memref<9x16x32xf32, #tpu.memory_space<vmem>>, vector<1x16x32xf32>
    %176 = vector.shape_cast %175 : vector<1x16x32xf32> to vector<16x32xf32>
    %cst_179 = arith.constant dense<0.000000e+00> : vector<200x32xf32>
    %177 = tpu.matmul %174, %176, %cst_179 {dimension_numbers = #tpu.dot_dimension_numbers<[1], [0], [0], [1], [0, 0, 1, 1], [], []>} : vector<200x16xf32>, vector<16x32xf32>, vector<200x32xf32> -> vector<200x32xf32>
    %178 = arith.addf %173, %177 : vector<200x32xf32>
    %c16_180 = arith.constant 16 : index
    %c0_181 = arith.constant 0 : index
    %179 = vector.load %arg21[%c16_180, %c0_181] : memref<232x16xf32, #tpu.memory_space<vmem>>, vector<200x16xf32>
    %c4_182 = arith.constant 4 : index
    %c0_183 = arith.constant 0 : index
    %c0_184 = arith.constant 0 : index
    %180 = vector.load %arg10[%c4_182, %c0_183, %c0_184] : memref<9x16x32xf32, #tpu.memory_space<vmem>>, vector<1x16x32xf32>
    %181 = vector.shape_cast %180 : vector<1x16x32xf32> to vector<16x32xf32>
    %cst_185 = arith.constant dense<0.000000e+00> : vector<200x32xf32>
    %182 = tpu.matmul %179, %181, %cst_185 {dimension_numbers = #tpu.dot_dimension_numbers<[1], [0], [0], [1], [0, 0, 1, 1], [], []>} : vector<200x16xf32>, vector<16x32xf32>, vector<200x32xf32> -> vector<200x32xf32>
    %183 = arith.addf %178, %182 : vector<200x32xf32>
    %c17_186 = arith.constant 17 : index
    %c0_187 = arith.constant 0 : index
    %184 = vector.load %arg21[%c17_186, %c0_187] : memref<232x16xf32, #tpu.memory_space<vmem>>, vector<200x16xf32>
    %c5_188 = arith.constant 5 : index
    %c0_189 = arith.constant 0 : index
    %c0_190 = arith.constant 0 : index
    %185 = vector.load %arg10[%c5_188, %c0_189, %c0_190] : memref<9x16x32xf32, #tpu.memory_space<vmem>>, vector<1x16x32xf32>
    %186 = vector.shape_cast %185 : vector<1x16x32xf32> to vector<16x32xf32>
    %cst_191 = arith.constant dense<0.000000e+00> : vector<200x32xf32>
    %187 = tpu.matmul %184, %186, %cst_191 {dimension_numbers = #tpu.dot_dimension_numbers<[1], [0], [0], [1], [0, 0, 1, 1], [], []>} : vector<200x16xf32>, vector<16x32xf32>, vector<200x32xf32> -> vector<200x32xf32>
    %188 = arith.addf %183, %187 : vector<200x32xf32>
    %c25_192 = arith.constant 25 : index
    %c0_193 = arith.constant 0 : index
    %189 = vector.load %arg21[%c25_192, %c0_193] : memref<232x16xf32, #tpu.memory_space<vmem>>, vector<200x16xf32>
    %c6_194 = arith.constant 6 : index
    %c0_195 = arith.constant 0 : index
    %c0_196 = arith.constant 0 : index
    %190 = vector.load %arg10[%c6_194, %c0_195, %c0_196] : memref<9x16x32xf32, #tpu.memory_space<vmem>>, vector<1x16x32xf32>
    %191 = vector.shape_cast %190 : vector<1x16x32xf32> to vector<16x32xf32>
    %cst_197 = arith.constant dense<0.000000e+00> : vector<200x32xf32>
    %192 = tpu.matmul %189, %191, %cst_197 {dimension_numbers = #tpu.dot_dimension_numbers<[1], [0], [0], [1], [0, 0, 1, 1], [], []>} : vector<200x16xf32>, vector<16x32xf32>, vector<200x32xf32> -> vector<200x32xf32>
    %193 = arith.addf %188, %192 : vector<200x32xf32>
    %c26_198 = arith.constant 26 : index
    %c0_199 = arith.constant 0 : index
    %194 = vector.load %arg21[%c26_198, %c0_199] : memref<232x16xf32, #tpu.memory_space<vmem>>, vector<200x16xf32>
    %c7_200 = arith.constant 7 : index
    %c0_201 = arith.constant 0 : index
    %c0_202 = arith.constant 0 : index
    %195 = vector.load %arg10[%c7_200, %c0_201, %c0_202] : memref<9x16x32xf32, #tpu.memory_space<vmem>>, vector<1x16x32xf32>
    %196 = vector.shape_cast %195 : vector<1x16x32xf32> to vector<16x32xf32>
    %cst_203 = arith.constant dense<0.000000e+00> : vector<200x32xf32>
    %197 = tpu.matmul %194, %196, %cst_203 {dimension_numbers = #tpu.dot_dimension_numbers<[1], [0], [0], [1], [0, 0, 1, 1], [], []>} : vector<200x16xf32>, vector<16x32xf32>, vector<200x32xf32> -> vector<200x32xf32>
    %198 = arith.addf %193, %197 : vector<200x32xf32>
    %c27_204 = arith.constant 27 : index
    %c0_205 = arith.constant 0 : index
    %199 = vector.load %arg21[%c27_204, %c0_205] : memref<232x16xf32, #tpu.memory_space<vmem>>, vector<200x16xf32>
    %c8_206 = arith.constant 8 : index
    %c0_207 = arith.constant 0 : index
    %c0_208 = arith.constant 0 : index
    %200 = vector.load %arg10[%c8_206, %c0_207, %c0_208] : memref<9x16x32xf32, #tpu.memory_space<vmem>>, vector<1x16x32xf32>
    %201 = vector.shape_cast %200 : vector<1x16x32xf32> to vector<16x32xf32>
    %cst_209 = arith.constant dense<0.000000e+00> : vector<200x32xf32>
    %202 = tpu.matmul %199, %201, %cst_209 {dimension_numbers = #tpu.dot_dimension_numbers<[1], [0], [0], [1], [0, 0, 1, 1], [], []>} : vector<200x16xf32>, vector<16x32xf32>, vector<200x32xf32> -> vector<200x32xf32>
    %203 = arith.addf %198, %202 : vector<200x32xf32>
    %c0_210 = arith.constant 0 : index
    %c0_211 = arith.constant 0 : index
    %204 = vector.load %arg12[%c0_210, %c0_211] : memref<72x200xf32, #tpu.memory_space<vmem>>, vector<72x200xf32>
    %cst_212 = arith.constant dense<0.000000e+00> : vector<72x32xf32>
    %205 = tpu.matmul %204, %203, %cst_212 {dimension_numbers = #tpu.dot_dimension_numbers<[1], [0], [0], [1], [0, 0, 1, 1], [], []>} : vector<72x200xf32>, vector<200x32xf32>, vector<72x32xf32> -> vector<72x32xf32>
    %c0_213 = arith.constant 0 : index
    %c0_214 = arith.constant 0 : index
    %206 = vector.load %arg11[%c0_213, %c0_214] : memref<1x32xf32, #tpu.memory_space<vmem>>, vector<1x32xf32>
    %207 = vector.broadcast %206 : vector<1x32xf32> to vector<72x32xf32>
    %208 = arith.addf %205, %207 : vector<72x32xf32>
    %cst_215 = arith.constant 0.000000e+00 : f32
    %209 = vector.broadcast %cst_215 : f32 to vector<72x32xf32>
    %210 = arith.maximumf %208, %209 : vector<72x32xf32>
    %c0_216 = arith.constant 0 : index
    %c0_217 = arith.constant 0 : index
    %211 = vector.load %arg13[%c0_216, %c0_217] : memref<72x1xf32, #tpu.memory_space<vmem>>, vector<72x1xf32>
    %cst_218 = arith.constant 5.000000e-01 : f32
    %212 = vector.broadcast %cst_218 : f32 to vector<72x1xf32>
    %213 = arith.cmpf ogt, %211, %212 : vector<72x1xf32>
    %cst_219 = arith.constant 0.000000e+00 : f32
    %214 = vector.shape_cast %213 : vector<72x1xi1> to vector<72x1xi1>
    %215 = vector.broadcast %214 : vector<72x1xi1> to vector<72x32xi1>
    %216 = vector.broadcast %cst_219 : f32 to vector<72x32xf32>
    %217 = arith.select %215, %210, %216 : vector<72x32xi1>, vector<72x32xf32>
    %c8_220 = arith.constant 8 : index
    %c0_221 = arith.constant 0 : index
    %218 = vector.load %arg23[%c8_220, %c0_221] : memref<88x32xf32, #tpu.memory_space<vmem>>, vector<72x32xf32>
    tpu.vector_store %arg23[%c8_220, %c0_221], %217 {strides = array<i32>} : memref<88x32xf32, #tpu.memory_space<vmem>>, vector<72x32xf32>,
    %c16_222 = arith.constant 16 : index
    %c0_223 = arith.constant 0 : index
    %219 = vector.load %arg21[%c16_222, %c0_223] : memref<232x16xf32, #tpu.memory_space<vmem>>, vector<200x16xf32>
    %c0_224 = arith.constant 0 : index
    %c0_225 = arith.constant 0 : index
    %220 = vector.load %arg16[%c0_224, %c0_225] : memref<16x32xf32, #tpu.memory_space<vmem>>, vector<16x32xf32>
    %cst_226 = arith.constant dense<0.000000e+00> : vector<200x32xf32>
    %221 = tpu.matmul %219, %220, %cst_226 {dimension_numbers = #tpu.dot_dimension_numbers<[1], [0], [0], [1], [0, 0, 1, 1], [], []>} : vector<200x16xf32>, vector<16x32xf32>, vector<200x32xf32> -> vector<200x32xf32>
    %c0_227 = arith.constant 0 : index
    %c0_228 = arith.constant 0 : index
    %222 = vector.load %arg12[%c0_227, %c0_228] : memref<72x200xf32, #tpu.memory_space<vmem>>, vector<72x200xf32>
    %cst_229 = arith.constant dense<0.000000e+00> : vector<72x32xf32>
    %223 = tpu.matmul %222, %221, %cst_229 {dimension_numbers = #tpu.dot_dimension_numbers<[1], [0], [0], [1], [0, 0, 1, 1], [], []>} : vector<72x200xf32>, vector<200x32xf32>, vector<72x32xf32> -> vector<72x32xf32>
    %c0_230 = arith.constant 0 : index
    %c0_231 = arith.constant 0 : index
    %224 = vector.load %arg17[%c0_230, %c0_231] : memref<1x32xf32, #tpu.memory_space<vmem>>, vector<1x32xf32>
    %225 = vector.broadcast %224 : vector<1x32xf32> to vector<72x32xf32>
    %226 = arith.addf %223, %225 : vector<72x32xf32>
    %c1_232 = arith.constant 1 : index
    %c0_233 = arith.constant 0 : index
    %227 = vector.load %arg23[%c1_232, %c0_233] : memref<88x32xf32, #tpu.memory_space<vmem>>, vector<72x32xf32>
    %c0_234 = arith.constant 0 : index
    %c0_235 = arith.constant 0 : index
    %c0_236 = arith.constant 0 : index
    %228 = vector.load %arg14[%c0_234, %c0_235, %c0_236] : memref<9x32x32xf32, #tpu.memory_space<vmem>>, vector<1x32x32xf32>
    %229 = vector.shape_cast %228 : vector<1x32x32xf32> to vector<32x32xf32>
    %cst_237 = arith.constant dense<0.000000e+00> : vector<72x32xf32>
    %230 = tpu.matmul %227, %229, %cst_237 {dimension_numbers = #tpu.dot_dimension_numbers<[1], [0], [0], [1], [0, 0, 1, 1], [], []>} : vector<72x32xf32>, vector<32x32xf32>, vector<72x32xf32> -> vector<72x32xf32>
    %c2_238 = arith.constant 2 : index
    %c0_239 = arith.constant 0 : index
    %231 = vector.load %arg23[%c2_238, %c0_239] : memref<88x32xf32, #tpu.memory_space<vmem>>, vector<72x32xf32>
    %c1_240 = arith.constant 1 : index
    %c0_241 = arith.constant 0 : index
    %c0_242 = arith.constant 0 : index
    %232 = vector.load %arg14[%c1_240, %c0_241, %c0_242] : memref<9x32x32xf32, #tpu.memory_space<vmem>>, vector<1x32x32xf32>
    %233 = vector.shape_cast %232 : vector<1x32x32xf32> to vector<32x32xf32>
    %cst_243 = arith.constant dense<0.000000e+00> : vector<72x32xf32>
    %234 = tpu.matmul %231, %233, %cst_243 {dimension_numbers = #tpu.dot_dimension_numbers<[1], [0], [0], [1], [0, 0, 1, 1], [], []>} : vector<72x32xf32>, vector<32x32xf32>, vector<72x32xf32> -> vector<72x32xf32>
    %235 = arith.addf %230, %234 : vector<72x32xf32>
    %c3_244 = arith.constant 3 : index
    %c0_245 = arith.constant 0 : index
    %236 = vector.load %arg23[%c3_244, %c0_245] : memref<88x32xf32, #tpu.memory_space<vmem>>, vector<72x32xf32>
    %c2_246 = arith.constant 2 : index
    %c0_247 = arith.constant 0 : index
    %c0_248 = arith.constant 0 : index
    %237 = vector.load %arg14[%c2_246, %c0_247, %c0_248] : memref<9x32x32xf32, #tpu.memory_space<vmem>>, vector<1x32x32xf32>
    %238 = vector.shape_cast %237 : vector<1x32x32xf32> to vector<32x32xf32>
    %cst_249 = arith.constant dense<0.000000e+00> : vector<72x32xf32>
    %239 = tpu.matmul %236, %238, %cst_249 {dimension_numbers = #tpu.dot_dimension_numbers<[1], [0], [0], [1], [0, 0, 1, 1], [], []>} : vector<72x32xf32>, vector<32x32xf32>, vector<72x32xf32> -> vector<72x32xf32>
    %240 = arith.addf %235, %239 : vector<72x32xf32>
    %c7_250 = arith.constant 7 : index
    %c0_251 = arith.constant 0 : index
    %241 = vector.load %arg23[%c7_250, %c0_251] : memref<88x32xf32, #tpu.memory_space<vmem>>, vector<72x32xf32>
    %c3_252 = arith.constant 3 : index
    %c0_253 = arith.constant 0 : index
    %c0_254 = arith.constant 0 : index
    %242 = vector.load %arg14[%c3_252, %c0_253, %c0_254] : memref<9x32x32xf32, #tpu.memory_space<vmem>>, vector<1x32x32xf32>
    %243 = vector.shape_cast %242 : vector<1x32x32xf32> to vector<32x32xf32>
    %cst_255 = arith.constant dense<0.000000e+00> : vector<72x32xf32>
    %244 = tpu.matmul %241, %243, %cst_255 {dimension_numbers = #tpu.dot_dimension_numbers<[1], [0], [0], [1], [0, 0, 1, 1], [], []>} : vector<72x32xf32>, vector<32x32xf32>, vector<72x32xf32> -> vector<72x32xf32>
    %245 = arith.addf %240, %244 : vector<72x32xf32>
    %c8_256 = arith.constant 8 : index
    %c0_257 = arith.constant 0 : index
    %246 = vector.load %arg23[%c8_256, %c0_257] : memref<88x32xf32, #tpu.memory_space<vmem>>, vector<72x32xf32>
    %c4_258 = arith.constant 4 : index
    %c0_259 = arith.constant 0 : index
    %c0_260 = arith.constant 0 : index
    %247 = vector.load %arg14[%c4_258, %c0_259, %c0_260] : memref<9x32x32xf32, #tpu.memory_space<vmem>>, vector<1x32x32xf32>
    %248 = vector.shape_cast %247 : vector<1x32x32xf32> to vector<32x32xf32>
    %cst_261 = arith.constant dense<0.000000e+00> : vector<72x32xf32>
    %249 = tpu.matmul %246, %248, %cst_261 {dimension_numbers = #tpu.dot_dimension_numbers<[1], [0], [0], [1], [0, 0, 1, 1], [], []>} : vector<72x32xf32>, vector<32x32xf32>, vector<72x32xf32> -> vector<72x32xf32>
    %250 = arith.addf %245, %249 : vector<72x32xf32>
    %c9 = arith.constant 9 : index
    %c0_262 = arith.constant 0 : index
    %251 = vector.load %arg23[%c9, %c0_262] : memref<88x32xf32, #tpu.memory_space<vmem>>, vector<72x32xf32>
    %c5_263 = arith.constant 5 : index
    %c0_264 = arith.constant 0 : index
    %c0_265 = arith.constant 0 : index
    %252 = vector.load %arg14[%c5_263, %c0_264, %c0_265] : memref<9x32x32xf32, #tpu.memory_space<vmem>>, vector<1x32x32xf32>
    %253 = vector.shape_cast %252 : vector<1x32x32xf32> to vector<32x32xf32>
    %cst_266 = arith.constant dense<0.000000e+00> : vector<72x32xf32>
    %254 = tpu.matmul %251, %253, %cst_266 {dimension_numbers = #tpu.dot_dimension_numbers<[1], [0], [0], [1], [0, 0, 1, 1], [], []>} : vector<72x32xf32>, vector<32x32xf32>, vector<72x32xf32> -> vector<72x32xf32>
    %255 = arith.addf %250, %254 : vector<72x32xf32>
    %c13 = arith.constant 13 : index
    %c0_267 = arith.constant 0 : index
    %256 = vector.load %arg23[%c13, %c0_267] : memref<88x32xf32, #tpu.memory_space<vmem>>, vector<72x32xf32>
    %c6_268 = arith.constant 6 : index
    %c0_269 = arith.constant 0 : index
    %c0_270 = arith.constant 0 : index
    %257 = vector.load %arg14[%c6_268, %c0_269, %c0_270] : memref<9x32x32xf32, #tpu.memory_space<vmem>>, vector<1x32x32xf32>
    %258 = vector.shape_cast %257 : vector<1x32x32xf32> to vector<32x32xf32>
    %cst_271 = arith.constant dense<0.000000e+00> : vector<72x32xf32>
    %259 = tpu.matmul %256, %258, %cst_271 {dimension_numbers = #tpu.dot_dimension_numbers<[1], [0], [0], [1], [0, 0, 1, 1], [], []>} : vector<72x32xf32>, vector<32x32xf32>, vector<72x32xf32> -> vector<72x32xf32>
    %260 = arith.addf %255, %259 : vector<72x32xf32>
    %c14 = arith.constant 14 : index
    %c0_272 = arith.constant 0 : index
    %261 = vector.load %arg23[%c14, %c0_272] : memref<88x32xf32, #tpu.memory_space<vmem>>, vector<72x32xf32>
    %c7_273 = arith.constant 7 : index
    %c0_274 = arith.constant 0 : index
    %c0_275 = arith.constant 0 : index
    %262 = vector.load %arg14[%c7_273, %c0_274, %c0_275] : memref<9x32x32xf32, #tpu.memory_space<vmem>>, vector<1x32x32xf32>
    %263 = vector.shape_cast %262 : vector<1x32x32xf32> to vector<32x32xf32>
    %cst_276 = arith.constant dense<0.000000e+00> : vector<72x32xf32>
    %264 = tpu.matmul %261, %263, %cst_276 {dimension_numbers = #tpu.dot_dimension_numbers<[1], [0], [0], [1], [0, 0, 1, 1], [], []>} : vector<72x32xf32>, vector<32x32xf32>, vector<72x32xf32> -> vector<72x32xf32>
    %265 = arith.addf %260, %264 : vector<72x32xf32>
    %c15_277 = arith.constant 15 : index
    %c0_278 = arith.constant 0 : index
    %266 = vector.load %arg23[%c15_277, %c0_278] : memref<88x32xf32, #tpu.memory_space<vmem>>, vector<72x32xf32>
    %c8_279 = arith.constant 8 : index
    %c0_280 = arith.constant 0 : index
    %c0_281 = arith.constant 0 : index
    %267 = vector.load %arg14[%c8_279, %c0_280, %c0_281] : memref<9x32x32xf32, #tpu.memory_space<vmem>>, vector<1x32x32xf32>
    %268 = vector.shape_cast %267 : vector<1x32x32xf32> to vector<32x32xf32>
    %cst_282 = arith.constant dense<0.000000e+00> : vector<72x32xf32>
    %269 = tpu.matmul %266, %268, %cst_282 {dimension_numbers = #tpu.dot_dimension_numbers<[1], [0], [0], [1], [0, 0, 1, 1], [], []>} : vector<72x32xf32>, vector<32x32xf32>, vector<72x32xf32> -> vector<72x32xf32>
    %270 = arith.addf %265, %269 : vector<72x32xf32>
    %c0_283 = arith.constant 0 : index
    %c0_284 = arith.constant 0 : index
    %271 = vector.load %arg15[%c0_283, %c0_284] : memref<1x32xf32, #tpu.memory_space<vmem>>, vector<1x32xf32>
    %272 = vector.broadcast %271 : vector<1x32xf32> to vector<72x32xf32>
    %273 = arith.addf %270, %272 : vector<72x32xf32>
    %274 = arith.addf %273, %226 : vector<72x32xf32>
    %cst_285 = arith.constant 0.000000e+00 : f32
    %275 = vector.broadcast %cst_285 : f32 to vector<72x32xf32>
    %276 = arith.maximumf %274, %275 : vector<72x32xf32>
    %c0_286 = arith.constant 0 : index
    %c0_287 = arith.constant 0 : index
    %277 = vector.load %arg18[%c0_286, %c0_287] : memref<2x72xf32, #tpu.memory_space<vmem>>, vector<2x72xf32>
    %cst_288 = arith.constant dense<0.000000e+00> : vector<2x32xf32>
    %278 = tpu.matmul %277, %276, %cst_288 {dimension_numbers = #tpu.dot_dimension_numbers<[1], [0], [0], [1], [0, 0, 1, 1], [], []>} : vector<2x72xf32>, vector<72x32xf32>, vector<2x32xf32> -> vector<2x32xf32>
    %c0_289 = arith.constant 0 : index
    %c0_290 = arith.constant 0 : index
    %279 = vector.load %arg19[%c0_289, %c0_290] : memref<2x32xf32, #tpu.memory_space<vmem>>, vector<2x32xf32>
    tpu.vector_store %arg19[%c0_289, %c0_290], %278 {strides = array<i32>} : memref<2x32xf32, #tpu.memory_space<vmem>>, vector<2x32xf32>,
    return
  }
}

</mosaic_0001>

<llo_original>
// kernel: resnet_fe_forward.1
$region0: #{resnet_fe_forward.1}
  #allocation0 [shape = 'u32[]', space=smem, size = 0x4, offset = 0x4, fixed_abs, tag = 'smem constant byte address 0x4 - core index']
  #allocation1 [shape = 'u32[72,128]{1,0:T(1,128)}', space=vmem, size = 0x9000, scoped, tag = 'internal scratch']
  #allocation2 [shape = 'f32[696,16]{1,0:T(8,128)}', space=vmem, size = 0x57000, scoped, tag = 'scratch operand']
  #allocation3 [shape = 'f32[232,16]{1,0:T(8,128)}', space=vmem, size = 0x1d000, scoped, tag = 'scratch operand']
  #allocation4 [shape = 'f32[232,16]{1,0:T(8,128)}', space=vmem, size = 0x1d000, scoped, tag = 'scratch operand']
  #allocation5 [shape = 'f32[88,32]{1,0:T(8,128)}', space=vmem, size = 0xb000, scoped, tag = 'scratch operand']
  %s0 = inlined_call_operand.vmem [shape: f32[648,147], index: 0, kind: input, shape index: {}]
  %s1 = inlined_call_operand.vmem [shape: f32[147,16], index: 1, kind: input, shape index: {}]
  %s2 = inlined_call_operand.vmem [shape: f32[1,16], index: 2, kind: input, shape index: {}]
  %s3 = inlined_call_operand.vmem [shape: f32[648,1], index: 3, kind: input, shape index: {}]
  %s4 = inlined_call_operand.vmem [shape: f32[200,648], index: 4, kind: input, shape index: {}]
  %s5 = inlined_call_operand.vmem [shape: f32[9,16,16], index: 5, kind: input, shape index: {}]
  %s6 = inlined_call_operand.vmem [shape: f32[1,16], index: 6, kind: input, shape index: {}]
  %s7 = inlined_call_operand.vmem [shape: f32[9,16,16], index: 7, kind: input, shape index: {}]
  %s8 = inlined_call_operand.vmem [shape: f32[1,16], index: 8, kind: input, shape index: {}]
  %s9 = inlined_call_operand.vmem [shape: f32[200,1], index: 9, kind: input, shape index: {}]
  %s10 = inlined_call_operand.vmem [shape: f32[9,16,32], index: 10, kind: input, shape index: {}]
  %s11 = inlined_call_operand.vmem [shape: f32[1,32], index: 11, kind: input, shape index: {}]
  %s12 = inlined_call_operand.vmem [shape: f32[72,200], index: 12, kind: input, shape index: {}]
  %s13 = inlined_call_operand.vmem [shape: f32[72,1], index: 13, kind: input, shape index: {}]
  %s14 = inlined_call_operand.vmem [shape: f32[9,32,32], index: 14, kind: input, shape index: {}]
  %s15 = inlined_call_operand.vmem [shape: f32[1,32], index: 15, kind: input, shape index: {}]
  %s16 = inlined_call_operand.vmem [shape: f32[16,32], index: 16, kind: input, shape index: {}]
  %s17 = inlined_call_operand.vmem [shape: f32[1,32], index: 17, kind: input, shape index: {}]
  %s18 = inlined_call_operand.vmem [shape: f32[2,72], index: 18, kind: input, shape index: {}]
  %s19 = inlined_call_operand.hbm [shape: f32[2,32], index: 19, kind: output, shape index: {}]
  %s20 = sld [smem:[#allocation0]]
  $region86: #{resnet_fe_forward.1} parent=0
    _
  %s22 = ssub.s32 1, %s20
  %s23 = scalar_select 0, %s22, %s20
  $region1: #{resnet_fe_forward.1} parent=0
    #allocation6 [shape = 'u8[1024]{0}', space=vmem, size = 0x400, scoped, tag = 'output window, operand 0, single buffered']
    #allocation7 [shape = 's32[1]{0}', space=sflag, size = 0x4, scoped, tag = 'scoped memory for resnet_fe_forward.1']
    %24 = vsyncpa [#allocation7], 0
    // Predicated region
    $region2: #{resnet_fe_forward.1} parent=1 // pred_check
      _
    $region3: #{resnet_fe_forward.1} parent=1 // pred_check_branch
      %26 = sbr.rel (0) target = $region5
    $region4: #{resnet_fe_forward.1} parent=1 // pred_region
      _
    $region5: #{resnet_fe_forward.1} parent=1 // pred_fallthru
      _
    // Predicated region
    $region6: #{resnet_fe_forward.1} parent=1 // pred_check
      _
    $region7: #{resnet_fe_forward.1} parent=1 // pred_check_branch
      %28 = sbr.rel (0) target = $region9
    $region8: #{resnet_fe_forward.1} parent=1 // pred_region
      _
    $region9: #{resnet_fe_forward.1} parent=1 // pred_fallthru
      _
    // Predicated region
    $region10: #{resnet_fe_forward.1} parent=1 // pred_check
      _
    $region11: #{resnet_fe_forward.1} parent=1 // pred_check_branch
      %30 = sbr.rel (0) target = $region13
    $region12: #{resnet_fe_forward.1} parent=1 // pred_region
      _
    $region13: #{resnet_fe_forward.1} parent=1 // pred_fallthru
      _
    // Predicated region
    $region14: #{resnet_fe_forward.1} parent=1 // pred_check
      _
    $region15: #{resnet_fe_forward.1} parent=1 // pred_check_branch
      %32 = sbr.rel (0) target = $region17
    $region16: #{resnet_fe_forward.1} parent=1 // pred_region
      _
    $region17: #{resnet_fe_forward.1} parent=1 // pred_fallthru
      _
    // Predicated region
    $region18: #{resnet_fe_forward.1} parent=1 // pred_check
      _
    $region19: #{resnet_fe_forward.1} parent=1 // pred_check_branch
      %34 = sbr.rel (0) target = $region21
    $region20: #{resnet_fe_forward.1} parent=1 // pred_region
      _
    $region21: #{resnet_fe_forward.1} parent=1 // pred_fallthru
      _
    // Predicated region
    $region22: #{resnet_fe_forward.1} parent=1 // pred_check
      _
    $region23: #{resnet_fe_forward.1} parent=1 // pred_check_branch
      %36 = sbr.rel (0) target = $region25
    $region24: #{resnet_fe_forward.1} parent=1 // pred_region
      _
    $region25: #{resnet_fe_forward.1} parent=1 // pred_fallthru
      _
    // Predicated region
    $region26: #{resnet_fe_forward.1} parent=1 // pred_check
      _
    $region27: #{resnet_fe_forward.1} parent=1 // pred_check_branch
      %38 = sbr.rel (0) target = $region29
    $region28: #{resnet_fe_forward.1} parent=1 // pred_region
      _
    $region29: #{resnet_fe_forward.1} parent=1 // pred_fallthru
      _
    // Predicated region
    $region30: #{resnet_fe_forward.1} parent=1 // pred_check
      _
    $region31: #{resnet_fe_forward.1} parent=1 // pred_check_branch
      %40 = sbr.rel (0) target = $region33
    $region32: #{resnet_fe_forward.1} parent=1 // pred_region
      _
    $region33: #{resnet_fe_forward.1} parent=1 // pred_fallthru
      _
    // Predicated region
    $region34: #{resnet_fe_forward.1} parent=1 // pred_check
      _
    $region35: #{resnet_fe_forward.1} parent=1 // pred_check_branch
      %42 = sbr.rel (0) target = $region37
    $region36: #{resnet_fe_forward.1} parent=1 // pred_region
      _
    $region37: #{resnet_fe_forward.1} parent=1 // pred_fallthru
      _
    // Predicated region
    $region38: #{resnet_fe_forward.1} parent=1 // pred_check
      _
    $region39: #{resnet_fe_forward.1} parent=1 // pred_check_branch
      %44 = sbr.rel (0) target = $region41
    $region40: #{resnet_fe_forward.1} parent=1 // pred_region
      _
    $region41: #{resnet_fe_forward.1} parent=1 // pred_fallthru
      _
    // Predicated region
    $region42: #{resnet_fe_forward.1} parent=1 // pred_check
      _
    $region43: #{resnet_fe_forward.1} parent=1 // pred_check_branch
      %46 = sbr.rel (0) target = $region45
    $region44: #{resnet_fe_forward.1} parent=1 // pred_region
      _
    $region45: #{resnet_fe_forward.1} parent=1 // pred_fallthru
      _
    // Predicated region
    $region46: #{resnet_fe_forward.1} parent=1 // pred_check
      _
    $region47: #{resnet_fe_forward.1} parent=1 // pred_check_branch
      %48 = sbr.rel (0) target = $region49
    $region48: #{resnet_fe_forward.1} parent=1 // pred_region
      _
    $region49: #{resnet_fe_forward.1} parent=1 // pred_fallthru
      _
    // Predicated region
    $region50: #{resnet_fe_forward.1} parent=1 // pred_check
      _
    $region51: #{resnet_fe_forward.1} parent=1 // pred_check_branch
      %50 = sbr.rel (0) target = $region53
    $region52: #{resnet_fe_forward.1} parent=1 // pred_region
      _
    $region53: #{resnet_fe_forward.1} parent=1 // pred_fallthru
      _
    // Predicated region
    $region54: #{resnet_fe_forward.1} parent=1 // pred_check
      _
    $region55: #{resnet_fe_forward.1} parent=1 // pred_check_branch
      %52 = sbr.rel (0) target = $region57
    $region56: #{resnet_fe_forward.1} parent=1 // pred_region
      _
    $region57: #{resnet_fe_forward.1} parent=1 // pred_fallthru
      _
    // Predicated region
    $region58: #{resnet_fe_forward.1} parent=1 // pred_check
      _
    $region59: #{resnet_fe_forward.1} parent=1 // pred_check_branch
      %54 = sbr.rel (0) target = $region61
    $region60: #{resnet_fe_forward.1} parent=1 // pred_region
      _
    $region61: #{resnet_fe_forward.1} parent=1 // pred_fallthru
      _
    // Predicated region
    $region62: #{resnet_fe_forward.1} parent=1 // pred_check
      _
    $region63: #{resnet_fe_forward.1} parent=1 // pred_check_branch
      %56 = sbr.rel (0) target = $region65
    $region64: #{resnet_fe_forward.1} parent=1 // pred_region
      _
    $region65: #{resnet_fe_forward.1} parent=1 // pred_fallthru
      _
    // Predicated region
    $region66: #{resnet_fe_forward.1} parent=1 // pred_check
      _
    $region67: #{resnet_fe_forward.1} parent=1 // pred_check_branch
      %58 = sbr.rel (0) target = $region69
    $region68: #{resnet_fe_forward.1} parent=1 // pred_region
      _
    $region69: #{resnet_fe_forward.1} parent=1 // pred_fallthru
      _
    // Predicated region
    $region70: #{resnet_fe_forward.1} parent=1 // pred_check
      _
    $region71: #{resnet_fe_forward.1} parent=1 // pred_check_branch
      %60 = sbr.rel (0) target = $region73
    $region72: #{resnet_fe_forward.1} parent=1 // pred_region
      _
    $region73: #{resnet_fe_forward.1} parent=1 // pred_fallthru
      _
    // Predicated region
    $region74: #{resnet_fe_forward.1} parent=1 // pred_check
      _
    $region75: #{resnet_fe_forward.1} parent=1 // pred_check_branch
      %62 = sbr.rel (0) target = $region77
    $region76: #{resnet_fe_forward.1} parent=1 // pred_region
      _
    $region77: #{resnet_fe_forward.1} parent=1 // pred_fallthru
      _
    %vm63 = vcmask 130048
    %64 = vst.msk [vmem:[#allocation2] sm:$0xff] %vm63, 0.0
    %65 = vst.msk [vmem:[#allocation2 + $0x8] sm:$0xff] %vm63, 0.0
    %66 = vst.msk [vmem:[#allocation2 + $0x10] sm:$0xff] %vm63, 0.0
    %67 = vst.msk [vmem:[#allocation2 + $0x18] sm:$0xff] %vm63, 0.0
    %68 = vst.msk [vmem:[#allocation2 + $0x20] sm:$0xff] %vm63, 0.0
    %69 = vst.msk [vmem:[#allocation2 + $0x28] sm:$0xff] %vm63, 0.0
    %70 = vst.msk [vmem:[#allocation2 + $0x30] sm:$0xff] %vm63, 0.0
    %71 = vst.msk [vmem:[#allocation2 + $0x38] sm:$0xff] %vm63, 0.0
    %72 = vst.msk [vmem:[#allocation2 + $0x40] sm:$0xff] %vm63, 0.0
    %73 = vst.msk [vmem:[#allocation2 + $0x48] sm:$0xff] %vm63, 0.0
    %74 = vst.msk [vmem:[#allocation2 + $0x50] sm:$0xff] %vm63, 0.0
    %75 = vst.msk [vmem:[#allocation2 + $0x58] sm:$0xff] %vm63, 0.0
    %76 = vst.msk [vmem:[#allocation2 + $0x60] sm:$0xff] %vm63, 0.0
    %77 = vst.msk [vmem:[#allocation2 + $0x68] sm:$0xff] %vm63, 0.0
    %78 = vst.msk [vmem:[#allocation2 + $0x70] sm:$0xff] %vm63, 0.0
    %79 = vst.msk [vmem:[#allocation2 + $0x78] sm:$0xff] %vm63, 0.0
    %80 = vst.msk [vmem:[#allocation2 + $0x80] sm:$0xff] %vm63, 0.0
    %81 = vst.msk [vmem:[#allocation2 + $0x88] sm:$0xff] %vm63, 0.0
    %82 = vst.msk [vmem:[#allocation2 + $0x90] sm:$0xff] %vm63, 0.0
    %83 = vst.msk [vmem:[#allocation2 + $0x98] sm:$0xff] %vm63, 0.0
    %84 = vst.msk [vmem:[#allocation2 + $0xa0] sm:$0xff] %vm63, 0.0
    %85 = vst.msk [vmem:[#allocation2 + $0xa8] sm:$0xff] %vm63, 0.0
    %86 = vst.msk [vmem:[#allocation2 + $0xb0] sm:$0xff] %vm63, 0.0
    %87 = vst.msk [vmem:[#allocation2 + $0xb8] sm:$0xff] %vm63, 0.0
    %88 = vst.msk [vmem:[#allocation2 + $0xc0] sm:$0xff] %vm63, 0.0
    %89 = vst.msk [vmem:[#allocation2 + $0xc8] sm:$0xff] %vm63, 0.0
    %90 = vst.msk [vmem:[#allocation2 + $0xd0] sm:$0xff] %vm63, 0.0
    %91 = vst.msk [vmem:[#allocation2 + $0xd8] sm:$0xff] %vm63, 0.0
    %92 = vst.msk [vmem:[#allocation2 + $0xe0] sm:$0xff] %vm63, 0.0
    %93 = vst.msk [vmem:[#allocation2 + $0xe8] sm:$0xff] %vm63, 0.0
    %94 = vst.msk [vmem:[#allocation2 + $0xf0] sm:$0xff] %vm63, 0.0
    %95 = vst.msk [vmem:[#allocation2 + $0xf8] sm:$0xff] %vm63, 0.0
    %96 = vst.msk [vmem:[#allocation2 + $0x100] sm:$0xff] %vm63, 0.0
    %97 = vst.msk [vmem:[#allocation2 + $0x108] sm:$0xff] %vm63, 0.0
    %98 = vst.msk [vmem:[#allocation2 + $0x110] sm:$0xff] %vm63, 0.0
    %99 = vst.msk [vmem:[#allocation2 + $0x118] sm:$0xff] %vm63, 0.0
    %100 = vst.msk [vmem:[#allocation2 + $0x120] sm:$0xff] %vm63, 0.0
    %101 = vst.msk [vmem:[#allocation2 + $0x128] sm:$0xff] %vm63, 0.0
    %102 = vst.msk [vmem:[#allocation2 + $0x130] sm:$0xff] %vm63, 0.0
    %103 = vst.msk [vmem:[#allocation2 + $0x138] sm:$0xff] %vm63, 0.0
    %104 = vst.msk [vmem:[#allocation2 + $0x140] sm:$0xff] %vm63, 0.0
    %105 = vst.msk [vmem:[#allocation2 + $0x148] sm:$0xff] %vm63, 0.0
    %106 = vst.msk [vmem:[#allocation2 + $0x150] sm:$0xff] %vm63, 0.0
    %107 = vst.msk [vmem:[#allocation2 + $0x158] sm:$0xff] %vm63, 0.0
    %108 = vst.msk [vmem:[#allocation2 + $0x160] sm:$0xff] %vm63, 0.0
    %109 = vst.msk [vmem:[#allocation2 + $0x168] sm:$0xff] %vm63, 0.0
    %110 = vst.msk [vmem:[#allocation2 + $0x170] sm:$0xff] %vm63, 0.0
    %111 = vst.msk [vmem:[#allocation2 + $0x178] sm:$0xff] %vm63, 0.0
    %112 = vst.msk [vmem:[#allocation2 + $0x180] sm:$0xff] %vm63, 0.0
    %113 = vst.msk [vmem:[#allocation2 + $0x188] sm:$0xff] %vm63, 0.0
    %114 = vst.msk [vmem:[#allocation2 + $0x190] sm:$0xff] %vm63, 0.0
    %115 = vst.msk [vmem:[#allocation2 + $0x198] sm:$0xff] %vm63, 0.0
    %116 = vst.msk [vmem:[#allocation2 + $0x1a0] sm:$0xff] %vm63, 0.0
    %117 = vst.msk [vmem:[#allocation2 + $0x1a8] sm:$0xff] %vm63, 0.0
    %118 = vst.msk [vmem:[#allocation2 + $0x1b0] sm:$0xff] %vm63, 0.0
    %119 = vst.msk [vmem:[#allocation2 + $0x1b8] sm:$0xff] %vm63, 0.0
    %120 = vst.msk [vmem:[#allocation2 + $0x1c0] sm:$0xff] %vm63, 0.0
    %121 = vst.msk [vmem:[#allocation2 + $0x1c8] sm:$0xff] %vm63, 0.0
    %122 = vst.msk [vmem:[#allocation2 + $0x1d0] sm:$0xff] %vm63, 0.0
    %123 = vst.msk [vmem:[#allocation2 + $0x1d8] sm:$0xff] %vm63, 0.0
    %124 = vst.msk [vmem:[#allocation2 + $0x1e0] sm:$0xff] %vm63, 0.0
    %125 = vst.msk [vmem:[#allocation2 + $0x1e8] sm:$0xff] %vm63, 0.0
    %126 = vst.msk [vmem:[#allocation2 + $0x1f0] sm:$0xff] %vm63, 0.0
    %127 = vst.msk [vmem:[#allocation2 + $0x1f8] sm:$0xff] %vm63, 0.0
    %128 = vst.msk [vmem:[#allocation2 + $0x200] sm:$0xff] %vm63, 0.0
    %129 = vst.msk [vmem:[#allocation2 + $0x208] sm:$0xff] %vm63, 0.0
    %130 = vst.msk [vmem:[#allocation2 + $0x210] sm:$0xff] %vm63, 0.0
    %131 = vst.msk [vmem:[#allocation2 + $0x218] sm:$0xff] %vm63, 0.0
    %132 = vst.msk [vmem:[#allocation2 + $0x220] sm:$0xff] %vm63, 0.0
    %133 = vst.msk [vmem:[#allocation2 + $0x228] sm:$0xff] %vm63, 0.0
    %134 = vst.msk [vmem:[#allocation2 + $0x230] sm:$0xff] %vm63, 0.0
    %135 = vst.msk [vmem:[#allocation2 + $0x238] sm:$0xff] %vm63, 0.0
    %136 = vst.msk [vmem:[#allocation2 + $0x240] sm:$0xff] %vm63, 0.0
    %137 = vst.msk [vmem:[#allocation2 + $0x248] sm:$0xff] %vm63, 0.0
    %138 = vst.msk [vmem:[#allocation2 + $0x250] sm:$0xff] %vm63, 0.0
    %139 = vst.msk [vmem:[#allocation2 + $0x258] sm:$0xff] %vm63, 0.0
    %140 = vst.msk [vmem:[#allocation2 + $0x260] sm:$0xff] %vm63, 0.0
    %141 = vst.msk [vmem:[#allocation2 + $0x268] sm:$0xff] %vm63, 0.0
    %142 = vst.msk [vmem:[#allocation2 + $0x270] sm:$0xff] %vm63, 0.0
    %143 = vst.msk [vmem:[#allocation2 + $0x278] sm:$0xff] %vm63, 0.0
    %144 = vst.msk [vmem:[#allocation2 + $0x280] sm:$0xff] %vm63, 0.0
    %145 = vst.msk [vmem:[#allocation2 + $0x288] sm:$0xff] %vm63, 0.0
    %146 = vst.msk [vmem:[#allocation2 + $0x290] sm:$0xff] %vm63, 0.0
    %147 = vst.msk [vmem:[#allocation2 + $0x298] sm:$0xff] %vm63, 0.0
    %148 = vst.msk [vmem:[#allocation2 + $0x2a0] sm:$0xff] %vm63, 0.0
    %149 = vst.msk [vmem:[#allocation2 + $0x2a8] sm:$0xff] %vm63, 0.0
    %150 = vst.msk [vmem:[#allocation2 + $0x2b0] sm:$0xff] %vm63, 0.0
    %151 = vst.msk [vmem:[#allocation3] sm:$0xff] %vm63, 0.0
    %152 = vst.msk [vmem:[#allocation3 + $0x8] sm:$0xff] %vm63, 0.0
    %153 = vst.msk [vmem:[#allocation3 + $0x10] sm:$0xff] %vm63, 0.0
    %154 = vst.msk [vmem:[#allocation3 + $0x18] sm:$0xff] %vm63, 0.0
    %155 = vst.msk [vmem:[#allocation3 + $0x20] sm:$0xff] %vm63, 0.0
    %156 = vst.msk [vmem:[#allocation3 + $0x28] sm:$0xff] %vm63, 0.0
    %157 = vst.msk [vmem:[#allocation3 + $0x30] sm:$0xff] %vm63, 0.0
    %158 = vst.msk [vmem:[#allocation3 + $0x38] sm:$0xff] %vm63, 0.0
    %159 = vst.msk [vmem:[#allocation3 + $0x40] sm:$0xff] %vm63, 0.0
    %160 = vst.msk [vmem:[#allocation3 + $0x48] sm:$0xff] %vm63, 0.0
    %161 = vst.msk [vmem:[#allocation3 + $0x50] sm:$0xff] %vm63, 0.0
    %162 = vst.msk [vmem:[#allocation3 + $0x58] sm:$0xff] %vm63, 0.0
    %163 = vst.msk [vmem:[#allocation3 + $0x60] sm:$0xff] %vm63, 0.0
    %164 = vst.msk [vmem:[#allocation3 + $0x68] sm:$0xff] %vm63, 0.0
    %165 = vst.msk [vmem:[#allocation3 + $0x70] sm:$0xff] %vm63, 0.0
    %166 = vst.msk [vmem:[#allocation3 + $0x78] sm:$0xff] %vm63, 0.0
    %167 = vst.msk [vmem:[#allocation3 + $0x80] sm:$0xff] %vm63, 0.0
    %168 = vst.msk [vmem:[#allocation3 + $0x88] sm:$0xff] %vm63, 0.0
    %169 = vst.msk [vmem:[#allocation3 + $0x90] sm:$0xff] %vm63, 0.0
    %170 = vst.msk [vmem:[#allocation3 + $0x98] sm:$0xff] %vm63, 0.0
    %171 = vst.msk [vmem:[#allocation3 + $0xa0] sm:$0xff] %vm63, 0.0
    %172 = vst.msk [vmem:[#allocation3 + $0xa8] sm:$0xff] %vm63, 0.0
    %173 = vst.msk [vmem:[#allocation3 + $0xb0] sm:$0xff] %vm63, 0.0
    %174 = vst.msk [vmem:[#allocation3 + $0xb8] sm:$0xff] %vm63, 0.0
    %175 = vst.msk [vmem:[#allocation3 + $0xc0] sm:$0xff] %vm63, 0.0
    %176 = vst.msk [vmem:[#allocation3 + $0xc8] sm:$0xff] %vm63, 0.0
    %177 = vst.msk [vmem:[#allocation3 + $0xd0] sm:$0xff] %vm63, 0.0
    %178 = vst.msk [vmem:[#allocation3 + $0xd8] sm:$0xff] %vm63, 0.0
    %179 = vst.msk [vmem:[#allocation3 + $0xe0] sm:$0xff] %vm63, 0.0
    %180 = vst.msk [vmem:[#allocation4] sm:$0xff] %vm63, 0.0
    %181 = vst.msk [vmem:[#allocation4 + $0x8] sm:$0xff] %vm63, 0.0
    %182 = vst.msk [vmem:[#allocation4 + $0x10] sm:$0xff] %vm63, 0.0
    %183 = vst.msk [vmem:[#allocation4 + $0x18] sm:$0xff] %vm63, 0.0
    %184 = vst.msk [vmem:[#allocation4 + $0x20] sm:$0xff] %vm63, 0.0
    %185 = vst.msk [vmem:[#allocation4 + $0x28] sm:$0xff] %vm63, 0.0
    %186 = vst.msk [vmem:[#allocation4 + $0x30] sm:$0xff] %vm63, 0.0
    %187 = vst.msk [vmem:[#allocation4 + $0x38] sm:$0xff] %vm63, 0.0
    %188 = vst.msk [vmem:[#allocation4 + $0x40] sm:$0xff] %vm63, 0.0
    %189 = vst.msk [vmem:[#allocation4 + $0x48] sm:$0xff] %vm63, 0.0
    %190 = vst.msk [vmem:[#allocation4 + $0x50] sm:$0xff] %vm63, 0.0
    %191 = vst.msk [vmem:[#allocation4 + $0x58] sm:$0xff] %vm63, 0.0
    %192 = vst.msk [vmem:[#allocation4 + $0x60] sm:$0xff] %vm63, 0.0
    %193 = vst.msk [vmem:[#allocation4 + $0x68] sm:$0xff] %vm63, 0.0
    %194 = vst.msk [vmem:[#allocation4 + $0x70] sm:$0xff] %vm63, 0.0
    %195 = vst.msk [vmem:[#allocation4 + $0x78] sm:$0xff] %vm63, 0.0
    %196 = vst.msk [vmem:[#allocation4 + $0x80] sm:$0xff] %vm63, 0.0
    %197 = vst.msk [vmem:[#allocation4 + $0x88] sm:$0xff] %vm63, 0.0
    %198 = vst.msk [vmem:[#allocation4 + $0x90] sm:$0xff] %vm63, 0.0
    %199 = vst.msk [vmem:[#allocation4 + $0x98] sm:$0xff] %vm63, 0.0
    %200 = vst.msk [vmem:[#allocation4 + $0xa0] sm:$0xff] %vm63, 0.0
    %201 = vst.msk [vmem:[#allocation4 + $0xa8] sm:$0xff] %vm63, 0.0
    %202 = vst.msk [vmem:[#allocation4 + $0xb0] sm:$0xff] %vm63, 0.0
    %203 = vst.msk [vmem:[#allocation4 + $0xb8] sm:$0xff] %vm63, 0.0
    %204 = vst.msk [vmem:[#allocation4 + $0xc0] sm:$0xff] %vm63, 0.0
    %205 = vst.msk [vmem:[#allocation4 + $0xc8] sm:$0xff] %vm63, 0.0
    %206 = vst.msk [vmem:[#allocation4 + $0xd0] sm:$0xff] %vm63, 0.0
    %207 = vst.msk [vmem:[#allocation4 + $0xd8] sm:$0xff] %vm63, 0.0
    %208 = vst.msk [vmem:[#allocation4 + $0xe0] sm:$0xff] %vm63, 0.0
    %vm209 = vcmask 261120
    %210 = vst.msk [vmem:[#allocation5] sm:$0xff] %vm209, 0.0
    %211 = vst.msk [vmem:[#allocation5 + $0x8] sm:$0xff] %vm209, 0.0
    %212 = vst.msk [vmem:[#allocation5 + $0x10] sm:$0xff] %vm209, 0.0
    %213 = vst.msk [vmem:[#allocation5 + $0x18] sm:$0xff] %vm209, 0.0
    %214 = vst.msk [vmem:[#allocation5 + $0x20] sm:$0xff] %vm209, 0.0
    %215 = vst.msk [vmem:[#allocation5 + $0x28] sm:$0xff] %vm209, 0.0
    %216 = vst.msk [vmem:[#allocation5 + $0x30] sm:$0xff] %vm209, 0.0
    %217 = vst.msk [vmem:[#allocation5 + $0x38] sm:$0xff] %vm209, 0.0
    %218 = vst.msk [vmem:[#allocation5 + $0x40] sm:$0xff] %vm209, 0.0
    %219 = vst.msk [vmem:[#allocation5 + $0x48] sm:$0xff] %vm209, 0.0
    %220 = vst.msk [vmem:[#allocation5 + $0x50] sm:$0xff] %vm209, 0.0
    %v221 = vld [vmem:[%s0] sm:$0xff]
    %v222 = vld [vmem:[%s0 + $0x8] sm:$0xff]
    %v223 = vld [vmem:[%s0 + $0x10] sm:$0xff]
    %v224 = vld [vmem:[%s0 + $0x18] sm:$0xff]
    %v225 = vld [vmem:[%s0 + $0x20] sm:$0xff]
    %v226 = vld [vmem:[%s0 + $0x28] sm:$0xff]
    %v227 = vld [vmem:[%s0 + $0x30] sm:$0xff]
    %v228 = vld [vmem:[%s0 + $0x38] sm:$0xff]
    %v229 = vld [vmem:[%s0 + $0x40] sm:$0xff]
    %v230 = vld [vmem:[%s0 + $0x48] sm:$0xff]
    %v231 = vld [vmem:[%s0 + $0x50] sm:$0xff]
    %v232 = vld [vmem:[%s0 + $0x58] sm:$0xff]
    %v233 = vld [vmem:[%s0 + $0x60] sm:$0xff]
    %v234 = vld [vmem:[%s0 + $0x68] sm:$0xff]
    %v235 = vld [vmem:[%s0 + $0x70] sm:$0xff]
    %v236 = vld [vmem:[%s0 + $0x78] sm:$0xff]
    %v237 = vld [vmem:[%s0 + $0x80] sm:$0xff]
    %v238 = vld [vmem:[%s0 + $0x88] sm:$0xff]
    %v239 = vld [vmem:[%s0 + $0x90] sm:$0xff]
    %v240 = vld [vmem:[%s0 + $0x98] sm:$0xff]
    %v241 = vld [vmem:[%s0 + $0xa0] sm:$0xff]
    %v242 = vld [vmem:[%s0 + $0xa8] sm:$0xff]
    %v243 = vld [vmem:[%s0 + $0xb0] sm:$0xff]
    %v244 = vld [vmem:[%s0 + $0xb8] sm:$0xff]
    %v245 = vld [vmem:[%s0 + $0xc0] sm:$0xff]
    %v246 = vld [vmem:[%s0 + $0xc8] sm:$0xff]
    %v247 = vld [vmem:[%s0 + $0xd0] sm:$0xff]
    %v248 = vld [vmem:[%s0 + $0xd8] sm:$0xff]
    %v249 = vld [vmem:[%s0 + $0xe0] sm:$0xff]
    %v250 = vld [vmem:[%s0 + $0xe8] sm:$0xff]
    %v251 = vld [vmem:[%s0 + $0xf0] sm:$0xff]
    %v252 = vld [vmem:[%s0 + $0xf8] sm:$0xff]
    %v253 = vld [vmem:[%s0 + $0x100] sm:$0xff]
    %v254 = vld [vmem:[%s0 + $0x108] sm:$0xff]
    %v255 = vld [vmem:[%s0 + $0x110] sm:$0xff]
    %v256 = vld [vmem:[%s0 + $0x118] sm:$0xff]
    %v257 = vld [vmem:[%s0 + $0x120] sm:$0xff]
    %v258 = vld [vmem:[%s0 + $0x128] sm:$0xff]
    %v259 = vld [vmem:[%s0 + $0x130] sm:$0xff]
    %v260 = vld [vmem:[%s0 + $0x138] sm:$0xff]
    %v261 = vld [vmem:[%s0 + $0x140] sm:$0xff]
    %v262 = vld [vmem:[%s0 + $0x148] sm:$0xff]
    %v263 = vld [vmem:[%s0 + $0x150] sm:$0xff]
    %v264 = vld [vmem:[%s0 + $0x158] sm:$0xff]
    %v265 = vld [vmem:[%s0 + $0x160] sm:$0xff]
    %v266 = vld [vmem:[%s0 + $0x168] sm:$0xff]
    %v267 = vld [vmem:[%s0 + $0x170] sm:$0xff]
    %v268 = vld [vmem:[%s0 + $0x178] sm:$0xff]
    %v269 = vld [vmem:[%s0 + $0x180] sm:$0xff]
    %v270 = vld [vmem:[%s0 + $0x188] sm:$0xff]
    %v271 = vld [vmem:[%s0 + $0x190] sm:$0xff]
    %v272 = vld [vmem:[%s0 + $0x198] sm:$0xff]
    %v273 = vld [vmem:[%s0 + $0x1a0] sm:$0xff]
    %v274 = vld [vmem:[%s0 + $0x1a8] sm:$0xff]
    %v275 = vld [vmem:[%s0 + $0x1b0] sm:$0xff]
    %v276 = vld [vmem:[%s0 + $0x1b8] sm:$0xff]
    %v277 = vld [vmem:[%s0 + $0x1c0] sm:$0xff]
    %v278 = vld [vmem:[%s0 + $0x1c8] sm:$0xff]
    %v279 = vld [vmem:[%s0 + $0x1d0] sm:$0xff]
    %v280 = vld [vmem:[%s0 + $0x1d8] sm:$0xff]
    %v281 = vld [vmem:[%s0 + $0x1e0] sm:$0xff]
    %v282 = vld [vmem:[%s0 + $0x1e8] sm:$0xff]
    %v283 = vld [vmem:[%s0 + $0x1f0] sm:$0xff]
    %v284 = vld [vmem:[%s0 + $0x1f8] sm:$0xff]
    %v285 = vld [vmem:[%s0 + $0x200] sm:$0xff]
    %v286 = vld [vmem:[%s0 + $0x208] sm:$0xff]
    %v287 = vld [vmem:[%s0 + $0x210] sm:$0xff]
    %v288 = vld [vmem:[%s0 + $0x218] sm:$0xff]
    %v289 = vld [vmem:[%s0 + $0x220] sm:$0xff]
    %v290 = vld [vmem:[%s0 + $0x228] sm:$0xff]
    %v291 = vld [vmem:[%s0 + $0x230] sm:$0xff]
    %v292 = vld [vmem:[%s0 + $0x238] sm:$0xff]
    %v293 = vld [vmem:[%s0 + $0x240] sm:$0xff]
    %v294 = vld [vmem:[%s0 + $0x248] sm:$0xff]
    %v295 = vld [vmem:[%s0 + $0x250] sm:$0xff]
    %v296 = vld [vmem:[%s0 + $0x258] sm:$0xff]
    %v297 = vld [vmem:[%s0 + $0x260] sm:$0xff]
    %v298 = vld [vmem:[%s0 + $0x268] sm:$0xff]
    %v299 = vld [vmem:[%s0 + $0x270] sm:$0xff]
    %v300 = vld [vmem:[%s0 + $0x278] sm:$0xff]
    %v301 = vld [vmem:[%s0 + $0x280] sm:$0xff]
    %v302 = vld [vmem:[%s0 + $0x288] sm:$0xff]
    %v303 = vld [vmem:[%s0 + $0x290] sm:$0xff]
    %v304 = vld [vmem:[%s0 + $0x298] sm:$0xff]
    %v305 = vld [vmem:[%s0 + $0x2a0] sm:$0xff]
    %v306 = vld [vmem:[%s0 + $0x2a8] sm:$0xff]
    %v307 = vld [vmem:[%s0 + $0x2b0] sm:$0xff]
    %v308 = vld [vmem:[%s0 + $0x2b8] sm:$0xff]
    %v309 = vld [vmem:[%s0 + $0x2c0] sm:$0xff]
    %v310 = vld [vmem:[%s0 + $0x2c8] sm:$0xff]
    %v311 = vld [vmem:[%s0 + $0x2d0] sm:$0xff]
    %v312 = vld [vmem:[%s0 + $0x2d8] sm:$0xff]
    %v313 = vld [vmem:[%s0 + $0x2e0] sm:$0xff]
    %v314 = vld [vmem:[%s0 + $0x2e8] sm:$0xff]
    %v315 = vld [vmem:[%s0 + $0x2f0] sm:$0xff]
    %v316 = vld [vmem:[%s0 + $0x2f8] sm:$0xff]
    %v317 = vld [vmem:[%s0 + $0x300] sm:$0xff]
    %v318 = vld [vmem:[%s0 + $0x308] sm:$0xff]
    %v319 = vld [vmem:[%s0 + $0x310] sm:$0xff]
    %v320 = vld [vmem:[%s0 + $0x318] sm:$0xff]
    %v321 = vld [vmem:[%s0 + $0x320] sm:$0xff]
    %v322 = vld [vmem:[%s0 + $0x328] sm:$0xff]
    %v323 = vld [vmem:[%s0 + $0x330] sm:$0xff]
    %v324 = vld [vmem:[%s0 + $0x338] sm:$0xff]
    %v325 = vld [vmem:[%s0 + $0x340] sm:$0xff]
    %v326 = vld [vmem:[%s0 + $0x348] sm:$0xff]
    %v327 = vld [vmem:[%s0 + $0x350] sm:$0xff]
    %v328 = vld [vmem:[%s0 + $0x358] sm:$0xff]
    %v329 = vld [vmem:[%s0 + $0x360] sm:$0xff]
    %v330 = vld [vmem:[%s0 + $0x368] sm:$0xff]
    %v331 = vld [vmem:[%s0 + $0x370] sm:$0xff]
    %v332 = vld [vmem:[%s0 + $0x378] sm:$0xff]
    %v333 = vld [vmem:[%s0 + $0x380] sm:$0xff]
    %v334 = vld [vmem:[%s0 + $0x388] sm:$0xff]
    %v335 = vld [vmem:[%s0 + $0x390] sm:$0xff]
    %v336 = vld [vmem:[%s0 + $0x398] sm:$0xff]
    %v337 = vld [vmem:[%s0 + $0x3a0] sm:$0xff]
    %v338 = vld [vmem:[%s0 + $0x3a8] sm:$0xff]
    %v339 = vld [vmem:[%s0 + $0x3b0] sm:$0xff]
    %v340 = vld [vmem:[%s0 + $0x3b8] sm:$0xff]
    %v341 = vld [vmem:[%s0 + $0x3c0] sm:$0xff]
    %v342 = vld [vmem:[%s0 + $0x3c8] sm:$0xff]
    %v343 = vld [vmem:[%s0 + $0x3d0] sm:$0xff]
    %v344 = vld [vmem:[%s0 + $0x3d8] sm:$0xff]
    %v345 = vld [vmem:[%s0 + $0x3e0] sm:$0xff]
    %v346 = vld [vmem:[%s0 + $0x3e8] sm:$0xff]
    %v347 = vld [vmem:[%s0 + $0x3f0] sm:$0xff]
    %v348 = vld [vmem:[%s0 + $0x3f8] sm:$0xff]
    %v349 = vld [vmem:[%s0 + $0x400] sm:$0xff]
    %v350 = vld [vmem:[%s0 + $0x408] sm:$0xff]
    %v351 = vld [vmem:[%s0 + $0x410] sm:$0xff]
    %v352 = vld [vmem:[%s0 + $0x418] sm:$0xff]
    %v353 = vld [vmem:[%s0 + $0x420] sm:$0xff]
    %v354 = vld [vmem:[%s0 + $0x428] sm:$0xff]
    %v355 = vld [vmem:[%s0 + $0x430] sm:$0xff]
    %v356 = vld [vmem:[%s0 + $0x438] sm:$0xff]
    %v357 = vld [vmem:[%s0 + $0x440] sm:$0xff]
    %v358 = vld [vmem:[%s0 + $0x448] sm:$0xff]
    %v359 = vld [vmem:[%s0 + $0x450] sm:$0xff]
    %v360 = vld [vmem:[%s0 + $0x458] sm:$0xff]
    %v361 = vld [vmem:[%s0 + $0x460] sm:$0xff]
    %v362 = vld [vmem:[%s0 + $0x468] sm:$0xff]
    %v363 = vld [vmem:[%s0 + $0x470] sm:$0xff]
    %v364 = vld [vmem:[%s0 + $0x478] sm:$0xff]
    %v365 = vld [vmem:[%s0 + $0x480] sm:$0xff]
    %v366 = vld [vmem:[%s0 + $0x488] sm:$0xff]
    %v367 = vld [vmem:[%s0 + $0x490] sm:$0xff]
    %v368 = vld [vmem:[%s0 + $0x498] sm:$0xff]
    %v369 = vld [vmem:[%s0 + $0x4a0] sm:$0xff]
    %v370 = vld [vmem:[%s0 + $0x4a8] sm:$0xff]
    %v371 = vld [vmem:[%s0 + $0x4b0] sm:$0xff]
    %v372 = vld [vmem:[%s0 + $0x4b8] sm:$0xff]
    %v373 = vld [vmem:[%s0 + $0x4c0] sm:$0xff]
    %v374 = vld [vmem:[%s0 + $0x4c8] sm:$0xff]
    %v375 = vld [vmem:[%s0 + $0x4d0] sm:$0xff]
    %v376 = vld [vmem:[%s0 + $0x4d8] sm:$0xff]
    %v377 = vld [vmem:[%s0 + $0x4e0] sm:$0xff]
    %v378 = vld [vmem:[%s0 + $0x4e8] sm:$0xff]
    %v379 = vld [vmem:[%s0 + $0x4f0] sm:$0xff]
    %v380 = vld [vmem:[%s0 + $0x4f8] sm:$0xff]
    %v381 = vld [vmem:[%s0 + $0x500] sm:$0xff]
    %v382 = vld [vmem:[%s0 + $0x508] sm:$0xff]
    %v383 = vld [vmem:[%s1] sm:$0xff]
    %v384 = vld [vmem:[%s1 + $0x8] sm:$0xff]
    %v385 = vld [vmem:[%s1 + $0x10] sm:$0xff]
    %v386 = vld [vmem:[%s1 + $0x18] sm:$0xff]
    %v387 = vld [vmem:[%s1 + $0x20] sm:$0xff]
    %v388 = vld [vmem:[%s1 + $0x28] sm:$0xff]
    %v389 = vld [vmem:[%s1 + $0x30] sm:$0xff]
    %v390 = vld [vmem:[%s1 + $0x38] sm:$0xff]
    %v391 = vld [vmem:[%s1 + $0x40] sm:$0xff]
    %v392 = vld [vmem:[%s1 + $0x48] sm:$0xff]
    %v393 = vld [vmem:[%s1 + $0x50] sm:$0xff]
    %v394 = vld [vmem:[%s1 + $0x58] sm:$0xff]
    %v395 = vld [vmem:[%s1 + $0x60] sm:$0xff]
    %v396 = vld [vmem:[%s1 + $0x68] sm:$0xff]
    %v397 = vld [vmem:[%s1 + $0x70] sm:$0xff]
    %v398 = vld [vmem:[%s1 + $0x78] sm:$0xff]
    %v399 = vld [vmem:[%s1 + $0x80] sm:$0xff]
    %v400 = vld [vmem:[%s1 + $0x88] sm:$0xff]
    %v401 = vld [vmem:[%s1 + $0x90] sm:$0x7]
    %v402 = vld [vmem:[%s2] sm:$0x1]
    %v404 = vperm.slane %v402, 0
    %vm406 = vcmask 154624
    %v408 = vsel %vm406, %v222, 0
    %v411 = vsel %vm406, %v224, 0
    %v414 = vsel %vm406, %v226, 0
    %v417 = vsel %vm406, %v228, 0
    %v420 = vsel %vm406, %v230, 0
    %v423 = vsel %vm406, %v232, 0
    %v426 = vsel %vm406, %v234, 0
    %v429 = vsel %vm406, %v236, 0
    %v432 = vsel %vm406, %v238, 0
    %v435 = vsel %vm406, %v240, 0
    %v438 = vsel %vm406, %v242, 0
    %v441 = vsel %vm406, %v244, 0
    %v444 = vsel %vm406, %v246, 0
    %v447 = vsel %vm406, %v248, 0
    %v450 = vsel %vm406, %v250, 0
    %v453 = vsel %vm406, %v252, 0
    %v456 = vsel %vm406, %v254, 0
    %v459 = vsel %vm406, %v256, 0
    %v462 = vsel %vm406, %v258, 0
    %v465 = vsel %vm406, %v260, 0
    %v468 = vsel %vm406, %v262, 0
    %v471 = vsel %vm406, %v264, 0
    %v474 = vsel %vm406, %v266, 0
    %v477 = vsel %vm406, %v268, 0
    %v480 = vsel %vm406, %v270, 0
    %v483 = vsel %vm406, %v272, 0
    %v486 = vsel %vm406, %v274, 0
    %v489 = vsel %vm406, %v276, 0
    %v492 = vsel %vm406, %v278, 0
    %v495 = vsel %vm406, %v280, 0
    %v498 = vsel %vm406, %v282, 0
    %v501 = vsel %vm406, %v284, 0
    %v504 = vsel %vm406, %v286, 0
    %v507 = vsel %vm406, %v288, 0
    %v510 = vsel %vm406, %v290, 0
    %v513 = vsel %vm406, %v292, 0
    %v516 = vsel %vm406, %v294, 0
    %v519 = vsel %vm406, %v296, 0
    %v522 = vsel %vm406, %v298, 0
    %v525 = vsel %vm406, %v300, 0
    %v528 = vsel %vm406, %v302, 0
    %v531 = vsel %vm406, %v304, 0
    %v534 = vsel %vm406, %v306, 0
    %v537 = vsel %vm406, %v308, 0
    %v540 = vsel %vm406, %v310, 0
    %v543 = vsel %vm406, %v312, 0
    %v546 = vsel %vm406, %v314, 0
    %v549 = vsel %vm406, %v316, 0
    %v552 = vsel %vm406, %v318, 0
    %v555 = vsel %vm406, %v320, 0
    %v558 = vsel %vm406, %v322, 0
    %v561 = vsel %vm406, %v324, 0
    %v564 = vsel %vm406, %v326, 0
    %v567 = vsel %vm406, %v328, 0
    %v570 = vsel %vm406, %v330, 0
    %v573 = vsel %vm406, %v332, 0
    %v576 = vsel %vm406, %v334, 0
    %v579 = vsel %vm406, %v336, 0
    %v582 = vsel %vm406, %v338, 0
    %v585 = vsel %vm406, %v340, 0
    %v588 = vsel %vm406, %v342, 0
    %v591 = vsel %vm406, %v344, 0
    %v594 = vsel %vm406, %v346, 0
    %v597 = vsel %vm406, %v348, 0
    %v600 = vsel %vm406, %v350, 0
    %v603 = vsel %vm406, %v352, 0
    %v606 = vsel %vm406, %v354, 0
    %v609 = vsel %vm406, %v356, 0
    %v612 = vsel %vm406, %v358, 0
    %v615 = vsel %vm406, %v360, 0
    %v618 = vsel %vm406, %v362, 0
    %v621 = vsel %vm406, %v364, 0
    %v624 = vsel %vm406, %v366, 0
    %v627 = vsel %vm406, %v368, 0
    %v630 = vsel %vm406, %v370, 0
    %v633 = vsel %vm406, %v372, 0
    %v636 = vsel %vm406, %v374, 0
    %v639 = vsel %vm406, %v376, 0
    %v642 = vsel %vm406, %v378, 0
    %v645 = vsel %vm406, %v380, 0
    %v648 = vsel %vm406, %v382, 0
    %vm650 = vcmask 1042432
    %v652 = vsel %vm650, %v401, 0
    %654 = vmatpush.msra.mxu0 %v398
    %655 = vmatpush.msra.mxu0 %v397
    %656 = vmatpush.msra.mxu0 %v396
    %657 = vmatpush.msra.mxu0 %v395
    %658 = vmatpush.msra.mxu0 %v394
    %659 = vmatpush.msra.mxu0 %v393
    %660 = vmatpush.msra.mxu0 %v392
    %661 = vmatpush.msra.mxu0 %v391
    %662 = vmatpush.msra.mxu0 %v390
    %663 = vmatpush.msra.mxu0 %v389
    %664 = vmatpush.msra.mxu0 %v388
    %665 = vmatpush.msra.mxu0 %v387
    %666 = vmatpush.msra.mxu0 %v386
    %667 = vmatpush.msra.mxu0 %v385
    %668 = vmatpush.msra.mxu0 %v384
    %669 = vmatpush.msra.mxu0 %v383
    %670 = vmatmul.f32.gmra.mxu0 %v221
    %v671 = vpop.f32.mrf.mxu0
    %v672 = vadd.f32 %v404, %v671
    %673 = vmatmul.f32.gmra.mxu0 %v223
    %v674 = vpop.f32.mrf.mxu0
    %v675 = vadd.f32 %v404, %v674
    %676 = vmatmul.f32.gmra.mxu0 %v225
    %v677 = vpop.f32.mrf.mxu0
    %v678 = vadd.f32 %v404, %v677
    %679 = vmatmul.f32.gmra.mxu0 %v227
    %v680 = vpop.f32.mrf.mxu0
    %v681 = vadd.f32 %v404, %v680
    %682 = vmatmul.f32.gmra.mxu0 %v229
    %v683 = vpop.f32.mrf.mxu0
    %v684 = vadd.f32 %v404, %v683
    %685 = vmatmul.f32.gmra.mxu0 %v231
    %v686 = vpop.f32.mrf.mxu0
    %v687 = vadd.f32 %v404, %v686
    %688 = vmatmul.f32.gmra.mxu0 %v233
    %v689 = vpop.f32.mrf.mxu0
    %v690 = vadd.f32 %v404, %v689
    %691 = vmatmul.f32.gmra.mxu0 %v235
    %v692 = vpop.f32.mrf.mxu0
    %v693 = vadd.f32 %v404, %v692
    %694 = vmatmul.f32.gmra.mxu0 %v237
    %v695 = vpop.f32.mrf.mxu0
    %v696 = vadd.f32 %v404, %v695
    %697 = vmatmul.f32.gmra.mxu0 %v239
    %v698 = vpop.f32.mrf.mxu0
    %v699 = vadd.f32 %v404, %v698
    %700 = vmatmul.f32.gmra.mxu0 %v241
    %v701 = vpop.f32.mrf.mxu0
    %v702 = vadd.f32 %v404, %v701
    %703 = vmatmul.f32.gmra.mxu0 %v243
    %v704 = vpop.f32.mrf.mxu0
    %v705 = vadd.f32 %v404, %v704
    %706 = vmatmul.f32.gmra.mxu0 %v245
    %v707 = vpop.f32.mrf.mxu0
    %v708 = vadd.f32 %v404, %v707
    %709 = vmatmul.f32.gmra.mxu0 %v247
    %v710 = vpop.f32.mrf.mxu0
    %v711 = vadd.f32 %v404, %v710
    %712 = vmatmul.f32.gmra.mxu0 %v249
    %v713 = vpop.f32.mrf.mxu0
    %v714 = vadd.f32 %v404, %v713
    %715 = vmatmul.f32.gmra.mxu0 %v251
    %v716 = vpop.f32.mrf.mxu0
    %v717 = vadd.f32 %v404, %v716
    %718 = vmatmul.f32.gmra.mxu0 %v253
    %v719 = vpop.f32.mrf.mxu0
    %v720 = vadd.f32 %v404, %v719
    %721 = vmatmul.f32.gmra.mxu0 %v255
    %v722 = vpop.f32.mrf.mxu0
    %v723 = vadd.f32 %v404, %v722
    %724 = vmatmul.f32.gmra.mxu0 %v257
    %v725 = vpop.f32.mrf.mxu0
    %v726 = vadd.f32 %v404, %v725
    %727 = vmatmul.f32.gmra.mxu0 %v259
    %v728 = vpop.f32.mrf.mxu0
    %v729 = vadd.f32 %v404, %v728
    %730 = vmatmul.f32.gmra.mxu0 %v261
    %v731 = vpop.f32.mrf.mxu0
    %v732 = vadd.f32 %v404, %v731
    %733 = vmatmul.f32.gmra.mxu0 %v263
    %v734 = vpop.f32.mrf.mxu0
    %v735 = vadd.f32 %v404, %v734
    %736 = vmatmul.f32.gmra.mxu0 %v265
    %v737 = vpop.f32.mrf.mxu0
    %v738 = vadd.f32 %v404, %v737
    %739 = vmatmul.f32.gmra.mxu0 %v267
    %v740 = vpop.f32.mrf.mxu0
    %v741 = vadd.f32 %v404, %v740
    %742 = vmatmul.f32.gmra.mxu0 %v269
    %v743 = vpop.f32.mrf.mxu0
    %v744 = vadd.f32 %v404, %v743
    %745 = vmatmul.f32.gmra.mxu0 %v271
    %v746 = vpop.f32.mrf.mxu0
    %v747 = vadd.f32 %v404, %v746
    %748 = vmatmul.f32.gmra.mxu0 %v273
    %v749 = vpop.f32.mrf.mxu0
    %v750 = vadd.f32 %v404, %v749
    %751 = vmatmul.f32.gmra.mxu0 %v275
    %v752 = vpop.f32.mrf.mxu0
    %v753 = vadd.f32 %v404, %v752
    %754 = vmatmul.f32.gmra.mxu0 %v277
    %v755 = vpop.f32.mrf.mxu0
    %v756 = vadd.f32 %v404, %v755
    %757 = vmatmul.f32.gmra.mxu0 %v279
    %v758 = vpop.f32.mrf.mxu0
    %v759 = vadd.f32 %v404, %v758
    %760 = vmatmul.f32.gmra.mxu0 %v281
    %v761 = vpop.f32.mrf.mxu0
    %v762 = vadd.f32 %v404, %v761
    %763 = vmatmul.f32.gmra.mxu0 %v283
    %v764 = vpop.f32.mrf.mxu0
    %v765 = vadd.f32 %v404, %v764
    %766 = vmatmul.f32.gmra.mxu0 %v285
    %v767 = vpop.f32.mrf.mxu0
    %v768 = vadd.f32 %v404, %v767
    %769 = vmatmul.f32.gmra.mxu0 %v287
    %v770 = vpop.f32.mrf.mxu0
    %v771 = vadd.f32 %v404, %v770
    %772 = vmatmul.f32.gmra.mxu0 %v289
    %v773 = vpop.f32.mrf.mxu0
    %v774 = vadd.f32 %v404, %v773
    %775 = vmatmul.f32.gmra.mxu0 %v291
    %v776 = vpop.f32.mrf.mxu0
    %v777 = vadd.f32 %v404, %v776
    %778 = vmatmul.f32.gmra.mxu0 %v293
    %v779 = vpop.f32.mrf.mxu0
    %v780 = vadd.f32 %v404, %v779
    %781 = vmatmul.f32.gmra.mxu0 %v295
    %v782 = vpop.f32.mrf.mxu0
    %v783 = vadd.f32 %v404, %v782
    %784 = vmatmul.f32.gmra.mxu0 %v297
    %v785 = vpop.f32.mrf.mxu0
    %v786 = vadd.f32 %v404, %v785
    %787 = vmatmul.f32.gmra.mxu0 %v299
    %v788 = vpop.f32.mrf.mxu0
    %v789 = vadd.f32 %v404, %v788
    %790 = vmatmul.f32.gmra.mxu0 %v301
    %v791 = vpop.f32.mrf.mxu0
    %v792 = vadd.f32 %v404, %v791
    %793 = vmatmul.f32.gmra.mxu0 %v303
    %v794 = vpop.f32.mrf.mxu0
    %v795 = vadd.f32 %v404, %v794
    %796 = vmatmul.f32.gmra.mxu0 %v305
    %v797 = vpop.f32.mrf.mxu0
    %v798 = vadd.f32 %v404, %v797
    %799 = vmatmul.f32.gmra.mxu0 %v307
    %v800 = vpop.f32.mrf.mxu0
    %v801 = vadd.f32 %v404, %v800
    %802 = vmatmul.f32.gmra.mxu0 %v309
    %v803 = vpop.f32.mrf.mxu0
    %v804 = vadd.f32 %v404, %v803
    %805 = vmatmul.f32.gmra.mxu0 %v311
    %v806 = vpop.f32.mrf.mxu0
    %v807 = vadd.f32 %v404, %v806
    %808 = vmatmul.f32.gmra.mxu0 %v313
    %v809 = vpop.f32.mrf.mxu0
    %v810 = vadd.f32 %v404, %v809
    %811 = vmatmul.f32.gmra.mxu0 %v315
    %v812 = vpop.f32.mrf.mxu0
    %v813 = vadd.f32 %v404, %v812
    %814 = vmatmul.f32.gmra.mxu0 %v317
    %v815 = vpop.f32.mrf.mxu0
    %v816 = vadd.f32 %v404, %v815
    %817 = vmatmul.f32.gmra.mxu0 %v319
    %v818 = vpop.f32.mrf.mxu0
    %v819 = vadd.f32 %v404, %v818
    %820 = vmatmul.f32.gmra.mxu0 %v321
    %v821 = vpop.f32.mrf.mxu0
    %v822 = vadd.f32 %v404, %v821
    %823 = vmatmul.f32.gmra.mxu0 %v323
    %v824 = vpop.f32.mrf.mxu0
    %v825 = vadd.f32 %v404, %v824
    %826 = vmatmul.f32.gmra.mxu0 %v325
    %v827 = vpop.f32.mrf.mxu0
    %v828 = vadd.f32 %v404, %v827
    %829 = vmatmul.f32.gmra.mxu0 %v327
    %v830 = vpop.f32.mrf.mxu0
    %v831 = vadd.f32 %v404, %v830
    %832 = vmatmul.f32.gmra.mxu0 %v329
    %v833 = vpop.f32.mrf.mxu0
    %v834 = vadd.f32 %v404, %v833
    %835 = vmatmul.f32.gmra.mxu0 %v331
    %v836 = vpop.f32.mrf.mxu0
    %v837 = vadd.f32 %v404, %v836
    %838 = vmatmul.f32.gmra.mxu0 %v333
    %v839 = vpop.f32.mrf.mxu0
    %v840 = vadd.f32 %v404, %v839
    %841 = vmatmul.f32.gmra.mxu0 %v335
    %v842 = vpop.f32.mrf.mxu0
    %v843 = vadd.f32 %v404, %v842
    %844 = vmatmul.f32.gmra.mxu0 %v337
    %v845 = vpop.f32.mrf.mxu0
    %v846 = vadd.f32 %v404, %v845
    %847 = vmatmul.f32.gmra.mxu0 %v339
    %v848 = vpop.f32.mrf.mxu0
    %v849 = vadd.f32 %v404, %v848
    %850 = vmatmul.f32.gmra.mxu0 %v341
    %v851 = vpop.f32.mrf.mxu0
    %v852 = vadd.f32 %v404, %v851
    %853 = vmatmul.f32.gmra.mxu0 %v343
    %v854 = vpop.f32.mrf.mxu0
    %v855 = vadd.f32 %v404, %v854
    %856 = vmatmul.f32.gmra.mxu0 %v345
    %v857 = vpop.f32.mrf.mxu0
    %v858 = vadd.f32 %v404, %v857
    %859 = vmatmul.f32.gmra.mxu0 %v347
    %v860 = vpop.f32.mrf.mxu0
    %v861 = vadd.f32 %v404, %v860
    %862 = vmatmul.f32.gmra.mxu0 %v349
    %v863 = vpop.f32.mrf.mxu0
    %v864 = vadd.f32 %v404, %v863
    %865 = vmatmul.f32.gmra.mxu0 %v351
    %v866 = vpop.f32.mrf.mxu0
    %v867 = vadd.f32 %v404, %v866
    %868 = vmatmul.f32.gmra.mxu0 %v353
    %v869 = vpop.f32.mrf.mxu0
    %v870 = vadd.f32 %v404, %v869
    %871 = vmatmul.f32.gmra.mxu0 %v355
    %v872 = vpop.f32.mrf.mxu0
    %v873 = vadd.f32 %v404, %v872
    %874 = vmatmul.f32.gmra.mxu0 %v357
    %v875 = vpop.f32.mrf.mxu0
    %v876 = vadd.f32 %v404, %v875
    %877 = vmatmul.f32.gmra.mxu0 %v359
    %v878 = vpop.f32.mrf.mxu0
    %v879 = vadd.f32 %v404, %v878
    %880 = vmatmul.f32.gmra.mxu0 %v361
    %v881 = vpop.f32.mrf.mxu0
    %v882 = vadd.f32 %v404, %v881
    %883 = vmatmul.f32.gmra.mxu0 %v363
    %v884 = vpop.f32.mrf.mxu0
    %v885 = vadd.f32 %v404, %v884
    %886 = vmatmul.f32.gmra.mxu0 %v365
    %v887 = vpop.f32.mrf.mxu0
    %v888 = vadd.f32 %v404, %v887
    %889 = vmatmul.f32.gmra.mxu0 %v367
    %v890 = vpop.f32.mrf.mxu0
    %v891 = vadd.f32 %v404, %v890
    %892 = vmatmul.f32.gmra.mxu0 %v369
    %v893 = vpop.f32.mrf.mxu0
    %v894 = vadd.f32 %v404, %v893
    %895 = vmatmul.f32.gmra.mxu0 %v371
    %v896 = vpop.f32.mrf.mxu0
    %v897 = vadd.f32 %v404, %v896
    %898 = vmatmul.f32.gmra.mxu0 %v373
    %v899 = vpop.f32.mrf.mxu0
    %v900 = vadd.f32 %v404, %v899
    %901 = vmatmul.f32.gmra.mxu0 %v375
    %v902 = vpop.f32.mrf.mxu0
    %v903 = vadd.f32 %v404, %v902
    %904 = vmatmul.f32.gmra.mxu0 %v377
    %v905 = vpop.f32.mrf.mxu0
    %v906 = vadd.f32 %v404, %v905
    %907 = vmatmul.f32.gmra.mxu0 %v379
    %v908 = vpop.f32.mrf.mxu0
    %v909 = vadd.f32 %v404, %v908
    %910 = vmatmul.f32.gmra.mxu0 %v381
    %v911 = vpop.f32.mrf.mxu0
    %v912 = vadd.f32 %v404, %v911
    %913 = vdwg.mxu0
    %914 = vmatpush.msra.mxu0 0.0
    %915 = vmatpush.msra.mxu0 0.0
    %916 = vmatpush.msra.mxu0 0.0
    %917 = vmatpush.msra.mxu0 0.0
    %918 = vmatpush.msra.mxu0 0.0
    %919 = vmatpush.msra.mxu0 0.0
    %920 = vmatpush.msra.mxu0 0.0
    %921 = vmatpush.msra.mxu0 0.0
    %922 = vmatpush.msra.mxu0 0.0
    %923 = vmatpush.msra.mxu0 0.0
    %924 = vmatpush.msra.mxu0 0.0
    %925 = vmatpush.msra.mxu0 0.0
    %926 = vmatpush.msra.mxu0 0.0
    %927 = vmatpush.msra.mxu0 %v652
    %928 = vmatpush.msra.mxu0 %v400
    %929 = vmatpush.msra.mxu0 %v399
    %930 = vmatmul.f32.gmra.mxu0 %v408
    %v931 = vpop.f32.mrf.mxu0
    %v932 = vadd.f32 %v672, %v931
    %933 = vmatmul.f32.gmra.mxu0 %v411
    %v934 = vpop.f32.mrf.mxu0
    %v935 = vadd.f32 %v675, %v934
    %936 = vmatmul.f32.gmra.mxu0 %v414
    %v937 = vpop.f32.mrf.mxu0
    %v938 = vadd.f32 %v678, %v937
    %939 = vmatmul.f32.gmra.mxu0 %v417
    %v940 = vpop.f32.mrf.mxu0
    %v941 = vadd.f32 %v681, %v940
    %942 = vmatmul.f32.gmra.mxu0 %v420
    %v943 = vpop.f32.mrf.mxu0
    %v944 = vadd.f32 %v684, %v943
    %945 = vmatmul.f32.gmra.mxu0 %v423
    %v946 = vpop.f32.mrf.mxu0
    %v947 = vadd.f32 %v687, %v946
    %948 = vmatmul.f32.gmra.mxu0 %v426
    %v949 = vpop.f32.mrf.mxu0
    %v950 = vadd.f32 %v690, %v949
    %951 = vmatmul.f32.gmra.mxu0 %v429
    %v952 = vpop.f32.mrf.mxu0
    %v953 = vadd.f32 %v693, %v952
    %954 = vmatmul.f32.gmra.mxu0 %v432
    %v955 = vpop.f32.mrf.mxu0
    %v956 = vadd.f32 %v696, %v955
    %957 = vmatmul.f32.gmra.mxu0 %v435
    %v958 = vpop.f32.mrf.mxu0
    %v959 = vadd.f32 %v699, %v958
    %960 = vmatmul.f32.gmra.mxu0 %v438
    %v961 = vpop.f32.mrf.mxu0
    %v962 = vadd.f32 %v702, %v961
    %963 = vmatmul.f32.gmra.mxu0 %v441
    %v964 = vpop.f32.mrf.mxu0
    %v965 = vadd.f32 %v705, %v964
    %966 = vmatmul.f32.gmra.mxu0 %v444
    %v967 = vpop.f32.mrf.mxu0
    %v968 = vadd.f32 %v708, %v967
    %969 = vmatmul.f32.gmra.mxu0 %v447
    %v970 = vpop.f32.mrf.mxu0
    %v971 = vadd.f32 %v711, %v970
    %972 = vmatmul.f32.gmra.mxu0 %v450
    %v973 = vpop.f32.mrf.mxu0
    %v974 = vadd.f32 %v714, %v973
    %975 = vmatmul.f32.gmra.mxu0 %v453
    %v976 = vpop.f32.mrf.mxu0
    %v977 = vadd.f32 %v717, %v976
    %978 = vmatmul.f32.gmra.mxu0 %v456
    %v979 = vpop.f32.mrf.mxu0
    %v980 = vadd.f32 %v720, %v979
    %981 = vmatmul.f32.gmra.mxu0 %v459
    %v982 = vpop.f32.mrf.mxu0
    %v983 = vadd.f32 %v723, %v982
    %984 = vmatmul.f32.gmra.mxu0 %v462
    %v985 = vpop.f32.mrf.mxu0
    %v986 = vadd.f32 %v726, %v985
    %987 = vmatmul.f32.gmra.mxu0 %v465
    %v988 = vpop.f32.mrf.mxu0
    %v989 = vadd.f32 %v729, %v988
    %990 = vmatmul.f32.gmra.mxu0 %v468
    %v991 = vpop.f32.mrf.mxu0
    %v992 = vadd.f32 %v732, %v991
    %993 = vmatmul.f32.gmra.mxu0 %v471
    %v994 = vpop.f32.mrf.mxu0
    %v995 = vadd.f32 %v735, %v994
    %996 = vmatmul.f32.gmra.mxu0 %v474
    %v997 = vpop.f32.mrf.mxu0
    %v998 = vadd.f32 %v738, %v997
    %999 = vmatmul.f32.gmra.mxu0 %v477
    %v1000 = vpop.f32.mrf.mxu0
    %v1001 = vadd.f32 %v741, %v1000
    %1002 = vmatmul.f32.gmra.mxu0 %v480
    %v1003 = vpop.f32.mrf.mxu0
    %v1004 = vadd.f32 %v744, %v1003
    %1005 = vmatmul.f32.gmra.mxu0 %v483
    %v1006 = vpop.f32.mrf.mxu0
    %v1007 = vadd.f32 %v747, %v1006
    %1008 = vmatmul.f32.gmra.mxu0 %v486
    %v1009 = vpop.f32.mrf.mxu0
    %v1010 = vadd.f32 %v750, %v1009
    %1011 = vmatmul.f32.gmra.mxu0 %v489
    %v1012 = vpop.f32.mrf.mxu0
    %v1013 = vadd.f32 %v753, %v1012
    %1014 = vmatmul.f32.gmra.mxu0 %v492
    %v1015 = vpop.f32.mrf.mxu0
    %v1016 = vadd.f32 %v756, %v1015
    %1017 = vmatmul.f32.gmra.mxu0 %v495
    %v1018 = vpop.f32.mrf.mxu0
    %v1019 = vadd.f32 %v759, %v1018
    %1020 = vmatmul.f32.gmra.mxu0 %v498
    %v1021 = vpop.f32.mrf.mxu0
    %v1022 = vadd.f32 %v762, %v1021
    %1023 = vmatmul.f32.gmra.mxu0 %v501
    %v1024 = vpop.f32.mrf.mxu0
    %v1025 = vadd.f32 %v765, %v1024
    %1026 = vmatmul.f32.gmra.mxu0 %v504
    %v1027 = vpop.f32.mrf.mxu0
    %v1028 = vadd.f32 %v768, %v1027
    %1029 = vmatmul.f32.gmra.mxu0 %v507
    %v1030 = vpop.f32.mrf.mxu0
    %v1031 = vadd.f32 %v771, %v1030
    %1032 = vmatmul.f32.gmra.mxu0 %v510
    %v1033 = vpop.f32.mrf.mxu0
    %v1034 = vadd.f32 %v774, %v1033
    %1035 = vmatmul.f32.gmra.mxu0 %v513
    %v1036 = vpop.f32.mrf.mxu0
    %v1037 = vadd.f32 %v777, %v1036
    %1038 = vmatmul.f32.gmra.mxu0 %v516
    %v1039 = vpop.f32.mrf.mxu0
    %v1040 = vadd.f32 %v780, %v1039
    %1041 = vmatmul.f32.gmra.mxu0 %v519
    %v1042 = vpop.f32.mrf.mxu0
    %v1043 = vadd.f32 %v783, %v1042
    %1044 = vmatmul.f32.gmra.mxu0 %v522
    %v1045 = vpop.f32.mrf.mxu0
    %v1046 = vadd.f32 %v786, %v1045
    %1047 = vmatmul.f32.gmra.mxu0 %v525
    %v1048 = vpop.f32.mrf.mxu0
    %v1049 = vadd.f32 %v789, %v1048
    %1050 = vmatmul.f32.gmra.mxu0 %v528
    %v1051 = vpop.f32.mrf.mxu0
    %v1052 = vadd.f32 %v792, %v1051
    %1053 = vmatmul.f32.gmra.mxu0 %v531
    %v1054 = vpop.f32.mrf.mxu0
    %v1055 = vadd.f32 %v795, %v1054
    %1056 = vmatmul.f32.gmra.mxu0 %v534
    %v1057 = vpop.f32.mrf.mxu0
    %v1058 = vadd.f32 %v798, %v1057
    %1059 = vmatmul.f32.gmra.mxu0 %v537
    %v1060 = vpop.f32.mrf.mxu0
    %v1061 = vadd.f32 %v801, %v1060
    %1062 = vmatmul.f32.gmra.mxu0 %v540
    %v1063 = vpop.f32.mrf.mxu0
    %v1064 = vadd.f32 %v804, %v1063
    %1065 = vmatmul.f32.gmra.mxu0 %v543
    %v1066 = vpop.f32.mrf.mxu0
    %v1067 = vadd.f32 %v807, %v1066
    %1068 = vmatmul.f32.gmra.mxu0 %v546
    %v1069 = vpop.f32.mrf.mxu0
    %v1070 = vadd.f32 %v810, %v1069
    %1071 = vmatmul.f32.gmra.mxu0 %v549
    %v1072 = vpop.f32.mrf.mxu0
    %v1073 = vadd.f32 %v813, %v1072
    %1074 = vmatmul.f32.gmra.mxu0 %v552
    %v1075 = vpop.f32.mrf.mxu0
    %v1076 = vadd.f32 %v816, %v1075
    %1077 = vmatmul.f32.gmra.mxu0 %v555
    %v1078 = vpop.f32.mrf.mxu0
    %v1079 = vadd.f32 %v819, %v1078
    %1080 = vmatmul.f32.gmra.mxu0 %v558
    %v1081 = vpop.f32.mrf.mxu0
    %v1082 = vadd.f32 %v822, %v1081
    %1083 = vmatmul.f32.gmra.mxu0 %v561
    %v1084 = vpop.f32.mrf.mxu0
    %v1085 = vadd.f32 %v825, %v1084
    %1086 = vmatmul.f32.gmra.mxu0 %v564
    %v1087 = vpop.f32.mrf.mxu0
    %v1088 = vadd.f32 %v828, %v1087
    %1089 = vmatmul.f32.gmra.mxu0 %v567
    %v1090 = vpop.f32.mrf.mxu0
    %v1091 = vadd.f32 %v831, %v1090
    %1092 = vmatmul.f32.gmra.mxu0 %v570
    %v1093 = vpop.f32.mrf.mxu0
    %v1094 = vadd.f32 %v834, %v1093
    %1095 = vmatmul.f32.gmra.mxu0 %v573
    %v1096 = vpop.f32.mrf.mxu0
    %v1097 = vadd.f32 %v837, %v1096
    %1098 = vmatmul.f32.gmra.mxu0 %v576
    %v1099 = vpop.f32.mrf.mxu0
    %v1100 = vadd.f32 %v840, %v1099
    %1101 = vmatmul.f32.gmra.mxu0 %v579
    %v1102 = vpop.f32.mrf.mxu0
    %v1103 = vadd.f32 %v843, %v1102
    %1104 = vmatmul.f32.gmra.mxu0 %v582
    %v1105 = vpop.f32.mrf.mxu0
    %v1106 = vadd.f32 %v846, %v1105
    %1107 = vmatmul.f32.gmra.mxu0 %v585
    %v1108 = vpop.f32.mrf.mxu0
    %v1109 = vadd.f32 %v849, %v1108
    %1110 = vmatmul.f32.gmra.mxu0 %v588
    %v1111 = vpop.f32.mrf.mxu0
    %v1112 = vadd.f32 %v852, %v1111
    %1113 = vmatmul.f32.gmra.mxu0 %v591
    %v1114 = vpop.f32.mrf.mxu0
    %v1115 = vadd.f32 %v855, %v1114
    %1116 = vmatmul.f32.gmra.mxu0 %v594
    %v1117 = vpop.f32.mrf.mxu0
    %v1118 = vadd.f32 %v858, %v1117
    %1119 = vmatmul.f32.gmra.mxu0 %v597
    %v1120 = vpop.f32.mrf.mxu0
    %v1121 = vadd.f32 %v861, %v1120
    %1122 = vmatmul.f32.gmra.mxu0 %v600
    %v1123 = vpop.f32.mrf.mxu0
    %v1124 = vadd.f32 %v864, %v1123
    %1125 = vmatmul.f32.gmra.mxu0 %v603
    %v1126 = vpop.f32.mrf.mxu0
    %v1127 = vadd.f32 %v867, %v1126
    %1128 = vmatmul.f32.gmra.mxu0 %v606
    %v1129 = vpop.f32.mrf.mxu0
    %v1130 = vadd.f32 %v870, %v1129
    %1131 = vmatmul.f32.gmra.mxu0 %v609
    %v1132 = vpop.f32.mrf.mxu0
    %v1133 = vadd.f32 %v873, %v1132
    %1134 = vmatmul.f32.gmra.mxu0 %v612
    %v1135 = vpop.f32.mrf.mxu0
    %v1136 = vadd.f32 %v876, %v1135
    %1137 = vmatmul.f32.gmra.mxu0 %v615
    %v1138 = vpop.f32.mrf.mxu0
    %v1139 = vadd.f32 %v879, %v1138
    %1140 = vmatmul.f32.gmra.mxu0 %v618
    %v1141 = vpop.f32.mrf.mxu0
    %v1142 = vadd.f32 %v882, %v1141
    %1143 = vmatmul.f32.gmra.mxu0 %v621
    %v1144 = vpop.f32.mrf.mxu0
    %v1145 = vadd.f32 %v885, %v1144
    %1146 = vmatmul.f32.gmra.mxu0 %v624
    %v1147 = vpop.f32.mrf.mxu0
    %v1148 = vadd.f32 %v888, %v1147
    %1149 = vmatmul.f32.gmra.mxu0 %v627
    %v1150 = vpop.f32.mrf.mxu0
    %v1151 = vadd.f32 %v891, %v1150
    %1152 = vmatmul.f32.gmra.mxu0 %v630
    %v1153 = vpop.f32.mrf.mxu0
    %v1154 = vadd.f32 %v894, %v1153
    %1155 = vmatmul.f32.gmra.mxu0 %v633
    %v1156 = vpop.f32.mrf.mxu0
    %v1157 = vadd.f32 %v897, %v1156
    %1158 = vmatmul.f32.gmra.mxu0 %v636
    %v1159 = vpop.f32.mrf.mxu0
    %v1160 = vadd.f32 %v900, %v1159
    %1161 = vmatmul.f32.gmra.mxu0 %v639
    %v1162 = vpop.f32.mrf.mxu0
    %v1163 = vadd.f32 %v903, %v1162
    %1164 = vmatmul.f32.gmra.mxu0 %v642
    %v1165 = vpop.f32.mrf.mxu0
    %v1166 = vadd.f32 %v906, %v1165
    %1167 = vmatmul.f32.gmra.mxu0 %v645
    %v1168 = vpop.f32.mrf.mxu0
    %v1169 = vadd.f32 %v909, %v1168
    %1170 = vmatmul.f32.gmra.mxu0 %v648
    %v1171 = vpop.f32.mrf.mxu0
    %v1172 = vadd.f32 %v912, %v1171
    %1173 = vdwg.mxu0
    %v1174 = vmax.f32 %v932, 0.0
    %v1175 = vmax.f32 %v935, 0.0
    %v1176 = vmax.f32 %v938, 0.0
    %v1177 = vmax.f32 %v941, 0.0
    %v1178 = vmax.f32 %v944, 0.0
    %v1179 = vmax.f32 %v947, 0.0
    %v1180 = vmax.f32 %v950, 0.0
    %v1181 = vmax.f32 %v953, 0.0
    %v1182 = vmax.f32 %v956, 0.0
    %v1183 = vmax.f32 %v959, 0.0
    %v1184 = vmax.f32 %v962, 0.0
    %v1185 = vmax.f32 %v965, 0.0
    %v1186 = vmax.f32 %v968, 0.0
    %v1187 = vmax.f32 %v971, 0.0
    %v1188 = vmax.f32 %v974, 0.0
    %v1189 = vmax.f32 %v977, 0.0
    %v1190 = vmax.f32 %v980, 0.0
    %v1191 = vmax.f32 %v983, 0.0
    %v1192 = vmax.f32 %v986, 0.0
    %v1193 = vmax.f32 %v989, 0.0
    %v1194 = vmax.f32 %v992, 0.0
    %v1195 = vmax.f32 %v995, 0.0
    %v1196 = vmax.f32 %v998, 0.0
    %v1197 = vmax.f32 %v1001, 0.0
    %v1198 = vmax.f32 %v1004, 0.0
    %v1199 = vmax.f32 %v1007, 0.0
    %v1200 = vmax.f32 %v1010, 0.0
    %v1201 = vmax.f32 %v1013, 0.0
    %v1202 = vmax.f32 %v1016, 0.0
    %v1203 = vmax.f32 %v1019, 0.0
    %v1204 = vmax.f32 %v1022, 0.0
    %v1205 = vmax.f32 %v1025, 0.0
    %v1206 = vmax.f32 %v1028, 0.0
    %v1207 = vmax.f32 %v1031, 0.0
    %v1208 = vmax.f32 %v1034, 0.0
    %v1209 = vmax.f32 %v1037, 0.0
    %v1210 = vmax.f32 %v1040, 0.0
    %v1211 = vmax.f32 %v1043, 0.0
    %v1212 = vmax.f32 %v1046, 0.0
    %v1213 = vmax.f32 %v1049, 0.0
    %v1214 = vmax.f32 %v1052, 0.0
    %v1215 = vmax.f32 %v1055, 0.0
    %v1216 = vmax.f32 %v1058, 0.0
    %v1217 = vmax.f32 %v1061, 0.0
    %v1218 = vmax.f32 %v1064, 0.0
    %v1219 = vmax.f32 %v1067, 0.0
    %v1220 = vmax.f32 %v1070, 0.0
    %v1221 = vmax.f32 %v1073, 0.0
    %v1222 = vmax.f32 %v1076, 0.0
    %v1223 = vmax.f32 %v1079, 0.0
    %v1224 = vmax.f32 %v1082, 0.0
    %v1225 = vmax.f32 %v1085, 0.0
    %v1226 = vmax.f32 %v1088, 0.0
    %v1227 = vmax.f32 %v1091, 0.0
    %v1228 = vmax.f32 %v1094, 0.0
    %v1229 = vmax.f32 %v1097, 0.0
    %v1230 = vmax.f32 %v1100, 0.0
    %v1231 = vmax.f32 %v1103, 0.0
    %v1232 = vmax.f32 %v1106, 0.0
    %v1233 = vmax.f32 %v1109, 0.0
    %v1234 = vmax.f32 %v1112, 0.0
    %v1235 = vmax.f32 %v1115, 0.0
    %v1236 = vmax.f32 %v1118, 0.0
    %v1237 = vmax.f32 %v1121, 0.0
    %v1238 = vmax.f32 %v1124, 0.0
    %v1239 = vmax.f32 %v1127, 0.0
    %v1240 = vmax.f32 %v1130, 0.0
    %v1241 = vmax.f32 %v1133, 0.0
    %v1242 = vmax.f32 %v1136, 0.0
    %v1243 = vmax.f32 %v1139, 0.0
    %v1244 = vmax.f32 %v1142, 0.0
    %v1245 = vmax.f32 %v1145, 0.0
    %v1246 = vmax.f32 %v1148, 0.0
    %v1247 = vmax.f32 %v1151, 0.0
    %v1248 = vmax.f32 %v1154, 0.0
    %v1249 = vmax.f32 %v1157, 0.0
    %v1250 = vmax.f32 %v1160, 0.0
    %v1251 = vmax.f32 %v1163, 0.0
    %v1252 = vmax.f32 %v1166, 0.0
    %v1253 = vmax.f32 %v1169, 0.0
    %v1254 = vmax.f32 %v1172, 0.0
    %v1255 = vld [vmem:[%s3] sm:$0xff]
    %v1256 = vld [vmem:[%s3 + $0x8] sm:$0xff]
    %v1257 = vld [vmem:[%s3 + $0x10] sm:$0xff]
    %v1258 = vld [vmem:[%s3 + $0x18] sm:$0xff]
    %v1259 = vld [vmem:[%s3 + $0x20] sm:$0xff]
    %v1260 = vld [vmem:[%s3 + $0x28] sm:$0xff]
    %v1261 = vld [vmem:[%s3 + $0x30] sm:$0xff]
    %v1262 = vld [vmem:[%s3 + $0x38] sm:$0xff]
    %v1263 = vld [vmem:[%s3 + $0x40] sm:$0xff]
    %v1264 = vld [vmem:[%s3 + $0x48] sm:$0xff]
    %v1265 = vld [vmem:[%s3 + $0x50] sm:$0xff]
    %v1266 = vld [vmem:[%s3 + $0x58] sm:$0xff]
    %v1267 = vld [vmem:[%s3 + $0x60] sm:$0xff]
    %v1268 = vld [vmem:[%s3 + $0x68] sm:$0xff]
    %v1269 = vld [vmem:[%s3 + $0x70] sm:$0xff]
    %v1270 = vld [vmem:[%s3 + $0x78] sm:$0xff]
    %v1271 = vld [vmem:[%s3 + $0x80] sm:$0xff]
    %v1272 = vld [vmem:[%s3 + $0x88] sm:$0xff]
    %v1273 = vld [vmem:[%s3 + $0x90] sm:$0xff]
    %v1274 = vld [vmem:[%s3 + $0x98] sm:$0xff]
    %v1275 = vld [vmem:[%s3 + $0xa0] sm:$0xff]
    %v1276 = vld [vmem:[%s3 + $0xa8] sm:$0xff]
    %v1277 = vld [vmem:[%s3 + $0xb0] sm:$0xff]
    %v1278 = vld [vmem:[%s3 + $0xb8] sm:$0xff]
    %v1279 = vld [vmem:[%s3 + $0xc0] sm:$0xff]
    %v1280 = vld [vmem:[%s3 + $0xc8] sm:$0xff]
    %v1281 = vld [vmem:[%s3 + $0xd0] sm:$0xff]
    %v1282 = vld [vmem:[%s3 + $0xd8] sm:$0xff]
    %v1283 = vld [vmem:[%s3 + $0xe0] sm:$0xff]
    %v1284 = vld [vmem:[%s3 + $0xe8] sm:$0xff]
    %v1285 = vld [vmem:[%s3 + $0xf0] sm:$0xff]
    %v1286 = vld [vmem:[%s3 + $0xf8] sm:$0xff]
    %v1287 = vld [vmem:[%s3 + $0x100] sm:$0xff]
    %v1288 = vld [vmem:[%s3 + $0x108] sm:$0xff]
    %v1289 = vld [vmem:[%s3 + $0x110] sm:$0xff]
    %v1290 = vld [vmem:[%s3 + $0x118] sm:$0xff]
    %v1291 = vld [vmem:[%s3 + $0x120] sm:$0xff]
    %v1292 = vld [vmem:[%s3 + $0x128] sm:$0xff]
    %v1293 = vld [vmem:[%s3 + $0x130] sm:$0xff]
    %v1294 = vld [vmem:[%s3 + $0x138] sm:$0xff]
    %v1295 = vld [vmem:[%s3 + $0x140] sm:$0xff]
    %v1296 = vld [vmem:[%s3 + $0x148] sm:$0xff]
    %v1297 = vld [vmem:[%s3 + $0x150] sm:$0xff]
    %v1298 = vld [vmem:[%s3 + $0x158] sm:$0xff]
    %v1299 = vld [vmem:[%s3 + $0x160] sm:$0xff]
    %v1300 = vld [vmem:[%s3 + $0x168] sm:$0xff]
    %v1301 = vld [vmem:[%s3 + $0x170] sm:$0xff]
    %v1302 = vld [vmem:[%s3 + $0x178] sm:$0xff]
    %v1303 = vld [vmem:[%s3 + $0x180] sm:$0xff]
    %v1304 = vld [vmem:[%s3 + $0x188] sm:$0xff]
    %v1305 = vld [vmem:[%s3 + $0x190] sm:$0xff]
    %v1306 = vld [vmem:[%s3 + $0x198] sm:$0xff]
    %v1307 = vld [vmem:[%s3 + $0x1a0] sm:$0xff]
    %v1308 = vld [vmem:[%s3 + $0x1a8] sm:$0xff]
    %v1309 = vld [vmem:[%s3 + $0x1b0] sm:$0xff]
    %v1310 = vld [vmem:[%s3 + $0x1b8] sm:$0xff]
    %v1311 = vld [vmem:[%s3 + $0x1c0] sm:$0xff]
    %v1312 = vld [vmem:[%s3 + $0x1c8] sm:$0xff]
    %v1313 = vld [vmem:[%s3 + $0x1d0] sm:$0xff]
    %v1314 = vld [vmem:[%s3 + $0x1d8] sm:$0xff]
    %v1315 = vld [vmem:[%s3 + $0x1e0] sm:$0xff]
    %v1316 = vld [vmem:[%s3 + $0x1e8] sm:$0xff]
    %v1317 = vld [vmem:[%s3 + $0x1f0] sm:$0xff]
    %v1318 = vld [vmem:[%s3 + $0x1f8] sm:$0xff]
    %v1319 = vld [vmem:[%s3 + $0x200] sm:$0xff]
    %v1320 = vld [vmem:[%s3 + $0x208] sm:$0xff]
    %v1321 = vld [vmem:[%s3 + $0x210] sm:$0xff]
    %v1322 = vld [vmem:[%s3 + $0x218] sm:$0xff]
    %v1323 = vld [vmem:[%s3 + $0x220] sm:$0xff]
    %v1324 = vld [vmem:[%s3 + $0x228] sm:$0xff]
    %v1325 = vld [vmem:[%s3 + $0x230] sm:$0xff]
    %v1326 = vld [vmem:[%s3 + $0x238] sm:$0xff]
    %v1327 = vld [vmem:[%s3 + $0x240] sm:$0xff]
    %v1328 = vld [vmem:[%s3 + $0x248] sm:$0xff]
    %v1329 = vld [vmem:[%s3 + $0x250] sm:$0xff]
    %v1330 = vld [vmem:[%s3 + $0x258] sm:$0xff]
    %v1331 = vld [vmem:[%s3 + $0x260] sm:$0xff]
    %v1332 = vld [vmem:[%s3 + $0x268] sm:$0xff]
    %v1333 = vld [vmem:[%s3 + $0x270] sm:$0xff]
    %v1334 = vld [vmem:[%s3 + $0x278] sm:$0xff]
    %v1335 = vld [vmem:[%s3 + $0x280] sm:$0xff]
    %vm1336 = vcmp.gt.f32.partialorder %v1255, 0.5
    %vm1337 = vcmp.gt.f32.partialorder %v1256, 0.5
    %vm1338 = vcmp.gt.f32.partialorder %v1257, 0.5
    %vm1339 = vcmp.gt.f32.partialorder %v1258, 0.5
    %vm1340 = vcmp.gt.f32.partialorder %v1259, 0.5
    %vm1341 = vcmp.gt.f32.partialorder %v1260, 0.5
    %vm1342 = vcmp.gt.f32.partialorder %v1261, 0.5
    %vm1343 = vcmp.gt.f32.partialorder %v1262, 0.5
    %vm1344 = vcmp.gt.f32.partialorder %v1263, 0.5
    %vm1345 = vcmp.gt.f32.partialorder %v1264, 0.5
    %vm1346 = vcmp.gt.f32.partialorder %v1265, 0.5
    %vm1347 = vcmp.gt.f32.partialorder %v1266, 0.5
    %vm1348 = vcmp.gt.f32.partialorder %v1267, 0.5
    %vm1349 = vcmp.gt.f32.partialorder %v1268, 0.5
    %vm1350 = vcmp.gt.f32.partialorder %v1269, 0.5
    %vm1351 = vcmp.gt.f32.partialorder %v1270, 0.5
    %vm1352 = vcmp.gt.f32.partialorder %v1271, 0.5
    %vm1353 = vcmp.gt.f32.partialorder %v1272, 0.5
    %vm1354 = vcmp.gt.f32.partialorder %v1273, 0.5
    %vm1355 = vcmp.gt.f32.partialorder %v1274, 0.5
    %vm1356 = vcmp.gt.f32.partialorder %v1275, 0.5
    %vm1357 = vcmp.gt.f32.partialorder %v1276, 0.5
    %vm1358 = vcmp.gt.f32.partialorder %v1277, 0.5
    %vm1359 = vcmp.gt.f32.partialorder %v1278, 0.5
    %vm1360 = vcmp.gt.f32.partialorder %v1279, 0.5
    %vm1361 = vcmp.gt.f32.partialorder %v1280, 0.5
    %vm1362 = vcmp.gt.f32.partialorder %v1281, 0.5
    %vm1363 = vcmp.gt.f32.partialorder %v1282, 0.5
    %vm1364 = vcmp.gt.f32.partialorder %v1283, 0.5
    %vm1365 = vcmp.gt.f32.partialorder %v1284, 0.5
    %vm1366 = vcmp.gt.f32.partialorder %v1285, 0.5
    %vm1367 = vcmp.gt.f32.partialorder %v1286, 0.5
    %vm1368 = vcmp.gt.f32.partialorder %v1287, 0.5
    %vm1369 = vcmp.gt.f32.partialorder %v1288, 0.5
    %vm1370 = vcmp.gt.f32.partialorder %v1289, 0.5
    %vm1371 = vcmp.gt.f32.partialorder %v1290, 0.5
    %vm1372 = vcmp.gt.f32.partialorder %v1291, 0.5
    %vm1373 = vcmp.gt.f32.partialorder %v1292, 0.5
    %vm1374 = vcmp.gt.f32.partialorder %v1293, 0.5
    %vm1375 = vcmp.gt.f32.partialorder %v1294, 0.5
    %vm1376 = vcmp.gt.f32.partialorder %v1295, 0.5
    %vm1377 = vcmp.gt.f32.partialorder %v1296, 0.5
    %vm1378 = vcmp.gt.f32.partialorder %v1297, 0.5
    %vm1379 = vcmp.gt.f32.partialorder %v1298, 0.5
    %vm1380 = vcmp.gt.f32.partialorder %v1299, 0.5
    %vm1381 = vcmp.gt.f32.partialorder %v1300, 0.5
    %vm1382 = vcmp.gt.f32.partialorder %v1301, 0.5
    %vm1383 = vcmp.gt.f32.partialorder %v1302, 0.5
    %vm1384 = vcmp.gt.f32.partialorder %v1303, 0.5
    %vm1385 = vcmp.gt.f32.partialorder %v1304, 0.5
    %vm1386 = vcmp.gt.f32.partialorder %v1305, 0.5
    %vm1387 = vcmp.gt.f32.partialorder %v1306, 0.5
    %vm1388 = vcmp.gt.f32.partialorder %v1307, 0.5
    %vm1389 = vcmp.gt.f32.partialorder %v1308, 0.5
    %vm1390 = vcmp.gt.f32.partialorder %v1309, 0.5
    %vm1391 = vcmp.gt.f32.partialorder %v1310, 0.5
    %vm1392 = vcmp.gt.f32.partialorder %v1311, 0.5
    %vm1393 = vcmp.gt.f32.partialorder %v1312, 0.5
    %vm1394 = vcmp.gt.f32.partialorder %v1313, 0.5
    %vm1395 = vcmp.gt.f32.partialorder %v1314, 0.5
    %vm1396 = vcmp.gt.f32.partialorder %v1315, 0.5
    %vm1397 = vcmp.gt.f32.partialorder %v1316, 0.5
    %vm1398 = vcmp.gt.f32.partialorder %v1317, 0.5
    %vm1399 = vcmp.gt.f32.partialorder %v1318, 0.5
    %vm1400 = vcmp.gt.f32.partialorder %v1319, 0.5
    %vm1401 = vcmp.gt.f32.partialorder %v1320, 0.5
    %vm1402 = vcmp.gt.f32.partialorder %v1321, 0.5
    %vm1403 = vcmp.gt.f32.partialorder %v1322, 0.5
    %vm1404 = vcmp.gt.f32.partialorder %v1323, 0.5
    %vm1405 = vcmp.gt.f32.partialorder %v1324, 0.5
    %vm1406 = vcmp.gt.f32.partialorder %v1325, 0.5
    %vm1407 = vcmp.gt.f32.partialorder %v1326, 0.5
    %vm1408 = vcmp.gt.f32.partialorder %v1327, 0.5
    %vm1409 = vcmp.gt.f32.partialorder %v1328, 0.5
    %vm1410 = vcmp.gt.f32.partialorder %v1329, 0.5
    %vm1411 = vcmp.gt.f32.partialorder %v1330, 0.5
    %vm1412 = vcmp.gt.f32.partialorder %v1331, 0.5
    %vm1413 = vcmp.gt.f32.partialorder %v1332, 0.5
    %vm1414 = vcmp.gt.f32.partialorder %v1333, 0.5
    %vm1415 = vcmp.gt.f32.partialorder %v1334, 0.5
    %vm1416 = vcmp.gt.f32.partialorder %v1335, 0.5
    %v1417 = vsel %vm1336, 1, 0
    %v1418 = vsel %vm1337, 1, 0
    %v1419 = vsel %vm1338, 1, 0
    %v1420 = vsel %vm1339, 1, 0
    %v1421 = vsel %vm1340, 1, 0
    %v1422 = vsel %vm1341, 1, 0
    %v1423 = vsel %vm1342, 1, 0
    %v1424 = vsel %vm1343, 1, 0
    %v1425 = vsel %vm1344, 1, 0
    %v1426 = vsel %vm1345, 1, 0
    %v1427 = vsel %vm1346, 1, 0
    %v1428 = vsel %vm1347, 1, 0
    %v1429 = vsel %vm1348, 1, 0
    %v1430 = vsel %vm1349, 1, 0
    %v1431 = vsel %vm1350, 1, 0
    %v1432 = vsel %vm1351, 1, 0
    %v1433 = vsel %vm1352, 1, 0
    %v1434 = vsel %vm1353, 1, 0
    %v1435 = vsel %vm1354, 1, 0
    %v1436 = vsel %vm1355, 1, 0
    %v1437 = vsel %vm1356, 1, 0
    %v1438 = vsel %vm1357, 1, 0
    %v1439 = vsel %vm1358, 1, 0
    %v1440 = vsel %vm1359, 1, 0
    %v1441 = vsel %vm1360, 1, 0
    %v1442 = vsel %vm1361, 1, 0
    %v1443 = vsel %vm1362, 1, 0
    %v1444 = vsel %vm1363, 1, 0
    %v1445 = vsel %vm1364, 1, 0
    %v1446 = vsel %vm1365, 1, 0
    %v1447 = vsel %vm1366, 1, 0
    %v1448 = vsel %vm1367, 1, 0
    %v1449 = vsel %vm1368, 1, 0
    %v1450 = vsel %vm1369, 1, 0
    %v1451 = vsel %vm1370, 1, 0
    %v1452 = vsel %vm1371, 1, 0
    %v1453 = vsel %vm1372, 1, 0
    %v1454 = vsel %vm1373, 1, 0
    %v1455 = vsel %vm1374, 1, 0
    %v1456 = vsel %vm1375, 1, 0
    %v1457 = vsel %vm1376, 1, 0
    %v1458 = vsel %vm1377, 1, 0
    %v1459 = vsel %vm1378, 1, 0
    %v1460 = vsel %vm1379, 1, 0
    %v1461 = vsel %vm1380, 1, 0
    %v1462 = vsel %vm1381, 1, 0
    %v1463 = vsel %vm1382, 1, 0
    %v1464 = vsel %vm1383, 1, 0
    %v1465 = vsel %vm1384, 1, 0
    %v1466 = vsel %vm1385, 1, 0
    %v1467 = vsel %vm1386, 1, 0
    %v1468 = vsel %vm1387, 1, 0
    %v1469 = vsel %vm1388, 1, 0
    %v1470 = vsel %vm1389, 1, 0
    %v1471 = vsel %vm1390, 1, 0
    %v1472 = vsel %vm1391, 1, 0
    %v1473 = vsel %vm1392, 1, 0
    %v1474 = vsel %vm1393, 1, 0
    %v1475 = vsel %vm1394, 1, 0
    %v1476 = vsel %vm1395, 1, 0
    %v1477 = vsel %vm1396, 1, 0
    %v1478 = vsel %vm1397, 1, 0
    %v1479 = vsel %vm1398, 1, 0
    %v1480 = vsel %vm1399, 1, 0
    %v1481 = vsel %vm1400, 1, 0
    %v1482 = vsel %vm1401, 1, 0
    %v1483 = vsel %vm1402, 1, 0
    %v1484 = vsel %vm1403, 1, 0
    %v1485 = vsel %vm1404, 1, 0
    %v1486 = vsel %vm1405, 1, 0
    %v1487 = vsel %vm1406, 1, 0
    %v1488 = vsel %vm1407, 1, 0
    %v1489 = vsel %vm1408, 1, 0
    %v1490 = vsel %vm1409, 1, 0
    %v1491 = vsel %vm1410, 1, 0
    %v1492 = vsel %vm1411, 1, 0
    %v1493 = vsel %vm1412, 1, 0
    %v1494 = vsel %vm1413, 1, 0
    %v1495 = vsel %vm1414, 1, 0
    %v1496 = vsel %vm1415, 1, 0
    %v1497 = vsel %vm1416, 1, 0
    %1498 = vset.pattern.permute.xlu0 0
    %1499 = vperm.xlu0 %1498, %v1417
    %v1500 = vpop.permute.xlu0 %1499
    %1501 = vset.pattern.permute.xlu0 0
    %1502 = vperm.xlu0 %1501, %v1418
    %v1503 = vpop.permute.xlu0 %1502
    %1504 = vset.pattern.permute.xlu0 0
    %1505 = vperm.xlu0 %1504, %v1419
    %v1506 = vpop.permute.xlu0 %1505
    %1507 = vset.pattern.permute.xlu0 0
    %1508 = vperm.xlu0 %1507, %v1420
    %v1509 = vpop.permute.xlu0 %1508
    %1510 = vset.pattern.permute.xlu0 0
    %1511 = vperm.xlu0 %1510, %v1421
    %v1512 = vpop.permute.xlu0 %1511
    %1513 = vset.pattern.permute.xlu0 0
    %1514 = vperm.xlu0 %1513, %v1422
    %v1515 = vpop.permute.xlu0 %1514
    %1516 = vset.pattern.permute.xlu0 0
    %1517 = vperm.xlu0 %1516, %v1423
    %v1518 = vpop.permute.xlu0 %1517
    %1519 = vset.pattern.permute.xlu0 0
    %1520 = vperm.xlu0 %1519, %v1424
    %v1521 = vpop.permute.xlu0 %1520
    %1522 = vset.pattern.permute.xlu0 0
    %1523 = vperm.xlu0 %1522, %v1425
    %v1524 = vpop.permute.xlu0 %1523
    %1525 = vset.pattern.permute.xlu0 0
    %1526 = vperm.xlu0 %1525, %v1426
    %v1527 = vpop.permute.xlu0 %1526
    %1528 = vset.pattern.permute.xlu0 0
    %1529 = vperm.xlu0 %1528, %v1427
    %v1530 = vpop.permute.xlu0 %1529
    %1531 = vset.pattern.permute.xlu0 0
    %1532 = vperm.xlu0 %1531, %v1428
    %v1533 = vpop.permute.xlu0 %1532
    %1534 = vset.pattern.permute.xlu0 0
    %1535 = vperm.xlu0 %1534, %v1429
    %v1536 = vpop.permute.xlu0 %1535
    %1537 = vset.pattern.permute.xlu0 0
    %1538 = vperm.xlu0 %1537, %v1430
    %v1539 = vpop.permute.xlu0 %1538
    %1540 = vset.pattern.permute.xlu0 0
    %1541 = vperm.xlu0 %1540, %v1431
    %v1542 = vpop.permute.xlu0 %1541
    %1543 = vset.pattern.permute.xlu0 0
    %1544 = vperm.xlu0 %1543, %v1432
    %v1545 = vpop.permute.xlu0 %1544
    %1546 = vset.pattern.permute.xlu0 0
    %1547 = vperm.xlu0 %1546, %v1433
    %v1548 = vpop.permute.xlu0 %1547
    %1549 = vset.pattern.permute.xlu0 0
    %1550 = vperm.xlu0 %1549, %v1434
    %v1551 = vpop.permute.xlu0 %1550
    %1552 = vset.pattern.permute.xlu0 0
    %1553 = vperm.xlu0 %1552, %v1435
    %v1554 = vpop.permute.xlu0 %1553
    %1555 = vset.pattern.permute.xlu0 0
    %1556 = vperm.xlu0 %1555, %v1436
    %v1557 = vpop.permute.xlu0 %1556
    %1558 = vset.pattern.permute.xlu0 0
    %1559 = vperm.xlu0 %1558, %v1437
    %v1560 = vpop.permute.xlu0 %1559
    %1561 = vset.pattern.permute.xlu0 0
    %1562 = vperm.xlu0 %1561, %v1438
    %v1563 = vpop.permute.xlu0 %1562
    %1564 = vset.pattern.permute.xlu0 0
    %1565 = vperm.xlu0 %1564, %v1439
    %v1566 = vpop.permute.xlu0 %1565
    %1567 = vset.pattern.permute.xlu0 0
    %1568 = vperm.xlu0 %1567, %v1440
    %v1569 = vpop.permute.xlu0 %1568
    %1570 = vset.pattern.permute.xlu0 0
    %1571 = vperm.xlu0 %1570, %v1441
    %v1572 = vpop.permute.xlu0 %1571
    %1573 = vset.pattern.permute.xlu0 0
    %1574 = vperm.xlu0 %1573, %v1442
    %v1575 = vpop.permute.xlu0 %1574
    %1576 = vset.pattern.permute.xlu0 0
    %1577 = vperm.xlu0 %1576, %v1443
    %v1578 = vpop.permute.xlu0 %1577
    %1579 = vset.pattern.permute.xlu0 0
    %1580 = vperm.xlu0 %1579, %v1444
    %v1581 = vpop.permute.xlu0 %1580
    %1582 = vset.pattern.permute.xlu0 0
    %1583 = vperm.xlu0 %1582, %v1445
    %v1584 = vpop.permute.xlu0 %1583
    %1585 = vset.pattern.permute.xlu0 0
    %1586 = vperm.xlu0 %1585, %v1446
    %v1587 = vpop.permute.xlu0 %1586
    %1588 = vset.pattern.permute.xlu0 0
    %1589 = vperm.xlu0 %1588, %v1447
    %v1590 = vpop.permute.xlu0 %1589
    %1591 = vset.pattern.permute.xlu0 0
    %1592 = vperm.xlu0 %1591, %v1448
    %v1593 = vpop.permute.xlu0 %1592
    %1594 = vset.pattern.permute.xlu0 0
    %1595 = vperm.xlu0 %1594, %v1449
    %v1596 = vpop.permute.xlu0 %1595
    %1597 = vset.pattern.permute.xlu0 0
    %1598 = vperm.xlu0 %1597, %v1450
    %v1599 = vpop.permute.xlu0 %1598
    %1600 = vset.pattern.permute.xlu0 0
    %1601 = vperm.xlu0 %1600, %v1451
    %v1602 = vpop.permute.xlu0 %1601
    %1603 = vset.pattern.permute.xlu0 0
    %1604 = vperm.xlu0 %1603, %v1452
    %v1605 = vpop.permute.xlu0 %1604
    %1606 = vset.pattern.permute.xlu0 0
    %1607 = vperm.xlu0 %1606, %v1453
    %v1608 = vpop.permute.xlu0 %1607
    %1609 = vset.pattern.permute.xlu0 0
    %1610 = vperm.xlu0 %1609, %v1454
    %v1611 = vpop.permute.xlu0 %1610
    %1612 = vset.pattern.permute.xlu0 0
    %1613 = vperm.xlu0 %1612, %v1455
    %v1614 = vpop.permute.xlu0 %1613
    %1615 = vset.pattern.permute.xlu0 0
    %1616 = vperm.xlu0 %1615, %v1456
    %v1617 = vpop.permute.xlu0 %1616
    %1618 = vset.pattern.permute.xlu0 0
    %1619 = vperm.xlu0 %1618, %v1457
    %v1620 = vpop.permute.xlu0 %1619
    %1621 = vset.pattern.permute.xlu0 0
    %1622 = vperm.xlu0 %1621, %v1458
    %v1623 = vpop.permute.xlu0 %1622
    %1624 = vset.pattern.permute.xlu0 0
    %1625 = vperm.xlu0 %1624, %v1459
    %v1626 = vpop.permute.xlu0 %1625
    %1627 = vset.pattern.permute.xlu0 0
    %1628 = vperm.xlu0 %1627, %v1460
    %v1629 = vpop.permute.xlu0 %1628
    %1630 = vset.pattern.permute.xlu0 0
    %1631 = vperm.xlu0 %1630, %v1461
    %v1632 = vpop.permute.xlu0 %1631
    %1633 = vset.pattern.permute.xlu0 0
    %1634 = vperm.xlu0 %1633, %v1462
    %v1635 = vpop.permute.xlu0 %1634
    %1636 = vset.pattern.permute.xlu0 0
    %1637 = vperm.xlu0 %1636, %v1463
    %v1638 = vpop.permute.xlu0 %1637
    %1639 = vset.pattern.permute.xlu0 0
    %1640 = vperm.xlu0 %1639, %v1464
    %v1641 = vpop.permute.xlu0 %1640
    %1642 = vset.pattern.permute.xlu0 0
    %1643 = vperm.xlu0 %1642, %v1465
    %v1644 = vpop.permute.xlu0 %1643
    %1645 = vset.pattern.permute.xlu0 0
    %1646 = vperm.xlu0 %1645, %v1466
    %v1647 = vpop.permute.xlu0 %1646
    %1648 = vset.pattern.permute.xlu0 0
    %1649 = vperm.xlu0 %1648, %v1467
    %v1650 = vpop.permute.xlu0 %1649
    %1651 = vset.pattern.permute.xlu0 0
    %1652 = vperm.xlu0 %1651, %v1468
    %v1653 = vpop.permute.xlu0 %1652
    %1654 = vset.pattern.permute.xlu0 0
    %1655 = vperm.xlu0 %1654, %v1469
    %v1656 = vpop.permute.xlu0 %1655
    %1657 = vset.pattern.permute.xlu0 0
    %1658 = vperm.xlu0 %1657, %v1470
    %v1659 = vpop.permute.xlu0 %1658
    %1660 = vset.pattern.permute.xlu0 0
    %1661 = vperm.xlu0 %1660, %v1471
    %v1662 = vpop.permute.xlu0 %1661
    %1663 = vset.pattern.permute.xlu0 0
    %1664 = vperm.xlu0 %1663, %v1472
    %v1665 = vpop.permute.xlu0 %1664
    %1666 = vset.pattern.permute.xlu0 0
    %1667 = vperm.xlu0 %1666, %v1473
    %v1668 = vpop.permute.xlu0 %1667
    %1669 = vset.pattern.permute.xlu0 0
    %1670 = vperm.xlu0 %1669, %v1474
    %v1671 = vpop.permute.xlu0 %1670
    %1672 = vset.pattern.permute.xlu0 0
    %1673 = vperm.xlu0 %1672, %v1475
    %v1674 = vpop.permute.xlu0 %1673
    %1675 = vset.pattern.permute.xlu0 0
    %1676 = vperm.xlu0 %1675, %v1476
    %v1677 = vpop.permute.xlu0 %1676
    %1678 = vset.pattern.permute.xlu0 0
    %1679 = vperm.xlu0 %1678, %v1477
    %v1680 = vpop.permute.xlu0 %1679
    %1681 = vset.pattern.permute.xlu0 0
    %1682 = vperm.xlu0 %1681, %v1478
    %v1683 = vpop.permute.xlu0 %1682
    %1684 = vset.pattern.permute.xlu0 0
    %1685 = vperm.xlu0 %1684, %v1479
    %v1686 = vpop.permute.xlu0 %1685
    %1687 = vset.pattern.permute.xlu0 0
    %1688 = vperm.xlu0 %1687, %v1480
    %v1689 = vpop.permute.xlu0 %1688
    %1690 = vset.pattern.permute.xlu0 0
    %1691 = vperm.xlu0 %1690, %v1481
    %v1692 = vpop.permute.xlu0 %1691
    %1693 = vset.pattern.permute.xlu0 0
    %1694 = vperm.xlu0 %1693, %v1482
    %v1695 = vpop.permute.xlu0 %1694
    %1696 = vset.pattern.permute.xlu0 0
    %1697 = vperm.xlu0 %1696, %v1483
    %v1698 = vpop.permute.xlu0 %1697
    %1699 = vset.pattern.permute.xlu0 0
    %1700 = vperm.xlu0 %1699, %v1484
    %v1701 = vpop.permute.xlu0 %1700
    %1702 = vset.pattern.permute.xlu0 0
    %1703 = vperm.xlu0 %1702, %v1485
    %v1704 = vpop.permute.xlu0 %1703
    %1705 = vset.pattern.permute.xlu0 0
    %1706 = vperm.xlu0 %1705, %v1486
    %v1707 = vpop.permute.xlu0 %1706
    %1708 = vset.pattern.permute.xlu0 0
    %1709 = vperm.xlu0 %1708, %v1487
    %v1710 = vpop.permute.xlu0 %1709
    %1711 = vset.pattern.permute.xlu0 0
    %1712 = vperm.xlu0 %1711, %v1488
    %v1713 = vpop.permute.xlu0 %1712
    %1714 = vset.pattern.permute.xlu0 0
    %1715 = vperm.xlu0 %1714, %v1489
    %v1716 = vpop.permute.xlu0 %1715
    %1717 = vset.pattern.permute.xlu0 0
    %1718 = vperm.xlu0 %1717, %v1490
    %v1719 = vpop.permute.xlu0 %1718
    %1720 = vset.pattern.permute.xlu0 0
    %1721 = vperm.xlu0 %1720, %v1491
    %v1722 = vpop.permute.xlu0 %1721
    %1723 = vset.pattern.permute.xlu0 0
    %1724 = vperm.xlu0 %1723, %v1492
    %v1725 = vpop.permute.xlu0 %1724
    %1726 = vset.pattern.permute.xlu0 0
    %1727 = vperm.xlu0 %1726, %v1493
    %v1728 = vpop.permute.xlu0 %1727
    %1729 = vset.pattern.permute.xlu0 0
    %1730 = vperm.xlu0 %1729, %v1494
    %v1731 = vpop.permute.xlu0 %1730
    %1732 = vset.pattern.permute.xlu0 0
    %1733 = vperm.xlu0 %1732, %v1495
    %v1734 = vpop.permute.xlu0 %1733
    %1735 = vset.pattern.permute.xlu0 0
    %1736 = vperm.xlu0 %1735, %v1496
    %v1737 = vpop.permute.xlu0 %1736
    %1738 = vset.pattern.permute.xlu0 0
    %1739 = vperm.xlu0 %1738, %v1497
    %v1740 = vpop.permute.xlu0 %1739
    %vm1741 = vcmp.eq.s32.totalorder %v1500, 1
    %vm1742 = vcmp.eq.s32.totalorder %v1503, 1
    %vm1743 = vcmp.eq.s32.totalorder %v1506, 1
    %vm1744 = vcmp.eq.s32.totalorder %v1509, 1
    %vm1745 = vcmp.eq.s32.totalorder %v1512, 1
    %vm1746 = vcmp.eq.s32.totalorder %v1515, 1
    %vm1747 = vcmp.eq.s32.totalorder %v1518, 1
    %vm1748 = vcmp.eq.s32.totalorder %v1521, 1
    %vm1749 = vcmp.eq.s32.totalorder %v1524, 1
    %vm1750 = vcmp.eq.s32.totalorder %v1527, 1
    %vm1751 = vcmp.eq.s32.totalorder %v1530, 1
    %vm1752 = vcmp.eq.s32.totalorder %v1533, 1
    %vm1753 = vcmp.eq.s32.totalorder %v1536, 1
    %vm1754 = vcmp.eq.s32.totalorder %v1539, 1
    %vm1755 = vcmp.eq.s32.totalorder %v1542, 1
    %vm1756 = vcmp.eq.s32.totalorder %v1545, 1
    %vm1757 = vcmp.eq.s32.totalorder %v1548, 1
    %vm1758 = vcmp.eq.s32.totalorder %v1551, 1
    %vm1759 = vcmp.eq.s32.totalorder %v1554, 1
    %vm1760 = vcmp.eq.s32.totalorder %v1557, 1
    %vm1761 = vcmp.eq.s32.totalorder %v1560, 1
    %vm1762 = vcmp.eq.s32.totalorder %v1563, 1
    %vm1763 = vcmp.eq.s32.totalorder %v1566, 1
    %vm1764 = vcmp.eq.s32.totalorder %v1569, 1
    %vm1765 = vcmp.eq.s32.totalorder %v1572, 1
    %vm1766 = vcmp.eq.s32.totalorder %v1575, 1
    %vm1767 = vcmp.eq.s32.totalorder %v1578, 1
    %vm1768 = vcmp.eq.s32.totalorder %v1581, 1
    %vm1769 = vcmp.eq.s32.totalorder %v1584, 1
    %vm1770 = vcmp.eq.s32.totalorder %v1587, 1
    %vm1771 = vcmp.eq.s32.totalorder %v1590, 1
    %vm1772 = vcmp.eq.s32.totalorder %v1593, 1
    %vm1773 = vcmp.eq.s32.totalorder %v1596, 1
    %vm1774 = vcmp.eq.s32.totalorder %v1599, 1
    %vm1775 = vcmp.eq.s32.totalorder %v1602, 1
    %vm1776 = vcmp.eq.s32.totalorder %v1605, 1
    %vm1777 = vcmp.eq.s32.totalorder %v1608, 1
    %vm1778 = vcmp.eq.s32.totalorder %v1611, 1
    %vm1779 = vcmp.eq.s32.totalorder %v1614, 1
    %vm1780 = vcmp.eq.s32.totalorder %v1617, 1
    %vm1781 = vcmp.eq.s32.totalorder %v1620, 1
    %vm1782 = vcmp.eq.s32.totalorder %v1623, 1
    %vm1783 = vcmp.eq.s32.totalorder %v1626, 1
    %vm1784 = vcmp.eq.s32.totalorder %v1629, 1
    %vm1785 = vcmp.eq.s32.totalorder %v1632, 1
    %vm1786 = vcmp.eq.s32.totalorder %v1635, 1
    %vm1787 = vcmp.eq.s32.totalorder %v1638, 1
    %vm1788 = vcmp.eq.s32.totalorder %v1641, 1
    %vm1789 = vcmp.eq.s32.totalorder %v1644, 1
    %vm1790 = vcmp.eq.s32.totalorder %v1647, 1
    %vm1791 = vcmp.eq.s32.totalorder %v1650, 1
    %vm1792 = vcmp.eq.s32.totalorder %v1653, 1
    %vm1793 = vcmp.eq.s32.totalorder %v1656, 1
    %vm1794 = vcmp.eq.s32.totalorder %v1659, 1
    %vm1795 = vcmp.eq.s32.totalorder %v1662, 1
    %vm1796 = vcmp.eq.s32.totalorder %v1665, 1
    %vm1797 = vcmp.eq.s32.totalorder %v1668, 1
    %vm1798 = vcmp.eq.s32.totalorder %v1671, 1
    %vm1799 = vcmp.eq.s32.totalorder %v1674, 1
    %vm1800 = vcmp.eq.s32.totalorder %v1677, 1
    %vm1801 = vcmp.eq.s32.totalorder %v1680, 1
    %vm1802 = vcmp.eq.s32.totalorder %v1683, 1
    %vm1803 = vcmp.eq.s32.totalorder %v1686, 1
    %vm1804 = vcmp.eq.s32.totalorder %v1689, 1
    %vm1805 = vcmp.eq.s32.totalorder %v1692, 1
    %vm1806 = vcmp.eq.s32.totalorder %v1695, 1
    %vm1807 = vcmp.eq.s32.totalorder %v1698, 1
    %vm1808 = vcmp.eq.s32.totalorder %v1701, 1
    %vm1809 = vcmp.eq.s32.totalorder %v1704, 1
    %vm1810 = vcmp.eq.s32.totalorder %v1707, 1
    %vm1811 = vcmp.eq.s32.totalorder %v1710, 1
    %vm1812 = vcmp.eq.s32.totalorder %v1713, 1
    %vm1813 = vcmp.eq.s32.totalorder %v1716, 1
    %vm1814 = vcmp.eq.s32.totalorder %v1719, 1
    %vm1815 = vcmp.eq.s32.totalorder %v1722, 1
    %vm1816 = vcmp.eq.s32.totalorder %v1725, 1
    %vm1817 = vcmp.eq.s32.totalorder %v1728, 1
    %vm1818 = vcmp.eq.s32.totalorder %v1731, 1
    %vm1819 = vcmp.eq.s32.totalorder %v1734, 1
    %vm1820 = vcmp.eq.s32.totalorder %v1737, 1
    %vm1821 = vcmp.eq.s32.totalorder %v1740, 1
    %v1822 = vsel %vm1741, %v1174, 0.0
    %v1823 = vsel %vm1742, %v1175, 0.0
    %v1824 = vsel %vm1743, %v1176, 0.0
    %v1825 = vsel %vm1744, %v1177, 0.0
    %v1826 = vsel %vm1745, %v1178, 0.0
    %v1827 = vsel %vm1746, %v1179, 0.0
    %v1828 = vsel %vm1747, %v1180, 0.0
    %v1829 = vsel %vm1748, %v1181, 0.0
    %v1830 = vsel %vm1749, %v1182, 0.0
    %v1831 = vsel %vm1750, %v1183, 0.0
    %v1832 = vsel %vm1751, %v1184, 0.0
    %v1833 = vsel %vm1752, %v1185, 0.0
    %v1834 = vsel %vm1753, %v1186, 0.0
    %v1835 = vsel %vm1754, %v1187, 0.0
    %v1836 = vsel %vm1755, %v1188, 0.0
    %v1837 = vsel %vm1756, %v1189, 0.0
    %v1838 = vsel %vm1757, %v1190, 0.0
    %v1839 = vsel %vm1758, %v1191, 0.0
    %v1840 = vsel %vm1759, %v1192, 0.0
    %v1841 = vsel %vm1760, %v1193, 0.0
    %v1842 = vsel %vm1761, %v1194, 0.0
    %v1843 = vsel %vm1762, %v1195, 0.0
    %v1844 = vsel %vm1763, %v1196, 0.0
    %v1845 = vsel %vm1764, %v1197, 0.0
    %v1846 = vsel %vm1765, %v1198, 0.0
    %v1847 = vsel %vm1766, %v1199, 0.0
    %v1848 = vsel %vm1767, %v1200, 0.0
    %v1849 = vsel %vm1768, %v1201, 0.0
    %v1850 = vsel %vm1769, %v1202, 0.0
    %v1851 = vsel %vm1770, %v1203, 0.0
    %v1852 = vsel %vm1771, %v1204, 0.0
    %v1853 = vsel %vm1772, %v1205, 0.0
    %v1854 = vsel %vm1773, %v1206, 0.0
    %v1855 = vsel %vm1774, %v1207, 0.0
    %v1856 = vsel %vm1775, %v1208, 0.0
    %v1857 = vsel %vm1776, %v1209, 0.0
    %v1858 = vsel %vm1777, %v1210, 0.0
    %v1859 = vsel %vm1778, %v1211, 0.0
    %v1860 = vsel %vm1779, %v1212, 0.0
    %v1861 = vsel %vm1780, %v1213, 0.0
    %v1862 = vsel %vm1781, %v1214, 0.0
    %v1863 = vsel %vm1782, %v1215, 0.0
    %v1864 = vsel %vm1783, %v1216, 0.0
    %v1865 = vsel %vm1784, %v1217, 0.0
    %v1866 = vsel %vm1785, %v1218, 0.0
    %v1867 = vsel %vm1786, %v1219, 0.0
    %v1868 = vsel %vm1787, %v1220, 0.0
    %v1869 = vsel %vm1788, %v1221, 0.0
    %v1870 = vsel %vm1789, %v1222, 0.0
    %v1871 = vsel %vm1790, %v1223, 0.0
    %v1872 = vsel %vm1791, %v1224, 0.0
    %v1873 = vsel %vm1792, %v1225, 0.0
    %v1874 = vsel %vm1793, %v1226, 0.0
    %v1875 = vsel %vm1794, %v1227, 0.0
    %v1876 = vsel %vm1795, %v1228, 0.0
    %v1877 = vsel %vm1796, %v1229, 0.0
    %v1878 = vsel %vm1797, %v1230, 0.0
    %v1879 = vsel %vm1798, %v1231, 0.0
    %v1880 = vsel %vm1799, %v1232, 0.0
    %v1881 = vsel %vm1800, %v1233, 0.0
    %v1882 = vsel %vm1801, %v1234, 0.0
    %v1883 = vsel %vm1802, %v1235, 0.0
    %v1884 = vsel %vm1803, %v1236, 0.0
    %v1885 = vsel %vm1804, %v1237, 0.0
    %v1886 = vsel %vm1805, %v1238, 0.0
    %v1887 = vsel %vm1806, %v1239, 0.0
    %v1888 = vsel %vm1807, %v1240, 0.0
    %v1889 = vsel %vm1808, %v1241, 0.0
    %v1890 = vsel %vm1809, %v1242, 0.0
    %v1891 = vsel %vm1810, %v1243, 0.0
    %v1892 = vsel %vm1811, %v1244, 0.0
    %v1893 = vsel %vm1812, %v1245, 0.0
    %v1894 = vsel %vm1813, %v1246, 0.0
    %v1895 = vsel %vm1814, %v1247, 0.0
    %v1896 = vsel %vm1815, %v1248, 0.0
    %v1897 = vsel %vm1816, %v1249, 0.0
    %v1898 = vsel %vm1817, %v1250, 0.0
    %v1899 = vsel %vm1818, %v1251, 0.0
    %v1900 = vsel %vm1819, %v1252, 0.0
    %v1901 = vsel %vm1820, %v1253, 0.0
    %v1902 = vsel %vm1821, %v1254, 0.0
    %1903 = vst.msk [vmem:[#allocation2 + $0x18] sm:$0xff] %vm63, %v1822
    %1904 = vst.msk [vmem:[#allocation2 + $0x20] sm:$0xff] %vm63, %v1823
    %1905 = vst.msk [vmem:[#allocation2 + $0x28] sm:$0xff] %vm63, %v1824
    %1906 = vst.msk [vmem:[#allocation2 + $0x30] sm:$0xff] %vm63, %v1825
    %1907 = vst.msk [vmem:[#allocation2 + $0x38] sm:$0xff] %vm63, %v1826
    %1908 = vst.msk [vmem:[#allocation2 + $0x40] sm:$0xff] %vm63, %v1827
    %1909 = vst.msk [vmem:[#allocation2 + $0x48] sm:$0xff] %vm63, %v1828
    %1910 = vst.msk [vmem:[#allocation2 + $0x50] sm:$0xff] %vm63, %v1829
    %1911 = vst.msk [vmem:[#allocation2 + $0x58] sm:$0xff] %vm63, %v1830
    %1912 = vst.msk [vmem:[#allocation2 + $0x60] sm:$0xff] %vm63, %v1831
    %1913 = vst.msk [vmem:[#allocation2 + $0x68] sm:$0xff] %vm63, %v1832
    %1914 = vst.msk [vmem:[#allocation2 + $0x70] sm:$0xff] %vm63, %v1833
    %1915 = vst.msk [vmem:[#allocation2 + $0x78] sm:$0xff] %vm63, %v1834
    %1916 = vst.msk [vmem:[#allocation2 + $0x80] sm:$0xff] %vm63, %v1835
    %1917 = vst.msk [vmem:[#allocation2 + $0x88] sm:$0xff] %vm63, %v1836
    %1918 = vst.msk [vmem:[#allocation2 + $0x90] sm:$0xff] %vm63, %v1837
    %1919 = vst.msk [vmem:[#allocation2 + $0x98] sm:$0xff] %vm63, %v1838
    %1920 = vst.msk [vmem:[#allocation2 + $0xa0] sm:$0xff] %vm63, %v1839
    %1921 = vst.msk [vmem:[#allocation2 + $0xa8] sm:$0xff] %vm63, %v1840
    %1922 = vst.msk [vmem:[#allocation2 + $0xb0] sm:$0xff] %vm63, %v1841
    %1923 = vst.msk [vmem:[#allocation2 + $0xb8] sm:$0xff] %vm63, %v1842
    %1924 = vst.msk [vmem:[#allocation2 + $0xc0] sm:$0xff] %vm63, %v1843
    %1925 = vst.msk [vmem:[#allocation2 + $0xc8] sm:$0xff] %vm63, %v1844
    %1926 = vst.msk [vmem:[#allocation2 + $0xd0] sm:$0xff] %vm63, %v1845
    %1927 = vst.msk [vmem:[#allocation2 + $0xd8] sm:$0xff] %vm63, %v1846
    %1928 = vst.msk [vmem:[#allocation2 + $0xe0] sm:$0xff] %vm63, %v1847
    %1929 = vst.msk [vmem:[#allocation2 + $0xe8] sm:$0xff] %vm63, %v1848
    %1930 = vst.msk [vmem:[#allocation2 + $0xf0] sm:$0xff] %vm63, %v1849
    %1931 = vst.msk [vmem:[#allocation2 + $0xf8] sm:$0xff] %vm63, %v1850
    %1932 = vst.msk [vmem:[#allocation2 + $0x100] sm:$0xff] %vm63, %v1851
    %1933 = vst.msk [vmem:[#allocation2 + $0x108] sm:$0xff] %vm63, %v1852
    %1934 = vst.msk [vmem:[#allocation2 + $0x110] sm:$0xff] %vm63, %v1853
    %1935 = vst.msk [vmem:[#allocation2 + $0x118] sm:$0xff] %vm63, %v1854
    %1936 = vst.msk [vmem:[#allocation2 + $0x120] sm:$0xff] %vm63, %v1855
    %1937 = vst.msk [vmem:[#allocation2 + $0x128] sm:$0xff] %vm63, %v1856
    %1938 = vst.msk [vmem:[#allocation2 + $0x130] sm:$0xff] %vm63, %v1857
    %1939 = vst.msk [vmem:[#allocation2 + $0x138] sm:$0xff] %vm63, %v1858
    %1940 = vst.msk [vmem:[#allocation2 + $0x140] sm:$0xff] %vm63, %v1859
    %1941 = vst.msk [vmem:[#allocation2 + $0x148] sm:$0xff] %vm63, %v1860
    %1942 = vst.msk [vmem:[#allocation2 + $0x150] sm:$0xff] %vm63, %v1861
    %1943 = vst.msk [vmem:[#allocation2 + $0x158] sm:$0xff] %vm63, %v1862
    %1944 = vst.msk [vmem:[#allocation2 + $0x160] sm:$0xff] %vm63, %v1863
    %1945 = vst.msk [vmem:[#allocation2 + $0x168] sm:$0xff] %vm63, %v1864
    %1946 = vst.msk [vmem:[#allocation2 + $0x170] sm:$0xff] %vm63, %v1865
    %1947 = vst.msk [vmem:[#allocation2 + $0x178] sm:$0xff] %vm63, %v1866
    %1948 = vst.msk [vmem:[#allocation2 + $0x180] sm:$0xff] %vm63, %v1867
    %1949 = vst.msk [vmem:[#allocation2 + $0x188] sm:$0xff] %vm63, %v1868
    %1950 = vst.msk [vmem:[#allocation2 + $0x190] sm:$0xff] %vm63, %v1869
    %1951 = vst.msk [vmem:[#allocation2 + $0x198] sm:$0xff] %vm63, %v1870
    %1952 = vst.msk [vmem:[#allocation2 + $0x1a0] sm:$0xff] %vm63, %v1871
    %1953 = vst.msk [vmem:[#allocation2 + $0x1a8] sm:$0xff] %vm63, %v1872
    %1954 = vst.msk [vmem:[#allocation2 + $0x1b0] sm:$0xff] %vm63, %v1873
    %1955 = vst.msk [vmem:[#allocation2 + $0x1b8] sm:$0xff] %vm63, %v1874
    %1956 = vst.msk [vmem:[#allocation2 + $0x1c0] sm:$0xff] %vm63, %v1875
    %1957 = vst.msk [vmem:[#allocation2 + $0x1c8] sm:$0xff] %vm63, %v1876
    %1958 = vst.msk [vmem:[#allocation2 + $0x1d0] sm:$0xff] %vm63, %v1877
    %1959 = vst.msk [vmem:[#allocation2 + $0x1d8] sm:$0xff] %vm63, %v1878
    %1960 = vst.msk [vmem:[#allocation2 + $0x1e0] sm:$0xff] %vm63, %v1879
    %1961 = vst.msk [vmem:[#allocation2 + $0x1e8] sm:$0xff] %vm63, %v1880
    %1962 = vst.msk [vmem:[#allocation2 + $0x1f0] sm:$0xff] %vm63, %v1881
    %1963 = vst.msk [vmem:[#allocation2 + $0x1f8] sm:$0xff] %vm63, %v1882
    %1964 = vst.msk [vmem:[#allocation2 + $0x200] sm:$0xff] %vm63, %v1883
    %1965 = vst.msk [vmem:[#allocation2 + $0x208] sm:$0xff] %vm63, %v1884
    %1966 = vst.msk [vmem:[#allocation2 + $0x210] sm:$0xff] %vm63, %v1885
    %1967 = vst.msk [vmem:[#allocation2 + $0x218] sm:$0xff] %vm63, %v1886
    %1968 = vst.msk [vmem:[#allocation2 + $0x220] sm:$0xff] %vm63, %v1887
    %1969 = vst.msk [vmem:[#allocation2 + $0x228] sm:$0xff] %vm63, %v1888
    %1970 = vst.msk [vmem:[#allocation2 + $0x230] sm:$0xff] %vm63, %v1889
    %1971 = vst.msk [vmem:[#allocation2 + $0x238] sm:$0xff] %vm63, %v1890
    %1972 = vst.msk [vmem:[#allocation2 + $0x240] sm:$0xff] %vm63, %v1891
    %1973 = vst.msk [vmem:[#allocation2 + $0x248] sm:$0xff] %vm63, %v1892
    %1974 = vst.msk [vmem:[#allocation2 + $0x250] sm:$0xff] %vm63, %v1893
    %1975 = vst.msk [vmem:[#allocation2 + $0x258] sm:$0xff] %vm63, %v1894
    %1976 = vst.msk [vmem:[#allocation2 + $0x260] sm:$0xff] %vm63, %v1895
    %1977 = vst.msk [vmem:[#allocation2 + $0x268] sm:$0xff] %vm63, %v1896
    %1978 = vst.msk [vmem:[#allocation2 + $0x270] sm:$0xff] %vm63, %v1897
    %1979 = vst.msk [vmem:[#allocation2 + $0x278] sm:$0xff] %vm63, %v1898
    %1980 = vst.msk [vmem:[#allocation2 + $0x280] sm:$0xff] %vm63, %v1899
    %1981 = vst.msk [vmem:[#allocation2 + $0x288] sm:$0xff] %vm63, %v1900
    %1982 = vst.msk [vmem:[#allocation2 + $0x290] sm:$0xff] %vm63, %v1901
    %1983 = vst.msk [vmem:[#allocation2 + $0x298] sm:$0xff] %vm63, %v1902
    %v1984 = vld [vmem:[#allocation2 + $0x5] sm:$0xff]
    %v1985 = vld [vmem:[#allocation2 + $0xd] sm:$0xff]
    %v1986 = vld [vmem:[#allocation2 + $0x15] sm:$0xff]
    %v1987 = vld [vmem:[#allocation2 + $0x1d] sm:$0xff]
    %v1988 = vld [vmem:[#allocation2 + $0x25] sm:$0xff]
    %v1989 = vld [vmem:[#allocation2 + $0x2d] sm:$0xff]
    %v1990 = vld [vmem:[#allocation2 + $0x35] sm:$0xff]
    %v1991 = vld [vmem:[#allocation2 + $0x3d] sm:$0xff]
    %v1992 = vld [vmem:[#allocation2 + $0x45] sm:$0xff]
    %v1993 = vld [vmem:[#allocation2 + $0x4d] sm:$0xff]
    %v1994 = vld [vmem:[#allocation2 + $0x55] sm:$0xff]
    %v1995 = vld [vmem:[#allocation2 + $0x5d] sm:$0xff]
    %v1996 = vld [vmem:[#allocation2 + $0x65] sm:$0xff]
    %v1997 = vld [vmem:[#allocation2 + $0x6d] sm:$0xff]
    %v1998 = vld [vmem:[#allocation2 + $0x75] sm:$0xff]
    %v1999 = vld [vmem:[#allocation2 + $0x7d] sm:$0xff]
    %v2000 = vld [vmem:[#allocation2 + $0x85] sm:$0xff]
    %v2001 = vld [vmem:[#allocation2 + $0x8d] sm:$0xff]
    %v2002 = vld [vmem:[#allocation2 + $0x95] sm:$0xff]
    %v2003 = vld [vmem:[#allocation2 + $0x9d] sm:$0xff]
    %v2004 = vld [vmem:[#allocation2 + $0xa5] sm:$0xff]
    %v2005 = vld [vmem:[#allocation2 + $0xad] sm:$0xff]
    %v2006 = vld [vmem:[#allocation2 + $0xb5] sm:$0xff]
    %v2007 = vld [vmem:[#allocation2 + $0xbd] sm:$0xff]
    %v2008 = vld [vmem:[#allocation2 + $0xc5] sm:$0xff]
    %v2009 = vld [vmem:[#allocation2 + $0xcd] sm:$0xff]
    %v2010 = vld [vmem:[#allocation2 + $0xd5] sm:$0xff]
    %v2011 = vld [vmem:[#allocation2 + $0xdd] sm:$0xff]
    %v2012 = vld [vmem:[#allocation2 + $0xe5] sm:$0xff]
    %v2013 = vld [vmem:[#allocation2 + $0xed] sm:$0xff]
    %v2014 = vld [vmem:[#allocation2 + $0xf5] sm:$0xff]
    %v2015 = vld [vmem:[#allocation2 + $0xfd] sm:$0xff]
    %v2016 = vld [vmem:[#allocation2 + $0x105] sm:$0xff]
    %v2017 = vld [vmem:[#allocation2 + $0x10d] sm:$0xff]
    %v2018 = vld [vmem:[#allocation2 + $0x115] sm:$0xff]
    %v2019 = vld [vmem:[#allocation2 + $0x11d] sm:$0xff]
    %v2020 = vld [vmem:[#allocation2 + $0x125] sm:$0xff]
    %v2021 = vld [vmem:[#allocation2 + $0x12d] sm:$0xff]
    %v2022 = vld [vmem:[#allocation2 + $0x135] sm:$0xff]
    %v2023 = vld [vmem:[#allocation2 + $0x13d] sm:$0xff]
    %v2024 = vld [vmem:[#allocation2 + $0x145] sm:$0xff]
    %v2025 = vld [vmem:[#allocation2 + $0x14d] sm:$0xff]
    %v2026 = vld [vmem:[#allocation2 + $0x155] sm:$0xff]
    %v2027 = vld [vmem:[#allocation2 + $0x15d] sm:$0xff]
    %v2028 = vld [vmem:[#allocation2 + $0x165] sm:$0xff]
    %v2029 = vld [vmem:[#allocation2 + $0x16d] sm:$0xff]
    %v2030 = vld [vmem:[#allocation2 + $0x175] sm:$0xff]
    %v2031 = vld [vmem:[#allocation2 + $0x17d] sm:$0xff]
    %v2032 = vld [vmem:[#allocation2 + $0x185] sm:$0xff]
    %v2033 = vld [vmem:[#allocation2 + $0x18d] sm:$0xff]
    %v2034 = vld [vmem:[#allocation2 + $0x195] sm:$0xff]
    %v2035 = vld [vmem:[#allocation2 + $0x19d] sm:$0xff]
    %v2036 = vld [vmem:[#allocation2 + $0x1a5] sm:$0xff]
    %v2037 = vld [vmem:[#allocation2 + $0x1ad] sm:$0xff]
    %v2038 = vld [vmem:[#allocation2 + $0x1b5] sm:$0xff]
    %v2039 = vld [vmem:[#allocation2 + $0x1bd] sm:$0xff]
    %v2040 = vld [vmem:[#allocation2 + $0x1c5] sm:$0xff]
    %v2041 = vld [vmem:[#allocation2 + $0x1cd] sm:$0xff]
    %v2042 = vld [vmem:[#allocation2 + $0x1d5] sm:$0xff]
    %v2043 = vld [vmem:[#allocation2 + $0x1dd] sm:$0xff]
    %v2044 = vld [vmem:[#allocation2 + $0x1e5] sm:$0xff]
    %v2045 = vld [vmem:[#allocation2 + $0x1ed] sm:$0xff]
    %v2046 = vld [vmem:[#allocation2 + $0x1f5] sm:$0xff]
    %v2047 = vld [vmem:[#allocation2 + $0x1fd] sm:$0xff]
    %v2048 = vld [vmem:[#allocation2 + $0x205] sm:$0xff]
    %v2049 = vld [vmem:[#allocation2 + $0x20d] sm:$0xff]
    %v2050 = vld [vmem:[#allocation2 + $0x215] sm:$0xff]
    %v2051 = vld [vmem:[#allocation2 + $0x21d] sm:$0xff]
    %v2052 = vld [vmem:[#allocation2 + $0x225] sm:$0xff]
    %v2053 = vld [vmem:[#allocation2 + $0x22d] sm:$0xff]
    %v2054 = vld [vmem:[#allocation2 + $0x235] sm:$0xff]
    %v2055 = vld [vmem:[#allocation2 + $0x23d] sm:$0xff]
    %v2056 = vld [vmem:[#allocation2 + $0x245] sm:$0xff]
    %v2057 = vld [vmem:[#allocation2 + $0x24d] sm:$0xff]
    %v2058 = vld [vmem:[#allocation2 + $0x255] sm:$0xff]
    %v2059 = vld [vmem:[#allocation2 + $0x25d] sm:$0xff]
    %v2060 = vld [vmem:[#allocation2 + $0x265] sm:$0xff]
    %v2061 = vld [vmem:[#allocation2 + $0x26d] sm:$0xff]
    %v2062 = vld [vmem:[#allocation2 + $0x275] sm:$0xff]
    %v2063 = vld [vmem:[#allocation2 + $0x27d] sm:$0xff]
    %v2064 = vld [vmem:[#allocation2 + $0x285] sm:$0xff]
    %v2065 = vld [vmem:[#allocation2 + $0x6] sm:$0xff]
    %v2066 = vld [vmem:[#allocation2 + $0xe] sm:$0xff]
    %v2067 = vld [vmem:[#allocation2 + $0x16] sm:$0xff]
    %v2068 = vld [vmem:[#allocation2 + $0x1e] sm:$0xff]
    %v2069 = vld [vmem:[#allocation2 + $0x26] sm:$0xff]
    %v2070 = vld [vmem:[#allocation2 + $0x2e] sm:$0xff]
    %v2071 = vld [vmem:[#allocation2 + $0x36] sm:$0xff]
    %v2072 = vld [vmem:[#allocation2 + $0x3e] sm:$0xff]
    %v2073 = vld [vmem:[#allocation2 + $0x46] sm:$0xff]
    %v2074 = vld [vmem:[#allocation2 + $0x4e] sm:$0xff]
    %v2075 = vld [vmem:[#allocation2 + $0x56] sm:$0xff]
    %v2076 = vld [vmem:[#allocation2 + $0x5e] sm:$0xff]
    %v2077 = vld [vmem:[#allocation2 + $0x66] sm:$0xff]
    %v2078 = vld [vmem:[#allocation2 + $0x6e] sm:$0xff]
    %v2079 = vld [vmem:[#allocation2 + $0x76] sm:$0xff]
    %v2080 = vld [vmem:[#allocation2 + $0x7e] sm:$0xff]
    %v2081 = vld [vmem:[#allocation2 + $0x86] sm:$0xff]
    %v2082 = vld [vmem:[#allocation2 + $0x8e] sm:$0xff]
    %v2083 = vld [vmem:[#allocation2 + $0x96] sm:$0xff]
    %v2084 = vld [vmem:[#allocation2 + $0x9e] sm:$0xff]
    %v2085 = vld [vmem:[#allocation2 + $0xa6] sm:$0xff]
    %v2086 = vld [vmem:[#allocation2 + $0xae] sm:$0xff]
    %v2087 = vld [vmem:[#allocation2 + $0xb6] sm:$0xff]
    %v2088 = vld [vmem:[#allocation2 + $0xbe] sm:$0xff]
    %v2089 = vld [vmem:[#allocation2 + $0xc6] sm:$0xff]
    %v2090 = vld [vmem:[#allocation2 + $0xce] sm:$0xff]
    %v2091 = vld [vmem:[#allocation2 + $0xd6] sm:$0xff]
    %v2092 = vld [vmem:[#allocation2 + $0xde] sm:$0xff]
    %v2093 = vld [vmem:[#allocation2 + $0xe6] sm:$0xff]
    %v2094 = vld [vmem:[#allocation2 + $0xee] sm:$0xff]
    %v2095 = vld [vmem:[#allocation2 + $0xf6] sm:$0xff]
    %v2096 = vld [vmem:[#allocation2 + $0xfe] sm:$0xff]
    %v2097 = vld [vmem:[#allocation2 + $0x106] sm:$0xff]
    %v2098 = vld [vmem:[#allocation2 + $0x10e] sm:$0xff]
    %v2099 = vld [vmem:[#allocation2 + $0x116] sm:$0xff]
    %v2100 = vld [vmem:[#allocation2 + $0x11e] sm:$0xff]
    %v2101 = vld [vmem:[#allocation2 + $0x126] sm:$0xff]
    %v2102 = vld [vmem:[#allocation2 + $0x12e] sm:$0xff]
    %v2103 = vld [vmem:[#allocation2 + $0x136] sm:$0xff]
    %v2104 = vld [vmem:[#allocation2 + $0x13e] sm:$0xff]
    %v2105 = vld [vmem:[#allocation2 + $0x146] sm:$0xff]
    %v2106 = vld [vmem:[#allocation2 + $0x14e] sm:$0xff]
    %v2107 = vld [vmem:[#allocation2 + $0x156] sm:$0xff]
    %v2108 = vld [vmem:[#allocation2 + $0x15e] sm:$0xff]
    %v2109 = vld [vmem:[#allocation2 + $0x166] sm:$0xff]
    %v2110 = vld [vmem:[#allocation2 + $0x16e] sm:$0xff]
    %v2111 = vld [vmem:[#allocation2 + $0x176] sm:$0xff]
    %v2112 = vld [vmem:[#allocation2 + $0x17e] sm:$0xff]
    %v2113 = vld [vmem:[#allocation2 + $0x186] sm:$0xff]
    %v2114 = vld [vmem:[#allocation2 + $0x18e] sm:$0xff]
    %v2115 = vld [vmem:[#allocation2 + $0x196] sm:$0xff]
    %v2116 = vld [vmem:[#allocation2 + $0x19e] sm:$0xff]
    %v2117 = vld [vmem:[#allocation2 + $0x1a6] sm:$0xff]
    %v2118 = vld [vmem:[#allocation2 + $0x1ae] sm:$0xff]
    %v2119 = vld [vmem:[#allocation2 + $0x1b6] sm:$0xff]
    %v2120 = vld [vmem:[#allocation2 + $0x1be] sm:$0xff]
    %v2121 = vld [vmem:[#allocation2 + $0x1c6] sm:$0xff]
    %v2122 = vld [vmem:[#allocation2 + $0x1ce] sm:$0xff]
    %v2123 = vld [vmem:[#allocation2 + $0x1d6] sm:$0xff]
    %v2124 = vld [vmem:[#allocation2 + $0x1de] sm:$0xff]
    %v2125 = vld [vmem:[#allocation2 + $0x1e6] sm:$0xff]
    %v2126 = vld [vmem:[#allocation2 + $0x1ee] sm:$0xff]
    %v2127 = vld [vmem:[#allocation2 + $0x1f6] sm:$0xff]
    %v2128 = vld [vmem:[#allocation2 + $0x1fe] sm:$0xff]
    %v2129 = vld [vmem:[#allocation2 + $0x206] sm:$0xff]
    %v2130 = vld [vmem:[#allocation2 + $0x20e] sm:$0xff]
    %v2131 = vld [vmem:[#allocation2 + $0x216] sm:$0xff]
    %v2132 = vld [vmem:[#allocation2 + $0x21e] sm:$0xff]
    %v2133 = vld [vmem:[#allocation2 + $0x226] sm:$0xff]
    %v2134 = vld [vmem:[#allocation2 + $0x22e] sm:$0xff]
    %v2135 = vld [vmem:[#allocation2 + $0x236] sm:$0xff]
    %v2136 = vld [vmem:[#allocation2 + $0x23e] sm:$0xff]
    %v2137 = vld [vmem:[#allocation2 + $0x246] sm:$0xff]
    %v2138 = vld [vmem:[#allocation2 + $0x24e] sm:$0xff]
    %v2139 = vld [vmem:[#allocation2 + $0x256] sm:$0xff]
    %v2140 = vld [vmem:[#allocation2 + $0x25e] sm:$0xff]
    %v2141 = vld [vmem:[#allocation2 + $0x266] sm:$0xff]
    %v2142 = vld [vmem:[#allocation2 + $0x26e] sm:$0xff]
    %v2143 = vld [vmem:[#allocation2 + $0x276] sm:$0xff]
    %v2144 = vld [vmem:[#allocation2 + $0x27e] sm:$0xff]
    %v2145 = vld [vmem:[#allocation2 + $0x286] sm:$0xff]
    %v2146 = vmax.f32 %v1984, %v2065
    %v2147 = vmax.f32 %v1985, %v2066
    %v2148 = vmax.f32 %v1986, %v2067
    %v2149 = vmax.f32 %v1987, %v2068
    %v2150 = vmax.f32 %v1988, %v2069
    %v2151 = vmax.f32 %v1989, %v2070
    %v2152 = vmax.f32 %v1990, %v2071
    %v2153 = vmax.f32 %v1991, %v2072
    %v2154 = vmax.f32 %v1992, %v2073
    %v2155 = vmax.f32 %v1993, %v2074
    %v2156 = vmax.f32 %v1994, %v2075
    %v2157 = vmax.f32 %v1995, %v2076
    %v2158 = vmax.f32 %v1996, %v2077
    %v2159 = vmax.f32 %v1997, %v2078
    %v2160 = vmax.f32 %v1998, %v2079
    %v2161 = vmax.f32 %v1999, %v2080
    %v2162 = vmax.f32 %v2000, %v2081
    %v2163 = vmax.f32 %v2001, %v2082
    %v2164 = vmax.f32 %v2002, %v2083
    %v2165 = vmax.f32 %v2003, %v2084
    %v2166 = vmax.f32 %v2004, %v2085
    %v2167 = vmax.f32 %v2005, %v2086
    %v2168 = vmax.f32 %v2006, %v2087
    %v2169 = vmax.f32 %v2007, %v2088
    %v2170 = vmax.f32 %v2008, %v2089
    %v2171 = vmax.f32 %v2009, %v2090
    %v2172 = vmax.f32 %v2010, %v2091
    %v2173 = vmax.f32 %v2011, %v2092
    %v2174 = vmax.f32 %v2012, %v2093
    %v2175 = vmax.f32 %v2013, %v2094
    %v2176 = vmax.f32 %v2014, %v2095
    %v2177 = vmax.f32 %v2015, %v2096
    %v2178 = vmax.f32 %v2016, %v2097
    %v2179 = vmax.f32 %v2017, %v2098
    %v2180 = vmax.f32 %v2018, %v2099
    %v2181 = vmax.f32 %v2019, %v2100
    %v2182 = vmax.f32 %v2020, %v2101
    %v2183 = vmax.f32 %v2021, %v2102
    %v2184 = vmax.f32 %v2022, %v2103
    %v2185 = vmax.f32 %v2023, %v2104
    %v2186 = vmax.f32 %v2024, %v2105
    %v2187 = vmax.f32 %v2025, %v2106
    %v2188 = vmax.f32 %v2026, %v2107
    %v2189 = vmax.f32 %v2027, %v2108
    %v2190 = vmax.f32 %v2028, %v2109
    %v2191 = vmax.f32 %v2029, %v2110
    %v2192 = vmax.f32 %v2030, %v2111
    %v2193 = vmax.f32 %v2031, %v2112
    %v2194 = vmax.f32 %v2032, %v2113
    %v2195 = vmax.f32 %v2033, %v2114
    %v2196 = vmax.f32 %v2034, %v2115
    %v2197 = vmax.f32 %v2035, %v2116
    %v2198 = vmax.f32 %v2036, %v2117
    %v2199 = vmax.f32 %v2037, %v2118
    %v2200 = vmax.f32 %v2038, %v2119
    %v2201 = vmax.f32 %v2039, %v2120
    %v2202 = vmax.f32 %v2040, %v2121
    %v2203 = vmax.f32 %v2041, %v2122
    %v2204 = vmax.f32 %v2042, %v2123
    %v2205 = vmax.f32 %v2043, %v2124
    %v2206 = vmax.f32 %v2044, %v2125
    %v2207 = vmax.f32 %v2045, %v2126
    %v2208 = vmax.f32 %v2046, %v2127
    %v2209 = vmax.f32 %v2047, %v2128
    %v2210 = vmax.f32 %v2048, %v2129
    %v2211 = vmax.f32 %v2049, %v2130
    %v2212 = vmax.f32 %v2050, %v2131
    %v2213 = vmax.f32 %v2051, %v2132
    %v2214 = vmax.f32 %v2052, %v2133
    %v2215 = vmax.f32 %v2053, %v2134
    %v2216 = vmax.f32 %v2054, %v2135
    %v2217 = vmax.f32 %v2055, %v2136
    %v2218 = vmax.f32 %v2056, %v2137
    %v2219 = vmax.f32 %v2057, %v2138
    %v2220 = vmax.f32 %v2058, %v2139
    %v2221 = vmax.f32 %v2059, %v2140
    %v2222 = vmax.f32 %v2060, %v2141
    %v2223 = vmax.f32 %v2061, %v2142
    %v2224 = vmax.f32 %v2062, %v2143
    %v2225 = vmax.f32 %v2063, %v2144
    %v2226 = vmax.f32 %v2064, %v2145
    %v2227 = vld [vmem:[#allocation2 + $0x7] sm:$0xff]
    %v2228 = vld [vmem:[#allocation2 + $0xf] sm:$0xff]
    %v2229 = vld [vmem:[#allocation2 + $0x17] sm:$0xff]
    %v2230 = vld [vmem:[#allocation2 + $0x1f] sm:$0xff]
    %v2231 = vld [vmem:[#allocation2 + $0x27] sm:$0xff]
    %v2232 = vld [vmem:[#allocation2 + $0x2f] sm:$0xff]
    %v2233 = vld [vmem:[#allocation2 + $0x37] sm:$0xff]
    %v2234 = vld [vmem:[#allocation2 + $0x3f] sm:$0xff]
    %v2235 = vld [vmem:[#allocation2 + $0x47] sm:$0xff]
    %v2236 = vld [vmem:[#allocation2 + $0x4f] sm:$0xff]
    %v2237 = vld [vmem:[#allocation2 + $0x57] sm:$0xff]
    %v2238 = vld [vmem:[#allocation2 + $0x5f] sm:$0xff]
    %v2239 = vld [vmem:[#allocation2 + $0x67] sm:$0xff]
    %v2240 = vld [vmem:[#allocation2 + $0x6f] sm:$0xff]
    %v2241 = vld [vmem:[#allocation2 + $0x77] sm:$0xff]
    %v2242 = vld [vmem:[#allocation2 + $0x7f] sm:$0xff]
    %v2243 = vld [vmem:[#allocation2 + $0x87] sm:$0xff]
    %v2244 = vld [vmem:[#allocation2 + $0x8f] sm:$0xff]
    %v2245 = vld [vmem:[#allocation2 + $0x97] sm:$0xff]
    %v2246 = vld [vmem:[#allocation2 + $0x9f] sm:$0xff]
    %v2247 = vld [vmem:[#allocation2 + $0xa7] sm:$0xff]
    %v2248 = vld [vmem:[#allocation2 + $0xaf] sm:$0xff]
    %v2249 = vld [vmem:[#allocation2 + $0xb7] sm:$0xff]
    %v2250 = vld [vmem:[#allocation2 + $0xbf] sm:$0xff]
    %v2251 = vld [vmem:[#allocation2 + $0xc7] sm:$0xff]
    %v2252 = vld [vmem:[#allocation2 + $0xcf] sm:$0xff]
    %v2253 = vld [vmem:[#allocation2 + $0xd7] sm:$0xff]
    %v2254 = vld [vmem:[#allocation2 + $0xdf] sm:$0xff]
    %v2255 = vld [vmem:[#allocation2 + $0xe7] sm:$0xff]
    %v2256 = vld [vmem:[#allocation2 + $0xef] sm:$0xff]
    %v2257 = vld [vmem:[#allocation2 + $0xf7] sm:$0xff]
    %v2258 = vld [vmem:[#allocation2 + $0xff] sm:$0xff]
    %v2259 = vld [vmem:[#allocation2 + $0x107] sm:$0xff]
    %v2260 = vld [vmem:[#allocation2 + $0x10f] sm:$0xff]
    %v2261 = vld [vmem:[#allocation2 + $0x117] sm:$0xff]
    %v2262 = vld [vmem:[#allocation2 + $0x11f] sm:$0xff]
    %v2263 = vld [vmem:[#allocation2 + $0x127] sm:$0xff]
    %v2264 = vld [vmem:[#allocation2 + $0x12f] sm:$0xff]
    %v2265 = vld [vmem:[#allocation2 + $0x137] sm:$0xff]
    %v2266 = vld [vmem:[#allocation2 + $0x13f] sm:$0xff]
    %v2267 = vld [vmem:[#allocation2 + $0x147] sm:$0xff]
    %v2268 = vld [vmem:[#allocation2 + $0x14f] sm:$0xff]
    %v2269 = vld [vmem:[#allocation2 + $0x157] sm:$0xff]
    %v2270 = vld [vmem:[#allocation2 + $0x15f] sm:$0xff]
    %v2271 = vld [vmem:[#allocation2 + $0x167] sm:$0xff]
    %v2272 = vld [vmem:[#allocation2 + $0x16f] sm:$0xff]
    %v2273 = vld [vmem:[#allocation2 + $0x177] sm:$0xff]
    %v2274 = vld [vmem:[#allocation2 + $0x17f] sm:$0xff]
    %v2275 = vld [vmem:[#allocation2 + $0x187] sm:$0xff]
    %v2276 = vld [vmem:[#allocation2 + $0x18f] sm:$0xff]
    %v2277 = vld [vmem:[#allocation2 + $0x197] sm:$0xff]
    %v2278 = vld [vmem:[#allocation2 + $0x19f] sm:$0xff]
    %v2279 = vld [vmem:[#allocation2 + $0x1a7] sm:$0xff]
    %v2280 = vld [vmem:[#allocation2 + $0x1af] sm:$0xff]
    %v2281 = vld [vmem:[#allocation2 + $0x1b7] sm:$0xff]
    %v2282 = vld [vmem:[#allocation2 + $0x1bf] sm:$0xff]
    %v2283 = vld [vmem:[#allocation2 + $0x1c7] sm:$0xff]
    %v2284 = vld [vmem:[#allocation2 + $0x1cf] sm:$0xff]
    %v2285 = vld [vmem:[#allocation2 + $0x1d7] sm:$0xff]
    %v2286 = vld [vmem:[#allocation2 + $0x1df] sm:$0xff]
    %v2287 = vld [vmem:[#allocation2 + $0x1e7] sm:$0xff]
    %v2288 = vld [vmem:[#allocation2 + $0x1ef] sm:$0xff]
    %v2289 = vld [vmem:[#allocation2 + $0x1f7] sm:$0xff]
    %v2290 = vld [vmem:[#allocation2 + $0x1ff] sm:$0xff]
    %v2291 = vld [vmem:[#allocation2 + $0x207] sm:$0xff]
    %v2292 = vld [vmem:[#allocation2 + $0x20f] sm:$0xff]
    %v2293 = vld [vmem:[#allocation2 + $0x217] sm:$0xff]
    %v2294 = vld [vmem:[#allocation2 + $0x21f] sm:$0xff]
    %v2295 = vld [vmem:[#allocation2 + $0x227] sm:$0xff]
    %v2296 = vld [vmem:[#allocation2 + $0x22f] sm:$0xff]
    %v2297 = vld [vmem:[#allocation2 + $0x237] sm:$0xff]
    %v2298 = vld [vmem:[#allocation2 + $0x23f] sm:$0xff]
    %v2299 = vld [vmem:[#allocation2 + $0x247] sm:$0xff]
    %v2300 = vld [vmem:[#allocation2 + $0x24f] sm:$0xff]
    %v2301 = vld [vmem:[#allocation2 + $0x257] sm:$0xff]
    %v2302 = vld [vmem:[#allocation2 + $0x25f] sm:$0xff]
    %v2303 = vld [vmem:[#allocation2 + $0x267] sm:$0xff]
    %v2304 = vld [vmem:[#allocation2 + $0x26f] sm:$0xff]
    %v2305 = vld [vmem:[#allocation2 + $0x277] sm:$0xff]
    %v2306 = vld [vmem:[#allocation2 + $0x27f] sm:$0xff]
    %v2307 = vld [vmem:[#allocation2 + $0x287] sm:$0xff]
    %v2308 = vmax.f32 %v2146, %v2227
    %v2309 = vmax.f32 %v2147, %v2228
    %v2310 = vmax.f32 %v2148, %v2229
    %v2311 = vmax.f32 %v2149, %v2230
    %v2312 = vmax.f32 %v2150, %v2231
    %v2313 = vmax.f32 %v2151, %v2232
    %v2314 = vmax.f32 %v2152, %v2233
    %v2315 = vmax.f32 %v2153, %v2234
    %v2316 = vmax.f32 %v2154, %v2235
    %v2317 = vmax.f32 %v2155, %v2236
    %v2318 = vmax.f32 %v2156, %v2237
    %v2319 = vmax.f32 %v2157, %v2238
    %v2320 = vmax.f32 %v2158, %v2239
    %v2321 = vmax.f32 %v2159, %v2240
    %v2322 = vmax.f32 %v2160, %v2241
    %v2323 = vmax.f32 %v2161, %v2242
    %v2324 = vmax.f32 %v2162, %v2243
    %v2325 = vmax.f32 %v2163, %v2244
    %v2326 = vmax.f32 %v2164, %v2245
    %v2327 = vmax.f32 %v2165, %v2246
    %v2328 = vmax.f32 %v2166, %v2247
    %v2329 = vmax.f32 %v2167, %v2248
    %v2330 = vmax.f32 %v2168, %v2249
    %v2331 = vmax.f32 %v2169, %v2250
    %v2332 = vmax.f32 %v2170, %v2251
    %v2333 = vmax.f32 %v2171, %v2252
    %v2334 = vmax.f32 %v2172, %v2253
    %v2335 = vmax.f32 %v2173, %v2254
    %v2336 = vmax.f32 %v2174, %v2255
    %v2337 = vmax.f32 %v2175, %v2256
    %v2338 = vmax.f32 %v2176, %v2257
    %v2339 = vmax.f32 %v2177, %v2258
    %v2340 = vmax.f32 %v2178, %v2259
    %v2341 = vmax.f32 %v2179, %v2260
    %v2342 = vmax.f32 %v2180, %v2261
    %v2343 = vmax.f32 %v2181, %v2262
    %v2344 = vmax.f32 %v2182, %v2263
    %v2345 = vmax.f32 %v2183, %v2264
    %v2346 = vmax.f32 %v2184, %v2265
    %v2347 = vmax.f32 %v2185, %v2266
    %v2348 = vmax.f32 %v2186, %v2267
    %v2349 = vmax.f32 %v2187, %v2268
    %v2350 = vmax.f32 %v2188, %v2269
    %v2351 = vmax.f32 %v2189, %v2270
    %v2352 = vmax.f32 %v2190, %v2271
    %v2353 = vmax.f32 %v2191, %v2272
    %v2354 = vmax.f32 %v2192, %v2273
    %v2355 = vmax.f32 %v2193, %v2274
    %v2356 = vmax.f32 %v2194, %v2275
    %v2357 = vmax.f32 %v2195, %v2276
    %v2358 = vmax.f32 %v2196, %v2277
    %v2359 = vmax.f32 %v2197, %v2278
    %v2360 = vmax.f32 %v2198, %v2279
    %v2361 = vmax.f32 %v2199, %v2280
    %v2362 = vmax.f32 %v2200, %v2281
    %v2363 = vmax.f32 %v2201, %v2282
    %v2364 = vmax.f32 %v2202, %v2283
    %v2365 = vmax.f32 %v2203, %v2284
    %v2366 = vmax.f32 %v2204, %v2285
    %v2367 = vmax.f32 %v2205, %v2286
    %v2368 = vmax.f32 %v2206, %v2287
    %v2369 = vmax.f32 %v2207, %v2288
    %v2370 = vmax.f32 %v2208, %v2289
    %v2371 = vmax.f32 %v2209, %v2290
    %v2372 = vmax.f32 %v2210, %v2291
    %v2373 = vmax.f32 %v2211, %v2292
    %v2374 = vmax.f32 %v2212, %v2293
    %v2375 = vmax.f32 %v2213, %v2294
    %v2376 = vmax.f32 %v2214, %v2295
    %v2377 = vmax.f32 %v2215, %v2296
    %v2378 = vmax.f32 %v2216, %v2297
    %v2379 = vmax.f32 %v2217, %v2298
    %v2380 = vmax.f32 %v2218, %v2299
    %v2381 = vmax.f32 %v2219, %v2300
    %v2382 = vmax.f32 %v2220, %v2301
    %v2383 = vmax.f32 %v2221, %v2302
    %v2384 = vmax.f32 %v2222, %v2303
    %v2385 = vmax.f32 %v2223, %v2304
    %v2386 = vmax.f32 %v2224, %v2305
    %v2387 = vmax.f32 %v2225, %v2306
    %v2388 = vmax.f32 %v2226, %v2307
    %v2389 = vld [vmem:[#allocation2 + $0x28f] sm:$0xff]
    %v2390 = vld [vmem:[#allocation2 + $0x297] sm:$0xff]
    %v2391 = vmax.f32 %v2308, %v2229
    %v2392 = vmax.f32 %v2309, %v2230
    %v2393 = vmax.f32 %v2310, %v2231
    %v2394 = vmax.f32 %v2311, %v2232
    %v2395 = vmax.f32 %v2312, %v2233
    %v2396 = vmax.f32 %v2313, %v2234
    %v2397 = vmax.f32 %v2314, %v2235
    %v2398 = vmax.f32 %v2315, %v2236
    %v2399 = vmax.f32 %v2316, %v2237
    %v2400 = vmax.f32 %v2317, %v2238
    %v2401 = vmax.f32 %v2318, %v2239
    %v2402 = vmax.f32 %v2319, %v2240
    %v2403 = vmax.f32 %v2320, %v2241
    %v2404 = vmax.f32 %v2321, %v2242
    %v2405 = vmax.f32 %v2322, %v2243
    %v2406 = vmax.f32 %v2323, %v2244
    %v2407 = vmax.f32 %v2324, %v2245
    %v2408 = vmax.f32 %v2325, %v2246
    %v2409 = vmax.f32 %v2326, %v2247
    %v2410 = vmax.f32 %v2327, %v2248
    %v2411 = vmax.f32 %v2328, %v2249
    %v2412 = vmax.f32 %v2329, %v2250
    %v2413 = vmax.f32 %v2330, %v2251
    %v2414 = vmax.f32 %v2331, %v2252
    %v2415 = vmax.f32 %v2332, %v2253
    %v2416 = vmax.f32 %v2333, %v2254
    %v2417 = vmax.f32 %v2334, %v2255
    %v2418 = vmax.f32 %v2335, %v2256
    %v2419 = vmax.f32 %v2336, %v2257
    %v2420 = vmax.f32 %v2337, %v2258
    %v2421 = vmax.f32 %v2338, %v2259
    %v2422 = vmax.f32 %v2339, %v2260
    %v2423 = vmax.f32 %v2340, %v2261
    %v2424 = vmax.f32 %v2341, %v2262
    %v2425 = vmax.f32 %v2342, %v2263
    %v2426 = vmax.f32 %v2343, %v2264
    %v2427 = vmax.f32 %v2344, %v2265
    %v2428 = vmax.f32 %v2345, %v2266
    %v2429 = vmax.f32 %v2346, %v2267
    %v2430 = vmax.f32 %v2347, %v2268
    %v2431 = vmax.f32 %v2348, %v2269
    %v2432 = vmax.f32 %v2349, %v2270
    %v2433 = vmax.f32 %v2350, %v2271
    %v2434 = vmax.f32 %v2351, %v2272
    %v2435 = vmax.f32 %v2352, %v2273
    %v2436 = vmax.f32 %v2353, %v2274
    %v2437 = vmax.f32 %v2354, %v2275
    %v2438 = vmax.f32 %v2355, %v2276
    %v2439 = vmax.f32 %v2356, %v2277
    %v2440 = vmax.f32 %v2357, %v2278
    %v2441 = vmax.f32 %v2358, %v2279
    %v2442 = vmax.f32 %v2359, %v2280
    %v2443 = vmax.f32 %v2360, %v2281
    %v2444 = vmax.f32 %v2361, %v2282
    %v2445 = vmax.f32 %v2362, %v2283
    %v2446 = vmax.f32 %v2363, %v2284
    %v2447 = vmax.f32 %v2364, %v2285
    %v2448 = vmax.f32 %v2365, %v2286
    %v2449 = vmax.f32 %v2366, %v2287
    %v2450 = vmax.f32 %v2367, %v2288
    %v2451 = vmax.f32 %v2368, %v2289
    %v2452 = vmax.f32 %v2369, %v2290
    %v2453 = vmax.f32 %v2370, %v2291
    %v2454 = vmax.f32 %v2371, %v2292
    %v2455 = vmax.f32 %v2372, %v2293
    %v2456 = vmax.f32 %v2373, %v2294
    %v2457 = vmax.f32 %v2374, %v2295
    %v2458 = vmax.f32 %v2375, %v2296
    %v2459 = vmax.f32 %v2376, %v2297
    %v2460 = vmax.f32 %v2377, %v2298
    %v2461 = vmax.f32 %v2378, %v2299
    %v2462 = vmax.f32 %v2379, %v2300
    %v2463 = vmax.f32 %v2380, %v2301
    %v2464 = vmax.f32 %v2381, %v2302
    %v2465 = vmax.f32 %v2382, %v2303
    %v2466 = vmax.f32 %v2383, %v2304
    %v2467 = vmax.f32 %v2384, %v2305
    %v2468 = vmax.f32 %v2385, %v2306
    %v2469 = vmax.f32 %v2386, %v2307
    %v2470 = vmax.f32 %v2387, %v2389
    %v2471 = vmax.f32 %v2388, %v2390
    %v2472 = vld [vmem:[#allocation2 + $0x18] sm:$0xff]
    %v2473 = vld [vmem:[#allocation2 + $0x20] sm:$0xff]
    %v2474 = vld [vmem:[#allocation2 + $0x28] sm:$0xff]
    %v2475 = vld [vmem:[#allocation2 + $0x30] sm:$0xff]
    %v2476 = vld [vmem:[#allocation2 + $0x38] sm:$0xff]
    %v2477 = vld [vmem:[#allocation2 + $0x40] sm:$0xff]
    %v2478 = vld [vmem:[#allocation2 + $0x48] sm:$0xff]
    %v2479 = vld [vmem:[#allocation2 + $0x50] sm:$0xff]
    %v2480 = vld [vmem:[#allocation2 + $0x58] sm:$0xff]
    %v2481 = vld [vmem:[#allocation2 + $0x60] sm:$0xff]
    %v2482 = vld [vmem:[#allocation2 + $0x68] sm:$0xff]
    %v2483 = vld [vmem:[#allocation2 + $0x70] sm:$0xff]
    %v2484 = vld [vmem:[#allocation2 + $0x78] sm:$0xff]
    %v2485 = vld [vmem:[#allocation2 + $0x80] sm:$0xff]
    %v2486 = vld [vmem:[#allocation2 + $0x88] sm:$0xff]
    %v2487 = vld [vmem:[#allocation2 + $0x90] sm:$0xff]
    %v2488 = vld [vmem:[#allocation2 + $0x98] sm:$0xff]
    %v2489 = vld [vmem:[#allocation2 + $0xa0] sm:$0xff]
    %v2490 = vld [vmem:[#allocation2 + $0xa8] sm:$0xff]
    %v2491 = vld [vmem:[#allocation2 + $0xb0] sm:$0xff]
    %v2492 = vld [vmem:[#allocation2 + $0xb8] sm:$0xff]
    %v2493 = vld [vmem:[#allocation2 + $0xc0] sm:$0xff]
    %v2494 = vld [vmem:[#allocation2 + $0xc8] sm:$0xff]
    %v2495 = vld [vmem:[#allocation2 + $0xd0] sm:$0xff]
    %v2496 = vld [vmem:[#allocation2 + $0xd8] sm:$0xff]
    %v2497 = vld [vmem:[#allocation2 + $0xe0] sm:$0xff]
    %v2498 = vld [vmem:[#allocation2 + $0xe8] sm:$0xff]
    %v2499 = vld [vmem:[#allocation2 + $0xf0] sm:$0xff]
    %v2500 = vld [vmem:[#allocation2 + $0xf8] sm:$0xff]
    %v2501 = vld [vmem:[#allocation2 + $0x100] sm:$0xff]
    %v2502 = vld [vmem:[#allocation2 + $0x108] sm:$0xff]
    %v2503 = vld [vmem:[#allocation2 + $0x110] sm:$0xff]
    %v2504 = vld [vmem:[#allocation2 + $0x118] sm:$0xff]
    %v2505 = vld [vmem:[#allocation2 + $0x120] sm:$0xff]
    %v2506 = vld [vmem:[#allocation2 + $0x128] sm:$0xff]
    %v2507 = vld [vmem:[#allocation2 + $0x130] sm:$0xff]
    %v2508 = vld [vmem:[#allocation2 + $0x138] sm:$0xff]
    %v2509 = vld [vmem:[#allocation2 + $0x140] sm:$0xff]
    %v2510 = vld [vmem:[#allocation2 + $0x148] sm:$0xff]
    %v2511 = vld [vmem:[#allocation2 + $0x150] sm:$0xff]
    %v2512 = vld [vmem:[#allocation2 + $0x158] sm:$0xff]
    %v2513 = vld [vmem:[#allocation2 + $0x160] sm:$0xff]
    %v2514 = vld [vmem:[#allocation2 + $0x168] sm:$0xff]
    %v2515 = vld [vmem:[#allocation2 + $0x170] sm:$0xff]
    %v2516 = vld [vmem:[#allocation2 + $0x178] sm:$0xff]
    %v2517 = vld [vmem:[#allocation2 + $0x180] sm:$0xff]
    %v2518 = vld [vmem:[#allocation2 + $0x188] sm:$0xff]
    %v2519 = vld [vmem:[#allocation2 + $0x190] sm:$0xff]
    %v2520 = vld [vmem:[#allocation2 + $0x198] sm:$0xff]
    %v2521 = vld [vmem:[#allocation2 + $0x1a0] sm:$0xff]
    %v2522 = vld [vmem:[#allocation2 + $0x1a8] sm:$0xff]
    %v2523 = vld [vmem:[#allocation2 + $0x1b0] sm:$0xff]
    %v2524 = vld [vmem:[#allocation2 + $0x1b8] sm:$0xff]
    %v2525 = vld [vmem:[#allocation2 + $0x1c0] sm:$0xff]
    %v2526 = vld [vmem:[#allocation2 + $0x1c8] sm:$0xff]
    %v2527 = vld [vmem:[#allocation2 + $0x1d0] sm:$0xff]
    %v2528 = vld [vmem:[#allocation2 + $0x1d8] sm:$0xff]
    %v2529 = vld [vmem:[#allocation2 + $0x1e0] sm:$0xff]
    %v2530 = vld [vmem:[#allocation2 + $0x1e8] sm:$0xff]
    %v2531 = vld [vmem:[#allocation2 + $0x1f0] sm:$0xff]
    %v2532 = vld [vmem:[#allocation2 + $0x1f8] sm:$0xff]
    %v2533 = vld [vmem:[#allocation2 + $0x200] sm:$0xff]
    %v2534 = vld [vmem:[#allocation2 + $0x208] sm:$0xff]
    %v2535 = vld [vmem:[#allocation2 + $0x210] sm:$0xff]
    %v2536 = vld [vmem:[#allocation2 + $0x218] sm:$0xff]
    %v2537 = vld [vmem:[#allocation2 + $0x220] sm:$0xff]
    %v2538 = vld [vmem:[#allocation2 + $0x228] sm:$0xff]
    %v2539 = vld [vmem:[#allocation2 + $0x230] sm:$0xff]
    %v2540 = vld [vmem:[#allocation2 + $0x238] sm:$0xff]
    %v2541 = vld [vmem:[#allocation2 + $0x240] sm:$0xff]
    %v2542 = vld [vmem:[#allocation2 + $0x248] sm:$0xff]
    %v2543 = vld [vmem:[#allocation2 + $0x250] sm:$0xff]
    %v2544 = vld [vmem:[#allocation2 + $0x258] sm:$0xff]
    %v2545 = vld [vmem:[#allocation2 + $0x260] sm:$0xff]
    %v2546 = vld [vmem:[#allocation2 + $0x268] sm:$0xff]
    %v2547 = vld [vmem:[#allocation2 + $0x270] sm:$0xff]
    %v2548 = vld [vmem:[#allocation2 + $0x278] sm:$0xff]
    %v2549 = vld [vmem:[#allocation2 + $0x280] sm:$0xff]
    %v2550 = vld [vmem:[#allocation2 + $0x288] sm:$0xff]
    %v2551 = vld [vmem:[#allocation2 + $0x290] sm:$0xff]
    %v2552 = vld [vmem:[#allocation2 + $0x298] sm:$0xff]
    %v2553 = vmax.f32 %v2391, %v2472
    %v2554 = vmax.f32 %v2392, %v2473
    %v2555 = vmax.f32 %v2393, %v2474
    %v2556 = vmax.f32 %v2394, %v2475
    %v2557 = vmax.f32 %v2395, %v2476
    %v2558 = vmax.f32 %v2396, %v2477
    %v2559 = vmax.f32 %v2397, %v2478
    %v2560 = vmax.f32 %v2398, %v2479
    %v2561 = vmax.f32 %v2399, %v2480
    %v2562 = vmax.f32 %v2400, %v2481
    %v2563 = vmax.f32 %v2401, %v2482
    %v2564 = vmax.f32 %v2402, %v2483
    %v2565 = vmax.f32 %v2403, %v2484
    %v2566 = vmax.f32 %v2404, %v2485
    %v2567 = vmax.f32 %v2405, %v2486
    %v2568 = vmax.f32 %v2406, %v2487
    %v2569 = vmax.f32 %v2407, %v2488
    %v2570 = vmax.f32 %v2408, %v2489
    %v2571 = vmax.f32 %v2409, %v2490
    %v2572 = vmax.f32 %v2410, %v2491
    %v2573 = vmax.f32 %v2411, %v2492
    %v2574 = vmax.f32 %v2412, %v2493
    %v2575 = vmax.f32 %v2413, %v2494
    %v2576 = vmax.f32 %v2414, %v2495
    %v2577 = vmax.f32 %v2415, %v2496
    %v2578 = vmax.f32 %v2416, %v2497
    %v2579 = vmax.f32 %v2417, %v2498
    %v2580 = vmax.f32 %v2418, %v2499
    %v2581 = vmax.f32 %v2419, %v2500
    %v2582 = vmax.f32 %v2420, %v2501
    %v2583 = vmax.f32 %v2421, %v2502
    %v2584 = vmax.f32 %v2422, %v2503
    %v2585 = vmax.f32 %v2423, %v2504
    %v2586 = vmax.f32 %v2424, %v2505
    %v2587 = vmax.f32 %v2425, %v2506
    %v2588 = vmax.f32 %v2426, %v2507
    %v2589 = vmax.f32 %v2427, %v2508
    %v2590 = vmax.f32 %v2428, %v2509
    %v2591 = vmax.f32 %v2429, %v2510
    %v2592 = vmax.f32 %v2430, %v2511
    %v2593 = vmax.f32 %v2431, %v2512
    %v2594 = vmax.f32 %v2432, %v2513
    %v2595 = vmax.f32 %v2433, %v2514
    %v2596 = vmax.f32 %v2434, %v2515
    %v2597 = vmax.f32 %v2435, %v2516
    %v2598 = vmax.f32 %v2436, %v2517
    %v2599 = vmax.f32 %v2437, %v2518
    %v2600 = vmax.f32 %v2438, %v2519
    %v2601 = vmax.f32 %v2439, %v2520
    %v2602 = vmax.f32 %v2440, %v2521
    %v2603 = vmax.f32 %v2441, %v2522
    %v2604 = vmax.f32 %v2442, %v2523
    %v2605 = vmax.f32 %v2443, %v2524
    %v2606 = vmax.f32 %v2444, %v2525
    %v2607 = vmax.f32 %v2445, %v2526
    %v2608 = vmax.f32 %v2446, %v2527
    %v2609 = vmax.f32 %v2447, %v2528
    %v2610 = vmax.f32 %v2448, %v2529
    %v2611 = vmax.f32 %v2449, %v2530
    %v2612 = vmax.f32 %v2450, %v2531
    %v2613 = vmax.f32 %v2451, %v2532
    %v2614 = vmax.f32 %v2452, %v2533
    %v2615 = vmax.f32 %v2453, %v2534
    %v2616 = vmax.f32 %v2454, %v2535
    %v2617 = vmax.f32 %v2455, %v2536
    %v2618 = vmax.f32 %v2456, %v2537
    %v2619 = vmax.f32 %v2457, %v2538
    %v2620 = vmax.f32 %v2458, %v2539
    %v2621 = vmax.f32 %v2459, %v2540
    %v2622 = vmax.f32 %v2460, %v2541
    %v2623 = vmax.f32 %v2461, %v2542
    %v2624 = vmax.f32 %v2462, %v2543
    %v2625 = vmax.f32 %v2463, %v2544
    %v2626 = vmax.f32 %v2464, %v2545
    %v2627 = vmax.f32 %v2465, %v2546
    %v2628 = vmax.f32 %v2466, %v2547
    %v2629 = vmax.f32 %v2467, %v2548
    %v2630 = vmax.f32 %v2468, %v2549
    %v2631 = vmax.f32 %v2469, %v2550
    %v2632 = vmax.f32 %v2470, %v2551
    %v2633 = vmax.f32 %v2471, %v2552
    %v2634 = vld [vmem:[#allocation2 + $0x19] sm:$0xff]
    %v2635 = vld [vmem:[#allocation2 + $0x21] sm:$0xff]
    %v2636 = vld [vmem:[#allocation2 + $0x29] sm:$0xff]
    %v2637 = vld [vmem:[#allocation2 + $0x31] sm:$0xff]
    %v2638 = vld [vmem:[#allocation2 + $0x39] sm:$0xff]
    %v2639 = vld [vmem:[#allocation2 + $0x41] sm:$0xff]
    %v2640 = vld [vmem:[#allocation2 + $0x49] sm:$0xff]
    %v2641 = vld [vmem:[#allocation2 + $0x51] sm:$0xff]
    %v2642 = vld [vmem:[#allocation2 + $0x59] sm:$0xff]
    %v2643 = vld [vmem:[#allocation2 + $0x61] sm:$0xff]
    %v2644 = vld [vmem:[#allocation2 + $0x69] sm:$0xff]
    %v2645 = vld [vmem:[#allocation2 + $0x71] sm:$0xff]
    %v2646 = vld [vmem:[#allocation2 + $0x79] sm:$0xff]
    %v2647 = vld [vmem:[#allocation2 + $0x81] sm:$0xff]
    %v2648 = vld [vmem:[#allocation2 + $0x89] sm:$0xff]
    %v2649 = vld [vmem:[#allocation2 + $0x91] sm:$0xff]
    %v2650 = vld [vmem:[#allocation2 + $0x99] sm:$0xff]
    %v2651 = vld [vmem:[#allocation2 + $0xa1] sm:$0xff]
    %v2652 = vld [vmem:[#allocation2 + $0xa9] sm:$0xff]
    %v2653 = vld [vmem:[#allocation2 + $0xb1] sm:$0xff]
    %v2654 = vld [vmem:[#allocation2 + $0xb9] sm:$0xff]
    %v2655 = vld [vmem:[#allocation2 + $0xc1] sm:$0xff]
    %v2656 = vld [vmem:[#allocation2 + $0xc9] sm:$0xff]
    %v2657 = vld [vmem:[#allocation2 + $0xd1] sm:$0xff]
    %v2658 = vld [vmem:[#allocation2 + $0xd9] sm:$0xff]
    %v2659 = vld [vmem:[#allocation2 + $0xe1] sm:$0xff]
    %v2660 = vld [vmem:[#allocation2 + $0xe9] sm:$0xff]
    %v2661 = vld [vmem:[#allocation2 + $0xf1] sm:$0xff]
    %v2662 = vld [vmem:[#allocation2 + $0xf9] sm:$0xff]
    %v2663 = vld [vmem:[#allocation2 + $0x101] sm:$0xff]
    %v2664 = vld [vmem:[#allocation2 + $0x109] sm:$0xff]
    %v2665 = vld [vmem:[#allocation2 + $0x111] sm:$0xff]
    %v2666 = vld [vmem:[#allocation2 + $0x119] sm:$0xff]
    %v2667 = vld [vmem:[#allocation2 + $0x121] sm:$0xff]
    %v2668 = vld [vmem:[#allocation2 + $0x129] sm:$0xff]
    %v2669 = vld [vmem:[#allocation2 + $0x131] sm:$0xff]
    %v2670 = vld [vmem:[#allocation2 + $0x139] sm:$0xff]
    %v2671 = vld [vmem:[#allocation2 + $0x141] sm:$0xff]
    %v2672 = vld [vmem:[#allocation2 + $0x149] sm:$0xff]
    %v2673 = vld [vmem:[#allocation2 + $0x151] sm:$0xff]
    %v2674 = vld [vmem:[#allocation2 + $0x159] sm:$0xff]
    %v2675 = vld [vmem:[#allocation2 + $0x161] sm:$0xff]
    %v2676 = vld [vmem:[#allocation2 + $0x169] sm:$0xff]
    %v2677 = vld [vmem:[#allocation2 + $0x171] sm:$0xff]
    %v2678 = vld [vmem:[#allocation2 + $0x179] sm:$0xff]
    %v2679 = vld [vmem:[#allocation2 + $0x181] sm:$0xff]
    %v2680 = vld [vmem:[#allocation2 + $0x189] sm:$0xff]
    %v2681 = vld [vmem:[#allocation2 + $0x191] sm:$0xff]
    %v2682 = vld [vmem:[#allocation2 + $0x199] sm:$0xff]
    %v2683 = vld [vmem:[#allocation2 + $0x1a1] sm:$0xff]
    %v2684 = vld [vmem:[#allocation2 + $0x1a9] sm:$0xff]
    %v2685 = vld [vmem:[#allocation2 + $0x1b1] sm:$0xff]
    %v2686 = vld [vmem:[#allocation2 + $0x1b9] sm:$0xff]
    %v2687 = vld [vmem:[#allocation2 + $0x1c1] sm:$0xff]
    %v2688 = vld [vmem:[#allocation2 + $0x1c9] sm:$0xff]
    %v2689 = vld [vmem:[#allocation2 + $0x1d1] sm:$0xff]
    %v2690 = vld [vmem:[#allocation2 + $0x1d9] sm:$0xff]
    %v2691 = vld [vmem:[#allocation2 + $0x1e1] sm:$0xff]
    %v2692 = vld [vmem:[#allocation2 + $0x1e9] sm:$0xff]
    %v2693 = vld [vmem:[#allocation2 + $0x1f1] sm:$0xff]
    %v2694 = vld [vmem:[#allocation2 + $0x1f9] sm:$0xff]
    %v2695 = vld [vmem:[#allocation2 + $0x201] sm:$0xff]
    %v2696 = vld [vmem:[#allocation2 + $0x209] sm:$0xff]
    %v2697 = vld [vmem:[#allocation2 + $0x211] sm:$0xff]
    %v2698 = vld [vmem:[#allocation2 + $0x219] sm:$0xff]
    %v2699 = vld [vmem:[#allocation2 + $0x221] sm:$0xff]
    %v2700 = vld [vmem:[#allocation2 + $0x229] sm:$0xff]
    %v2701 = vld [vmem:[#allocation2 + $0x231] sm:$0xff]
    %v2702 = vld [vmem:[#allocation2 + $0x239] sm:$0xff]
    %v2703 = vld [vmem:[#allocation2 + $0x241] sm:$0xff]
    %v2704 = vld [vmem:[#allocation2 + $0x249] sm:$0xff]
    %v2705 = vld [vmem:[#allocation2 + $0x251] sm:$0xff]
    %v2706 = vld [vmem:[#allocation2 + $0x259] sm:$0xff]
    %v2707 = vld [vmem:[#allocation2 + $0x261] sm:$0xff]
    %v2708 = vld [vmem:[#allocation2 + $0x269] sm:$0xff]
    %v2709 = vld [vmem:[#allocation2 + $0x271] sm:$0xff]
    %v2710 = vld [vmem:[#allocation2 + $0x279] sm:$0xff]
    %v2711 = vld [vmem:[#allocation2 + $0x281] sm:$0xff]
    %v2712 = vld [vmem:[#allocation2 + $0x289] sm:$0xff]
    %v2713 = vld [vmem:[#allocation2 + $0x291] sm:$0xff]
    %v2714 = vld [vmem:[#allocation2 + $0x299] sm:$0xff]
    %v2715 = vmax.f32 %v2553, %v2634
    %v2716 = vmax.f32 %v2554, %v2635
    %v2717 = vmax.f32 %v2555, %v2636
    %v2718 = vmax.f32 %v2556, %v2637
    %v2719 = vmax.f32 %v2557, %v2638
    %v2720 = vmax.f32 %v2558, %v2639
    %v2721 = vmax.f32 %v2559, %v2640
    %v2722 = vmax.f32 %v2560, %v2641
    %v2723 = vmax.f32 %v2561, %v2642
    %v2724 = vmax.f32 %v2562, %v2643
    %v2725 = vmax.f32 %v2563, %v2644
    %v2726 = vmax.f32 %v2564, %v2645
    %v2727 = vmax.f32 %v2565, %v2646
    %v2728 = vmax.f32 %v2566, %v2647
    %v2729 = vmax.f32 %v2567, %v2648
    %v2730 = vmax.f32 %v2568, %v2649
    %v2731 = vmax.f32 %v2569, %v2650
    %v2732 = vmax.f32 %v2570, %v2651
    %v2733 = vmax.f32 %v2571, %v2652
    %v2734 = vmax.f32 %v2572, %v2653
    %v2735 = vmax.f32 %v2573, %v2654
    %v2736 = vmax.f32 %v2574, %v2655
    %v2737 = vmax.f32 %v2575, %v2656
    %v2738 = vmax.f32 %v2576, %v2657
    %v2739 = vmax.f32 %v2577, %v2658
    %v2740 = vmax.f32 %v2578, %v2659
    %v2741 = vmax.f32 %v2579, %v2660
    %v2742 = vmax.f32 %v2580, %v2661
    %v2743 = vmax.f32 %v2581, %v2662
    %v2744 = vmax.f32 %v2582, %v2663
    %v2745 = vmax.f32 %v2583, %v2664
    %v2746 = vmax.f32 %v2584, %v2665
    %v2747 = vmax.f32 %v2585, %v2666
    %v2748 = vmax.f32 %v2586, %v2667
    %v2749 = vmax.f32 %v2587, %v2668
    %v2750 = vmax.f32 %v2588, %v2669
    %v2751 = vmax.f32 %v2589, %v2670
    %v2752 = vmax.f32 %v2590, %v2671
    %v2753 = vmax.f32 %v2591, %v2672
    %v2754 = vmax.f32 %v2592, %v2673
    %v2755 = vmax.f32 %v2593, %v2674
    %v2756 = vmax.f32 %v2594, %v2675
    %v2757 = vmax.f32 %v2595, %v2676
    %v2758 = vmax.f32 %v2596, %v2677
    %v2759 = vmax.f32 %v2597, %v2678
    %v2760 = vmax.f32 %v2598, %v2679
    %v2761 = vmax.f32 %v2599, %v2680
    %v2762 = vmax.f32 %v2600, %v2681
    %v2763 = vmax.f32 %v2601, %v2682
    %v2764 = vmax.f32 %v2602, %v2683
    %v2765 = vmax.f32 %v2603, %v2684
    %v2766 = vmax.f32 %v2604, %v2685
    %v2767 = vmax.f32 %v2605, %v2686
    %v2768 = vmax.f32 %v2606, %v2687
    %v2769 = vmax.f32 %v2607, %v2688
    %v2770 = vmax.f32 %v2608, %v2689
    %v2771 = vmax.f32 %v2609, %v2690
    %v2772 = vmax.f32 %v2610, %v2691
    %v2773 = vmax.f32 %v2611, %v2692
    %v2774 = vmax.f32 %v2612, %v2693
    %v2775 = vmax.f32 %v2613, %v2694
    %v2776 = vmax.f32 %v2614, %v2695
    %v2777 = vmax.f32 %v2615, %v2696
    %v2778 = vmax.f32 %v2616, %v2697
    %v2779 = vmax.f32 %v2617, %v2698
    %v2780 = vmax.f32 %v2618, %v2699
    %v2781 = vmax.f32 %v2619, %v2700
    %v2782 = vmax.f32 %v2620, %v2701
    %v2783 = vmax.f32 %v2621, %v2702
    %v2784 = vmax.f32 %v2622, %v2703
    %v2785 = vmax.f32 %v2623, %v2704
    %v2786 = vmax.f32 %v2624, %v2705
    %v2787 = vmax.f32 %v2625, %v2706
    %v2788 = vmax.f32 %v2626, %v2707
    %v2789 = vmax.f32 %v2627, %v2708
    %v2790 = vmax.f32 %v2628, %v2709
    %v2791 = vmax.f32 %v2629, %v2710
    %v2792 = vmax.f32 %v2630, %v2711
    %v2793 = vmax.f32 %v2631, %v2712
    %v2794 = vmax.f32 %v2632, %v2713
    %v2795 = vmax.f32 %v2633, %v2714
    %v2796 = vld [vmem:[#allocation2 + $0x2a1] sm:$0xff]
    %v2797 = vld [vmem:[#allocation2 + $0x2a9] sm:$0xff]
    %v2798 = vmax.f32 %v2715, %v2636
    %v2799 = vmax.f32 %v2716, %v2637
    %v2800 = vmax.f32 %v2717, %v2638
    %v2801 = vmax.f32 %v2718, %v2639
    %v2802 = vmax.f32 %v2719, %v2640
    %v2803 = vmax.f32 %v2720, %v2641
    %v2804 = vmax.f32 %v2721, %v2642
    %v2805 = vmax.f32 %v2722, %v2643
    %v2806 = vmax.f32 %v2723, %v2644
    %v2807 = vmax.f32 %v2724, %v2645
    %v2808 = vmax.f32 %v2725, %v2646
    %v2809 = vmax.f32 %v2726, %v2647
    %v2810 = vmax.f32 %v2727, %v2648
    %v2811 = vmax.f32 %v2728, %v2649
    %v2812 = vmax.f32 %v2729, %v2650
    %v2813 = vmax.f32 %v2730, %v2651
    %v2814 = vmax.f32 %v2731, %v2652
    %v2815 = vmax.f32 %v2732, %v2653
    %v2816 = vmax.f32 %v2733, %v2654
    %v2817 = vmax.f32 %v2734, %v2655
    %v2818 = vmax.f32 %v2735, %v2656
    %v2819 = vmax.f32 %v2736, %v2657
    %v2820 = vmax.f32 %v2737, %v2658
    %v2821 = vmax.f32 %v2738, %v2659
    %v2822 = vmax.f32 %v2739, %v2660
    %v2823 = vmax.f32 %v2740, %v2661
    %v2824 = vmax.f32 %v2741, %v2662
    %v2825 = vmax.f32 %v2742, %v2663
    %v2826 = vmax.f32 %v2743, %v2664
    %v2827 = vmax.f32 %v2744, %v2665
    %v2828 = vmax.f32 %v2745, %v2666
    %v2829 = vmax.f32 %v2746, %v2667
    %v2830 = vmax.f32 %v2747, %v2668
    %v2831 = vmax.f32 %v2748, %v2669
    %v2832 = vmax.f32 %v2749, %v2670
    %v2833 = vmax.f32 %v2750, %v2671
    %v2834 = vmax.f32 %v2751, %v2672
    %v2835 = vmax.f32 %v2752, %v2673
    %v2836 = vmax.f32 %v2753, %v2674
    %v2837 = vmax.f32 %v2754, %v2675
    %v2838 = vmax.f32 %v2755, %v2676
    %v2839 = vmax.f32 %v2756, %v2677
    %v2840 = vmax.f32 %v2757, %v2678
    %v2841 = vmax.f32 %v2758, %v2679
    %v2842 = vmax.f32 %v2759, %v2680
    %v2843 = vmax.f32 %v2760, %v2681
    %v2844 = vmax.f32 %v2761, %v2682
    %v2845 = vmax.f32 %v2762, %v2683
    %v2846 = vmax.f32 %v2763, %v2684
    %v2847 = vmax.f32 %v2764, %v2685
    %v2848 = vmax.f32 %v2765, %v2686
    %v2849 = vmax.f32 %v2766, %v2687
    %v2850 = vmax.f32 %v2767, %v2688
    %v2851 = vmax.f32 %v2768, %v2689
    %v2852 = vmax.f32 %v2769, %v2690
    %v2853 = vmax.f32 %v2770, %v2691
    %v2854 = vmax.f32 %v2771, %v2692
    %v2855 = vmax.f32 %v2772, %v2693
    %v2856 = vmax.f32 %v2773, %v2694
    %v2857 = vmax.f32 %v2774, %v2695
    %v2858 = vmax.f32 %v2775, %v2696
    %v2859 = vmax.f32 %v2776, %v2697
    %v2860 = vmax.f32 %v2777, %v2698
    %v2861 = vmax.f32 %v2778, %v2699
    %v2862 = vmax.f32 %v2779, %v2700
    %v2863 = vmax.f32 %v2780, %v2701
    %v2864 = vmax.f32 %v2781, %v2702
    %v2865 = vmax.f32 %v2782, %v2703
    %v2866 = vmax.f32 %v2783, %v2704
    %v2867 = vmax.f32 %v2784, %v2705
    %v2868 = vmax.f32 %v2785, %v2706
    %v2869 = vmax.f32 %v2786, %v2707
    %v2870 = vmax.f32 %v2787, %v2708
    %v2871 = vmax.f32 %v2788, %v2709
    %v2872 = vmax.f32 %v2789, %v2710
    %v2873 = vmax.f32 %v2790, %v2711
    %v2874 = vmax.f32 %v2791, %v2712
    %v2875 = vmax.f32 %v2792, %v2713
    %v2876 = vmax.f32 %v2793, %v2714
    %v2877 = vmax.f32 %v2794, %v2796
    %v2878 = vmax.f32 %v2795, %v2797
    %v2879 = vld [vmem:[#allocation2 + $0x2a] sm:$0xff]
    %v2880 = vld [vmem:[#allocation2 + $0x32] sm:$0xff]
    %v2881 = vld [vmem:[#allocation2 + $0x3a] sm:$0xff]
    %v2882 = vld [vmem:[#allocation2 + $0x42] sm:$0xff]
    %v2883 = vld [vmem:[#allocation2 + $0x4a] sm:$0xff]
    %v2884 = vld [vmem:[#allocation2 + $0x52] sm:$0xff]
    %v2885 = vld [vmem:[#allocation2 + $0x5a] sm:$0xff]
    %v2886 = vld [vmem:[#allocation2 + $0x62] sm:$0xff]
    %v2887 = vld [vmem:[#allocation2 + $0x6a] sm:$0xff]
    %v2888 = vld [vmem:[#allocation2 + $0x72] sm:$0xff]
    %v2889 = vld [vmem:[#allocation2 + $0x7a] sm:$0xff]
    %v2890 = vld [vmem:[#allocation2 + $0x82] sm:$0xff]
    %v2891 = vld [vmem:[#allocation2 + $0x8a] sm:$0xff]
    %v2892 = vld [vmem:[#allocation2 + $0x92] sm:$0xff]
    %v2893 = vld [vmem:[#allocation2 + $0x9a] sm:$0xff]
    %v2894 = vld [vmem:[#allocation2 + $0xa2] sm:$0xff]
    %v2895 = vld [vmem:[#allocation2 + $0xaa] sm:$0xff]
    %v2896 = vld [vmem:[#allocation2 + $0xb2] sm:$0xff]
    %v2897 = vld [vmem:[#allocation2 + $0xba] sm:$0xff]
    %v2898 = vld [vmem:[#allocation2 + $0xc2] sm:$0xff]
    %v2899 = vld [vmem:[#allocation2 + $0xca] sm:$0xff]
    %v2900 = vld [vmem:[#allocation2 + $0xd2] sm:$0xff]
    %v2901 = vld [vmem:[#allocation2 + $0xda] sm:$0xff]
    %v2902 = vld [vmem:[#allocation2 + $0xe2] sm:$0xff]
    %v2903 = vld [vmem:[#allocation2 + $0xea] sm:$0xff]
    %v2904 = vld [vmem:[#allocation2 + $0xf2] sm:$0xff]
    %v2905 = vld [vmem:[#allocation2 + $0xfa] sm:$0xff]
    %v2906 = vld [vmem:[#allocation2 + $0x102] sm:$0xff]
    %v2907 = vld [vmem:[#allocation2 + $0x10a] sm:$0xff]
    %v2908 = vld [vmem:[#allocation2 + $0x112] sm:$0xff]
    %v2909 = vld [vmem:[#allocation2 + $0x11a] sm:$0xff]
    %v2910 = vld [vmem:[#allocation2 + $0x122] sm:$0xff]
    %v2911 = vld [vmem:[#allocation2 + $0x12a] sm:$0xff]
    %v2912 = vld [vmem:[#allocation2 + $0x132] sm:$0xff]
    %v2913 = vld [vmem:[#allocation2 + $0x13a] sm:$0xff]
    %v2914 = vld [vmem:[#allocation2 + $0x142] sm:$0xff]
    %v2915 = vld [vmem:[#allocation2 + $0x14a] sm:$0xff]
    %v2916 = vld [vmem:[#allocation2 + $0x152] sm:$0xff]
    %v2917 = vld [vmem:[#allocation2 + $0x15a] sm:$0xff]
    %v2918 = vld [vmem:[#allocation2 + $0x162] sm:$0xff]
    %v2919 = vld [vmem:[#allocation2 + $0x16a] sm:$0xff]
    %v2920 = vld [vmem:[#allocation2 + $0x172] sm:$0xff]
    %v2921 = vld [vmem:[#allocation2 + $0x17a] sm:$0xff]
    %v2922 = vld [vmem:[#allocation2 + $0x182] sm:$0xff]
    %v2923 = vld [vmem:[#allocation2 + $0x18a] sm:$0xff]
    %v2924 = vld [vmem:[#allocation2 + $0x192] sm:$0xff]
    %v2925 = vld [vmem:[#allocation2 + $0x19a] sm:$0xff]
    %v2926 = vld [vmem:[#allocation2 + $0x1a2] sm:$0xff]
    %v2927 = vld [vmem:[#allocation2 + $0x1aa] sm:$0xff]
    %v2928 = vld [vmem:[#allocation2 + $0x1b2] sm:$0xff]
    %v2929 = vld [vmem:[#allocation2 + $0x1ba] sm:$0xff]
    %v2930 = vld [vmem:[#allocation2 + $0x1c2] sm:$0xff]
    %v2931 = vld [vmem:[#allocation2 + $0x1ca] sm:$0xff]
    %v2932 = vld [vmem:[#allocation2 + $0x1d2] sm:$0xff]
    %v2933 = vld [vmem:[#allocation2 + $0x1da] sm:$0xff]
    %v2934 = vld [vmem:[#allocation2 + $0x1e2] sm:$0xff]
    %v2935 = vld [vmem:[#allocation2 + $0x1ea] sm:$0xff]
    %v2936 = vld [vmem:[#allocation2 + $0x1f2] sm:$0xff]
    %v2937 = vld [vmem:[#allocation2 + $0x1fa] sm:$0xff]
    %v2938 = vld [vmem:[#allocation2 + $0x202] sm:$0xff]
    %v2939 = vld [vmem:[#allocation2 + $0x20a] sm:$0xff]
    %v2940 = vld [vmem:[#allocation2 + $0x212] sm:$0xff]
    %v2941 = vld [vmem:[#allocation2 + $0x21a] sm:$0xff]
    %v2942 = vld [vmem:[#allocation2 + $0x222] sm:$0xff]
    %v2943 = vld [vmem:[#allocation2 + $0x22a] sm:$0xff]
    %v2944 = vld [vmem:[#allocation2 + $0x232] sm:$0xff]
    %v2945 = vld [vmem:[#allocation2 + $0x23a] sm:$0xff]
    %v2946 = vld [vmem:[#allocation2 + $0x242] sm:$0xff]
    %v2947 = vld [vmem:[#allocation2 + $0x24a] sm:$0xff]
    %v2948 = vld [vmem:[#allocation2 + $0x252] sm:$0xff]
    %v2949 = vld [vmem:[#allocation2 + $0x25a] sm:$0xff]
    %v2950 = vld [vmem:[#allocation2 + $0x262] sm:$0xff]
    %v2951 = vld [vmem:[#allocation2 + $0x26a] sm:$0xff]
    %v2952 = vld [vmem:[#allocation2 + $0x272] sm:$0xff]
    %v2953 = vld [vmem:[#allocation2 + $0x27a] sm:$0xff]
    %v2954 = vld [vmem:[#allocation2 + $0x282] sm:$0xff]
    %v2955 = vld [vmem:[#allocation2 + $0x28a] sm:$0xff]
    %v2956 = vld [vmem:[#allocation2 + $0x292] sm:$0xff]
    %v2957 = vld [vmem:[#allocation2 + $0x29a] sm:$0xff]
    %v2958 = vld [vmem:[#allocation2 + $0x2a2] sm:$0xff]
    %v2959 = vld [vmem:[#allocation2 + $0x2aa] sm:$0xff]
    %v2960 = vmax.f32 %v2798, %v2879
    %v2961 = vmax.f32 %v2799, %v2880
    %v2962 = vmax.f32 %v2800, %v2881
    %v2963 = vmax.f32 %v2801, %v2882
    %v2964 = vmax.f32 %v2802, %v2883
    %v2965 = vmax.f32 %v2803, %v2884
    %v2966 = vmax.f32 %v2804, %v2885
    %v2967 = vmax.f32 %v2805, %v2886
    %v2968 = vmax.f32 %v2806, %v2887
    %v2969 = vmax.f32 %v2807, %v2888
    %v2970 = vmax.f32 %v2808, %v2889
    %v2971 = vmax.f32 %v2809, %v2890
    %v2972 = vmax.f32 %v2810, %v2891
    %v2973 = vmax.f32 %v2811, %v2892
    %v2974 = vmax.f32 %v2812, %v2893
    %v2975 = vmax.f32 %v2813, %v2894
    %v2976 = vmax.f32 %v2814, %v2895
    %v2977 = vmax.f32 %v2815, %v2896
    %v2978 = vmax.f32 %v2816, %v2897
    %v2979 = vmax.f32 %v2817, %v2898
    %v2980 = vmax.f32 %v2818, %v2899
    %v2981 = vmax.f32 %v2819, %v2900
    %v2982 = vmax.f32 %v2820, %v2901
    %v2983 = vmax.f32 %v2821, %v2902
    %v2984 = vmax.f32 %v2822, %v2903
    %v2985 = vmax.f32 %v2823, %v2904
    %v2986 = vmax.f32 %v2824, %v2905
    %v2987 = vmax.f32 %v2825, %v2906
    %v2988 = vmax.f32 %v2826, %v2907
    %v2989 = vmax.f32 %v2827, %v2908
    %v2990 = vmax.f32 %v2828, %v2909
    %v2991 = vmax.f32 %v2829, %v2910
    %v2992 = vmax.f32 %v2830, %v2911
    %v2993 = vmax.f32 %v2831, %v2912
    %v2994 = vmax.f32 %v2832, %v2913
    %v2995 = vmax.f32 %v2833, %v2914
    %v2996 = vmax.f32 %v2834, %v2915
    %v2997 = vmax.f32 %v2835, %v2916
    %v2998 = vmax.f32 %v2836, %v2917
    %v2999 = vmax.f32 %v2837, %v2918
    %v3000 = vmax.f32 %v2838, %v2919
    %v3001 = vmax.f32 %v2839, %v2920
    %v3002 = vmax.f32 %v2840, %v2921
    %v3003 = vmax.f32 %v2841, %v2922
    %v3004 = vmax.f32 %v2842, %v2923
    %v3005 = vmax.f32 %v2843, %v2924
    %v3006 = vmax.f32 %v2844, %v2925
    %v3007 = vmax.f32 %v2845, %v2926
    %v3008 = vmax.f32 %v2846, %v2927
    %v3009 = vmax.f32 %v2847, %v2928
    %v3010 = vmax.f32 %v2848, %v2929
    %v3011 = vmax.f32 %v2849, %v2930
    %v3012 = vmax.f32 %v2850, %v2931
    %v3013 = vmax.f32 %v2851, %v2932
    %v3014 = vmax.f32 %v2852, %v2933
    %v3015 = vmax.f32 %v2853, %v2934
    %v3016 = vmax.f32 %v2854, %v2935
    %v3017 = vmax.f32 %v2855, %v2936
    %v3018 = vmax.f32 %v2856, %v2937
    %v3019 = vmax.f32 %v2857, %v2938
    %v3020 = vmax.f32 %v2858, %v2939
    %v3021 = vmax.f32 %v2859, %v2940
    %v3022 = vmax.f32 %v2860, %v2941
    %v3023 = vmax.f32 %v2861, %v2942
    %v3024 = vmax.f32 %v2862, %v2943
    %v3025 = vmax.f32 %v2863, %v2944
    %v3026 = vmax.f32 %v2864, %v2945
    %v3027 = vmax.f32 %v2865, %v2946
    %v3028 = vmax.f32 %v2866, %v2947
    %v3029 = vmax.f32 %v2867, %v2948
    %v3030 = vmax.f32 %v2868, %v2949
    %v3031 = vmax.f32 %v2869, %v2950
    %v3032 = vmax.f32 %v2870, %v2951
    %v3033 = vmax.f32 %v2871, %v2952
    %v3034 = vmax.f32 %v2872, %v2953
    %v3035 = vmax.f32 %v2873, %v2954
    %v3036 = vmax.f32 %v2874, %v2955
    %v3037 = vmax.f32 %v2875, %v2956
    %v3038 = vmax.f32 %v2876, %v2957
    %v3039 = vmax.f32 %v2877, %v2958
    %v3040 = vmax.f32 %v2878, %v2959
    %v3041 = vld [vmem:[#allocation2 + $0x2b] sm:$0xff]
    %v3042 = vld [vmem:[#allocation2 + $0x33] sm:$0xff]
    %v3043 = vld [vmem:[#allocation2 + $0x3b] sm:$0xff]
    %v3044 = vld [vmem:[#allocation2 + $0x43] sm:$0xff]
    %v3045 = vld [vmem:[#allocation2 + $0x4b] sm:$0xff]
    %v3046 = vld [vmem:[#allocation2 + $0x53] sm:$0xff]
    %v3047 = vld [vmem:[#allocation2 + $0x5b] sm:$0xff]
    %v3048 = vld [vmem:[#allocation2 + $0x63] sm:$0xff]
    %v3049 = vld [vmem:[#allocation2 + $0x6b] sm:$0xff]
    %v3050 = vld [vmem:[#allocation2 + $0x73] sm:$0xff]
    %v3051 = vld [vmem:[#allocation2 + $0x7b] sm:$0xff]
    %v3052 = vld [vmem:[#allocation2 + $0x83] sm:$0xff]
    %v3053 = vld [vmem:[#allocation2 + $0x8b] sm:$0xff]
    %v3054 = vld [vmem:[#allocation2 + $0x93] sm:$0xff]
    %v3055 = vld [vmem:[#allocation2 + $0x9b] sm:$0xff]
    %v3056 = vld [vmem:[#allocation2 + $0xa3] sm:$0xff]
    %v3057 = vld [vmem:[#allocation2 + $0xab] sm:$0xff]
    %v3058 = vld [vmem:[#allocation2 + $0xb3] sm:$0xff]
    %v3059 = vld [vmem:[#allocation2 + $0xbb] sm:$0xff]
    %v3060 = vld [vmem:[#allocation2 + $0xc3] sm:$0xff]
    %v3061 = vld [vmem:[#allocation2 + $0xcb] sm:$0xff]
    %v3062 = vld [vmem:[#allocation2 + $0xd3] sm:$0xff]
    %v3063 = vld [vmem:[#allocation2 + $0xdb] sm:$0xff]
    %v3064 = vld [vmem:[#allocation2 + $0xe3] sm:$0xff]
    %v3065 = vld [vmem:[#allocation2 + $0xeb] sm:$0xff]
    %v3066 = vld [vmem:[#allocation2 + $0xf3] sm:$0xff]
    %v3067 = vld [vmem:[#allocation2 + $0xfb] sm:$0xff]
    %v3068 = vld [vmem:[#allocation2 + $0x103] sm:$0xff]
    %v3069 = vld [vmem:[#allocation2 + $0x10b] sm:$0xff]
    %v3070 = vld [vmem:[#allocation2 + $0x113] sm:$0xff]
    %v3071 = vld [vmem:[#allocation2 + $0x11b] sm:$0xff]
    %v3072 = vld [vmem:[#allocation2 + $0x123] sm:$0xff]
    %v3073 = vld [vmem:[#allocation2 + $0x12b] sm:$0xff]
    %v3074 = vld [vmem:[#allocation2 + $0x133] sm:$0xff]
    %v3075 = vld [vmem:[#allocation2 + $0x13b] sm:$0xff]
    %v3076 = vld [vmem:[#allocation2 + $0x143] sm:$0xff]
    %v3077 = vld [vmem:[#allocation2 + $0x14b] sm:$0xff]
    %v3078 = vld [vmem:[#allocation2 + $0x153] sm:$0xff]
    %v3079 = vld [vmem:[#allocation2 + $0x15b] sm:$0xff]
    %v3080 = vld [vmem:[#allocation2 + $0x163] sm:$0xff]
    %v3081 = vld [vmem:[#allocation2 + $0x16b] sm:$0xff]
    %v3082 = vld [vmem:[#allocation2 + $0x173] sm:$0xff]
    %v3083 = vld [vmem:[#allocation2 + $0x17b] sm:$0xff]
    %v3084 = vld [vmem:[#allocation2 + $0x183] sm:$0xff]
    %v3085 = vld [vmem:[#allocation2 + $0x18b] sm:$0xff]
    %v3086 = vld [vmem:[#allocation2 + $0x193] sm:$0xff]
    %v3087 = vld [vmem:[#allocation2 + $0x19b] sm:$0xff]
    %v3088 = vld [vmem:[#allocation2 + $0x1a3] sm:$0xff]
    %v3089 = vld [vmem:[#allocation2 + $0x1ab] sm:$0xff]
    %v3090 = vld [vmem:[#allocation2 + $0x1b3] sm:$0xff]
    %v3091 = vld [vmem:[#allocation2 + $0x1bb] sm:$0xff]
    %v3092 = vld [vmem:[#allocation2 + $0x1c3] sm:$0xff]
    %v3093 = vld [vmem:[#allocation2 + $0x1cb] sm:$0xff]
    %v3094 = vld [vmem:[#allocation2 + $0x1d3] sm:$0xff]
    %v3095 = vld [vmem:[#allocation2 + $0x1db] sm:$0xff]
    %v3096 = vld [vmem:[#allocation2 + $0x1e3] sm:$0xff]
    %v3097 = vld [vmem:[#allocation2 + $0x1eb] sm:$0xff]
    %v3098 = vld [vmem:[#allocation2 + $0x1f3] sm:$0xff]
    %v3099 = vld [vmem:[#allocation2 + $0x1fb] sm:$0xff]
    %v3100 = vld [vmem:[#allocation2 + $0x203] sm:$0xff]
    %v3101 = vld [vmem:[#allocation2 + $0x20b] sm:$0xff]
    %v3102 = vld [vmem:[#allocation2 + $0x213] sm:$0xff]
    %v3103 = vld [vmem:[#allocation2 + $0x21b] sm:$0xff]
    %v3104 = vld [vmem:[#allocation2 + $0x223] sm:$0xff]
    %v3105 = vld [vmem:[#allocation2 + $0x22b] sm:$0xff]
    %v3106 = vld [vmem:[#allocation2 + $0x233] sm:$0xff]
    %v3107 = vld [vmem:[#allocation2 + $0x23b] sm:$0xff]
    %v3108 = vld [vmem:[#allocation2 + $0x243] sm:$0xff]
    %v3109 = vld [vmem:[#allocation2 + $0x24b] sm:$0xff]
    %v3110 = vld [vmem:[#allocation2 + $0x253] sm:$0xff]
    %v3111 = vld [vmem:[#allocation2 + $0x25b] sm:$0xff]
    %v3112 = vld [vmem:[#allocation2 + $0x263] sm:$0xff]
    %v3113 = vld [vmem:[#allocation2 + $0x26b] sm:$0xff]
    %v3114 = vld [vmem:[#allocation2 + $0x273] sm:$0xff]
    %v3115 = vld [vmem:[#allocation2 + $0x27b] sm:$0xff]
    %v3116 = vld [vmem:[#allocation2 + $0x283] sm:$0xff]
    %v3117 = vld [vmem:[#allocation2 + $0x28b] sm:$0xff]
    %v3118 = vld [vmem:[#allocation2 + $0x293] sm:$0xff]
    %v3119 = vld [vmem:[#allocation2 + $0x29b] sm:$0xff]
    %v3120 = vld [vmem:[#allocation2 + $0x2a3] sm:$0xff]
    %v3121 = vld [vmem:[#allocation2 + $0x2ab] sm:$0xff]
    %v3122 = vmax.f32 %v2960, %v3041
    %v3123 = vmax.f32 %v2961, %v3042
    %v3124 = vmax.f32 %v2962, %v3043
    %v3125 = vmax.f32 %v2963, %v3044
    %v3126 = vmax.f32 %v2964, %v3045
    %v3127 = vmax.f32 %v2965, %v3046
    %v3128 = vmax.f32 %v2966, %v3047
    %v3129 = vmax.f32 %v2967, %v3048
    %v3130 = vmax.f32 %v2968, %v3049
    %v3131 = vmax.f32 %v2969, %v3050
    %v3132 = vmax.f32 %v2970, %v3051
    %v3133 = vmax.f32 %v2971, %v3052
    %v3134 = vmax.f32 %v2972, %v3053
    %v3135 = vmax.f32 %v2973, %v3054
    %v3136 = vmax.f32 %v2974, %v3055
    %v3137 = vmax.f32 %v2975, %v3056
    %v3138 = vmax.f32 %v2976, %v3057
    %v3139 = vmax.f32 %v2977, %v3058
    %v3140 = vmax.f32 %v2978, %v3059
    %v3141 = vmax.f32 %v2979, %v3060
    %v3142 = vmax.f32 %v2980, %v3061
    %v3143 = vmax.f32 %v2981, %v3062
    %v3144 = vmax.f32 %v2982, %v3063
    %v3145 = vmax.f32 %v2983, %v3064
    %v3146 = vmax.f32 %v2984, %v3065
    %v3147 = vmax.f32 %v2985, %v3066
    %v3148 = vmax.f32 %v2986, %v3067
    %v3149 = vmax.f32 %v2987, %v3068
    %v3150 = vmax.f32 %v2988, %v3069
    %v3151 = vmax.f32 %v2989, %v3070
    %v3152 = vmax.f32 %v2990, %v3071
    %v3153 = vmax.f32 %v2991, %v3072
    %v3154 = vmax.f32 %v2992, %v3073
    %v3155 = vmax.f32 %v2993, %v3074
    %v3156 = vmax.f32 %v2994, %v3075
    %v3157 = vmax.f32 %v2995, %v3076
    %v3158 = vmax.f32 %v2996, %v3077
    %v3159 = vmax.f32 %v2997, %v3078
    %v3160 = vmax.f32 %v2998, %v3079
    %v3161 = vmax.f32 %v2999, %v3080
    %v3162 = vmax.f32 %v3000, %v3081
    %v3163 = vmax.f32 %v3001, %v3082
    %v3164 = vmax.f32 %v3002, %v3083
    %v3165 = vmax.f32 %v3003, %v3084
    %v3166 = vmax.f32 %v3004, %v3085
    %v3167 = vmax.f32 %v3005, %v3086
    %v3168 = vmax.f32 %v3006, %v3087
    %v3169 = vmax.f32 %v3007, %v3088
    %v3170 = vmax.f32 %v3008, %v3089
    %v3171 = vmax.f32 %v3009, %v3090
    %v3172 = vmax.f32 %v3010, %v3091
    %v3173 = vmax.f32 %v3011, %v3092
    %v3174 = vmax.f32 %v3012, %v3093
    %v3175 = vmax.f32 %v3013, %v3094
    %v3176 = vmax.f32 %v3014, %v3095
    %v3177 = vmax.f32 %v3015, %v3096
    %v3178 = vmax.f32 %v3016, %v3097
    %v3179 = vmax.f32 %v3017, %v3098
    %v3180 = vmax.f32 %v3018, %v3099
    %v3181 = vmax.f32 %v3019, %v3100
    %v3182 = vmax.f32 %v3020, %v3101
    %v3183 = vmax.f32 %v3021, %v3102
    %v3184 = vmax.f32 %v3022, %v3103
    %v3185 = vmax.f32 %v3023, %v3104
    %v3186 = vmax.f32 %v3024, %v3105
    %v3187 = vmax.f32 %v3025, %v3106
    %v3188 = vmax.f32 %v3026, %v3107
    %v3189 = vmax.f32 %v3027, %v3108
    %v3190 = vmax.f32 %v3028, %v3109
    %v3191 = vmax.f32 %v3029, %v3110
    %v3192 = vmax.f32 %v3030, %v3111
    %v3193 = vmax.f32 %v3031, %v3112
    %v3194 = vmax.f32 %v3032, %v3113
    %v3195 = vmax.f32 %v3033, %v3114
    %v3196 = vmax.f32 %v3034, %v3115
    %v3197 = vmax.f32 %v3035, %v3116
    %v3198 = vmax.f32 %v3036, %v3117
    %v3199 = vmax.f32 %v3037, %v3118
    %v3200 = vmax.f32 %v3038, %v3119
    %v3201 = vmax.f32 %v3039, %v3120
    %v3202 = vmax.f32 %v3040, %v3121
    %v3203 = vld [vmem:[%s4] sm:$0xff]
    %v3204 = vld [vmem:[%s4 + $0x8] sm:$0xff]
    %v3205 = vld [vmem:[%s4 + $0x10] sm:$0xff]
    %v3206 = vld [vmem:[%s4 + $0x18] sm:$0xff]
    %v3207 = vld [vmem:[%s4 + $0x20] sm:$0xff]
    %v3208 = vld [vmem:[%s4 + $0x28] sm:$0xff]
    %v3209 = vld [vmem:[%s4 + $0x30] sm:$0xff]
    %v3210 = vld [vmem:[%s4 + $0x38] sm:$0xff]
    %v3211 = vld [vmem:[%s4 + $0x40] sm:$0xff]
    %v3212 = vld [vmem:[%s4 + $0x48] sm:$0xff]
    %v3213 = vld [vmem:[%s4 + $0x50] sm:$0xff]
    %v3214 = vld [vmem:[%s4 + $0x58] sm:$0xff]
    %v3215 = vld [vmem:[%s4 + $0x60] sm:$0xff]
    %v3216 = vld [vmem:[%s4 + $0x68] sm:$0xff]
    %v3217 = vld [vmem:[%s4 + $0x70] sm:$0xff]
    %v3218 = vld [vmem:[%s4 + $0x78] sm:$0xff]
    %v3219 = vld [vmem:[%s4 + $0x80] sm:$0xff]
    %v3220 = vld [vmem:[%s4 + $0x88] sm:$0xff]
    %v3221 = vld [vmem:[%s4 + $0x90] sm:$0xff]
    %v3222 = vld [vmem:[%s4 + $0x98] sm:$0xff]
    %v3223 = vld [vmem:[%s4 + $0xa0] sm:$0xff]
    %v3224 = vld [vmem:[%s4 + $0xa8] sm:$0xff]
    %v3225 = vld [vmem:[%s4 + $0xb0] sm:$0xff]
    %v3226 = vld [vmem:[%s4 + $0xb8] sm:$0xff]
    %v3227 = vld [vmem:[%s4 + $0xc0] sm:$0xff]
    %v3228 = vld [vmem:[%s4 + $0xc8] sm:$0xff]
    %v3229 = vld [vmem:[%s4 + $0xd0] sm:$0xff]
    %v3230 = vld [vmem:[%s4 + $0xd8] sm:$0xff]
    %v3231 = vld [vmem:[%s4 + $0xe0] sm:$0xff]
    %v3232 = vld [vmem:[%s4 + $0xe8] sm:$0xff]
    %v3233 = vld [vmem:[%s4 + $0xf0] sm:$0xff]
    %v3234 = vld [vmem:[%s4 + $0xf8] sm:$0xff]
    %v3235 = vld [vmem:[%s4 + $0x100] sm:$0xff]
    %v3236 = vld [vmem:[%s4 + $0x108] sm:$0xff]
    %v3237 = vld [vmem:[%s4 + $0x110] sm:$0xff]
    %v3238 = vld [vmem:[%s4 + $0x118] sm:$0xff]
    %v3239 = vld [vmem:[%s4 + $0x120] sm:$0xff]
    %v3240 = vld [vmem:[%s4 + $0x128] sm:$0xff]
    %v3241 = vld [vmem:[%s4 + $0x130] sm:$0xff]
    %v3242 = vld [vmem:[%s4 + $0x138] sm:$0xff]
    %v3243 = vld [vmem:[%s4 + $0x140] sm:$0xff]
    %v3244 = vld [vmem:[%s4 + $0x148] sm:$0xff]
    %v3245 = vld [vmem:[%s4 + $0x150] sm:$0xff]
    %v3246 = vld [vmem:[%s4 + $0x158] sm:$0xff]
    %v3247 = vld [vmem:[%s4 + $0x160] sm:$0xff]
    %v3248 = vld [vmem:[%s4 + $0x168] sm:$0xff]
    %v3249 = vld [vmem:[%s4 + $0x170] sm:$0xff]
    %v3250 = vld [vmem:[%s4 + $0x178] sm:$0xff]
    %v3251 = vld [vmem:[%s4 + $0x180] sm:$0xff]
    %v3252 = vld [vmem:[%s4 + $0x188] sm:$0xff]
    %v3253 = vld [vmem:[%s4 + $0x190] sm:$0xff]
    %v3254 = vld [vmem:[%s4 + $0x198] sm:$0xff]
    %v3255 = vld [vmem:[%s4 + $0x1a0] sm:$0xff]
    %v3256 = vld [vmem:[%s4 + $0x1a8] sm:$0xff]
    %v3257 = vld [vmem:[%s4 + $0x1b0] sm:$0xff]
    %v3258 = vld [vmem:[%s4 + $0x1b8] sm:$0xff]
    %v3259 = vld [vmem:[%s4 + $0x1c0] sm:$0xff]
    %v3260 = vld [vmem:[%s4 + $0x1c8] sm:$0xff]
    %v3261 = vld [vmem:[%s4 + $0x1d0] sm:$0xff]
    %v3262 = vld [vmem:[%s4 + $0x1d8] sm:$0xff]
    %v3263 = vld [vmem:[%s4 + $0x1e0] sm:$0xff]
    %v3264 = vld [vmem:[%s4 + $0x1e8] sm:$0xff]
    %v3265 = vld [vmem:[%s4 + $0x1f0] sm:$0xff]
    %v3266 = vld [vmem:[%s4 + $0x1f8] sm:$0xff]
    %v3267 = vld [vmem:[%s4 + $0x200] sm:$0xff]
    %v3268 = vld [vmem:[%s4 + $0x208] sm:$0xff]
    %v3269 = vld [vmem:[%s4 + $0x210] sm:$0xff]
    %v3270 = vld [vmem:[%s4 + $0x218] sm:$0xff]
    %v3271 = vld [vmem:[%s4 + $0x220] sm:$0xff]
    %v3272 = vld [vmem:[%s4 + $0x228] sm:$0xff]
    %v3273 = vld [vmem:[%s4 + $0x230] sm:$0xff]
    %v3274 = vld [vmem:[%s4 + $0x238] sm:$0xff]
    %v3275 = vld [vmem:[%s4 + $0x240] sm:$0xff]
    %v3276 = vld [vmem:[%s4 + $0x248] sm:$0xff]
    %v3277 = vld [vmem:[%s4 + $0x250] sm:$0xff]
    %v3278 = vld [vmem:[%s4 + $0x258] sm:$0xff]
    %v3279 = vld [vmem:[%s4 + $0x260] sm:$0xff]
    %v3280 = vld [vmem:[%s4 + $0x268] sm:$0xff]
    %v3281 = vld [vmem:[%s4 + $0x270] sm:$0xff]
    %v3282 = vld [vmem:[%s4 + $0x278] sm:$0xff]
    %v3283 = vld [vmem:[%s4 + $0x280] sm:$0xff]
    %v3284 = vld [vmem:[%s4 + $0x288] sm:$0xff]
    %v3285 = vld [vmem:[%s4 + $0x290] sm:$0xff]
    %v3286 = vld [vmem:[%s4 + $0x298] sm:$0xff]
    %v3287 = vld [vmem:[%s4 + $0x2a0] sm:$0xff]
    %v3288 = vld [vmem:[%s4 + $0x2a8] sm:$0xff]
    %v3289 = vld [vmem:[%s4 + $0x2b0] sm:$0xff]
    %v3290 = vld [vmem:[%s4 + $0x2b8] sm:$0xff]
    %v3291 = vld [vmem:[%s4 + $0x2c0] sm:$0xff]
    %v3292 = vld [vmem:[%s4 + $0x2c8] sm:$0xff]
    %v3293 = vld [vmem:[%s4 + $0x2d0] sm:$0xff]
    %v3294 = vld [vmem:[%s4 + $0x2d8] sm:$0xff]
    %v3295 = vld [vmem:[%s4 + $0x2e0] sm:$0xff]
    %v3296 = vld [vmem:[%s4 + $0x2e8] sm:$0xff]
    %v3297 = vld [vmem:[%s4 + $0x2f0] sm:$0xff]
    %v3298 = vld [vmem:[%s4 + $0x2f8] sm:$0xff]
    %v3299 = vld [vmem:[%s4 + $0x300] sm:$0xff]
    %v3300 = vld [vmem:[%s4 + $0x308] sm:$0xff]
    %v3301 = vld [vmem:[%s4 + $0x310] sm:$0xff]
    %v3302 = vld [vmem:[%s4 + $0x318] sm:$0xff]
    %v3303 = vld [vmem:[%s4 + $0x320] sm:$0xff]
    %v3304 = vld [vmem:[%s4 + $0x328] sm:$0xff]
    %v3305 = vld [vmem:[%s4 + $0x330] sm:$0xff]
    %v3306 = vld [vmem:[%s4 + $0x338] sm:$0xff]
    %v3307 = vld [vmem:[%s4 + $0x340] sm:$0xff]
    %v3308 = vld [vmem:[%s4 + $0x348] sm:$0xff]
    %v3309 = vld [vmem:[%s4 + $0x350] sm:$0xff]
    %v3310 = vld [vmem:[%s4 + $0x358] sm:$0xff]
    %v3311 = vld [vmem:[%s4 + $0x360] sm:$0xff]
    %v3312 = vld [vmem:[%s4 + $0x368] sm:$0xff]
    %v3313 = vld [vmem:[%s4 + $0x370] sm:$0xff]
    %v3314 = vld [vmem:[%s4 + $0x378] sm:$0xff]
    %v3315 = vld [vmem:[%s4 + $0x380] sm:$0xff]
    %v3316 = vld [vmem:[%s4 + $0x388] sm:$0xff]
    %v3317 = vld [vmem:[%s4 + $0x390] sm:$0xff]
    %v3318 = vld [vmem:[%s4 + $0x398] sm:$0xff]
    %v3319 = vld [vmem:[%s4 + $0x3a0] sm:$0xff]
    %v3320 = vld [vmem:[%s4 + $0x3a8] sm:$0xff]
    %v3321 = vld [vmem:[%s4 + $0x3b0] sm:$0xff]
    %v3322 = vld [vmem:[%s4 + $0x3b8] sm:$0xff]
    %v3323 = vld [vmem:[%s4 + $0x3c0] sm:$0xff]
    %v3324 = vld [vmem:[%s4 + $0x3c8] sm:$0xff]
    %v3325 = vld [vmem:[%s4 + $0x3d0] sm:$0xff]
    %v3326 = vld [vmem:[%s4 + $0x3d8] sm:$0xff]
    %v3327 = vld [vmem:[%s4 + $0x3e0] sm:$0xff]
    %v3328 = vld [vmem:[%s4 + $0x3e8] sm:$0xff]
    %v3329 = vld [vmem:[%s4 + $0x3f0] sm:$0xff]
    %v3330 = vld [vmem:[%s4 + $0x3f8] sm:$0xff]
    %v3331 = vld [vmem:[%s4 + $0x400] sm:$0xff]
    %v3332 = vld [vmem:[%s4 + $0x408] sm:$0xff]
    %v3333 = vld [vmem:[%s4 + $0x410] sm:$0xff]
    %v3334 = vld [vmem:[%s4 + $0x418] sm:$0xff]
    %v3335 = vld [vmem:[%s4 + $0x420] sm:$0xff]
    %v3336 = vld [vmem:[%s4 + $0x428] sm:$0xff]
    %v3337 = vld [vmem:[%s4 + $0x430] sm:$0xff]
    %v3338 = vld [vmem:[%s4 + $0x438] sm:$0xff]
    %v3339 = vld [vmem:[%s4 + $0x440] sm:$0xff]
    %v3340 = vld [vmem:[%s4 + $0x448] sm:$0xff]
    %v3341 = vld [vmem:[%s4 + $0x450] sm:$0xff]
    %v3342 = vld [vmem:[%s4 + $0x458] sm:$0xff]
    %v3343 = vld [vmem:[%s4 + $0x460] sm:$0xff]
    %v3344 = vld [vmem:[%s4 + $0x468] sm:$0xff]
    %v3345 = vld [vmem:[%s4 + $0x470] sm:$0xff]
    %v3346 = vld [vmem:[%s4 + $0x478] sm:$0xff]
    %v3347 = vld [vmem:[%s4 + $0x480] sm:$0xff]
    %v3348 = vld [vmem:[%s4 + $0x488] sm:$0xff]
    %v3349 = vld [vmem:[%s4 + $0x490] sm:$0xff]
    %v3350 = vld [vmem:[%s4 + $0x498] sm:$0xff]
    %v3351 = vld [vmem:[%s4 + $0x4a0] sm:$0xff]
    %v3352 = vld [vmem:[%s4 + $0x4a8] sm:$0xff]
    %vm3353 = vcmask 64512
    %v3355 = vsel %vm3353, %v3208, 0
    %v3358 = vsel %vm3353, %v3214, 0
    %v3361 = vsel %vm3353, %v3220, 0
    %v3364 = vsel %vm3353, %v3226, 0
    %v3367 = vsel %vm3353, %v3232, 0
    %v3370 = vsel %vm3353, %v3238, 0
    %v3373 = vsel %vm3353, %v3244, 0
    %v3376 = vsel %vm3353, %v3250, 0
    %v3379 = vsel %vm3353, %v3256, 0
    %v3382 = vsel %vm3353, %v3262, 0
    %v3385 = vsel %vm3353, %v3268, 0
    %v3388 = vsel %vm3353, %v3274, 0
    %v3391 = vsel %vm3353, %v3280, 0
    %v3394 = vsel %vm3353, %v3286, 0
    %v3397 = vsel %vm3353, %v3292, 0
    %v3400 = vsel %vm3353, %v3298, 0
    %v3403 = vsel %vm3353, %v3304, 0
    %v3406 = vsel %vm3353, %v3310, 0
    %v3409 = vsel %vm3353, %v3316, 0
    %v3412 = vsel %vm3353, %v3322, 0
    %v3415 = vsel %vm3353, %v3328, 0
    %v3418 = vsel %vm3353, %v3334, 0
    %v3421 = vsel %vm3353, %v3340, 0
    %v3424 = vsel %vm3353, %v3346, 0
    %v3427 = vsel %vm3353, %v3352, 0
    %3429 = vmatpush.msra.mxu0 %v3137
    %3430 = vmatpush.msra.mxu0 %v3136
    %3431 = vmatpush.msra.mxu0 %v3135
    %3432 = vmatpush.msra.mxu0 %v3134
    %3433 = vmatpush.msra.mxu0 %v3133
    %3434 = vmatpush.msra.mxu0 %v3132
    %3435 = vmatpush.msra.mxu0 %v3131
    %3436 = vmatpush.msra.mxu0 %v3130
    %3437 = vmatpush.msra.mxu0 %v3129
    %3438 = vmatpush.msra.mxu0 %v3128
    %3439 = vmatpush.msra.mxu0 %v3127
    %3440 = vmatpush.msra.mxu0 %v3126
    %3441 = vmatpush.msra.mxu0 %v3125
    %3442 = vmatpush.msra.mxu0 %v3124
    %3443 = vmatpush.msra.mxu0 %v3123
    %3444 = vmatpush.msra.mxu0 %v3122
    %3445 = vmatmul.f32.gmra.mxu0 %v3203
    %v3446 = vpop.f32.mrf.mxu0
    %v3447 = vadd.f32 0.0, %v3446
    %3448 = vmatmul.f32.gmra.mxu0 %v3209
    %v3449 = vpop.f32.mrf.mxu0
    %v3450 = vadd.f32 0.0, %v3449
    %3451 = vmatmul.f32.gmra.mxu0 %v3215
    %v3452 = vpop.f32.mrf.mxu0
    %v3453 = vadd.f32 0.0, %v3452
    %3454 = vmatmul.f32.gmra.mxu0 %v3221
    %v3455 = vpop.f32.mrf.mxu0
    %v3456 = vadd.f32 0.0, %v3455
    %3457 = vmatmul.f32.gmra.mxu0 %v3227
    %v3458 = vpop.f32.mrf.mxu0
    %v3459 = vadd.f32 0.0, %v3458
    %3460 = vmatmul.f32.gmra.mxu0 %v3233
    %v3461 = vpop.f32.mrf.mxu0
    %v3462 = vadd.f32 0.0, %v3461
    %3463 = vmatmul.f32.gmra.mxu0 %v3239
    %v3464 = vpop.f32.mrf.mxu0
    %v3465 = vadd.f32 0.0, %v3464
    %3466 = vmatmul.f32.gmra.mxu0 %v3245
    %v3467 = vpop.f32.mrf.mxu0
    %v3468 = vadd.f32 0.0, %v3467
    %3469 = vmatmul.f32.gmra.mxu0 %v3251
    %v3470 = vpop.f32.mrf.mxu0
    %v3471 = vadd.f32 0.0, %v3470
    %3472 = vmatmul.f32.gmra.mxu0 %v3257
    %v3473 = vpop.f32.mrf.mxu0
    %v3474 = vadd.f32 0.0, %v3473
    %3475 = vmatmul.f32.gmra.mxu0 %v3263
    %v3476 = vpop.f32.mrf.mxu0
    %v3477 = vadd.f32 0.0, %v3476
    %3478 = vmatmul.f32.gmra.mxu0 %v3269
    %v3479 = vpop.f32.mrf.mxu0
    %v3480 = vadd.f32 0.0, %v3479
    %3481 = vmatmul.f32.gmra.mxu0 %v3275
    %v3482 = vpop.f32.mrf.mxu0
    %v3483 = vadd.f32 0.0, %v3482
    %3484 = vmatmul.f32.gmra.mxu0 %v3281
    %v3485 = vpop.f32.mrf.mxu0
    %v3486 = vadd.f32 0.0, %v3485
    %3487 = vmatmul.f32.gmra.mxu0 %v3287
    %v3488 = vpop.f32.mrf.mxu0
    %v3489 = vadd.f32 0.0, %v3488
    %3490 = vmatmul.f32.gmra.mxu0 %v3293
    %v3491 = vpop.f32.mrf.mxu0
    %v3492 = vadd.f32 0.0, %v3491
    %3493 = vmatmul.f32.gmra.mxu0 %v3299
    %v3494 = vpop.f32.mrf.mxu0
    %v3495 = vadd.f32 0.0, %v3494
    %3496 = vmatmul.f32.gmra.mxu0 %v3305
    %v3497 = vpop.f32.mrf.mxu0
    %v3498 = vadd.f32 0.0, %v3497
    %3499 = vmatmul.f32.gmra.mxu0 %v3311
    %v3500 = vpop.f32.mrf.mxu0
    %v3501 = vadd.f32 0.0, %v3500
    %3502 = vmatmul.f32.gmra.mxu0 %v3317
    %v3503 = vpop.f32.mrf.mxu0
    %v3504 = vadd.f32 0.0, %v3503
    %3505 = vmatmul.f32.gmra.mxu0 %v3323
    %v3506 = vpop.f32.mrf.mxu0
    %v3507 = vadd.f32 0.0, %v3506
    %3508 = vmatmul.f32.gmra.mxu0 %v3329
    %v3509 = vpop.f32.mrf.mxu0
    %v3510 = vadd.f32 0.0, %v3509
    %3511 = vmatmul.f32.gmra.mxu0 %v3335
    %v3512 = vpop.f32.mrf.mxu0
    %v3513 = vadd.f32 0.0, %v3512
    %3514 = vmatmul.f32.gmra.mxu0 %v3341
    %v3515 = vpop.f32.mrf.mxu0
    %v3516 = vadd.f32 0.0, %v3515
    %3517 = vmatmul.f32.gmra.mxu0 %v3347
    %v3518 = vpop.f32.mrf.mxu0
    %v3519 = vadd.f32 0.0, %v3518
    %3520 = vdwg.mxu0
    %3521 = vmatpush.msra.mxu0 %v3153
    %3522 = vmatpush.msra.mxu0 %v3152
    %3523 = vmatpush.msra.mxu0 %v3151
    %3524 = vmatpush.msra.mxu0 %v3150
    %3525 = vmatpush.msra.mxu0 %v3149
    %3526 = vmatpush.msra.mxu0 %v3148
    %3527 = vmatpush.msra.mxu0 %v3147
    %3528 = vmatpush.msra.mxu0 %v3146
    %3529 = vmatpush.msra.mxu0 %v3145
    %3530 = vmatpush.msra.mxu0 %v3144
    %3531 = vmatpush.msra.mxu0 %v3143
    %3532 = vmatpush.msra.mxu0 %v3142
    %3533 = vmatpush.msra.mxu0 %v3141
    %3534 = vmatpush.msra.mxu0 %v3140
    %3535 = vmatpush.msra.mxu0 %v3139
    %3536 = vmatpush.msra.mxu0 %v3138
    %3537 = vmatmul.f32.gmra.mxu0 %v3204
    %v3538 = vpop.f32.mrf.mxu0
    %v3539 = vadd.f32 %v3447, %v3538
    %3540 = vmatmul.f32.gmra.mxu0 %v3210
    %v3541 = vpop.f32.mrf.mxu0
    %v3542 = vadd.f32 %v3450, %v3541
    %3543 = vmatmul.f32.gmra.mxu0 %v3216
    %v3544 = vpop.f32.mrf.mxu0
    %v3545 = vadd.f32 %v3453, %v3544
    %3546 = vmatmul.f32.gmra.mxu0 %v3222
    %v3547 = vpop.f32.mrf.mxu0
    %v3548 = vadd.f32 %v3456, %v3547
    %3549 = vmatmul.f32.gmra.mxu0 %v3228
    %v3550 = vpop.f32.mrf.mxu0
    %v3551 = vadd.f32 %v3459, %v3550
    %3552 = vmatmul.f32.gmra.mxu0 %v3234
    %v3553 = vpop.f32.mrf.mxu0
    %v3554 = vadd.f32 %v3462, %v3553
    %3555 = vmatmul.f32.gmra.mxu0 %v3240
    %v3556 = vpop.f32.mrf.mxu0
    %v3557 = vadd.f32 %v3465, %v3556
    %3558 = vmatmul.f32.gmra.mxu0 %v3246
    %v3559 = vpop.f32.mrf.mxu0
    %v3560 = vadd.f32 %v3468, %v3559
    %3561 = vmatmul.f32.gmra.mxu0 %v3252
    %v3562 = vpop.f32.mrf.mxu0
    %v3563 = vadd.f32 %v3471, %v3562
    %3564 = vmatmul.f32.gmra.mxu0 %v3258
    %v3565 = vpop.f32.mrf.mxu0
    %v3566 = vadd.f32 %v3474, %v3565
    %3567 = vmatmul.f32.gmra.mxu0 %v3264
    %v3568 = vpop.f32.mrf.mxu0
    %v3569 = vadd.f32 %v3477, %v3568
    %3570 = vmatmul.f32.gmra.mxu0 %v3270
    %v3571 = vpop.f32.mrf.mxu0
    %v3572 = vadd.f32 %v3480, %v3571
    %3573 = vmatmul.f32.gmra.mxu0 %v3276
    %v3574 = vpop.f32.mrf.mxu0
    %v3575 = vadd.f32 %v3483, %v3574
    %3576 = vmatmul.f32.gmra.mxu0 %v3282
    %v3577 = vpop.f32.mrf.mxu0
    %v3578 = vadd.f32 %v3486, %v3577
    %3579 = vmatmul.f32.gmra.mxu0 %v3288
    %v3580 = vpop.f32.mrf.mxu0
    %v3581 = vadd.f32 %v3489, %v3580
    %3582 = vmatmul.f32.gmra.mxu0 %v3294
    %v3583 = vpop.f32.mrf.mxu0
    %v3584 = vadd.f32 %v3492, %v3583
    %3585 = vmatmul.f32.gmra.mxu0 %v3300
    %v3586 = vpop.f32.mrf.mxu0
    %v3587 = vadd.f32 %v3495, %v3586
    %3588 = vmatmul.f32.gmra.mxu0 %v3306
    %v3589 = vpop.f32.mrf.mxu0
    %v3590 = vadd.f32 %v3498, %v3589
    %3591 = vmatmul.f32.gmra.mxu0 %v3312
    %v3592 = vpop.f32.mrf.mxu0
    %v3593 = vadd.f32 %v3501, %v3592
    %3594 = vmatmul.f32.gmra.mxu0 %v3318
    %v3595 = vpop.f32.mrf.mxu0
    %v3596 = vadd.f32 %v3504, %v3595
    %3597 = vmatmul.f32.gmra.mxu0 %v3324
    %v3598 = vpop.f32.mrf.mxu0
    %v3599 = vadd.f32 %v3507, %v3598
    %3600 = vmatmul.f32.gmra.mxu0 %v3330
    %v3601 = vpop.f32.mrf.mxu0
    %v3602 = vadd.f32 %v3510, %v3601
    %3603 = vmatmul.f32.gmra.mxu0 %v3336
    %v3604 = vpop.f32.mrf.mxu0
    %v3605 = vadd.f32 %v3513, %v3604
    %3606 = vmatmul.f32.gmra.mxu0 %v3342
    %v3607 = vpop.f32.mrf.mxu0
    %v3608 = vadd.f32 %v3516, %v3607
    %3609 = vmatmul.f32.gmra.mxu0 %v3348
    %v3610 = vpop.f32.mrf.mxu0
    %v3611 = vadd.f32 %v3519, %v3610
    %3612 = vdwg.mxu0
    %3613 = vmatpush.msra.mxu0 %v3169
    %3614 = vmatpush.msra.mxu0 %v3168
    %3615 = vmatpush.msra.mxu0 %v3167
    %3616 = vmatpush.msra.mxu0 %v3166
    %3617 = vmatpush.msra.mxu0 %v3165
    %3618 = vmatpush.msra.mxu0 %v3164
    %3619 = vmatpush.msra.mxu0 %v3163
    %3620 = vmatpush.msra.mxu0 %v3162
    %3621 = vmatpush.msra.mxu0 %v3161
    %3622 = vmatpush.msra.mxu0 %v3160
    %3623 = vmatpush.msra.mxu0 %v3159
    %3624 = vmatpush.msra.mxu0 %v3158
    %3625 = vmatpush.msra.mxu0 %v3157
    %3626 = vmatpush.msra.mxu0 %v3156
    %3627 = vmatpush.msra.mxu0 %v3155
    %3628 = vmatpush.msra.mxu0 %v3154
    %3629 = vmatmul.f32.gmra.mxu0 %v3205
    %v3630 = vpop.f32.mrf.mxu0
    %v3631 = vadd.f32 %v3539, %v3630
    %3632 = vmatmul.f32.gmra.mxu0 %v3211
    %v3633 = vpop.f32.mrf.mxu0
    %v3634 = vadd.f32 %v3542, %v3633
    %3635 = vmatmul.f32.gmra.mxu0 %v3217
    %v3636 = vpop.f32.mrf.mxu0
    %v3637 = vadd.f32 %v3545, %v3636
    %3638 = vmatmul.f32.gmra.mxu0 %v3223
    %v3639 = vpop.f32.mrf.mxu0
    %v3640 = vadd.f32 %v3548, %v3639
    %3641 = vmatmul.f32.gmra.mxu0 %v3229
    %v3642 = vpop.f32.mrf.mxu0
    %v3643 = vadd.f32 %v3551, %v3642
    %3644 = vmatmul.f32.gmra.mxu0 %v3235
    %v3645 = vpop.f32.mrf.mxu0
    %v3646 = vadd.f32 %v3554, %v3645
    %3647 = vmatmul.f32.gmra.mxu0 %v3241
    %v3648 = vpop.f32.mrf.mxu0
    %v3649 = vadd.f32 %v3557, %v3648
    %3650 = vmatmul.f32.gmra.mxu0 %v3247
    %v3651 = vpop.f32.mrf.mxu0
    %v3652 = vadd.f32 %v3560, %v3651
    %3653 = vmatmul.f32.gmra.mxu0 %v3253
    %v3654 = vpop.f32.mrf.mxu0
    %v3655 = vadd.f32 %v3563, %v3654
    %3656 = vmatmul.f32.gmra.mxu0 %v3259
    %v3657 = vpop.f32.mrf.mxu0
    %v3658 = vadd.f32 %v3566, %v3657
    %3659 = vmatmul.f32.gmra.mxu0 %v3265
    %v3660 = vpop.f32.mrf.mxu0
    %v3661 = vadd.f32 %v3569, %v3660
    %3662 = vmatmul.f32.gmra.mxu0 %v3271
    %v3663 = vpop.f32.mrf.mxu0
    %v3664 = vadd.f32 %v3572, %v3663
    %3665 = vmatmul.f32.gmra.mxu0 %v3277
    %v3666 = vpop.f32.mrf.mxu0
    %v3667 = vadd.f32 %v3575, %v3666
    %3668 = vmatmul.f32.gmra.mxu0 %v3283
    %v3669 = vpop.f32.mrf.mxu0
    %v3670 = vadd.f32 %v3578, %v3669
    %3671 = vmatmul.f32.gmra.mxu0 %v3289
    %v3672 = vpop.f32.mrf.mxu0
    %v3673 = vadd.f32 %v3581, %v3672
    %3674 = vmatmul.f32.gmra.mxu0 %v3295
    %v3675 = vpop.f32.mrf.mxu0
    %v3676 = vadd.f32 %v3584, %v3675
    %3677 = vmatmul.f32.gmra.mxu0 %v3301
    %v3678 = vpop.f32.mrf.mxu0
    %v3679 = vadd.f32 %v3587, %v3678
    %3680 = vmatmul.f32.gmra.mxu0 %v3307
    %v3681 = vpop.f32.mrf.mxu0
    %v3682 = vadd.f32 %v3590, %v3681
    %3683 = vmatmul.f32.gmra.mxu0 %v3313
    %v3684 = vpop.f32.mrf.mxu0
    %v3685 = vadd.f32 %v3593, %v3684
    %3686 = vmatmul.f32.gmra.mxu0 %v3319
    %v3687 = vpop.f32.mrf.mxu0
    %v3688 = vadd.f32 %v3596, %v3687
    %3689 = vmatmul.f32.gmra.mxu0 %v3325
    %v3690 = vpop.f32.mrf.mxu0
    %v3691 = vadd.f32 %v3599, %v3690
    %3692 = vmatmul.f32.gmra.mxu0 %v3331
    %v3693 = vpop.f32.mrf.mxu0
    %v3694 = vadd.f32 %v3602, %v3693
    %3695 = vmatmul.f32.gmra.mxu0 %v3337
    %v3696 = vpop.f32.mrf.mxu0
    %v3697 = vadd.f32 %v3605, %v3696
    %3698 = vmatmul.f32.gmra.mxu0 %v3343
    %v3699 = vpop.f32.mrf.mxu0
    %v3700 = vadd.f32 %v3608, %v3699
    %3701 = vmatmul.f32.gmra.mxu0 %v3349
    %v3702 = vpop.f32.mrf.mxu0
    %v3703 = vadd.f32 %v3611, %v3702
    %3704 = vdwg.mxu0
    %3705 = vmatpush.msra.mxu0 %v3185
    %3706 = vmatpush.msra.mxu0 %v3184
    %3707 = vmatpush.msra.mxu0 %v3183
    %3708 = vmatpush.msra.mxu0 %v3182
    %3709 = vmatpush.msra.mxu0 %v3181
    %3710 = vmatpush.msra.mxu0 %v3180
    %3711 = vmatpush.msra.mxu0 %v3179
    %3712 = vmatpush.msra.mxu0 %v3178
    %3713 = vmatpush.msra.mxu0 %v3177
    %3714 = vmatpush.msra.mxu0 %v3176
    %3715 = vmatpush.msra.mxu0 %v3175
    %3716 = vmatpush.msra.mxu0 %v3174
    %3717 = vmatpush.msra.mxu0 %v3173
    %3718 = vmatpush.msra.mxu0 %v3172
    %3719 = vmatpush.msra.mxu0 %v3171
    %3720 = vmatpush.msra.mxu0 %v3170
    %3721 = vmatmul.f32.gmra.mxu0 %v3206
    %v3722 = vpop.f32.mrf.mxu0
    %v3723 = vadd.f32 %v3631, %v3722
    %3724 = vmatmul.f32.gmra.mxu0 %v3212
    %v3725 = vpop.f32.mrf.mxu0
    %v3726 = vadd.f32 %v3634, %v3725
    %3727 = vmatmul.f32.gmra.mxu0 %v3218
    %v3728 = vpop.f32.mrf.mxu0
    %v3729 = vadd.f32 %v3637, %v3728
    %3730 = vmatmul.f32.gmra.mxu0 %v3224
    %v3731 = vpop.f32.mrf.mxu0
    %v3732 = vadd.f32 %v3640, %v3731
    %3733 = vmatmul.f32.gmra.mxu0 %v3230
    %v3734 = vpop.f32.mrf.mxu0
    %v3735 = vadd.f32 %v3643, %v3734
    %3736 = vmatmul.f32.gmra.mxu0 %v3236
    %v3737 = vpop.f32.mrf.mxu0
    %v3738 = vadd.f32 %v3646, %v3737
    %3739 = vmatmul.f32.gmra.mxu0 %v3242
    %v3740 = vpop.f32.mrf.mxu0
    %v3741 = vadd.f32 %v3649, %v3740
    %3742 = vmatmul.f32.gmra.mxu0 %v3248
    %v3743 = vpop.f32.mrf.mxu0
    %v3744 = vadd.f32 %v3652, %v3743
    %3745 = vmatmul.f32.gmra.mxu0 %v3254
    %v3746 = vpop.f32.mrf.mxu0
    %v3747 = vadd.f32 %v3655, %v3746
    %3748 = vmatmul.f32.gmra.mxu0 %v3260
    %v3749 = vpop.f32.mrf.mxu0
    %v3750 = vadd.f32 %v3658, %v3749
    %3751 = vmatmul.f32.gmra.mxu0 %v3266
    %v3752 = vpop.f32.mrf.mxu0
    %v3753 = vadd.f32 %v3661, %v3752
    %3754 = vmatmul.f32.gmra.mxu0 %v3272
    %v3755 = vpop.f32.mrf.mxu0
    %v3756 = vadd.f32 %v3664, %v3755
    %3757 = vmatmul.f32.gmra.mxu0 %v3278
    %v3758 = vpop.f32.mrf.mxu0
    %v3759 = vadd.f32 %v3667, %v3758
    %3760 = vmatmul.f32.gmra.mxu0 %v3284
    %v3761 = vpop.f32.mrf.mxu0
    %v3762 = vadd.f32 %v3670, %v3761
    %3763 = vmatmul.f32.gmra.mxu0 %v3290
    %v3764 = vpop.f32.mrf.mxu0
    %v3765 = vadd.f32 %v3673, %v3764
    %3766 = vmatmul.f32.gmra.mxu0 %v3296
    %v3767 = vpop.f32.mrf.mxu0
    %v3768 = vadd.f32 %v3676, %v3767
    %3769 = vmatmul.f32.gmra.mxu0 %v3302
    %v3770 = vpop.f32.mrf.mxu0
    %v3771 = vadd.f32 %v3679, %v3770
    %3772 = vmatmul.f32.gmra.mxu0 %v3308
    %v3773 = vpop.f32.mrf.mxu0
    %v3774 = vadd.f32 %v3682, %v3773
    %3775 = vmatmul.f32.gmra.mxu0 %v3314
    %v3776 = vpop.f32.mrf.mxu0
    %v3777 = vadd.f32 %v3685, %v3776
    %3778 = vmatmul.f32.gmra.mxu0 %v3320
    %v3779 = vpop.f32.mrf.mxu0
    %v3780 = vadd.f32 %v3688, %v3779
    %3781 = vmatmul.f32.gmra.mxu0 %v3326
    %v3782 = vpop.f32.mrf.mxu0
    %v3783 = vadd.f32 %v3691, %v3782
    %3784 = vmatmul.f32.gmra.mxu0 %v3332
    %v3785 = vpop.f32.mrf.mxu0
    %v3786 = vadd.f32 %v3694, %v3785
    %3787 = vmatmul.f32.gmra.mxu0 %v3338
    %v3788 = vpop.f32.mrf.mxu0
    %v3789 = vadd.f32 %v3697, %v3788
    %3790 = vmatmul.f32.gmra.mxu0 %v3344
    %v3791 = vpop.f32.mrf.mxu0
    %v3792 = vadd.f32 %v3700, %v3791
    %3793 = vmatmul.f32.gmra.mxu0 %v3350
    %v3794 = vpop.f32.mrf.mxu0
    %v3795 = vadd.f32 %v3703, %v3794
    %3796 = vdwg.mxu0
    %3797 = vmatpush.msra.mxu0 %v3201
    %3798 = vmatpush.msra.mxu0 %v3200
    %3799 = vmatpush.msra.mxu0 %v3199
    %3800 = vmatpush.msra.mxu0 %v3198
    %3801 = vmatpush.msra.mxu0 %v3197
    %3802 = vmatpush.msra.mxu0 %v3196
    %3803 = vmatpush.msra.mxu0 %v3195
    %3804 = vmatpush.msra.mxu0 %v3194
    %3805 = vmatpush.msra.mxu0 %v3193
    %3806 = vmatpush.msra.mxu0 %v3192
    %3807 = vmatpush.msra.mxu0 %v3191
    %3808 = vmatpush.msra.mxu0 %v3190
    %3809 = vmatpush.msra.mxu0 %v3189
    %3810 = vmatpush.msra.mxu0 %v3188
    %3811 = vmatpush.msra.mxu0 %v3187
    %3812 = vmatpush.msra.mxu0 %v3186
    %3813 = vmatmul.f32.gmra.mxu0 %v3207
    %v3814 = vpop.f32.mrf.mxu0
    %v3815 = vadd.f32 %v3723, %v3814
    %3816 = vmatmul.f32.gmra.mxu0 %v3213
    %v3817 = vpop.f32.mrf.mxu0
    %v3818 = vadd.f32 %v3726, %v3817
    %3819 = vmatmul.f32.gmra.mxu0 %v3219
    %v3820 = vpop.f32.mrf.mxu0
    %v3821 = vadd.f32 %v3729, %v3820
    %3822 = vmatmul.f32.gmra.mxu0 %v3225
    %v3823 = vpop.f32.mrf.mxu0
    %v3824 = vadd.f32 %v3732, %v3823
    %3825 = vmatmul.f32.gmra.mxu0 %v3231
    %v3826 = vpop.f32.mrf.mxu0
    %v3827 = vadd.f32 %v3735, %v3826
    %3828 = vmatmul.f32.gmra.mxu0 %v3237
    %v3829 = vpop.f32.mrf.mxu0
    %v3830 = vadd.f32 %v3738, %v3829
    %3831 = vmatmul.f32.gmra.mxu0 %v3243
    %v3832 = vpop.f32.mrf.mxu0
    %v3833 = vadd.f32 %v3741, %v3832
    %3834 = vmatmul.f32.gmra.mxu0 %v3249
    %v3835 = vpop.f32.mrf.mxu0
    %v3836 = vadd.f32 %v3744, %v3835
    %3837 = vmatmul.f32.gmra.mxu0 %v3255
    %v3838 = vpop.f32.mrf.mxu0
    %v3839 = vadd.f32 %v3747, %v3838
    %3840 = vmatmul.f32.gmra.mxu0 %v3261
    %v3841 = vpop.f32.mrf.mxu0
    %v3842 = vadd.f32 %v3750, %v3841
    %3843 = vmatmul.f32.gmra.mxu0 %v3267
    %v3844 = vpop.f32.mrf.mxu0
    %v3845 = vadd.f32 %v3753, %v3844
    %3846 = vmatmul.f32.gmra.mxu0 %v3273
    %v3847 = vpop.f32.mrf.mxu0
    %v3848 = vadd.f32 %v3756, %v3847
    %3849 = vmatmul.f32.gmra.mxu0 %v3279
    %v3850 = vpop.f32.mrf.mxu0
    %v3851 = vadd.f32 %v3759, %v3850
    %3852 = vmatmul.f32.gmra.mxu0 %v3285
    %v3853 = vpop.f32.mrf.mxu0
    %v3854 = vadd.f32 %v3762, %v3853
    %3855 = vmatmul.f32.gmra.mxu0 %v3291
    %v3856 = vpop.f32.mrf.mxu0
    %v3857 = vadd.f32 %v3765, %v3856
    %3858 = vmatmul.f32.gmra.mxu0 %v3297
    %v3859 = vpop.f32.mrf.mxu0
    %v3860 = vadd.f32 %v3768, %v3859
    %3861 = vmatmul.f32.gmra.mxu0 %v3303
    %v3862 = vpop.f32.mrf.mxu0
    %v3863 = vadd.f32 %v3771, %v3862
    %3864 = vmatmul.f32.gmra.mxu0 %v3309
    %v3865 = vpop.f32.mrf.mxu0
    %v3866 = vadd.f32 %v3774, %v3865
    %3867 = vmatmul.f32.gmra.mxu0 %v3315
    %v3868 = vpop.f32.mrf.mxu0
    %v3869 = vadd.f32 %v3777, %v3868
    %3870 = vmatmul.f32.gmra.mxu0 %v3321
    %v3871 = vpop.f32.mrf.mxu0
    %v3872 = vadd.f32 %v3780, %v3871
    %3873 = vmatmul.f32.gmra.mxu0 %v3327
    %v3874 = vpop.f32.mrf.mxu0
    %v3875 = vadd.f32 %v3783, %v3874
    %3876 = vmatmul.f32.gmra.mxu0 %v3333
    %v3877 = vpop.f32.mrf.mxu0
    %v3878 = vadd.f32 %v3786, %v3877
    %3879 = vmatmul.f32.gmra.mxu0 %v3339
    %v3880 = vpop.f32.mrf.mxu0
    %v3881 = vadd.f32 %v3789, %v3880
    %3882 = vmatmul.f32.gmra.mxu0 %v3345
    %v3883 = vpop.f32.mrf.mxu0
    %v3884 = vadd.f32 %v3792, %v3883
    %3885 = vmatmul.f32.gmra.mxu0 %v3351
    %v3886 = vpop.f32.mrf.mxu0
    %v3887 = vadd.f32 %v3795, %v3886
    %3888 = vdwg.mxu0
    %3889 = vmatpush.msra.mxu0 0.0
    %3890 = vmatpush.msra.mxu0 0.0
    %3891 = vmatpush.msra.mxu0 0.0
    %3892 = vmatpush.msra.mxu0 0.0
    %3893 = vmatpush.msra.mxu0 0.0
    %3894 = vmatpush.msra.mxu0 0.0
    %3895 = vmatpush.msra.mxu0 0.0
    %3896 = vmatpush.msra.mxu0 0.0
    %3897 = vmatpush.msra.mxu0 0.0
    %3898 = vmatpush.msra.mxu0 0.0
    %3899 = vmatpush.msra.mxu0 0.0
    %3900 = vmatpush.msra.mxu0 0.0
    %3901 = vmatpush.msra.mxu0 0.0
    %3902 = vmatpush.msra.mxu0 0.0
    %3903 = vmatpush.msra.mxu0 0.0
    %3904 = vmatpush.msra.mxu0 %v3202
    %3905 = vmatmul.f32.gmra.mxu0 %v3355
    %v3906 = vpop.f32.mrf.mxu0
    %v3907 = vadd.f32 %v3815, %v3906
    %3908 = vmatmul.f32.gmra.mxu0 %v3358
    %v3909 = vpop.f32.mrf.mxu0
    %v3910 = vadd.f32 %v3818, %v3909
    %3911 = vmatmul.f32.gmra.mxu0 %v3361
    %v3912 = vpop.f32.mrf.mxu0
    %v3913 = vadd.f32 %v3821, %v3912
    %3914 = vmatmul.f32.gmra.mxu0 %v3364
    %v3915 = vpop.f32.mrf.mxu0
    %v3916 = vadd.f32 %v3824, %v3915
    %3917 = vmatmul.f32.gmra.mxu0 %v3367
    %v3918 = vpop.f32.mrf.mxu0
    %v3919 = vadd.f32 %v3827, %v3918
    %3920 = vmatmul.f32.gmra.mxu0 %v3370
    %v3921 = vpop.f32.mrf.mxu0
    %v3922 = vadd.f32 %v3830, %v3921
    %3923 = vmatmul.f32.gmra.mxu0 %v3373
    %v3924 = vpop.f32.mrf.mxu0
    %v3925 = vadd.f32 %v3833, %v3924
    %3926 = vmatmul.f32.gmra.mxu0 %v3376
    %v3927 = vpop.f32.mrf.mxu0
    %v3928 = vadd.f32 %v3836, %v3927
    %3929 = vmatmul.f32.gmra.mxu0 %v3379
    %v3930 = vpop.f32.mrf.mxu0
    %v3931 = vadd.f32 %v3839, %v3930
    %3932 = vmatmul.f32.gmra.mxu0 %v3382
    %v3933 = vpop.f32.mrf.mxu0
    %v3934 = vadd.f32 %v3842, %v3933
    %3935 = vmatmul.f32.gmra.mxu0 %v3385
    %v3936 = vpop.f32.mrf.mxu0
    %v3937 = vadd.f32 %v3845, %v3936
    %3938 = vmatmul.f32.gmra.mxu0 %v3388
    %v3939 = vpop.f32.mrf.mxu0
    %v3940 = vadd.f32 %v3848, %v3939
    %3941 = vmatmul.f32.gmra.mxu0 %v3391
    %v3942 = vpop.f32.mrf.mxu0
    %v3943 = vadd.f32 %v3851, %v3942
    %3944 = vmatmul.f32.gmra.mxu0 %v3394
    %v3945 = vpop.f32.mrf.mxu0
    %v3946 = vadd.f32 %v3854, %v3945
    %3947 = vmatmul.f32.gmra.mxu0 %v3397
    %v3948 = vpop.f32.mrf.mxu0
    %v3949 = vadd.f32 %v3857, %v3948
    %3950 = vmatmul.f32.gmra.mxu0 %v3400
    %v3951 = vpop.f32.mrf.mxu0
    %v3952 = vadd.f32 %v3860, %v3951
    %3953 = vmatmul.f32.gmra.mxu0 %v3403
    %v3954 = vpop.f32.mrf.mxu0
    %v3955 = vadd.f32 %v3863, %v3954
    %3956 = vmatmul.f32.gmra.mxu0 %v3406
    %v3957 = vpop.f32.mrf.mxu0
    %v3958 = vadd.f32 %v3866, %v3957
    %3959 = vmatmul.f32.gmra.mxu0 %v3409
    %v3960 = vpop.f32.mrf.mxu0
    %v3961 = vadd.f32 %v3869, %v3960
    %3962 = vmatmul.f32.gmra.mxu0 %v3412
    %v3963 = vpop.f32.mrf.mxu0
    %v3964 = vadd.f32 %v3872, %v3963
    %3965 = vmatmul.f32.gmra.mxu0 %v3415
    %v3966 = vpop.f32.mrf.mxu0
    %v3967 = vadd.f32 %v3875, %v3966
    %3968 = vmatmul.f32.gmra.mxu0 %v3418
    %v3969 = vpop.f32.mrf.mxu0
    %v3970 = vadd.f32 %v3878, %v3969
    %3971 = vmatmul.f32.gmra.mxu0 %v3421
    %v3972 = vpop.f32.mrf.mxu0
    %v3973 = vadd.f32 %v3881, %v3972
    %3974 = vmatmul.f32.gmra.mxu0 %v3424
    %v3975 = vpop.f32.mrf.mxu0
    %v3976 = vadd.f32 %v3884, %v3975
    %3977 = vmatmul.f32.gmra.mxu0 %v3427
    %v3978 = vpop.f32.mrf.mxu0
    %v3979 = vadd.f32 %v3887, %v3978
    %3980 = vdwg.mxu0
    %3981 = vst.msk [vmem:[#allocation3 + $0x10] sm:$0xff] %vm63, %v3907
    %3982 = vst.msk [vmem:[#allocation3 + $0x18] sm:$0xff] %vm63, %v3910
    %3983 = vst.msk [vmem:[#allocation3 + $0x20] sm:$0xff] %vm63, %v3913
    %3984 = vst.msk [vmem:[#allocation3 + $0x28] sm:$0xff] %vm63, %v3916
    %3985 = vst.msk [vmem:[#allocation3 + $0x30] sm:$0xff] %vm63, %v3919
    %3986 = vst.msk [vmem:[#allocation3 + $0x38] sm:$0xff] %vm63, %v3922
    %3987 = vst.msk [vmem:[#allocation3 + $0x40] sm:$0xff] %vm63, %v3925
    %3988 = vst.msk [vmem:[#allocation3 + $0x48] sm:$0xff] %vm63, %v3928
    %3989 = vst.msk [vmem:[#allocation3 + $0x50] sm:$0xff] %vm63, %v3931
    %3990 = vst.msk [vmem:[#allocation3 + $0x58] sm:$0xff] %vm63, %v3934
    %3991 = vst.msk [vmem:[#allocation3 + $0x60] sm:$0xff] %vm63, %v3937
    %3992 = vst.msk [vmem:[#allocation3 + $0x68] sm:$0xff] %vm63, %v3940
    %3993 = vst.msk [vmem:[#allocation3 + $0x70] sm:$0xff] %vm63, %v3943
    %3994 = vst.msk [vmem:[#allocation3 + $0x78] sm:$0xff] %vm63, %v3946
    %3995 = vst.msk [vmem:[#allocation3 + $0x80] sm:$0xff] %vm63, %v3949
    %3996 = vst.msk [vmem:[#allocation3 + $0x88] sm:$0xff] %vm63, %v3952
    %3997 = vst.msk [vmem:[#allocation3 + $0x90] sm:$0xff] %vm63, %v3955
    %3998 = vst.msk [vmem:[#allocation3 + $0x98] sm:$0xff] %vm63, %v3958
    %3999 = vst.msk [vmem:[#allocation3 + $0xa0] sm:$0xff] %vm63, %v3961
    %4000 = vst.msk [vmem:[#allocation3 + $0xa8] sm:$0xff] %vm63, %v3964
    %4001 = vst.msk [vmem:[#allocation3 + $0xb0] sm:$0xff] %vm63, %v3967
    %4002 = vst.msk [vmem:[#allocation3 + $0xb8] sm:$0xff] %vm63, %v3970
    %4003 = vst.msk [vmem:[#allocation3 + $0xc0] sm:$0xff] %vm63, %v3973
    %4004 = vst.msk [vmem:[#allocation3 + $0xc8] sm:$0xff] %vm63, %v3976
    %4005 = vst.msk [vmem:[#allocation3 + $0xd0] sm:$0xff] %vm63, %v3979
    %v4006 = vld [vmem:[#allocation3 + $0x5] sm:$0xff]
    %v4007 = vld [vmem:[#allocation3 + $0xd] sm:$0xff]
    %v4008 = vld [vmem:[#allocation3 + $0x15] sm:$0xff]
    %v4009 = vld [vmem:[#allocation3 + $0x1d] sm:$0xff]
    %v4010 = vld [vmem:[#allocation3 + $0x25] sm:$0xff]
    %v4011 = vld [vmem:[#allocation3 + $0x2d] sm:$0xff]
    %v4012 = vld [vmem:[#allocation3 + $0x35] sm:$0xff]
    %v4013 = vld [vmem:[#allocation3 + $0x3d] sm:$0xff]
    %v4014 = vld [vmem:[#allocation3 + $0x45] sm:$0xff]
    %v4015 = vld [vmem:[#allocation3 + $0x4d] sm:$0xff]
    %v4016 = vld [vmem:[#allocation3 + $0x55] sm:$0xff]
    %v4017 = vld [vmem:[#allocation3 + $0x5d] sm:$0xff]
    %v4018 = vld [vmem:[#allocation3 + $0x65] sm:$0xff]
    %v4019 = vld [vmem:[#allocation3 + $0x6d] sm:$0xff]
    %v4020 = vld [vmem:[#allocation3 + $0x75] sm:$0xff]
    %v4021 = vld [vmem:[#allocation3 + $0x7d] sm:$0xff]
    %v4022 = vld [vmem:[#allocation3 + $0x85] sm:$0xff]
    %v4023 = vld [vmem:[#allocation3 + $0x8d] sm:$0xff]
    %v4024 = vld [vmem:[#allocation3 + $0x95] sm:$0xff]
    %v4025 = vld [vmem:[#allocation3 + $0x9d] sm:$0xff]
    %v4026 = vld [vmem:[#allocation3 + $0xa5] sm:$0xff]
    %v4027 = vld [vmem:[#allocation3 + $0xad] sm:$0xff]
    %v4028 = vld [vmem:[#allocation3 + $0xb5] sm:$0xff]
    %v4029 = vld [vmem:[#allocation3 + $0xbd] sm:$0xff]
    %v4030 = vld [vmem:[#allocation3 + $0xc5] sm:$0xff]
    %v4031 = vld [vmem:[%s5] sm:$0xff]
    %v4032 = vld [vmem:[%s5 + $0x8] sm:$0xff]
    %v4033 = vld [vmem:[#allocation3 + $0x6] sm:$0xff]
    %v4034 = vld [vmem:[#allocation3 + $0xe] sm:$0xff]
    %v4035 = vld [vmem:[#allocation3 + $0x16] sm:$0xff]
    %v4036 = vld [vmem:[#allocation3 + $0x1e] sm:$0xff]
    %v4037 = vld [vmem:[#allocation3 + $0x26] sm:$0xff]
    %v4038 = vld [vmem:[#allocation3 + $0x2e] sm:$0xff]
    %v4039 = vld [vmem:[#allocation3 + $0x36] sm:$0xff]
    %v4040 = vld [vmem:[#allocation3 + $0x3e] sm:$0xff]
    %v4041 = vld [vmem:[#allocation3 + $0x46] sm:$0xff]
    %v4042 = vld [vmem:[#allocation3 + $0x4e] sm:$0xff]
    %v4043 = vld [vmem:[#allocation3 + $0x56] sm:$0xff]
    %v4044 = vld [vmem:[#allocation3 + $0x5e] sm:$0xff]
    %v4045 = vld [vmem:[#allocation3 + $0x66] sm:$0xff]
    %v4046 = vld [vmem:[#allocation3 + $0x6e] sm:$0xff]
    %v4047 = vld [vmem:[#allocation3 + $0x76] sm:$0xff]
    %v4048 = vld [vmem:[#allocation3 + $0x7e] sm:$0xff]
    %v4049 = vld [vmem:[#allocation3 + $0x86] sm:$0xff]
    %v4050 = vld [vmem:[#allocation3 + $0x8e] sm:$0xff]
    %v4051 = vld [vmem:[#allocation3 + $0x96] sm:$0xff]
    %v4052 = vld [vmem:[#allocation3 + $0x9e] sm:$0xff]
    %v4053 = vld [vmem:[#allocation3 + $0xa6] sm:$0xff]
    %v4054 = vld [vmem:[#allocation3 + $0xae] sm:$0xff]
    %v4055 = vld [vmem:[#allocation3 + $0xb6] sm:$0xff]
    %v4056 = vld [vmem:[#allocation3 + $0xbe] sm:$0xff]
    %v4057 = vld [vmem:[#allocation3 + $0xc6] sm:$0xff]
    %s4058 = scalar_lea.vmem %s5, 16
    %v4059 = vld [vmem:[%s4058] sm:$0xff]
    %v4060 = vld [vmem:[%s4058 + $0x8] sm:$0xff]
    %v4062 = vsel %vm63, %v4033, 0
    %v4065 = vsel %vm63, %v4034, 0
    %v4068 = vsel %vm63, %v4035, 0
    %v4071 = vsel %vm63, %v4036, 0
    %v4074 = vsel %vm63, %v4037, 0
    %v4077 = vsel %vm63, %v4038, 0
    %v4080 = vsel %vm63, %v4039, 0
    %v4083 = vsel %vm63, %v4040, 0
    %v4086 = vsel %vm63, %v4041, 0
    %v4089 = vsel %vm63, %v4042, 0
    %v4092 = vsel %vm63, %v4043, 0
    %v4095 = vsel %vm63, %v4044, 0
    %v4098 = vsel %vm63, %v4045, 0
    %v4101 = vsel %vm63, %v4046, 0
    %v4104 = vsel %vm63, %v4047, 0
    %v4107 = vsel %vm63, %v4048, 0
    %v4110 = vsel %vm63, %v4049, 0
    %v4113 = vsel %vm63, %v4050, 0
    %v4116 = vsel %vm63, %v4051, 0
    %v4119 = vsel %vm63, %v4052, 0
    %v4122 = vsel %vm63, %v4053, 0
    %v4125 = vsel %vm63, %v4054, 0
    %v4128 = vsel %vm63, %v4055, 0
    %v4131 = vsel %vm63, %v4056, 0
    %v4134 = vsel %vm63, %v4057, 0
    %4136 = vmatpush.msra.mxu0 0.0
    %4137 = vmatpush.msra.mxu0 0.0
    %4138 = vmatpush.msra.mxu0 0.0
    %4139 = vmatpush.msra.mxu0 0.0
    %4140 = vmatpush.msra.mxu0 0.0
    %4141 = vmatpush.msra.mxu0 0.0
    %4142 = vmatpush.msra.mxu0 0.0
    %4143 = vmatpush.msra.mxu0 0.0
    %4144 = vmatpush.msra.mxu0 0.0
    %4145 = vmatpush.msra.mxu0 0.0
    %4146 = vmatpush.msra.mxu0 0.0
    %4147 = vmatpush.msra.mxu0 0.0
    %4148 = vmatpush.msra.mxu0 0.0
    %4149 = vmatpush.msra.mxu0 0.0
    %4150 = vmatpush.msra.mxu0 %v4060
    %4151 = vmatpush.msra.mxu0 %v4059
    %4152 = vmatmul.f32.gmra.mxu0 %v4062
    %v4153 = vpop.f32.mrf.mxu0
    %v4154 = vadd.f32 0.0, %v4153
    %4155 = vmatmul.f32.gmra.mxu0 %v4065
    %v4156 = vpop.f32.mrf.mxu0
    %v4157 = vadd.f32 0.0, %v4156
    %4158 = vmatmul.f32.gmra.mxu0 %v4068
    %v4159 = vpop.f32.mrf.mxu0
    %v4160 = vadd.f32 0.0, %v4159
    %4161 = vmatmul.f32.gmra.mxu0 %v4071
    %v4162 = vpop.f32.mrf.mxu0
    %v4163 = vadd.f32 0.0, %v4162
    %4164 = vmatmul.f32.gmra.mxu0 %v4074
    %v4165 = vpop.f32.mrf.mxu0
    %v4166 = vadd.f32 0.0, %v4165
    %4167 = vmatmul.f32.gmra.mxu0 %v4077
    %v4168 = vpop.f32.mrf.mxu0
    %v4169 = vadd.f32 0.0, %v4168
    %4170 = vmatmul.f32.gmra.mxu0 %v4080
    %v4171 = vpop.f32.mrf.mxu0
    %v4172 = vadd.f32 0.0, %v4171
    %4173 = vmatmul.f32.gmra.mxu0 %v4083
    %v4174 = vpop.f32.mrf.mxu0
    %v4175 = vadd.f32 0.0, %v4174
    %4176 = vmatmul.f32.gmra.mxu0 %v4086
    %v4177 = vpop.f32.mrf.mxu0
    %v4178 = vadd.f32 0.0, %v4177
    %4179 = vmatmul.f32.gmra.mxu0 %v4089
    %v4180 = vpop.f32.mrf.mxu0
    %v4181 = vadd.f32 0.0, %v4180
    %4182 = vmatmul.f32.gmra.mxu0 %v4092
    %v4183 = vpop.f32.mrf.mxu0
    %v4184 = vadd.f32 0.0, %v4183
    %4185 = vmatmul.f32.gmra.mxu0 %v4095
    %v4186 = vpop.f32.mrf.mxu0
    %v4187 = vadd.f32 0.0, %v4186
    %4188 = vmatmul.f32.gmra.mxu0 %v4098
    %v4189 = vpop.f32.mrf.mxu0
    %v4190 = vadd.f32 0.0, %v4189
    %4191 = vmatmul.f32.gmra.mxu0 %v4101
    %v4192 = vpop.f32.mrf.mxu0
    %v4193 = vadd.f32 0.0, %v4192
    %4194 = vmatmul.f32.gmra.mxu0 %v4104
    %v4195 = vpop.f32.mrf.mxu0
    %v4196 = vadd.f32 0.0, %v4195
    %4197 = vmatmul.f32.gmra.mxu0 %v4107
    %v4198 = vpop.f32.mrf.mxu0
    %v4199 = vadd.f32 0.0, %v4198
    %4200 = vmatmul.f32.gmra.mxu0 %v4110
    %v4201 = vpop.f32.mrf.mxu0
    %v4202 = vadd.f32 0.0, %v4201
    %4203 = vmatmul.f32.gmra.mxu0 %v4113
    %v4204 = vpop.f32.mrf.mxu0
    %v4205 = vadd.f32 0.0, %v4204
    %4206 = vmatmul.f32.gmra.mxu0 %v4116
    %v4207 = vpop.f32.mrf.mxu0
    %v4208 = vadd.f32 0.0, %v4207
    %4209 = vmatmul.f32.gmra.mxu0 %v4119
    %v4210 = vpop.f32.mrf.mxu0
    %v4211 = vadd.f32 0.0, %v4210
    %4212 = vmatmul.f32.gmra.mxu0 %v4122
    %v4213 = vpop.f32.mrf.mxu0
    %v4214 = vadd.f32 0.0, %v4213
    %4215 = vmatmul.f32.gmra.mxu0 %v4125
    %v4216 = vpop.f32.mrf.mxu0
    %v4217 = vadd.f32 0.0, %v4216
    %4218 = vmatmul.f32.gmra.mxu0 %v4128
    %v4219 = vpop.f32.mrf.mxu0
    %v4220 = vadd.f32 0.0, %v4219
    %4221 = vmatmul.f32.gmra.mxu0 %v4131
    %v4222 = vpop.f32.mrf.mxu0
    %v4223 = vadd.f32 0.0, %v4222
    %4224 = vmatmul.f32.gmra.mxu0 %v4134
    %v4225 = vpop.f32.mrf.mxu0
    %v4226 = vadd.f32 0.0, %v4225
    %4227 = vdwg.mxu0
    %v4229 = vsel %vm63, %v4006, 0
    %v4232 = vsel %vm63, %v4007, 0
    %v4235 = vsel %vm63, %v4008, 0
    %v4238 = vsel %vm63, %v4009, 0
    %v4241 = vsel %vm63, %v4010, 0
    %v4244 = vsel %vm63, %v4011, 0
    %v4247 = vsel %vm63, %v4012, 0
    %v4250 = vsel %vm63, %v4013, 0
    %v4253 = vsel %vm63, %v4014, 0
    %v4256 = vsel %vm63, %v4015, 0
    %v4259 = vsel %vm63, %v4016, 0
    %v4262 = vsel %vm63, %v4017, 0
    %v4265 = vsel %vm63, %v4018, 0
    %v4268 = vsel %vm63, %v4019, 0
    %v4271 = vsel %vm63, %v4020, 0
    %v4274 = vsel %vm63, %v4021, 0
    %v4277 = vsel %vm63, %v4022, 0
    %v4280 = vsel %vm63, %v4023, 0
    %v4283 = vsel %vm63, %v4024, 0
    %v4286 = vsel %vm63, %v4025, 0
    %v4289 = vsel %vm63, %v4026, 0
    %v4292 = vsel %vm63, %v4027, 0
    %v4295 = vsel %vm63, %v4028, 0
    %v4298 = vsel %vm63, %v4029, 0
    %v4301 = vsel %vm63, %v4030, 0
    %4303 = vmatpush.msra.mxu0 0.0
    %4304 = vmatpush.msra.mxu0 0.0
    %4305 = vmatpush.msra.mxu0 0.0
    %4306 = vmatpush.msra.mxu0 0.0
    %4307 = vmatpush.msra.mxu0 0.0
    %4308 = vmatpush.msra.mxu0 0.0
    %4309 = vmatpush.msra.mxu0 0.0
    %4310 = vmatpush.msra.mxu0 0.0
    %4311 = vmatpush.msra.mxu0 0.0
    %4312 = vmatpush.msra.mxu0 0.0
    %4313 = vmatpush.msra.mxu0 0.0
    %4314 = vmatpush.msra.mxu0 0.0
    %4315 = vmatpush.msra.mxu0 0.0
    %4316 = vmatpush.msra.mxu0 0.0
    %4317 = vmatpush.msra.mxu0 %v4032
    %4318 = vmatpush.msra.mxu0 %v4031
    %4319 = vmatmul.f32.gmra.mxu0 %v4229
    %v4320 = vpop.f32.mrf.mxu0
    %v4321 = vadd.f32 %v4154, %v4320
    %4322 = vmatmul.f32.gmra.mxu0 %v4232
    %v4323 = vpop.f32.mrf.mxu0
    %v4324 = vadd.f32 %v4157, %v4323
    %4325 = vmatmul.f32.gmra.mxu0 %v4235
    %v4326 = vpop.f32.mrf.mxu0
    %v4327 = vadd.f32 %v4160, %v4326
    %4328 = vmatmul.f32.gmra.mxu0 %v4238
    %v4329 = vpop.f32.mrf.mxu0
    %v4330 = vadd.f32 %v4163, %v4329
    %4331 = vmatmul.f32.gmra.mxu0 %v4241
    %v4332 = vpop.f32.mrf.mxu0
    %v4333 = vadd.f32 %v4166, %v4332
    %4334 = vmatmul.f32.gmra.mxu0 %v4244
    %v4335 = vpop.f32.mrf.mxu0
    %v4336 = vadd.f32 %v4169, %v4335
    %4337 = vmatmul.f32.gmra.mxu0 %v4247
    %v4338 = vpop.f32.mrf.mxu0
    %v4339 = vadd.f32 %v4172, %v4338
    %4340 = vmatmul.f32.gmra.mxu0 %v4250
    %v4341 = vpop.f32.mrf.mxu0
    %v4342 = vadd.f32 %v4175, %v4341
    %4343 = vmatmul.f32.gmra.mxu0 %v4253
    %v4344 = vpop.f32.mrf.mxu0
    %v4345 = vadd.f32 %v4178, %v4344
    %4346 = vmatmul.f32.gmra.mxu0 %v4256
    %v4347 = vpop.f32.mrf.mxu0
    %v4348 = vadd.f32 %v4181, %v4347
    %4349 = vmatmul.f32.gmra.mxu0 %v4259
    %v4350 = vpop.f32.mrf.mxu0
    %v4351 = vadd.f32 %v4184, %v4350
    %4352 = vmatmul.f32.gmra.mxu0 %v4262
    %v4353 = vpop.f32.mrf.mxu0
    %v4354 = vadd.f32 %v4187, %v4353
    %4355 = vmatmul.f32.gmra.mxu0 %v4265
    %v4356 = vpop.f32.mrf.mxu0
    %v4357 = vadd.f32 %v4190, %v4356
    %4358 = vmatmul.f32.gmra.mxu0 %v4268
    %v4359 = vpop.f32.mrf.mxu0
    %v4360 = vadd.f32 %v4193, %v4359
    %4361 = vmatmul.f32.gmra.mxu0 %v4271
    %v4362 = vpop.f32.mrf.mxu0
    %v4363 = vadd.f32 %v4196, %v4362
    %4364 = vmatmul.f32.gmra.mxu0 %v4274
    %v4365 = vpop.f32.mrf.mxu0
    %v4366 = vadd.f32 %v4199, %v4365
    %4367 = vmatmul.f32.gmra.mxu0 %v4277
    %v4368 = vpop.f32.mrf.mxu0
    %v4369 = vadd.f32 %v4202, %v4368
    %4370 = vmatmul.f32.gmra.mxu0 %v4280
    %v4371 = vpop.f32.mrf.mxu0
    %v4372 = vadd.f32 %v4205, %v4371
    %4373 = vmatmul.f32.gmra.mxu0 %v4283
    %v4374 = vpop.f32.mrf.mxu0
    %v4375 = vadd.f32 %v4208, %v4374
    %4376 = vmatmul.f32.gmra.mxu0 %v4286
    %v4377 = vpop.f32.mrf.mxu0
    %v4378 = vadd.f32 %v4211, %v4377
    %4379 = vmatmul.f32.gmra.mxu0 %v4289
    %v4380 = vpop.f32.mrf.mxu0
    %v4381 = vadd.f32 %v4214, %v4380
    %4382 = vmatmul.f32.gmra.mxu0 %v4292
    %v4383 = vpop.f32.mrf.mxu0
    %v4384 = vadd.f32 %v4217, %v4383
    %4385 = vmatmul.f32.gmra.mxu0 %v4295
    %v4386 = vpop.f32.mrf.mxu0
    %v4387 = vadd.f32 %v4220, %v4386
    %4388 = vmatmul.f32.gmra.mxu0 %v4298
    %v4389 = vpop.f32.mrf.mxu0
    %v4390 = vadd.f32 %v4223, %v4389
    %4391 = vmatmul.f32.gmra.mxu0 %v4301
    %v4392 = vpop.f32.mrf.mxu0
    %v4393 = vadd.f32 %v4226, %v4392
    %4394 = vdwg.mxu0
    %v4395 = vld [vmem:[#allocation3 + $0x7] sm:$0xff]
    %v4396 = vld [vmem:[#allocation3 + $0xf] sm:$0xff]
    %v4397 = vld [vmem:[#allocation3 + $0x17] sm:$0xff]
    %v4398 = vld [vmem:[#allocation3 + $0x1f] sm:$0xff]
    %v4399 = vld [vmem:[#allocation3 + $0x27] sm:$0xff]
    %v4400 = vld [vmem:[#allocation3 + $0x2f] sm:$0xff]
    %v4401 = vld [vmem:[#allocation3 + $0x37] sm:$0xff]
    %v4402 = vld [vmem:[#allocation3 + $0x3f] sm:$0xff]
    %v4403 = vld [vmem:[#allocation3 + $0x47] sm:$0xff]
    %v4404 = vld [vmem:[#allocation3 + $0x4f] sm:$0xff]
    %v4405 = vld [vmem:[#allocation3 + $0x57] sm:$0xff]
    %v4406 = vld [vmem:[#allocation3 + $0x5f] sm:$0xff]
    %v4407 = vld [vmem:[#allocation3 + $0x67] sm:$0xff]
    %v4408 = vld [vmem:[#allocation3 + $0x6f] sm:$0xff]
    %v4409 = vld [vmem:[#allocation3 + $0x77] sm:$0xff]
    %v4410 = vld [vmem:[#allocation3 + $0x7f] sm:$0xff]
    %v4411 = vld [vmem:[#allocation3 + $0x87] sm:$0xff]
    %v4412 = vld [vmem:[#allocation3 + $0x8f] sm:$0xff]
    %v4413 = vld [vmem:[#allocation3 + $0x97] sm:$0xff]
    %v4414 = vld [vmem:[#allocation3 + $0x9f] sm:$0xff]
    %v4415 = vld [vmem:[#allocation3 + $0xa7] sm:$0xff]
    %v4416 = vld [vmem:[#allocation3 + $0xaf] sm:$0xff]
    %v4417 = vld [vmem:[#allocation3 + $0xb7] sm:$0xff]
    %v4418 = vld [vmem:[#allocation3 + $0xbf] sm:$0xff]
    %v4419 = vld [vmem:[#allocation3 + $0xc7] sm:$0xff]
    %s4420 = scalar_lea.vmem %s5, 32
    %v4421 = vld [vmem:[%s4420] sm:$0xff]
    %v4422 = vld [vmem:[%s4420 + $0x8] sm:$0xff]
    %v4424 = vsel %vm63, %v4395, 0
    %v4427 = vsel %vm63, %v4396, 0
    %v4430 = vsel %vm63, %v4397, 0
    %v4433 = vsel %vm63, %v4398, 0
    %v4436 = vsel %vm63, %v4399, 0
    %v4439 = vsel %vm63, %v4400, 0
    %v4442 = vsel %vm63, %v4401, 0
    %v4445 = vsel %vm63, %v4402, 0
    %v4448 = vsel %vm63, %v4403, 0
    %v4451 = vsel %vm63, %v4404, 0
    %v4454 = vsel %vm63, %v4405, 0
    %v4457 = vsel %vm63, %v4406, 0
    %v4460 = vsel %vm63, %v4407, 0
    %v4463 = vsel %vm63, %v4408, 0
    %v4466 = vsel %vm63, %v4409, 0
    %v4469 = vsel %vm63, %v4410, 0
    %v4472 = vsel %vm63, %v4411, 0
    %v4475 = vsel %vm63, %v4412, 0
    %v4478 = vsel %vm63, %v4413, 0
    %v4481 = vsel %vm63, %v4414, 0
    %v4484 = vsel %vm63, %v4415, 0
    %v4487 = vsel %vm63, %v4416, 0
    %v4490 = vsel %vm63, %v4417, 0
    %v4493 = vsel %vm63, %v4418, 0
    %v4496 = vsel %vm63, %v4419, 0
    %4498 = vmatpush.msra.mxu0 0.0
    %4499 = vmatpush.msra.mxu0 0.0
    %4500 = vmatpush.msra.mxu0 0.0
    %4501 = vmatpush.msra.mxu0 0.0
    %4502 = vmatpush.msra.mxu0 0.0
    %4503 = vmatpush.msra.mxu0 0.0
    %4504 = vmatpush.msra.mxu0 0.0
    %4505 = vmatpush.msra.mxu0 0.0
    %4506 = vmatpush.msra.mxu0 0.0
    %4507 = vmatpush.msra.mxu0 0.0
    %4508 = vmatpush.msra.mxu0 0.0
    %4509 = vmatpush.msra.mxu0 0.0
    %4510 = vmatpush.msra.mxu0 0.0
    %4511 = vmatpush.msra.mxu0 0.0
    %4512 = vmatpush.msra.mxu0 %v4422
    %4513 = vmatpush.msra.mxu0 %v4421
    %4514 = vmatmul.f32.gmra.mxu0 %v4424
    %v4515 = vpop.f32.mrf.mxu0
    %v4516 = vadd.f32 0.0, %v4515
    %4517 = vmatmul.f32.gmra.mxu0 %v4427
    %v4518 = vpop.f32.mrf.mxu0
    %v4519 = vadd.f32 0.0, %v4518
    %4520 = vmatmul.f32.gmra.mxu0 %v4430
    %v4521 = vpop.f32.mrf.mxu0
    %v4522 = vadd.f32 0.0, %v4521
    %4523 = vmatmul.f32.gmra.mxu0 %v4433
    %v4524 = vpop.f32.mrf.mxu0
    %v4525 = vadd.f32 0.0, %v4524
    %4526 = vmatmul.f32.gmra.mxu0 %v4436
    %v4527 = vpop.f32.mrf.mxu0
    %v4528 = vadd.f32 0.0, %v4527
    %4529 = vmatmul.f32.gmra.mxu0 %v4439
    %v4530 = vpop.f32.mrf.mxu0
    %v4531 = vadd.f32 0.0, %v4530
    %4532 = vmatmul.f32.gmra.mxu0 %v4442
    %v4533 = vpop.f32.mrf.mxu0
    %v4534 = vadd.f32 0.0, %v4533
    %4535 = vmatmul.f32.gmra.mxu0 %v4445
    %v4536 = vpop.f32.mrf.mxu0
    %v4537 = vadd.f32 0.0, %v4536
    %4538 = vmatmul.f32.gmra.mxu0 %v4448
    %v4539 = vpop.f32.mrf.mxu0
    %v4540 = vadd.f32 0.0, %v4539
    %4541 = vmatmul.f32.gmra.mxu0 %v4451
    %v4542 = vpop.f32.mrf.mxu0
    %v4543 = vadd.f32 0.0, %v4542
    %4544 = vmatmul.f32.gmra.mxu0 %v4454
    %v4545 = vpop.f32.mrf.mxu0
    %v4546 = vadd.f32 0.0, %v4545
    %4547 = vmatmul.f32.gmra.mxu0 %v4457
    %v4548 = vpop.f32.mrf.mxu0
    %v4549 = vadd.f32 0.0, %v4548
    %4550 = vmatmul.f32.gmra.mxu0 %v4460
    %v4551 = vpop.f32.mrf.mxu0
    %v4552 = vadd.f32 0.0, %v4551
    %4553 = vmatmul.f32.gmra.mxu0 %v4463
    %v4554 = vpop.f32.mrf.mxu0
    %v4555 = vadd.f32 0.0, %v4554
    %4556 = vmatmul.f32.gmra.mxu0 %v4466
    %v4557 = vpop.f32.mrf.mxu0
    %v4558 = vadd.f32 0.0, %v4557
    %4559 = vmatmul.f32.gmra.mxu0 %v4469
    %v4560 = vpop.f32.mrf.mxu0
    %v4561 = vadd.f32 0.0, %v4560
    %4562 = vmatmul.f32.gmra.mxu0 %v4472
    %v4563 = vpop.f32.mrf.mxu0
    %v4564 = vadd.f32 0.0, %v4563
    %4565 = vmatmul.f32.gmra.mxu0 %v4475
    %v4566 = vpop.f32.mrf.mxu0
    %v4567 = vadd.f32 0.0, %v4566
    %4568 = vmatmul.f32.gmra.mxu0 %v4478
    %v4569 = vpop.f32.mrf.mxu0
    %v4570 = vadd.f32 0.0, %v4569
    %4571 = vmatmul.f32.gmra.mxu0 %v4481
    %v4572 = vpop.f32.mrf.mxu0
    %v4573 = vadd.f32 0.0, %v4572
    %4574 = vmatmul.f32.gmra.mxu0 %v4484
    %v4575 = vpop.f32.mrf.mxu0
    %v4576 = vadd.f32 0.0, %v4575
    %4577 = vmatmul.f32.gmra.mxu0 %v4487
    %v4578 = vpop.f32.mrf.mxu0
    %v4579 = vadd.f32 0.0, %v4578
    %4580 = vmatmul.f32.gmra.mxu0 %v4490
    %v4581 = vpop.f32.mrf.mxu0
    %v4582 = vadd.f32 0.0, %v4581
    %4583 = vmatmul.f32.gmra.mxu0 %v4493
    %v4584 = vpop.f32.mrf.mxu0
    %v4585 = vadd.f32 0.0, %v4584
    %4586 = vmatmul.f32.gmra.mxu0 %v4496
    %v4587 = vpop.f32.mrf.mxu0
    %v4588 = vadd.f32 0.0, %v4587
    %4589 = vdwg.mxu0
    %v4590 = vadd.f32 %v4321, %v4516
    %v4591 = vadd.f32 %v4324, %v4519
    %v4592 = vadd.f32 %v4327, %v4522
    %v4593 = vadd.f32 %v4330, %v4525
    %v4594 = vadd.f32 %v4333, %v4528
    %v4595 = vadd.f32 %v4336, %v4531
    %v4596 = vadd.f32 %v4339, %v4534
    %v4597 = vadd.f32 %v4342, %v4537
    %v4598 = vadd.f32 %v4345, %v4540
    %v4599 = vadd.f32 %v4348, %v4543
    %v4600 = vadd.f32 %v4351, %v4546
    %v4601 = vadd.f32 %v4354, %v4549
    %v4602 = vadd.f32 %v4357, %v4552
    %v4603 = vadd.f32 %v4360, %v4555
    %v4604 = vadd.f32 %v4363, %v4558
    %v4605 = vadd.f32 %v4366, %v4561
    %v4606 = vadd.f32 %v4369, %v4564
    %v4607 = vadd.f32 %v4372, %v4567
    %v4608 = vadd.f32 %v4375, %v4570
    %v4609 = vadd.f32 %v4378, %v4573
    %v4610 = vadd.f32 %v4381, %v4576
    %v4611 = vadd.f32 %v4384, %v4579
    %v4612 = vadd.f32 %v4387, %v4582
    %v4613 = vadd.f32 %v4390, %v4585
    %v4614 = vadd.f32 %v4393, %v4588
    %v4615 = vld [vmem:[#allocation3 + $0xf] sm:$0xff]
    %v4616 = vld [vmem:[#allocation3 + $0x17] sm:$0xff]
    %v4617 = vld [vmem:[#allocation3 + $0x1f] sm:$0xff]
    %v4618 = vld [vmem:[#allocation3 + $0x27] sm:$0xff]
    %v4619 = vld [vmem:[#allocation3 + $0x2f] sm:$0xff]
    %v4620 = vld [vmem:[#allocation3 + $0x37] sm:$0xff]
    %v4621 = vld [vmem:[#allocation3 + $0x3f] sm:$0xff]
    %v4622 = vld [vmem:[#allocation3 + $0x47] sm:$0xff]
    %v4623 = vld [vmem:[#allocation3 + $0x4f] sm:$0xff]
    %v4624 = vld [vmem:[#allocation3 + $0x57] sm:$0xff]
    %v4625 = vld [vmem:[#allocation3 + $0x5f] sm:$0xff]
    %v4626 = vld [vmem:[#allocation3 + $0x67] sm:$0xff]
    %v4627 = vld [vmem:[#allocation3 + $0x6f] sm:$0xff]
    %v4628 = vld [vmem:[#allocation3 + $0x77] sm:$0xff]
    %v4629 = vld [vmem:[#allocation3 + $0x7f] sm:$0xff]
    %v4630 = vld [vmem:[#allocation3 + $0x87] sm:$0xff]
    %v4631 = vld [vmem:[#allocation3 + $0x8f] sm:$0xff]
    %v4632 = vld [vmem:[#allocation3 + $0x97] sm:$0xff]
    %v4633 = vld [vmem:[#allocation3 + $0x9f] sm:$0xff]
    %v4634 = vld [vmem:[#allocation3 + $0xa7] sm:$0xff]
    %v4635 = vld [vmem:[#allocation3 + $0xaf] sm:$0xff]
    %v4636 = vld [vmem:[#allocation3 + $0xb7] sm:$0xff]
    %v4637 = vld [vmem:[#allocation3 + $0xbf] sm:$0xff]
    %v4638 = vld [vmem:[#allocation3 + $0xc7] sm:$0xff]
    %v4639 = vld [vmem:[#allocation3 + $0xcf] sm:$0xff]
    %s4640 = scalar_lea.vmem %s5, 48
    %v4641 = vld [vmem:[%s4640] sm:$0xff]
    %v4642 = vld [vmem:[%s4640 + $0x8] sm:$0xff]
    %v4644 = vsel %vm63, %v4615, 0
    %v4647 = vsel %vm63, %v4616, 0
    %v4650 = vsel %vm63, %v4617, 0
    %v4653 = vsel %vm63, %v4618, 0
    %v4656 = vsel %vm63, %v4619, 0
    %v4659 = vsel %vm63, %v4620, 0
    %v4662 = vsel %vm63, %v4621, 0
    %v4665 = vsel %vm63, %v4622, 0
    %v4668 = vsel %vm63, %v4623, 0
    %v4671 = vsel %vm63, %v4624, 0
    %v4674 = vsel %vm63, %v4625, 0
    %v4677 = vsel %vm63, %v4626, 0
    %v4680 = vsel %vm63, %v4627, 0
    %v4683 = vsel %vm63, %v4628, 0
    %v4686 = vsel %vm63, %v4629, 0
    %v4689 = vsel %vm63, %v4630, 0
    %v4692 = vsel %vm63, %v4631, 0
    %v4695 = vsel %vm63, %v4632, 0
    %v4698 = vsel %vm63, %v4633, 0
    %v4701 = vsel %vm63, %v4634, 0
    %v4704 = vsel %vm63, %v4635, 0
    %v4707 = vsel %vm63, %v4636, 0
    %v4710 = vsel %vm63, %v4637, 0
    %v4713 = vsel %vm63, %v4638, 0
    %v4716 = vsel %vm63, %v4639, 0
    %4718 = vmatpush.msra.mxu0 0.0
    %4719 = vmatpush.msra.mxu0 0.0
    %4720 = vmatpush.msra.mxu0 0.0
    %4721 = vmatpush.msra.mxu0 0.0
    %4722 = vmatpush.msra.mxu0 0.0
    %4723 = vmatpush.msra.mxu0 0.0
    %4724 = vmatpush.msra.mxu0 0.0
    %4725 = vmatpush.msra.mxu0 0.0
    %4726 = vmatpush.msra.mxu0 0.0
    %4727 = vmatpush.msra.mxu0 0.0
    %4728 = vmatpush.msra.mxu0 0.0
    %4729 = vmatpush.msra.mxu0 0.0
    %4730 = vmatpush.msra.mxu0 0.0
    %4731 = vmatpush.msra.mxu0 0.0
    %4732 = vmatpush.msra.mxu0 %v4642
    %4733 = vmatpush.msra.mxu0 %v4641
    %4734 = vmatmul.f32.gmra.mxu0 %v4644
    %v4735 = vpop.f32.mrf.mxu0
    %v4736 = vadd.f32 0.0, %v4735
    %4737 = vmatmul.f32.gmra.mxu0 %v4647
    %v4738 = vpop.f32.mrf.mxu0
    %v4739 = vadd.f32 0.0, %v4738
    %4740 = vmatmul.f32.gmra.mxu0 %v4650
    %v4741 = vpop.f32.mrf.mxu0
    %v4742 = vadd.f32 0.0, %v4741
    %4743 = vmatmul.f32.gmra.mxu0 %v4653
    %v4744 = vpop.f32.mrf.mxu0
    %v4745 = vadd.f32 0.0, %v4744
    %4746 = vmatmul.f32.gmra.mxu0 %v4656
    %v4747 = vpop.f32.mrf.mxu0
    %v4748 = vadd.f32 0.0, %v4747
    %4749 = vmatmul.f32.gmra.mxu0 %v4659
    %v4750 = vpop.f32.mrf.mxu0
    %v4751 = vadd.f32 0.0, %v4750
    %4752 = vmatmul.f32.gmra.mxu0 %v4662
    %v4753 = vpop.f32.mrf.mxu0
    %v4754 = vadd.f32 0.0, %v4753
    %4755 = vmatmul.f32.gmra.mxu0 %v4665
    %v4756 = vpop.f32.mrf.mxu0
    %v4757 = vadd.f32 0.0, %v4756
    %4758 = vmatmul.f32.gmra.mxu0 %v4668
    %v4759 = vpop.f32.mrf.mxu0
    %v4760 = vadd.f32 0.0, %v4759
    %4761 = vmatmul.f32.gmra.mxu0 %v4671
    %v4762 = vpop.f32.mrf.mxu0
    %v4763 = vadd.f32 0.0, %v4762
    %4764 = vmatmul.f32.gmra.mxu0 %v4674
    %v4765 = vpop.f32.mrf.mxu0
    %v4766 = vadd.f32 0.0, %v4765
    %4767 = vmatmul.f32.gmra.mxu0 %v4677
    %v4768 = vpop.f32.mrf.mxu0
    %v4769 = vadd.f32 0.0, %v4768
    %4770 = vmatmul.f32.gmra.mxu0 %v4680
    %v4771 = vpop.f32.mrf.mxu0
    %v4772 = vadd.f32 0.0, %v4771
    %4773 = vmatmul.f32.gmra.mxu0 %v4683
    %v4774 = vpop.f32.mrf.mxu0
    %v4775 = vadd.f32 0.0, %v4774
    %4776 = vmatmul.f32.gmra.mxu0 %v4686
    %v4777 = vpop.f32.mrf.mxu0
    %v4778 = vadd.f32 0.0, %v4777
    %4779 = vmatmul.f32.gmra.mxu0 %v4689
    %v4780 = vpop.f32.mrf.mxu0
    %v4781 = vadd.f32 0.0, %v4780
    %4782 = vmatmul.f32.gmra.mxu0 %v4692
    %v4783 = vpop.f32.mrf.mxu0
    %v4784 = vadd.f32 0.0, %v4783
    %4785 = vmatmul.f32.gmra.mxu0 %v4695
    %v4786 = vpop.f32.mrf.mxu0
    %v4787 = vadd.f32 0.0, %v4786
    %4788 = vmatmul.f32.gmra.mxu0 %v4698
    %v4789 = vpop.f32.mrf.mxu0
    %v4790 = vadd.f32 0.0, %v4789
    %4791 = vmatmul.f32.gmra.mxu0 %v4701
    %v4792 = vpop.f32.mrf.mxu0
    %v4793 = vadd.f32 0.0, %v4792
    %4794 = vmatmul.f32.gmra.mxu0 %v4704
    %v4795 = vpop.f32.mrf.mxu0
    %v4796 = vadd.f32 0.0, %v4795
    %4797 = vmatmul.f32.gmra.mxu0 %v4707
    %v4798 = vpop.f32.mrf.mxu0
    %v4799 = vadd.f32 0.0, %v4798
    %4800 = vmatmul.f32.gmra.mxu0 %v4710
    %v4801 = vpop.f32.mrf.mxu0
    %v4802 = vadd.f32 0.0, %v4801
    %4803 = vmatmul.f32.gmra.mxu0 %v4713
    %v4804 = vpop.f32.mrf.mxu0
    %v4805 = vadd.f32 0.0, %v4804
    %4806 = vmatmul.f32.gmra.mxu0 %v4716
    %v4807 = vpop.f32.mrf.mxu0
    %v4808 = vadd.f32 0.0, %v4807
    %4809 = vdwg.mxu0
    %v4810 = vadd.f32 %v4590, %v4736
    %v4811 = vadd.f32 %v4591, %v4739
    %v4812 = vadd.f32 %v4592, %v4742
    %v4813 = vadd.f32 %v4593, %v4745
    %v4814 = vadd.f32 %v4594, %v4748
    %v4815 = vadd.f32 %v4595, %v4751
    %v4816 = vadd.f32 %v4596, %v4754
    %v4817 = vadd.f32 %v4597, %v4757
    %v4818 = vadd.f32 %v4598, %v4760
    %v4819 = vadd.f32 %v4599, %v4763
    %v4820 = vadd.f32 %v4600, %v4766
    %v4821 = vadd.f32 %v4601, %v4769
    %v4822 = vadd.f32 %v4602, %v4772
    %v4823 = vadd.f32 %v4603, %v4775
    %v4824 = vadd.f32 %v4604, %v4778
    %v4825 = vadd.f32 %v4605, %v4781
    %v4826 = vadd.f32 %v4606, %v4784
    %v4827 = vadd.f32 %v4607, %v4787
    %v4828 = vadd.f32 %v4608, %v4790
    %v4829 = vadd.f32 %v4609, %v4793
    %v4830 = vadd.f32 %v4610, %v4796
    %v4831 = vadd.f32 %v4611, %v4799
    %v4832 = vadd.f32 %v4612, %v4802
    %v4833 = vadd.f32 %v4613, %v4805
    %v4834 = vadd.f32 %v4614, %v4808
    %v4835 = vld [vmem:[#allocation3 + $0x10] sm:$0xff]
    %v4836 = vld [vmem:[#allocation3 + $0x18] sm:$0xff]
    %v4837 = vld [vmem:[#allocation3 + $0x20] sm:$0xff]
    %v4838 = vld [vmem:[#allocation3 + $0x28] sm:$0xff]
    %v4839 = vld [vmem:[#allocation3 + $0x30] sm:$0xff]
    %v4840 = vld [vmem:[#allocation3 + $0x38] sm:$0xff]
    %v4841 = vld [vmem:[#allocation3 + $0x40] sm:$0xff]
    %v4842 = vld [vmem:[#allocation3 + $0x48] sm:$0xff]
    %v4843 = vld [vmem:[#allocation3 + $0x50] sm:$0xff]
    %v4844 = vld [vmem:[#allocation3 + $0x58] sm:$0xff]
    %v4845 = vld [vmem:[#allocation3 + $0x60] sm:$0xff]
    %v4846 = vld [vmem:[#allocation3 + $0x68] sm:$0xff]
    %v4847 = vld [vmem:[#allocation3 + $0x70] sm:$0xff]
    %v4848 = vld [vmem:[#allocation3 + $0x78] sm:$0xff]
    %v4849 = vld [vmem:[#allocation3 + $0x80] sm:$0xff]
    %v4850 = vld [vmem:[#allocation3 + $0x88] sm:$0xff]
    %v4851 = vld [vmem:[#allocation3 + $0x90] sm:$0xff]
    %v4852 = vld [vmem:[#allocation3 + $0x98] sm:$0xff]
    %v4853 = vld [vmem:[#allocation3 + $0xa0] sm:$0xff]
    %v4854 = vld [vmem:[#allocation3 + $0xa8] sm:$0xff]
    %v4855 = vld [vmem:[#allocation3 + $0xb0] sm:$0xff]
    %v4856 = vld [vmem:[#allocation3 + $0xb8] sm:$0xff]
    %v4857 = vld [vmem:[#allocation3 + $0xc0] sm:$0xff]
    %v4858 = vld [vmem:[#allocation3 + $0xc8] sm:$0xff]
    %v4859 = vld [vmem:[#allocation3 + $0xd0] sm:$0xff]
    %s4860 = scalar_lea.vmem %s5, 64
    %v4861 = vld [vmem:[%s4860] sm:$0xff]
    %v4862 = vld [vmem:[%s4860 + $0x8] sm:$0xff]
    %v4864 = vsel %vm63, %v4835, 0
    %v4867 = vsel %vm63, %v4836, 0
    %v4870 = vsel %vm63, %v4837, 0
    %v4873 = vsel %vm63, %v4838, 0
    %v4876 = vsel %vm63, %v4839, 0
    %v4879 = vsel %vm63, %v4840, 0
    %v4882 = vsel %vm63, %v4841, 0
    %v4885 = vsel %vm63, %v4842, 0
    %v4888 = vsel %vm63, %v4843, 0
    %v4891 = vsel %vm63, %v4844, 0
    %v4894 = vsel %vm63, %v4845, 0
    %v4897 = vsel %vm63, %v4846, 0
    %v4900 = vsel %vm63, %v4847, 0
    %v4903 = vsel %vm63, %v4848, 0
    %v4906 = vsel %vm63, %v4849, 0
    %v4909 = vsel %vm63, %v4850, 0
    %v4912 = vsel %vm63, %v4851, 0
    %v4915 = vsel %vm63, %v4852, 0
    %v4918 = vsel %vm63, %v4853, 0
    %v4921 = vsel %vm63, %v4854, 0
    %v4924 = vsel %vm63, %v4855, 0
    %v4927 = vsel %vm63, %v4856, 0
    %v4930 = vsel %vm63, %v4857, 0
    %v4933 = vsel %vm63, %v4858, 0
    %v4936 = vsel %vm63, %v4859, 0
    %4938 = vmatpush.msra.mxu0 0.0
    %4939 = vmatpush.msra.mxu0 0.0
    %4940 = vmatpush.msra.mxu0 0.0
    %4941 = vmatpush.msra.mxu0 0.0
    %4942 = vmatpush.msra.mxu0 0.0
    %4943 = vmatpush.msra.mxu0 0.0
    %4944 = vmatpush.msra.mxu0 0.0
    %4945 = vmatpush.msra.mxu0 0.0
    %4946 = vmatpush.msra.mxu0 0.0
    %4947 = vmatpush.msra.mxu0 0.0
    %4948 = vmatpush.msra.mxu0 0.0
    %4949 = vmatpush.msra.mxu0 0.0
    %4950 = vmatpush.msra.mxu0 0.0
    %4951 = vmatpush.msra.mxu0 0.0
    %4952 = vmatpush.msra.mxu0 %v4862
    %4953 = vmatpush.msra.mxu0 %v4861
    %4954 = vmatmul.f32.gmra.mxu0 %v4864
    %v4955 = vpop.f32.mrf.mxu0
    %v4956 = vadd.f32 0.0, %v4955
    %4957 = vmatmul.f32.gmra.mxu0 %v4867
    %v4958 = vpop.f32.mrf.mxu0
    %v4959 = vadd.f32 0.0, %v4958
    %4960 = vmatmul.f32.gmra.mxu0 %v4870
    %v4961 = vpop.f32.mrf.mxu0
    %v4962 = vadd.f32 0.0, %v4961
    %4963 = vmatmul.f32.gmra.mxu0 %v4873
    %v4964 = vpop.f32.mrf.mxu0
    %v4965 = vadd.f32 0.0, %v4964
    %4966 = vmatmul.f32.gmra.mxu0 %v4876
    %v4967 = vpop.f32.mrf.mxu0
    %v4968 = vadd.f32 0.0, %v4967
    %4969 = vmatmul.f32.gmra.mxu0 %v4879
    %v4970 = vpop.f32.mrf.mxu0
    %v4971 = vadd.f32 0.0, %v4970
    %4972 = vmatmul.f32.gmra.mxu0 %v4882
    %v4973 = vpop.f32.mrf.mxu0
    %v4974 = vadd.f32 0.0, %v4973
    %4975 = vmatmul.f32.gmra.mxu0 %v4885
    %v4976 = vpop.f32.mrf.mxu0
    %v4977 = vadd.f32 0.0, %v4976
    %4978 = vmatmul.f32.gmra.mxu0 %v4888
    %v4979 = vpop.f32.mrf.mxu0
    %v4980 = vadd.f32 0.0, %v4979
    %4981 = vmatmul.f32.gmra.mxu0 %v4891
    %v4982 = vpop.f32.mrf.mxu0
    %v4983 = vadd.f32 0.0, %v4982
    %4984 = vmatmul.f32.gmra.mxu0 %v4894
    %v4985 = vpop.f32.mrf.mxu0
    %v4986 = vadd.f32 0.0, %v4985
    %4987 = vmatmul.f32.gmra.mxu0 %v4897
    %v4988 = vpop.f32.mrf.mxu0
    %v4989 = vadd.f32 0.0, %v4988
    %4990 = vmatmul.f32.gmra.mxu0 %v4900
    %v4991 = vpop.f32.mrf.mxu0
    %v4992 = vadd.f32 0.0, %v4991
    %4993 = vmatmul.f32.gmra.mxu0 %v4903
    %v4994 = vpop.f32.mrf.mxu0
    %v4995 = vadd.f32 0.0, %v4994
    %4996 = vmatmul.f32.gmra.mxu0 %v4906
    %v4997 = vpop.f32.mrf.mxu0
    %v4998 = vadd.f32 0.0, %v4997
    %4999 = vmatmul.f32.gmra.mxu0 %v4909
    %v5000 = vpop.f32.mrf.mxu0
    %v5001 = vadd.f32 0.0, %v5000
    %5002 = vmatmul.f32.gmra.mxu0 %v4912
    %v5003 = vpop.f32.mrf.mxu0
    %v5004 = vadd.f32 0.0, %v5003
    %5005 = vmatmul.f32.gmra.mxu0 %v4915
    %v5006 = vpop.f32.mrf.mxu0
    %v5007 = vadd.f32 0.0, %v5006
    %5008 = vmatmul.f32.gmra.mxu0 %v4918
    %v5009 = vpop.f32.mrf.mxu0
    %v5010 = vadd.f32 0.0, %v5009
    %5011 = vmatmul.f32.gmra.mxu0 %v4921
    %v5012 = vpop.f32.mrf.mxu0
    %v5013 = vadd.f32 0.0, %v5012
    %5014 = vmatmul.f32.gmra.mxu0 %v4924
    %v5015 = vpop.f32.mrf.mxu0
    %v5016 = vadd.f32 0.0, %v5015
    %5017 = vmatmul.f32.gmra.mxu0 %v4927
    %v5018 = vpop.f32.mrf.mxu0
    %v5019 = vadd.f32 0.0, %v5018
    %5020 = vmatmul.f32.gmra.mxu0 %v4930
    %v5021 = vpop.f32.mrf.mxu0
    %v5022 = vadd.f32 0.0, %v5021
    %5023 = vmatmul.f32.gmra.mxu0 %v4933
    %v5024 = vpop.f32.mrf.mxu0
    %v5025 = vadd.f32 0.0, %v5024
    %5026 = vmatmul.f32.gmra.mxu0 %v4936
    %v5027 = vpop.f32.mrf.mxu0
    %v5028 = vadd.f32 0.0, %v5027
    %5029 = vdwg.mxu0
    %v5030 = vadd.f32 %v4810, %v4956
    %v5031 = vadd.f32 %v4811, %v4959
    %v5032 = vadd.f32 %v4812, %v4962
    %v5033 = vadd.f32 %v4813, %v4965
    %v5034 = vadd.f32 %v4814, %v4968
    %v5035 = vadd.f32 %v4815, %v4971
    %v5036 = vadd.f32 %v4816, %v4974
    %v5037 = vadd.f32 %v4817, %v4977
    %v5038 = vadd.f32 %v4818, %v4980
    %v5039 = vadd.f32 %v4819, %v4983
    %v5040 = vadd.f32 %v4820, %v4986
    %v5041 = vadd.f32 %v4821, %v4989
    %v5042 = vadd.f32 %v4822, %v4992
    %v5043 = vadd.f32 %v4823, %v4995
    %v5044 = vadd.f32 %v4824, %v4998
    %v5045 = vadd.f32 %v4825, %v5001
    %v5046 = vadd.f32 %v4826, %v5004
    %v5047 = vadd.f32 %v4827, %v5007
    %v5048 = vadd.f32 %v4828, %v5010
    %v5049 = vadd.f32 %v4829, %v5013
    %v5050 = vadd.f32 %v4830, %v5016
    %v5051 = vadd.f32 %v4831, %v5019
    %v5052 = vadd.f32 %v4832, %v5022
    %v5053 = vadd.f32 %v4833, %v5025
    %v5054 = vadd.f32 %v4834, %v5028
    %v5055 = vld [vmem:[#allocation3 + $0x11] sm:$0xff]
    %v5056 = vld [vmem:[#allocation3 + $0x19] sm:$0xff]
    %v5057 = vld [vmem:[#allocation3 + $0x21] sm:$0xff]
    %v5058 = vld [vmem:[#allocation3 + $0x29] sm:$0xff]
    %v5059 = vld [vmem:[#allocation3 + $0x31] sm:$0xff]
    %v5060 = vld [vmem:[#allocation3 + $0x39] sm:$0xff]
    %v5061 = vld [vmem:[#allocation3 + $0x41] sm:$0xff]
    %v5062 = vld [vmem:[#allocation3 + $0x49] sm:$0xff]
    %v5063 = vld [vmem:[#allocation3 + $0x51] sm:$0xff]
    %v5064 = vld [vmem:[#allocation3 + $0x59] sm:$0xff]
    %v5065 = vld [vmem:[#allocation3 + $0x61] sm:$0xff]
    %v5066 = vld [vmem:[#allocation3 + $0x69] sm:$0xff]
    %v5067 = vld [vmem:[#allocation3 + $0x71] sm:$0xff]
    %v5068 = vld [vmem:[#allocation3 + $0x79] sm:$0xff]
    %v5069 = vld [vmem:[#allocation3 + $0x81] sm:$0xff]
    %v5070 = vld [vmem:[#allocation3 + $0x89] sm:$0xff]
    %v5071 = vld [vmem:[#allocation3 + $0x91] sm:$0xff]
    %v5072 = vld [vmem:[#allocation3 + $0x99] sm:$0xff]
    %v5073 = vld [vmem:[#allocation3 + $0xa1] sm:$0xff]
    %v5074 = vld [vmem:[#allocation3 + $0xa9] sm:$0xff]
    %v5075 = vld [vmem:[#allocation3 + $0xb1] sm:$0xff]
    %v5076 = vld [vmem:[#allocation3 + $0xb9] sm:$0xff]
    %v5077 = vld [vmem:[#allocation3 + $0xc1] sm:$0xff]
    %v5078 = vld [vmem:[#allocation3 + $0xc9] sm:$0xff]
    %v5079 = vld [vmem:[#allocation3 + $0xd1] sm:$0xff]
    %s5080 = scalar_lea.vmem %s5, 80
    %v5081 = vld [vmem:[%s5080] sm:$0xff]
    %v5082 = vld [vmem:[%s5080 + $0x8] sm:$0xff]
    %v5084 = vsel %vm63, %v5055, 0
    %v5087 = vsel %vm63, %v5056, 0
    %v5090 = vsel %vm63, %v5057, 0
    %v5093 = vsel %vm63, %v5058, 0
    %v5096 = vsel %vm63, %v5059, 0
    %v5099 = vsel %vm63, %v5060, 0
    %v5102 = vsel %vm63, %v5061, 0
    %v5105 = vsel %vm63, %v5062, 0
    %v5108 = vsel %vm63, %v5063, 0
    %v5111 = vsel %vm63, %v5064, 0
    %v5114 = vsel %vm63, %v5065, 0
    %v5117 = vsel %vm63, %v5066, 0
    %v5120 = vsel %vm63, %v5067, 0
    %v5123 = vsel %vm63, %v5068, 0
    %v5126 = vsel %vm63, %v5069, 0
    %v5129 = vsel %vm63, %v5070, 0
    %v5132 = vsel %vm63, %v5071, 0
    %v5135 = vsel %vm63, %v5072, 0
    %v5138 = vsel %vm63, %v5073, 0
    %v5141 = vsel %vm63, %v5074, 0
    %v5144 = vsel %vm63, %v5075, 0
    %v5147 = vsel %vm63, %v5076, 0
    %v5150 = vsel %vm63, %v5077, 0
    %v5153 = vsel %vm63, %v5078, 0
    %v5156 = vsel %vm63, %v5079, 0
    %5158 = vmatpush.msra.mxu0 0.0
    %5159 = vmatpush.msra.mxu0 0.0
    %5160 = vmatpush.msra.mxu0 0.0
    %5161 = vmatpush.msra.mxu0 0.0
    %5162 = vmatpush.msra.mxu0 0.0
    %5163 = vmatpush.msra.mxu0 0.0
    %5164 = vmatpush.msra.mxu0 0.0
    %5165 = vmatpush.msra.mxu0 0.0
    %5166 = vmatpush.msra.mxu0 0.0
    %5167 = vmatpush.msra.mxu0 0.0
    %5168 = vmatpush.msra.mxu0 0.0
    %5169 = vmatpush.msra.mxu0 0.0
    %5170 = vmatpush.msra.mxu0 0.0
    %5171 = vmatpush.msra.mxu0 0.0
    %5172 = vmatpush.msra.mxu0 %v5082
    %5173 = vmatpush.msra.mxu0 %v5081
    %5174 = vmatmul.f32.gmra.mxu0 %v5084
    %v5175 = vpop.f32.mrf.mxu0
    %v5176 = vadd.f32 0.0, %v5175
    %5177 = vmatmul.f32.gmra.mxu0 %v5087
    %v5178 = vpop.f32.mrf.mxu0
    %v5179 = vadd.f32 0.0, %v5178
    %5180 = vmatmul.f32.gmra.mxu0 %v5090
    %v5181 = vpop.f32.mrf.mxu0
    %v5182 = vadd.f32 0.0, %v5181
    %5183 = vmatmul.f32.gmra.mxu0 %v5093
    %v5184 = vpop.f32.mrf.mxu0
    %v5185 = vadd.f32 0.0, %v5184
    %5186 = vmatmul.f32.gmra.mxu0 %v5096
    %v5187 = vpop.f32.mrf.mxu0
    %v5188 = vadd.f32 0.0, %v5187
    %5189 = vmatmul.f32.gmra.mxu0 %v5099
    %v5190 = vpop.f32.mrf.mxu0
    %v5191 = vadd.f32 0.0, %v5190
    %5192 = vmatmul.f32.gmra.mxu0 %v5102
    %v5193 = vpop.f32.mrf.mxu0
    %v5194 = vadd.f32 0.0, %v5193
    %5195 = vmatmul.f32.gmra.mxu0 %v5105
    %v5196 = vpop.f32.mrf.mxu0
    %v5197 = vadd.f32 0.0, %v5196
    %5198 = vmatmul.f32.gmra.mxu0 %v5108
    %v5199 = vpop.f32.mrf.mxu0
    %v5200 = vadd.f32 0.0, %v5199
    %5201 = vmatmul.f32.gmra.mxu0 %v5111
    %v5202 = vpop.f32.mrf.mxu0
    %v5203 = vadd.f32 0.0, %v5202
    %5204 = vmatmul.f32.gmra.mxu0 %v5114
    %v5205 = vpop.f32.mrf.mxu0
    %v5206 = vadd.f32 0.0, %v5205
    %5207 = vmatmul.f32.gmra.mxu0 %v5117
    %v5208 = vpop.f32.mrf.mxu0
    %v5209 = vadd.f32 0.0, %v5208
    %5210 = vmatmul.f32.gmra.mxu0 %v5120
    %v5211 = vpop.f32.mrf.mxu0
    %v5212 = vadd.f32 0.0, %v5211
    %5213 = vmatmul.f32.gmra.mxu0 %v5123
    %v5214 = vpop.f32.mrf.mxu0
    %v5215 = vadd.f32 0.0, %v5214
    %5216 = vmatmul.f32.gmra.mxu0 %v5126
    %v5217 = vpop.f32.mrf.mxu0
    %v5218 = vadd.f32 0.0, %v5217
    %5219 = vmatmul.f32.gmra.mxu0 %v5129
    %v5220 = vpop.f32.mrf.mxu0
    %v5221 = vadd.f32 0.0, %v5220
    %5222 = vmatmul.f32.gmra.mxu0 %v5132
    %v5223 = vpop.f32.mrf.mxu0
    %v5224 = vadd.f32 0.0, %v5223
    %5225 = vmatmul.f32.gmra.mxu0 %v5135
    %v5226 = vpop.f32.mrf.mxu0
    %v5227 = vadd.f32 0.0, %v5226
    %5228 = vmatmul.f32.gmra.mxu0 %v5138
    %v5229 = vpop.f32.mrf.mxu0
    %v5230 = vadd.f32 0.0, %v5229
    %5231 = vmatmul.f32.gmra.mxu0 %v5141
    %v5232 = vpop.f32.mrf.mxu0
    %v5233 = vadd.f32 0.0, %v5232
    %5234 = vmatmul.f32.gmra.mxu0 %v5144
    %v5235 = vpop.f32.mrf.mxu0
    %v5236 = vadd.f32 0.0, %v5235
    %5237 = vmatmul.f32.gmra.mxu0 %v5147
    %v5238 = vpop.f32.mrf.mxu0
    %v5239 = vadd.f32 0.0, %v5238
    %5240 = vmatmul.f32.gmra.mxu0 %v5150
    %v5241 = vpop.f32.mrf.mxu0
    %v5242 = vadd.f32 0.0, %v5241
    %5243 = vmatmul.f32.gmra.mxu0 %v5153
    %v5244 = vpop.f32.mrf.mxu0
    %v5245 = vadd.f32 0.0, %v5244
    %5246 = vmatmul.f32.gmra.mxu0 %v5156
    %v5247 = vpop.f32.mrf.mxu0
    %v5248 = vadd.f32 0.0, %v5247
    %5249 = vdwg.mxu0
    %v5250 = vadd.f32 %v5030, %v5176
    %v5251 = vadd.f32 %v5031, %v5179
    %v5252 = vadd.f32 %v5032, %v5182
    %v5253 = vadd.f32 %v5033, %v5185
    %v5254 = vadd.f32 %v5034, %v5188
    %v5255 = vadd.f32 %v5035, %v5191
    %v5256 = vadd.f32 %v5036, %v5194
    %v5257 = vadd.f32 %v5037, %v5197
    %v5258 = vadd.f32 %v5038, %v5200
    %v5259 = vadd.f32 %v5039, %v5203
    %v5260 = vadd.f32 %v5040, %v5206
    %v5261 = vadd.f32 %v5041, %v5209
    %v5262 = vadd.f32 %v5042, %v5212
    %v5263 = vadd.f32 %v5043, %v5215
    %v5264 = vadd.f32 %v5044, %v5218
    %v5265 = vadd.f32 %v5045, %v5221
    %v5266 = vadd.f32 %v5046, %v5224
    %v5267 = vadd.f32 %v5047, %v5227
    %v5268 = vadd.f32 %v5048, %v5230
    %v5269 = vadd.f32 %v5049, %v5233
    %v5270 = vadd.f32 %v5050, %v5236
    %v5271 = vadd.f32 %v5051, %v5239
    %v5272 = vadd.f32 %v5052, %v5242
    %v5273 = vadd.f32 %v5053, %v5245
    %v5274 = vadd.f32 %v5054, %v5248
    %v5275 = vld [vmem:[#allocation3 + $0x19] sm:$0xff]
    %v5276 = vld [vmem:[#allocation3 + $0x21] sm:$0xff]
    %v5277 = vld [vmem:[#allocation3 + $0x29] sm:$0xff]
    %v5278 = vld [vmem:[#allocation3 + $0x31] sm:$0xff]
    %v5279 = vld [vmem:[#allocation3 + $0x39] sm:$0xff]
    %v5280 = vld [vmem:[#allocation3 + $0x41] sm:$0xff]
    %v5281 = vld [vmem:[#allocation3 + $0x49] sm:$0xff]
    %v5282 = vld [vmem:[#allocation3 + $0x51] sm:$0xff]
    %v5283 = vld [vmem:[#allocation3 + $0x59] sm:$0xff]
    %v5284 = vld [vmem:[#allocation3 + $0x61] sm:$0xff]
    %v5285 = vld [vmem:[#allocation3 + $0x69] sm:$0xff]
    %v5286 = vld [vmem:[#allocation3 + $0x71] sm:$0xff]
    %v5287 = vld [vmem:[#allocation3 + $0x79] sm:$0xff]
    %v5288 = vld [vmem:[#allocation3 + $0x81] sm:$0xff]
    %v5289 = vld [vmem:[#allocation3 + $0x89] sm:$0xff]
    %v5290 = vld [vmem:[#allocation3 + $0x91] sm:$0xff]
    %v5291 = vld [vmem:[#allocation3 + $0x99] sm:$0xff]
    %v5292 = vld [vmem:[#allocation3 + $0xa1] sm:$0xff]
    %v5293 = vld [vmem:[#allocation3 + $0xa9] sm:$0xff]
    %v5294 = vld [vmem:[#allocation3 + $0xb1] sm:$0xff]
    %v5295 = vld [vmem:[#allocation3 + $0xb9] sm:$0xff]
    %v5296 = vld [vmem:[#allocation3 + $0xc1] sm:$0xff]
    %v5297 = vld [vmem:[#allocation3 + $0xc9] sm:$0xff]
    %v5298 = vld [vmem:[#allocation3 + $0xd1] sm:$0xff]
    %v5299 = vld [vmem:[#allocation3 + $0xd9] sm:$0xff]
    %s5300 = scalar_lea.vmem %s5, 96
    %v5301 = vld [vmem:[%s5300] sm:$0xff]
    %v5302 = vld [vmem:[%s5300 + $0x8] sm:$0xff]
    %v5304 = vsel %vm63, %v5275, 0
    %v5307 = vsel %vm63, %v5276, 0
    %v5310 = vsel %vm63, %v5277, 0
    %v5313 = vsel %vm63, %v5278, 0
    %v5316 = vsel %vm63, %v5279, 0
    %v5319 = vsel %vm63, %v5280, 0
    %v5322 = vsel %vm63, %v5281, 0
    %v5325 = vsel %vm63, %v5282, 0
    %v5328 = vsel %vm63, %v5283, 0
    %v5331 = vsel %vm63, %v5284, 0
    %v5334 = vsel %vm63, %v5285, 0
    %v5337 = vsel %vm63, %v5286, 0
    %v5340 = vsel %vm63, %v5287, 0
    %v5343 = vsel %vm63, %v5288, 0
    %v5346 = vsel %vm63, %v5289, 0
    %v5349 = vsel %vm63, %v5290, 0
    %v5352 = vsel %vm63, %v5291, 0
    %v5355 = vsel %vm63, %v5292, 0
    %v5358 = vsel %vm63, %v5293, 0
    %v5361 = vsel %vm63, %v5294, 0
    %v5364 = vsel %vm63, %v5295, 0
    %v5367 = vsel %vm63, %v5296, 0
    %v5370 = vsel %vm63, %v5297, 0
    %v5373 = vsel %vm63, %v5298, 0
    %v5376 = vsel %vm63, %v5299, 0
    %5378 = vmatpush.msra.mxu0 0.0
    %5379 = vmatpush.msra.mxu0 0.0
    %5380 = vmatpush.msra.mxu0 0.0
    %5381 = vmatpush.msra.mxu0 0.0
    %5382 = vmatpush.msra.mxu0 0.0
    %5383 = vmatpush.msra.mxu0 0.0
    %5384 = vmatpush.msra.mxu0 0.0
    %5385 = vmatpush.msra.mxu0 0.0
    %5386 = vmatpush.msra.mxu0 0.0
    %5387 = vmatpush.msra.mxu0 0.0
    %5388 = vmatpush.msra.mxu0 0.0
    %5389 = vmatpush.msra.mxu0 0.0
    %5390 = vmatpush.msra.mxu0 0.0
    %5391 = vmatpush.msra.mxu0 0.0
    %5392 = vmatpush.msra.mxu0 %v5302
    %5393 = vmatpush.msra.mxu0 %v5301
    %5394 = vmatmul.f32.gmra.mxu0 %v5304
    %v5395 = vpop.f32.mrf.mxu0
    %v5396 = vadd.f32 0.0, %v5395
    %5397 = vmatmul.f32.gmra.mxu0 %v5307
    %v5398 = vpop.f32.mrf.mxu0
    %v5399 = vadd.f32 0.0, %v5398
    %5400 = vmatmul.f32.gmra.mxu0 %v5310
    %v5401 = vpop.f32.mrf.mxu0
    %v5402 = vadd.f32 0.0, %v5401
    %5403 = vmatmul.f32.gmra.mxu0 %v5313
    %v5404 = vpop.f32.mrf.mxu0
    %v5405 = vadd.f32 0.0, %v5404
    %5406 = vmatmul.f32.gmra.mxu0 %v5316
    %v5407 = vpop.f32.mrf.mxu0
    %v5408 = vadd.f32 0.0, %v5407
    %5409 = vmatmul.f32.gmra.mxu0 %v5319
    %v5410 = vpop.f32.mrf.mxu0
    %v5411 = vadd.f32 0.0, %v5410
    %5412 = vmatmul.f32.gmra.mxu0 %v5322
    %v5413 = vpop.f32.mrf.mxu0
    %v5414 = vadd.f32 0.0, %v5413
    %5415 = vmatmul.f32.gmra.mxu0 %v5325
    %v5416 = vpop.f32.mrf.mxu0
    %v5417 = vadd.f32 0.0, %v5416
    %5418 = vmatmul.f32.gmra.mxu0 %v5328
    %v5419 = vpop.f32.mrf.mxu0
    %v5420 = vadd.f32 0.0, %v5419
    %5421 = vmatmul.f32.gmra.mxu0 %v5331
    %v5422 = vpop.f32.mrf.mxu0
    %v5423 = vadd.f32 0.0, %v5422
    %5424 = vmatmul.f32.gmra.mxu0 %v5334
    %v5425 = vpop.f32.mrf.mxu0
    %v5426 = vadd.f32 0.0, %v5425
    %5427 = vmatmul.f32.gmra.mxu0 %v5337
    %v5428 = vpop.f32.mrf.mxu0
    %v5429 = vadd.f32 0.0, %v5428
    %5430 = vmatmul.f32.gmra.mxu0 %v5340
    %v5431 = vpop.f32.mrf.mxu0
    %v5432 = vadd.f32 0.0, %v5431
    %5433 = vmatmul.f32.gmra.mxu0 %v5343
    %v5434 = vpop.f32.mrf.mxu0
    %v5435 = vadd.f32 0.0, %v5434
    %5436 = vmatmul.f32.gmra.mxu0 %v5346
    %v5437 = vpop.f32.mrf.mxu0
    %v5438 = vadd.f32 0.0, %v5437
    %5439 = vmatmul.f32.gmra.mxu0 %v5349
    %v5440 = vpop.f32.mrf.mxu0
    %v5441 = vadd.f32 0.0, %v5440
    %5442 = vmatmul.f32.gmra.mxu0 %v5352
    %v5443 = vpop.f32.mrf.mxu0
    %v5444 = vadd.f32 0.0, %v5443
    %5445 = vmatmul.f32.gmra.mxu0 %v5355
    %v5446 = vpop.f32.mrf.mxu0
    %v5447 = vadd.f32 0.0, %v5446
    %5448 = vmatmul.f32.gmra.mxu0 %v5358
    %v5449 = vpop.f32.mrf.mxu0
    %v5450 = vadd.f32 0.0, %v5449
    %5451 = vmatmul.f32.gmra.mxu0 %v5361
    %v5452 = vpop.f32.mrf.mxu0
    %v5453 = vadd.f32 0.0, %v5452
    %5454 = vmatmul.f32.gmra.mxu0 %v5364
    %v5455 = vpop.f32.mrf.mxu0
    %v5456 = vadd.f32 0.0, %v5455
    %5457 = vmatmul.f32.gmra.mxu0 %v5367
    %v5458 = vpop.f32.mrf.mxu0
    %v5459 = vadd.f32 0.0, %v5458
    %5460 = vmatmul.f32.gmra.mxu0 %v5370
    %v5461 = vpop.f32.mrf.mxu0
    %v5462 = vadd.f32 0.0, %v5461
    %5463 = vmatmul.f32.gmra.mxu0 %v5373
    %v5464 = vpop.f32.mrf.mxu0
    %v5465 = vadd.f32 0.0, %v5464
    %5466 = vmatmul.f32.gmra.mxu0 %v5376
    %v5467 = vpop.f32.mrf.mxu0
    %v5468 = vadd.f32 0.0, %v5467
    %5469 = vdwg.mxu0
    %v5470 = vadd.f32 %v5250, %v5396
    %v5471 = vadd.f32 %v5251, %v5399
    %v5472 = vadd.f32 %v5252, %v5402
    %v5473 = vadd.f32 %v5253, %v5405
    %v5474 = vadd.f32 %v5254, %v5408
    %v5475 = vadd.f32 %v5255, %v5411
    %v5476 = vadd.f32 %v5256, %v5414
    %v5477 = vadd.f32 %v5257, %v5417
    %v5478 = vadd.f32 %v5258, %v5420
    %v5479 = vadd.f32 %v5259, %v5423
    %v5480 = vadd.f32 %v5260, %v5426
    %v5481 = vadd.f32 %v5261, %v5429
    %v5482 = vadd.f32 %v5262, %v5432
    %v5483 = vadd.f32 %v5263, %v5435
    %v5484 = vadd.f32 %v5264, %v5438
    %v5485 = vadd.f32 %v5265, %v5441
    %v5486 = vadd.f32 %v5266, %v5444
    %v5487 = vadd.f32 %v5267, %v5447
    %v5488 = vadd.f32 %v5268, %v5450
    %v5489 = vadd.f32 %v5269, %v5453
    %v5490 = vadd.f32 %v5270, %v5456
    %v5491 = vadd.f32 %v5271, %v5459
    %v5492 = vadd.f32 %v5272, %v5462
    %v5493 = vadd.f32 %v5273, %v5465
    %v5494 = vadd.f32 %v5274, %v5468
    %v5495 = vld [vmem:[#allocation3 + $0x1a] sm:$0xff]
    %v5496 = vld [vmem:[#allocation3 + $0x22] sm:$0xff]
    %v5497 = vld [vmem:[#allocation3 + $0x2a] sm:$0xff]
    %v5498 = vld [vmem:[#allocation3 + $0x32] sm:$0xff]
    %v5499 = vld [vmem:[#allocation3 + $0x3a] sm:$0xff]
    %v5500 = vld [vmem:[#allocation3 + $0x42] sm:$0xff]
    %v5501 = vld [vmem:[#allocation3 + $0x4a] sm:$0xff]
    %v5502 = vld [vmem:[#allocation3 + $0x52] sm:$0xff]
    %v5503 = vld [vmem:[#allocation3 + $0x5a] sm:$0xff]
    %v5504 = vld [vmem:[#allocation3 + $0x62] sm:$0xff]
    %v5505 = vld [vmem:[#allocation3 + $0x6a] sm:$0xff]
    %v5506 = vld [vmem:[#allocation3 + $0x72] sm:$0xff]
    %v5507 = vld [vmem:[#allocation3 + $0x7a] sm:$0xff]
    %v5508 = vld [vmem:[#allocation3 + $0x82] sm:$0xff]
    %v5509 = vld [vmem:[#allocation3 + $0x8a] sm:$0xff]
    %v5510 = vld [vmem:[#allocation3 + $0x92] sm:$0xff]
    %v5511 = vld [vmem:[#allocation3 + $0x9a] sm:$0xff]
    %v5512 = vld [vmem:[#allocation3 + $0xa2] sm:$0xff]
    %v5513 = vld [vmem:[#allocation3 + $0xaa] sm:$0xff]
    %v5514 = vld [vmem:[#allocation3 + $0xb2] sm:$0xff]
    %v5515 = vld [vmem:[#allocation3 + $0xba] sm:$0xff]
    %v5516 = vld [vmem:[#allocation3 + $0xc2] sm:$0xff]
    %v5517 = vld [vmem:[#allocation3 + $0xca] sm:$0xff]
    %v5518 = vld [vmem:[#allocation3 + $0xd2] sm:$0xff]
    %v5519 = vld [vmem:[#allocation3 + $0xda] sm:$0xff]
    %s5520 = scalar_lea.vmem %s5, 112
    %v5521 = vld [vmem:[%s5520] sm:$0xff]
    %v5522 = vld [vmem:[%s5520 + $0x8] sm:$0xff]
    %v5524 = vsel %vm63, %v5495, 0
    %v5527 = vsel %vm63, %v5496, 0
    %v5530 = vsel %vm63, %v5497, 0
    %v5533 = vsel %vm63, %v5498, 0
    %v5536 = vsel %vm63, %v5499, 0
    %v5539 = vsel %vm63, %v5500, 0
    %v5542 = vsel %vm63, %v5501, 0
    %v5545 = vsel %vm63, %v5502, 0
    %v5548 = vsel %vm63, %v5503, 0
    %v5551 = vsel %vm63, %v5504, 0
    %v5554 = vsel %vm63, %v5505, 0
    %v5557 = vsel %vm63, %v5506, 0
    %v5560 = vsel %vm63, %v5507, 0
    %v5563 = vsel %vm63, %v5508, 0
    %v5566 = vsel %vm63, %v5509, 0
    %v5569 = vsel %vm63, %v5510, 0
    %v5572 = vsel %vm63, %v5511, 0
    %v5575 = vsel %vm63, %v5512, 0
    %v5578 = vsel %vm63, %v5513, 0
    %v5581 = vsel %vm63, %v5514, 0
    %v5584 = vsel %vm63, %v5515, 0
    %v5587 = vsel %vm63, %v5516, 0
    %v5590 = vsel %vm63, %v5517, 0
    %v5593 = vsel %vm63, %v5518, 0
    %v5596 = vsel %vm63, %v5519, 0
    %5598 = vmatpush.msra.mxu0 0.0
    %5599 = vmatpush.msra.mxu0 0.0
    %5600 = vmatpush.msra.mxu0 0.0
    %5601 = vmatpush.msra.mxu0 0.0
    %5602 = vmatpush.msra.mxu0 0.0
    %5603 = vmatpush.msra.mxu0 0.0
    %5604 = vmatpush.msra.mxu0 0.0
    %5605 = vmatpush.msra.mxu0 0.0
    %5606 = vmatpush.msra.mxu0 0.0
    %5607 = vmatpush.msra.mxu0 0.0
    %5608 = vmatpush.msra.mxu0 0.0
    %5609 = vmatpush.msra.mxu0 0.0
    %5610 = vmatpush.msra.mxu0 0.0
    %5611 = vmatpush.msra.mxu0 0.0
    %5612 = vmatpush.msra.mxu0 %v5522
    %5613 = vmatpush.msra.mxu0 %v5521
    %5614 = vmatmul.f32.gmra.mxu0 %v5524
    %v5615 = vpop.f32.mrf.mxu0
    %v5616 = vadd.f32 0.0, %v5615
    %5617 = vmatmul.f32.gmra.mxu0 %v5527
    %v5618 = vpop.f32.mrf.mxu0
    %v5619 = vadd.f32 0.0, %v5618
    %5620 = vmatmul.f32.gmra.mxu0 %v5530
    %v5621 = vpop.f32.mrf.mxu0
    %v5622 = vadd.f32 0.0, %v5621
    %5623 = vmatmul.f32.gmra.mxu0 %v5533
    %v5624 = vpop.f32.mrf.mxu0
    %v5625 = vadd.f32 0.0, %v5624
    %5626 = vmatmul.f32.gmra.mxu0 %v5536
    %v5627 = vpop.f32.mrf.mxu0
    %v5628 = vadd.f32 0.0, %v5627
    %5629 = vmatmul.f32.gmra.mxu0 %v5539
    %v5630 = vpop.f32.mrf.mxu0
    %v5631 = vadd.f32 0.0, %v5630
    %5632 = vmatmul.f32.gmra.mxu0 %v5542
    %v5633 = vpop.f32.mrf.mxu0
    %v5634 = vadd.f32 0.0, %v5633
    %5635 = vmatmul.f32.gmra.mxu0 %v5545
    %v5636 = vpop.f32.mrf.mxu0
    %v5637 = vadd.f32 0.0, %v5636
    %5638 = vmatmul.f32.gmra.mxu0 %v5548
    %v5639 = vpop.f32.mrf.mxu0
    %v5640 = vadd.f32 0.0, %v5639
    %5641 = vmatmul.f32.gmra.mxu0 %v5551
    %v5642 = vpop.f32.mrf.mxu0
    %v5643 = vadd.f32 0.0, %v5642
    %5644 = vmatmul.f32.gmra.mxu0 %v5554
    %v5645 = vpop.f32.mrf.mxu0
    %v5646 = vadd.f32 0.0, %v5645
    %5647 = vmatmul.f32.gmra.mxu0 %v5557
    %v5648 = vpop.f32.mrf.mxu0
    %v5649 = vadd.f32 0.0, %v5648
    %5650 = vmatmul.f32.gmra.mxu0 %v5560
    %v5651 = vpop.f32.mrf.mxu0
    %v5652 = vadd.f32 0.0, %v5651
    %5653 = vmatmul.f32.gmra.mxu0 %v5563
    %v5654 = vpop.f32.mrf.mxu0
    %v5655 = vadd.f32 0.0, %v5654
    %5656 = vmatmul.f32.gmra.mxu0 %v5566
    %v5657 = vpop.f32.mrf.mxu0
    %v5658 = vadd.f32 0.0, %v5657
    %5659 = vmatmul.f32.gmra.mxu0 %v5569
    %v5660 = vpop.f32.mrf.mxu0
    %v5661 = vadd.f32 0.0, %v5660
    %5662 = vmatmul.f32.gmra.mxu0 %v5572
    %v5663 = vpop.f32.mrf.mxu0
    %v5664 = vadd.f32 0.0, %v5663
    %5665 = vmatmul.f32.gmra.mxu0 %v5575
    %v5666 = vpop.f32.mrf.mxu0
    %v5667 = vadd.f32 0.0, %v5666
    %5668 = vmatmul.f32.gmra.mxu0 %v5578
    %v5669 = vpop.f32.mrf.mxu0
    %v5670 = vadd.f32 0.0, %v5669
    %5671 = vmatmul.f32.gmra.mxu0 %v5581
    %v5672 = vpop.f32.mrf.mxu0
    %v5673 = vadd.f32 0.0, %v5672
    %5674 = vmatmul.f32.gmra.mxu0 %v5584
    %v5675 = vpop.f32.mrf.mxu0
    %v5676 = vadd.f32 0.0, %v5675
    %5677 = vmatmul.f32.gmra.mxu0 %v5587
    %v5678 = vpop.f32.mrf.mxu0
    %v5679 = vadd.f32 0.0, %v5678
    %5680 = vmatmul.f32.gmra.mxu0 %v5590
    %v5681 = vpop.f32.mrf.mxu0
    %v5682 = vadd.f32 0.0, %v5681
    %5683 = vmatmul.f32.gmra.mxu0 %v5593
    %v5684 = vpop.f32.mrf.mxu0
    %v5685 = vadd.f32 0.0, %v5684
    %5686 = vmatmul.f32.gmra.mxu0 %v5596
    %v5687 = vpop.f32.mrf.mxu0
    %v5688 = vadd.f32 0.0, %v5687
    %5689 = vdwg.mxu0
    %v5690 = vadd.f32 %v5470, %v5616
    %v5691 = vadd.f32 %v5471, %v5619
    %v5692 = vadd.f32 %v5472, %v5622
    %v5693 = vadd.f32 %v5473, %v5625
    %v5694 = vadd.f32 %v5474, %v5628
    %v5695 = vadd.f32 %v5475, %v5631
    %v5696 = vadd.f32 %v5476, %v5634
    %v5697 = vadd.f32 %v5477, %v5637
    %v5698 = vadd.f32 %v5478, %v5640
    %v5699 = vadd.f32 %v5479, %v5643
    %v5700 = vadd.f32 %v5480, %v5646
    %v5701 = vadd.f32 %v5481, %v5649
    %v5702 = vadd.f32 %v5482, %v5652
    %v5703 = vadd.f32 %v5483, %v5655
    %v5704 = vadd.f32 %v5484, %v5658
    %v5705 = vadd.f32 %v5485, %v5661
    %v5706 = vadd.f32 %v5486, %v5664
    %v5707 = vadd.f32 %v5487, %v5667
    %v5708 = vadd.f32 %v5488, %v5670
    %v5709 = vadd.f32 %v5489, %v5673
    %v5710 = vadd.f32 %v5490, %v5676
    %v5711 = vadd.f32 %v5491, %v5679
    %v5712 = vadd.f32 %v5492, %v5682
    %v5713 = vadd.f32 %v5493, %v5685
    %v5714 = vadd.f32 %v5494, %v5688
    %v5715 = vld [vmem:[#allocation3 + $0x1b] sm:$0xff]
    %v5716 = vld [vmem:[#allocation3 + $0x23] sm:$0xff]
    %v5717 = vld [vmem:[#allocation3 + $0x2b] sm:$0xff]
    %v5718 = vld [vmem:[#allocation3 + $0x33] sm:$0xff]
    %v5719 = vld [vmem:[#allocation3 + $0x3b] sm:$0xff]
    %v5720 = vld [vmem:[#allocation3 + $0x43] sm:$0xff]
    %v5721 = vld [vmem:[#allocation3 + $0x4b] sm:$0xff]
    %v5722 = vld [vmem:[#allocation3 + $0x53] sm:$0xff]
    %v5723 = vld [vmem:[#allocation3 + $0x5b] sm:$0xff]
    %v5724 = vld [vmem:[#allocation3 + $0x63] sm:$0xff]
    %v5725 = vld [vmem:[#allocation3 + $0x6b] sm:$0xff]
    %v5726 = vld [vmem:[#allocation3 + $0x73] sm:$0xff]
    %v5727 = vld [vmem:[#allocation3 + $0x7b] sm:$0xff]
    %v5728 = vld [vmem:[#allocation3 + $0x83] sm:$0xff]
    %v5729 = vld [vmem:[#allocation3 + $0x8b] sm:$0xff]
    %v5730 = vld [vmem:[#allocation3 + $0x93] sm:$0xff]
    %v5731 = vld [vmem:[#allocation3 + $0x9b] sm:$0xff]
    %v5732 = vld [vmem:[#allocation3 + $0xa3] sm:$0xff]
    %v5733 = vld [vmem:[#allocation3 + $0xab] sm:$0xff]
    %v5734 = vld [vmem:[#allocation3 + $0xb3] sm:$0xff]
    %v5735 = vld [vmem:[#allocation3 + $0xbb] sm:$0xff]
    %v5736 = vld [vmem:[#allocation3 + $0xc3] sm:$0xff]
    %v5737 = vld [vmem:[#allocation3 + $0xcb] sm:$0xff]
    %v5738 = vld [vmem:[#allocation3 + $0xd3] sm:$0xff]
    %v5739 = vld [vmem:[#allocation3 + $0xdb] sm:$0xff]
    %s5740 = scalar_lea.vmem %s5, 128
    %v5741 = vld [vmem:[%s5740] sm:$0xff]
    %v5742 = vld [vmem:[%s5740 + $0x8] sm:$0xff]
    %v5744 = vsel %vm63, %v5715, 0
    %v5747 = vsel %vm63, %v5716, 0
    %v5750 = vsel %vm63, %v5717, 0
    %v5753 = vsel %vm63, %v5718, 0
    %v5756 = vsel %vm63, %v5719, 0
    %v5759 = vsel %vm63, %v5720, 0
    %v5762 = vsel %vm63, %v5721, 0
    %v5765 = vsel %vm63, %v5722, 0
    %v5768 = vsel %vm63, %v5723, 0
    %v5771 = vsel %vm63, %v5724, 0
    %v5774 = vsel %vm63, %v5725, 0
    %v5777 = vsel %vm63, %v5726, 0
    %v5780 = vsel %vm63, %v5727, 0
    %v5783 = vsel %vm63, %v5728, 0
    %v5786 = vsel %vm63, %v5729, 0
    %v5789 = vsel %vm63, %v5730, 0
    %v5792 = vsel %vm63, %v5731, 0
    %v5795 = vsel %vm63, %v5732, 0
    %v5798 = vsel %vm63, %v5733, 0
    %v5801 = vsel %vm63, %v5734, 0
    %v5804 = vsel %vm63, %v5735, 0
    %v5807 = vsel %vm63, %v5736, 0
    %v5810 = vsel %vm63, %v5737, 0
    %v5813 = vsel %vm63, %v5738, 0
    %v5816 = vsel %vm63, %v5739, 0
    %5818 = vmatpush.msra.mxu0 0.0
    %5819 = vmatpush.msra.mxu0 0.0
    %5820 = vmatpush.msra.mxu0 0.0
    %5821 = vmatpush.msra.mxu0 0.0
    %5822 = vmatpush.msra.mxu0 0.0
    %5823 = vmatpush.msra.mxu0 0.0
    %5824 = vmatpush.msra.mxu0 0.0
    %5825 = vmatpush.msra.mxu0 0.0
    %5826 = vmatpush.msra.mxu0 0.0
    %5827 = vmatpush.msra.mxu0 0.0
    %5828 = vmatpush.msra.mxu0 0.0
    %5829 = vmatpush.msra.mxu0 0.0
    %5830 = vmatpush.msra.mxu0 0.0
    %5831 = vmatpush.msra.mxu0 0.0
    %5832 = vmatpush.msra.mxu0 %v5742
    %5833 = vmatpush.msra.mxu0 %v5741
    %5834 = vmatmul.f32.gmra.mxu0 %v5744
    %v5835 = vpop.f32.mrf.mxu0
    %v5836 = vadd.f32 0.0, %v5835
    %5837 = vmatmul.f32.gmra.mxu0 %v5747
    %v5838 = vpop.f32.mrf.mxu0
    %v5839 = vadd.f32 0.0, %v5838
    %5840 = vmatmul.f32.gmra.mxu0 %v5750
    %v5841 = vpop.f32.mrf.mxu0
    %v5842 = vadd.f32 0.0, %v5841
    %5843 = vmatmul.f32.gmra.mxu0 %v5753
    %v5844 = vpop.f32.mrf.mxu0
    %v5845 = vadd.f32 0.0, %v5844
    %5846 = vmatmul.f32.gmra.mxu0 %v5756
    %v5847 = vpop.f32.mrf.mxu0
    %v5848 = vadd.f32 0.0, %v5847
    %5849 = vmatmul.f32.gmra.mxu0 %v5759
    %v5850 = vpop.f32.mrf.mxu0
    %v5851 = vadd.f32 0.0, %v5850
    %5852 = vmatmul.f32.gmra.mxu0 %v5762
    %v5853 = vpop.f32.mrf.mxu0
    %v5854 = vadd.f32 0.0, %v5853
    %5855 = vmatmul.f32.gmra.mxu0 %v5765
    %v5856 = vpop.f32.mrf.mxu0
    %v5857 = vadd.f32 0.0, %v5856
    %5858 = vmatmul.f32.gmra.mxu0 %v5768
    %v5859 = vpop.f32.mrf.mxu0
    %v5860 = vadd.f32 0.0, %v5859
    %5861 = vmatmul.f32.gmra.mxu0 %v5771
    %v5862 = vpop.f32.mrf.mxu0
    %v5863 = vadd.f32 0.0, %v5862
    %5864 = vmatmul.f32.gmra.mxu0 %v5774
    %v5865 = vpop.f32.mrf.mxu0
    %v5866 = vadd.f32 0.0, %v5865
    %5867 = vmatmul.f32.gmra.mxu0 %v5777
    %v5868 = vpop.f32.mrf.mxu0
    %v5869 = vadd.f32 0.0, %v5868
    %5870 = vmatmul.f32.gmra.mxu0 %v5780
    %v5871 = vpop.f32.mrf.mxu0
    %v5872 = vadd.f32 0.0, %v5871
    %5873 = vmatmul.f32.gmra.mxu0 %v5783
    %v5874 = vpop.f32.mrf.mxu0
    %v5875 = vadd.f32 0.0, %v5874
    %5876 = vmatmul.f32.gmra.mxu0 %v5786
    %v5877 = vpop.f32.mrf.mxu0
    %v5878 = vadd.f32 0.0, %v5877
    %5879 = vmatmul.f32.gmra.mxu0 %v5789
    %v5880 = vpop.f32.mrf.mxu0
    %v5881 = vadd.f32 0.0, %v5880
    %5882 = vmatmul.f32.gmra.mxu0 %v5792
    %v5883 = vpop.f32.mrf.mxu0
    %v5884 = vadd.f32 0.0, %v5883
    %5885 = vmatmul.f32.gmra.mxu0 %v5795
    %v5886 = vpop.f32.mrf.mxu0
    %v5887 = vadd.f32 0.0, %v5886
    %5888 = vmatmul.f32.gmra.mxu0 %v5798
    %v5889 = vpop.f32.mrf.mxu0
    %v5890 = vadd.f32 0.0, %v5889
    %5891 = vmatmul.f32.gmra.mxu0 %v5801
    %v5892 = vpop.f32.mrf.mxu0
    %v5893 = vadd.f32 0.0, %v5892
    %5894 = vmatmul.f32.gmra.mxu0 %v5804
    %v5895 = vpop.f32.mrf.mxu0
    %v5896 = vadd.f32 0.0, %v5895
    %5897 = vmatmul.f32.gmra.mxu0 %v5807
    %v5898 = vpop.f32.mrf.mxu0
    %v5899 = vadd.f32 0.0, %v5898
    %5900 = vmatmul.f32.gmra.mxu0 %v5810
    %v5901 = vpop.f32.mrf.mxu0
    %v5902 = vadd.f32 0.0, %v5901
    %5903 = vmatmul.f32.gmra.mxu0 %v5813
    %v5904 = vpop.f32.mrf.mxu0
    %v5905 = vadd.f32 0.0, %v5904
    %5906 = vmatmul.f32.gmra.mxu0 %v5816
    %v5907 = vpop.f32.mrf.mxu0
    %v5908 = vadd.f32 0.0, %v5907
    %5909 = vdwg.mxu0
    %v5910 = vadd.f32 %v5690, %v5836
    %v5911 = vadd.f32 %v5691, %v5839
    %v5912 = vadd.f32 %v5692, %v5842
    %v5913 = vadd.f32 %v5693, %v5845
    %v5914 = vadd.f32 %v5694, %v5848
    %v5915 = vadd.f32 %v5695, %v5851
    %v5916 = vadd.f32 %v5696, %v5854
    %v5917 = vadd.f32 %v5697, %v5857
    %v5918 = vadd.f32 %v5698, %v5860
    %v5919 = vadd.f32 %v5699, %v5863
    %v5920 = vadd.f32 %v5700, %v5866
    %v5921 = vadd.f32 %v5701, %v5869
    %v5922 = vadd.f32 %v5702, %v5872
    %v5923 = vadd.f32 %v5703, %v5875
    %v5924 = vadd.f32 %v5704, %v5878
    %v5925 = vadd.f32 %v5705, %v5881
    %v5926 = vadd.f32 %v5706, %v5884
    %v5927 = vadd.f32 %v5707, %v5887
    %v5928 = vadd.f32 %v5708, %v5890
    %v5929 = vadd.f32 %v5709, %v5893
    %v5930 = vadd.f32 %v5710, %v5896
    %v5931 = vadd.f32 %v5711, %v5899
    %v5932 = vadd.f32 %v5712, %v5902
    %v5933 = vadd.f32 %v5713, %v5905
    %v5934 = vadd.f32 %v5714, %v5908
    %v5935 = vld [vmem:[%s6] sm:$0x1]
    %v5937 = vperm.slane %v5935, 0
    %v5939 = vadd.f32 %v5910, %v5937
    %v5940 = vadd.f32 %v5911, %v5937
    %v5941 = vadd.f32 %v5912, %v5937
    %v5942 = vadd.f32 %v5913, %v5937
    %v5943 = vadd.f32 %v5914, %v5937
    %v5944 = vadd.f32 %v5915, %v5937
    %v5945 = vadd.f32 %v5916, %v5937
    %v5946 = vadd.f32 %v5917, %v5937
    %v5947 = vadd.f32 %v5918, %v5937
    %v5948 = vadd.f32 %v5919, %v5937
    %v5949 = vadd.f32 %v5920, %v5937
    %v5950 = vadd.f32 %v5921, %v5937
    %v5951 = vadd.f32 %v5922, %v5937
    %v5952 = vadd.f32 %v5923, %v5937
    %v5953 = vadd.f32 %v5924, %v5937
    %v5954 = vadd.f32 %v5925, %v5937
    %v5955 = vadd.f32 %v5926, %v5937
    %v5956 = vadd.f32 %v5927, %v5937
    %v5957 = vadd.f32 %v5928, %v5937
    %v5958 = vadd.f32 %v5929, %v5937
    %v5959 = vadd.f32 %v5930, %v5937
    %v5960 = vadd.f32 %v5931, %v5937
    %v5961 = vadd.f32 %v5932, %v5937
    %v5962 = vadd.f32 %v5933, %v5937
    %v5963 = vadd.f32 %v5934, %v5937
    %v5964 = vmax.f32 %v5939, 0.0
    %v5965 = vmax.f32 %v5940, 0.0
    %v5966 = vmax.f32 %v5941, 0.0
    %v5967 = vmax.f32 %v5942, 0.0
    %v5968 = vmax.f32 %v5943, 0.0
    %v5969 = vmax.f32 %v5944, 0.0
    %v5970 = vmax.f32 %v5945, 0.0
    %v5971 = vmax.f32 %v5946, 0.0
    %v5972 = vmax.f32 %v5947, 0.0
    %v5973 = vmax.f32 %v5948, 0.0
    %v5974 = vmax.f32 %v5949, 0.0
    %v5975 = vmax.f32 %v5950, 0.0
    %v5976 = vmax.f32 %v5951, 0.0
    %v5977 = vmax.f32 %v5952, 0.0
    %v5978 = vmax.f32 %v5953, 0.0
    %v5979 = vmax.f32 %v5954, 0.0
    %v5980 = vmax.f32 %v5955, 0.0
    %v5981 = vmax.f32 %v5956, 0.0
    %v5982 = vmax.f32 %v5957, 0.0
    %v5983 = vmax.f32 %v5958, 0.0
    %v5984 = vmax.f32 %v5959, 0.0
    %v5985 = vmax.f32 %v5960, 0.0
    %v5986 = vmax.f32 %v5961, 0.0
    %v5987 = vmax.f32 %v5962, 0.0
    %v5988 = vmax.f32 %v5963, 0.0
    %v5989 = vld [vmem:[%s9] sm:$0xff]
    %v5990 = vld [vmem:[%s9 + $0x8] sm:$0xff]
    %v5991 = vld [vmem:[%s9 + $0x10] sm:$0xff]
    %v5992 = vld [vmem:[%s9 + $0x18] sm:$0xff]
    %v5993 = vld [vmem:[%s9 + $0x20] sm:$0xff]
    %v5994 = vld [vmem:[%s9 + $0x28] sm:$0xff]
    %v5995 = vld [vmem:[%s9 + $0x30] sm:$0xff]
    %v5996 = vld [vmem:[%s9 + $0x38] sm:$0xff]
    %v5997 = vld [vmem:[%s9 + $0x40] sm:$0xff]
    %v5998 = vld [vmem:[%s9 + $0x48] sm:$0xff]
    %v5999 = vld [vmem:[%s9 + $0x50] sm:$0xff]
    %v6000 = vld [vmem:[%s9 + $0x58] sm:$0xff]
    %v6001 = vld [vmem:[%s9 + $0x60] sm:$0xff]
    %v6002 = vld [vmem:[%s9 + $0x68] sm:$0xff]
    %v6003 = vld [vmem:[%s9 + $0x70] sm:$0xff]
    %v6004 = vld [vmem:[%s9 + $0x78] sm:$0xff]
    %v6005 = vld [vmem:[%s9 + $0x80] sm:$0xff]
    %v6006 = vld [vmem:[%s9 + $0x88] sm:$0xff]
    %v6007 = vld [vmem:[%s9 + $0x90] sm:$0xff]
    %v6008 = vld [vmem:[%s9 + $0x98] sm:$0xff]
    %v6009 = vld [vmem:[%s9 + $0xa0] sm:$0xff]
    %v6010 = vld [vmem:[%s9 + $0xa8] sm:$0xff]
    %v6011 = vld [vmem:[%s9 + $0xb0] sm:$0xff]
    %v6012 = vld [vmem:[%s9 + $0xb8] sm:$0xff]
    %v6013 = vld [vmem:[%s9 + $0xc0] sm:$0xff]
    %vm6014 = vcmp.gt.f32.partialorder %v5989, 0.5
    %vm6015 = vcmp.gt.f32.partialorder %v5990, 0.5
    %vm6016 = vcmp.gt.f32.partialorder %v5991, 0.5
    %vm6017 = vcmp.gt.f32.partialorder %v5992, 0.5
    %vm6018 = vcmp.gt.f32.partialorder %v5993, 0.5
    %vm6019 = vcmp.gt.f32.partialorder %v5994, 0.5
    %vm6020 = vcmp.gt.f32.partialorder %v5995, 0.5
    %vm6021 = vcmp.gt.f32.partialorder %v5996, 0.5
    %vm6022 = vcmp.gt.f32.partialorder %v5997, 0.5
    %vm6023 = vcmp.gt.f32.partialorder %v5998, 0.5
    %vm6024 = vcmp.gt.f32.partialorder %v5999, 0.5
    %vm6025 = vcmp.gt.f32.partialorder %v6000, 0.5
    %vm6026 = vcmp.gt.f32.partialorder %v6001, 0.5
    %vm6027 = vcmp.gt.f32.partialorder %v6002, 0.5
    %vm6028 = vcmp.gt.f32.partialorder %v6003, 0.5
    %vm6029 = vcmp.gt.f32.partialorder %v6004, 0.5
    %vm6030 = vcmp.gt.f32.partialorder %v6005, 0.5
    %vm6031 = vcmp.gt.f32.partialorder %v6006, 0.5
    %vm6032 = vcmp.gt.f32.partialorder %v6007, 0.5
    %vm6033 = vcmp.gt.f32.partialorder %v6008, 0.5
    %vm6034 = vcmp.gt.f32.partialorder %v6009, 0.5
    %vm6035 = vcmp.gt.f32.partialorder %v6010, 0.5
    %vm6036 = vcmp.gt.f32.partialorder %v6011, 0.5
    %vm6037 = vcmp.gt.f32.partialorder %v6012, 0.5
    %vm6038 = vcmp.gt.f32.partialorder %v6013, 0.5
    %v6039 = vsel %vm6014, 1, 0
    %v6040 = vsel %vm6015, 1, 0
    %v6041 = vsel %vm6016, 1, 0
    %v6042 = vsel %vm6017, 1, 0
    %v6043 = vsel %vm6018, 1, 0
    %v6044 = vsel %vm6019, 1, 0
    %v6045 = vsel %vm6020, 1, 0
    %v6046 = vsel %vm6021, 1, 0
    %v6047 = vsel %vm6022, 1, 0
    %v6048 = vsel %vm6023, 1, 0
    %v6049 = vsel %vm6024, 1, 0
    %v6050 = vsel %vm6025, 1, 0
    %v6051 = vsel %vm6026, 1, 0
    %v6052 = vsel %vm6027, 1, 0
    %v6053 = vsel %vm6028, 1, 0
    %v6054 = vsel %vm6029, 1, 0
    %v6055 = vsel %vm6030, 1, 0
    %v6056 = vsel %vm6031, 1, 0
    %v6057 = vsel %vm6032, 1, 0
    %v6058 = vsel %vm6033, 1, 0
    %v6059 = vsel %vm6034, 1, 0
    %v6060 = vsel %vm6035, 1, 0
    %v6061 = vsel %vm6036, 1, 0
    %v6062 = vsel %vm6037, 1, 0
    %v6063 = vsel %vm6038, 1, 0
    %6064 = vset.pattern.permute.xlu0 0
    %6065 = vperm.xlu0 %6064, %v6039
    %v6066 = vpop.permute.xlu0 %6065
    %6067 = vset.pattern.permute.xlu0 0
    %6068 = vperm.xlu0 %6067, %v6040
    %v6069 = vpop.permute.xlu0 %6068
    %6070 = vset.pattern.permute.xlu0 0
    %6071 = vperm.xlu0 %6070, %v6041
    %v6072 = vpop.permute.xlu0 %6071
    %6073 = vset.pattern.permute.xlu0 0
    %6074 = vperm.xlu0 %6073, %v6042
    %v6075 = vpop.permute.xlu0 %6074
    %6076 = vset.pattern.permute.xlu0 0
    %6077 = vperm.xlu0 %6076, %v6043
    %v6078 = vpop.permute.xlu0 %6077
    %6079 = vset.pattern.permute.xlu0 0
    %6080 = vperm.xlu0 %6079, %v6044
    %v6081 = vpop.permute.xlu0 %6080
    %6082 = vset.pattern.permute.xlu0 0
    %6083 = vperm.xlu0 %6082, %v6045
    %v6084 = vpop.permute.xlu0 %6083
    %6085 = vset.pattern.permute.xlu0 0
    %6086 = vperm.xlu0 %6085, %v6046
    %v6087 = vpop.permute.xlu0 %6086
    %6088 = vset.pattern.permute.xlu0 0
    %6089 = vperm.xlu0 %6088, %v6047
    %v6090 = vpop.permute.xlu0 %6089
    %6091 = vset.pattern.permute.xlu0 0
    %6092 = vperm.xlu0 %6091, %v6048
    %v6093 = vpop.permute.xlu0 %6092
    %6094 = vset.pattern.permute.xlu0 0
    %6095 = vperm.xlu0 %6094, %v6049
    %v6096 = vpop.permute.xlu0 %6095
    %6097 = vset.pattern.permute.xlu0 0
    %6098 = vperm.xlu0 %6097, %v6050
    %v6099 = vpop.permute.xlu0 %6098
    %6100 = vset.pattern.permute.xlu0 0
    %6101 = vperm.xlu0 %6100, %v6051
    %v6102 = vpop.permute.xlu0 %6101
    %6103 = vset.pattern.permute.xlu0 0
    %6104 = vperm.xlu0 %6103, %v6052
    %v6105 = vpop.permute.xlu0 %6104
    %6106 = vset.pattern.permute.xlu0 0
    %6107 = vperm.xlu0 %6106, %v6053
    %v6108 = vpop.permute.xlu0 %6107
    %6109 = vset.pattern.permute.xlu0 0
    %6110 = vperm.xlu0 %6109, %v6054
    %v6111 = vpop.permute.xlu0 %6110
    %6112 = vset.pattern.permute.xlu0 0
    %6113 = vperm.xlu0 %6112, %v6055
    %v6114 = vpop.permute.xlu0 %6113
    %6115 = vset.pattern.permute.xlu0 0
    %6116 = vperm.xlu0 %6115, %v6056
    %v6117 = vpop.permute.xlu0 %6116
    %6118 = vset.pattern.permute.xlu0 0
    %6119 = vperm.xlu0 %6118, %v6057
    %v6120 = vpop.permute.xlu0 %6119
    %6121 = vset.pattern.permute.xlu0 0
    %6122 = vperm.xlu0 %6121, %v6058
    %v6123 = vpop.permute.xlu0 %6122
    %6124 = vset.pattern.permute.xlu0 0
    %6125 = vperm.xlu0 %6124, %v6059
    %v6126 = vpop.permute.xlu0 %6125
    %6127 = vset.pattern.permute.xlu0 0
    %6128 = vperm.xlu0 %6127, %v6060
    %v6129 = vpop.permute.xlu0 %6128
    %6130 = vset.pattern.permute.xlu0 0
    %6131 = vperm.xlu0 %6130, %v6061
    %v6132 = vpop.permute.xlu0 %6131
    %6133 = vset.pattern.permute.xlu0 0
    %6134 = vperm.xlu0 %6133, %v6062
    %v6135 = vpop.permute.xlu0 %6134
    %6136 = vset.pattern.permute.xlu0 0
    %6137 = vperm.xlu0 %6136, %v6063
    %v6138 = vpop.permute.xlu0 %6137
    %vm6139 = vcmp.eq.s32.totalorder %v6066, 1
    %vm6140 = vcmp.eq.s32.totalorder %v6069, 1
    %vm6141 = vcmp.eq.s32.totalorder %v6072, 1
    %vm6142 = vcmp.eq.s32.totalorder %v6075, 1
    %vm6143 = vcmp.eq.s32.totalorder %v6078, 1
    %vm6144 = vcmp.eq.s32.totalorder %v6081, 1
    %vm6145 = vcmp.eq.s32.totalorder %v6084, 1
    %vm6146 = vcmp.eq.s32.totalorder %v6087, 1
    %vm6147 = vcmp.eq.s32.totalorder %v6090, 1
    %vm6148 = vcmp.eq.s32.totalorder %v6093, 1
    %vm6149 = vcmp.eq.s32.totalorder %v6096, 1
    %vm6150 = vcmp.eq.s32.totalorder %v6099, 1
    %vm6151 = vcmp.eq.s32.totalorder %v6102, 1
    %vm6152 = vcmp.eq.s32.totalorder %v6105, 1
    %vm6153 = vcmp.eq.s32.totalorder %v6108, 1
    %vm6154 = vcmp.eq.s32.totalorder %v6111, 1
    %vm6155 = vcmp.eq.s32.totalorder %v6114, 1
    %vm6156 = vcmp.eq.s32.totalorder %v6117, 1
    %vm6157 = vcmp.eq.s32.totalorder %v6120, 1
    %vm6158 = vcmp.eq.s32.totalorder %v6123, 1
    %vm6159 = vcmp.eq.s32.totalorder %v6126, 1
    %vm6160 = vcmp.eq.s32.totalorder %v6129, 1
    %vm6161 = vcmp.eq.s32.totalorder %v6132, 1
    %vm6162 = vcmp.eq.s32.totalorder %v6135, 1
    %vm6163 = vcmp.eq.s32.totalorder %v6138, 1
    %v6164 = vsel %vm6139, %v5964, 0.0
    %v6165 = vsel %vm6140, %v5965, 0.0
    %v6166 = vsel %vm6141, %v5966, 0.0
    %v6167 = vsel %vm6142, %v5967, 0.0
    %v6168 = vsel %vm6143, %v5968, 0.0
    %v6169 = vsel %vm6144, %v5969, 0.0
    %v6170 = vsel %vm6145, %v5970, 0.0
    %v6171 = vsel %vm6146, %v5971, 0.0
    %v6172 = vsel %vm6147, %v5972, 0.0
    %v6173 = vsel %vm6148, %v5973, 0.0
    %v6174 = vsel %vm6149, %v5974, 0.0
    %v6175 = vsel %vm6150, %v5975, 0.0
    %v6176 = vsel %vm6151, %v5976, 0.0
    %v6177 = vsel %vm6152, %v5977, 0.0
    %v6178 = vsel %vm6153, %v5978, 0.0
    %v6179 = vsel %vm6154, %v5979, 0.0
    %v6180 = vsel %vm6155, %v5980, 0.0
    %v6181 = vsel %vm6156, %v5981, 0.0
    %v6182 = vsel %vm6157, %v5982, 0.0
    %v6183 = vsel %vm6158, %v5983, 0.0
    %v6184 = vsel %vm6159, %v5984, 0.0
    %v6185 = vsel %vm6160, %v5985, 0.0
    %v6186 = vsel %vm6161, %v5986, 0.0
    %v6187 = vsel %vm6162, %v5987, 0.0
    %v6188 = vsel %vm6163, %v5988, 0.0
    %6189 = vst.msk [vmem:[#allocation4 + $0x10] sm:$0xff] %vm63, %v6164
    %6190 = vst.msk [vmem:[#allocation4 + $0x18] sm:$0xff] %vm63, %v6165
    %6191 = vst.msk [vmem:[#allocation4 + $0x20] sm:$0xff] %vm63, %v6166
    %6192 = vst.msk [vmem:[#allocation4 + $0x28] sm:$0xff] %vm63, %v6167
    %6193 = vst.msk [vmem:[#allocation4 + $0x30] sm:$0xff] %vm63, %v6168
    %6194 = vst.msk [vmem:[#allocation4 + $0x38] sm:$0xff] %vm63, %v6169
    %6195 = vst.msk [vmem:[#allocation4 + $0x40] sm:$0xff] %vm63, %v6170
    %6196 = vst.msk [vmem:[#allocation4 + $0x48] sm:$0xff] %vm63, %v6171
    %6197 = vst.msk [vmem:[#allocation4 + $0x50] sm:$0xff] %vm63, %v6172
    %6198 = vst.msk [vmem:[#allocation4 + $0x58] sm:$0xff] %vm63, %v6173
    %6199 = vst.msk [vmem:[#allocation4 + $0x60] sm:$0xff] %vm63, %v6174
    %6200 = vst.msk [vmem:[#allocation4 + $0x68] sm:$0xff] %vm63, %v6175
    %6201 = vst.msk [vmem:[#allocation4 + $0x70] sm:$0xff] %vm63, %v6176
    %6202 = vst.msk [vmem:[#allocation4 + $0x78] sm:$0xff] %vm63, %v6177
    %6203 = vst.msk [vmem:[#allocation4 + $0x80] sm:$0xff] %vm63, %v6178
    %6204 = vst.msk [vmem:[#allocation4 + $0x88] sm:$0xff] %vm63, %v6179
    %6205 = vst.msk [vmem:[#allocation4 + $0x90] sm:$0xff] %vm63, %v6180
    %6206 = vst.msk [vmem:[#allocation4 + $0x98] sm:$0xff] %vm63, %v6181
    %6207 = vst.msk [vmem:[#allocation4 + $0xa0] sm:$0xff] %vm63, %v6182
    %6208 = vst.msk [vmem:[#allocation4 + $0xa8] sm:$0xff] %vm63, %v6183
    %6209 = vst.msk [vmem:[#allocation4 + $0xb0] sm:$0xff] %vm63, %v6184
    %6210 = vst.msk [vmem:[#allocation4 + $0xb8] sm:$0xff] %vm63, %v6185
    %6211 = vst.msk [vmem:[#allocation4 + $0xc0] sm:$0xff] %vm63, %v6186
    %6212 = vst.msk [vmem:[#allocation4 + $0xc8] sm:$0xff] %vm63, %v6187
    %6213 = vst.msk [vmem:[#allocation4 + $0xd0] sm:$0xff] %vm63, %v6188
    %v6214 = vld [vmem:[#allocation4 + $0x5] sm:$0xff]
    %v6215 = vld [vmem:[#allocation4 + $0xd] sm:$0xff]
    %v6216 = vld [vmem:[#allocation4 + $0x15] sm:$0xff]
    %v6217 = vld [vmem:[#allocation4 + $0x1d] sm:$0xff]
    %v6218 = vld [vmem:[#allocation4 + $0x25] sm:$0xff]
    %v6219 = vld [vmem:[#allocation4 + $0x2d] sm:$0xff]
    %v6220 = vld [vmem:[#allocation4 + $0x35] sm:$0xff]
    %v6221 = vld [vmem:[#allocation4 + $0x3d] sm:$0xff]
    %v6222 = vld [vmem:[#allocation4 + $0x45] sm:$0xff]
    %v6223 = vld [vmem:[#allocation4 + $0x4d] sm:$0xff]
    %v6224 = vld [vmem:[#allocation4 + $0x55] sm:$0xff]
    %v6225 = vld [vmem:[#allocation4 + $0x5d] sm:$0xff]
    %v6226 = vld [vmem:[#allocation4 + $0x65] sm:$0xff]
    %v6227 = vld [vmem:[#allocation4 + $0x6d] sm:$0xff]
    %v6228 = vld [vmem:[#allocation4 + $0x75] sm:$0xff]
    %v6229 = vld [vmem:[#allocation4 + $0x7d] sm:$0xff]
    %v6230 = vld [vmem:[#allocation4 + $0x85] sm:$0xff]
    %v6231 = vld [vmem:[#allocation4 + $0x8d] sm:$0xff]
    %v6232 = vld [vmem:[#allocation4 + $0x95] sm:$0xff]
    %v6233 = vld [vmem:[#allocation4 + $0x9d] sm:$0xff]
    %v6234 = vld [vmem:[#allocation4 + $0xa5] sm:$0xff]
    %v6235 = vld [vmem:[#allocation4 + $0xad] sm:$0xff]
    %v6236 = vld [vmem:[#allocation4 + $0xb5] sm:$0xff]
    %v6237 = vld [vmem:[#allocation4 + $0xbd] sm:$0xff]
    %v6238 = vld [vmem:[#allocation4 + $0xc5] sm:$0xff]
    %v6239 = vld [vmem:[%s7] sm:$0xff]
    %v6240 = vld [vmem:[%s7 + $0x8] sm:$0xff]
    %v6241 = vld [vmem:[#allocation4 + $0x6] sm:$0xff]
    %v6242 = vld [vmem:[#allocation4 + $0xe] sm:$0xff]
    %v6243 = vld [vmem:[#allocation4 + $0x16] sm:$0xff]
    %v6244 = vld [vmem:[#allocation4 + $0x1e] sm:$0xff]
    %v6245 = vld [vmem:[#allocation4 + $0x26] sm:$0xff]
    %v6246 = vld [vmem:[#allocation4 + $0x2e] sm:$0xff]
    %v6247 = vld [vmem:[#allocation4 + $0x36] sm:$0xff]
    %v6248 = vld [vmem:[#allocation4 + $0x3e] sm:$0xff]
    %v6249 = vld [vmem:[#allocation4 + $0x46] sm:$0xff]
    %v6250 = vld [vmem:[#allocation4 + $0x4e] sm:$0xff]
    %v6251 = vld [vmem:[#allocation4 + $0x56] sm:$0xff]
    %v6252 = vld [vmem:[#allocation4 + $0x5e] sm:$0xff]
    %v6253 = vld [vmem:[#allocation4 + $0x66] sm:$0xff]
    %v6254 = vld [vmem:[#allocation4 + $0x6e] sm:$0xff]
    %v6255 = vld [vmem:[#allocation4 + $0x76] sm:$0xff]
    %v6256 = vld [vmem:[#allocation4 + $0x7e] sm:$0xff]
    %v6257 = vld [vmem:[#allocation4 + $0x86] sm:$0xff]
    %v6258 = vld [vmem:[#allocation4 + $0x8e] sm:$0xff]
    %v6259 = vld [vmem:[#allocation4 + $0x96] sm:$0xff]
    %v6260 = vld [vmem:[#allocation4 + $0x9e] sm:$0xff]
    %v6261 = vld [vmem:[#allocation4 + $0xa6] sm:$0xff]
    %v6262 = vld [vmem:[#allocation4 + $0xae] sm:$0xff]
    %v6263 = vld [vmem:[#allocation4 + $0xb6] sm:$0xff]
    %v6264 = vld [vmem:[#allocation4 + $0xbe] sm:$0xff]
    %v6265 = vld [vmem:[#allocation4 + $0xc6] sm:$0xff]
    %s6266 = scalar_lea.vmem %s7, 16
    %v6267 = vld [vmem:[%s6266] sm:$0xff]
    %v6268 = vld [vmem:[%s6266 + $0x8] sm:$0xff]
    %v6270 = vsel %vm63, %v6241, 0
    %v6273 = vsel %vm63, %v6242, 0
    %v6276 = vsel %vm63, %v6243, 0
    %v6279 = vsel %vm63, %v6244, 0
    %v6282 = vsel %vm63, %v6245, 0
    %v6285 = vsel %vm63, %v6246, 0
    %v6288 = vsel %vm63, %v6247, 0
    %v6291 = vsel %vm63, %v6248, 0
    %v6294 = vsel %vm63, %v6249, 0
    %v6297 = vsel %vm63, %v6250, 0
    %v6300 = vsel %vm63, %v6251, 0
    %v6303 = vsel %vm63, %v6252, 0
    %v6306 = vsel %vm63, %v6253, 0
    %v6309 = vsel %vm63, %v6254, 0
    %v6312 = vsel %vm63, %v6255, 0
    %v6315 = vsel %vm63, %v6256, 0
    %v6318 = vsel %vm63, %v6257, 0
    %v6321 = vsel %vm63, %v6258, 0
    %v6324 = vsel %vm63, %v6259, 0
    %v6327 = vsel %vm63, %v6260, 0
    %v6330 = vsel %vm63, %v6261, 0
    %v6333 = vsel %vm63, %v6262, 0
    %v6336 = vsel %vm63, %v6263, 0
    %v6339 = vsel %vm63, %v6264, 0
    %v6342 = vsel %vm63, %v6265, 0
    %6344 = vmatpush.msra.mxu0 0.0
    %6345 = vmatpush.msra.mxu0 0.0
    %6346 = vmatpush.msra.mxu0 0.0
    %6347 = vmatpush.msra.mxu0 0.0
    %6348 = vmatpush.msra.mxu0 0.0
    %6349 = vmatpush.msra.mxu0 0.0
    %6350 = vmatpush.msra.mxu0 0.0
    %6351 = vmatpush.msra.mxu0 0.0
    %6352 = vmatpush.msra.mxu0 0.0
    %6353 = vmatpush.msra.mxu0 0.0
    %6354 = vmatpush.msra.mxu0 0.0
    %6355 = vmatpush.msra.mxu0 0.0
    %6356 = vmatpush.msra.mxu0 0.0
    %6357 = vmatpush.msra.mxu0 0.0
    %6358 = vmatpush.msra.mxu0 %v6268
    %6359 = vmatpush.msra.mxu0 %v6267
    %6360 = vmatmul.f32.gmra.mxu0 %v6270
    %v6361 = vpop.f32.mrf.mxu0
    %v6362 = vadd.f32 0.0, %v6361
    %6363 = vmatmul.f32.gmra.mxu0 %v6273
    %v6364 = vpop.f32.mrf.mxu0
    %v6365 = vadd.f32 0.0, %v6364
    %6366 = vmatmul.f32.gmra.mxu0 %v6276
    %v6367 = vpop.f32.mrf.mxu0
    %v6368 = vadd.f32 0.0, %v6367
    %6369 = vmatmul.f32.gmra.mxu0 %v6279
    %v6370 = vpop.f32.mrf.mxu0
    %v6371 = vadd.f32 0.0, %v6370
    %6372 = vmatmul.f32.gmra.mxu0 %v6282
    %v6373 = vpop.f32.mrf.mxu0
    %v6374 = vadd.f32 0.0, %v6373
    %6375 = vmatmul.f32.gmra.mxu0 %v6285
    %v6376 = vpop.f32.mrf.mxu0
    %v6377 = vadd.f32 0.0, %v6376
    %6378 = vmatmul.f32.gmra.mxu0 %v6288
    %v6379 = vpop.f32.mrf.mxu0
    %v6380 = vadd.f32 0.0, %v6379
    %6381 = vmatmul.f32.gmra.mxu0 %v6291
    %v6382 = vpop.f32.mrf.mxu0
    %v6383 = vadd.f32 0.0, %v6382
    %6384 = vmatmul.f32.gmra.mxu0 %v6294
    %v6385 = vpop.f32.mrf.mxu0
    %v6386 = vadd.f32 0.0, %v6385
    %6387 = vmatmul.f32.gmra.mxu0 %v6297
    %v6388 = vpop.f32.mrf.mxu0
    %v6389 = vadd.f32 0.0, %v6388
    %6390 = vmatmul.f32.gmra.mxu0 %v6300
    %v6391 = vpop.f32.mrf.mxu0
    %v6392 = vadd.f32 0.0, %v6391
    %6393 = vmatmul.f32.gmra.mxu0 %v6303
    %v6394 = vpop.f32.mrf.mxu0
    %v6395 = vadd.f32 0.0, %v6394
    %6396 = vmatmul.f32.gmra.mxu0 %v6306
    %v6397 = vpop.f32.mrf.mxu0
    %v6398 = vadd.f32 0.0, %v6397
    %6399 = vmatmul.f32.gmra.mxu0 %v6309
    %v6400 = vpop.f32.mrf.mxu0
    %v6401 = vadd.f32 0.0, %v6400
    %6402 = vmatmul.f32.gmra.mxu0 %v6312
    %v6403 = vpop.f32.mrf.mxu0
    %v6404 = vadd.f32 0.0, %v6403
    %6405 = vmatmul.f32.gmra.mxu0 %v6315
    %v6406 = vpop.f32.mrf.mxu0
    %v6407 = vadd.f32 0.0, %v6406
    %6408 = vmatmul.f32.gmra.mxu0 %v6318
    %v6409 = vpop.f32.mrf.mxu0
    %v6410 = vadd.f32 0.0, %v6409
    %6411 = vmatmul.f32.gmra.mxu0 %v6321
    %v6412 = vpop.f32.mrf.mxu0
    %v6413 = vadd.f32 0.0, %v6412
    %6414 = vmatmul.f32.gmra.mxu0 %v6324
    %v6415 = vpop.f32.mrf.mxu0
    %v6416 = vadd.f32 0.0, %v6415
    %6417 = vmatmul.f32.gmra.mxu0 %v6327
    %v6418 = vpop.f32.mrf.mxu0
    %v6419 = vadd.f32 0.0, %v6418
    %6420 = vmatmul.f32.gmra.mxu0 %v6330
    %v6421 = vpop.f32.mrf.mxu0
    %v6422 = vadd.f32 0.0, %v6421
    %6423 = vmatmul.f32.gmra.mxu0 %v6333
    %v6424 = vpop.f32.mrf.mxu0
    %v6425 = vadd.f32 0.0, %v6424
    %6426 = vmatmul.f32.gmra.mxu0 %v6336
    %v6427 = vpop.f32.mrf.mxu0
    %v6428 = vadd.f32 0.0, %v6427
    %6429 = vmatmul.f32.gmra.mxu0 %v6339
    %v6430 = vpop.f32.mrf.mxu0
    %v6431 = vadd.f32 0.0, %v6430
    %6432 = vmatmul.f32.gmra.mxu0 %v6342
    %v6433 = vpop.f32.mrf.mxu0
    %v6434 = vadd.f32 0.0, %v6433
    %6435 = vdwg.mxu0
    %v6437 = vsel %vm63, %v6214, 0
    %v6440 = vsel %vm63, %v6215, 0
    %v6443 = vsel %vm63, %v6216, 0
    %v6446 = vsel %vm63, %v6217, 0
    %v6449 = vsel %vm63, %v6218, 0
    %v6452 = vsel %vm63, %v6219, 0
    %v6455 = vsel %vm63, %v6220, 0
    %v6458 = vsel %vm63, %v6221, 0
    %v6461 = vsel %vm63, %v6222, 0
    %v6464 = vsel %vm63, %v6223, 0
    %v6467 = vsel %vm63, %v6224, 0
    %v6470 = vsel %vm63, %v6225, 0
    %v6473 = vsel %vm63, %v6226, 0
    %v6476 = vsel %vm63, %v6227, 0
    %v6479 = vsel %vm63, %v6228, 0
    %v6482 = vsel %vm63, %v6229, 0
    %v6485 = vsel %vm63, %v6230, 0
    %v6488 = vsel %vm63, %v6231, 0
    %v6491 = vsel %vm63, %v6232, 0
    %v6494 = vsel %vm63, %v6233, 0
    %v6497 = vsel %vm63, %v6234, 0
    %v6500 = vsel %vm63, %v6235, 0
    %v6503 = vsel %vm63, %v6236, 0
    %v6506 = vsel %vm63, %v6237, 0
    %v6509 = vsel %vm63, %v6238, 0
    %6511 = vmatpush.msra.mxu0 0.0
    %6512 = vmatpush.msra.mxu0 0.0
    %6513 = vmatpush.msra.mxu0 0.0
    %6514 = vmatpush.msra.mxu0 0.0
    %6515 = vmatpush.msra.mxu0 0.0
    %6516 = vmatpush.msra.mxu0 0.0
    %6517 = vmatpush.msra.mxu0 0.0
    %6518 = vmatpush.msra.mxu0 0.0
    %6519 = vmatpush.msra.mxu0 0.0
    %6520 = vmatpush.msra.mxu0 0.0
    %6521 = vmatpush.msra.mxu0 0.0
    %6522 = vmatpush.msra.mxu0 0.0
    %6523 = vmatpush.msra.mxu0 0.0
    %6524 = vmatpush.msra.mxu0 0.0
    %6525 = vmatpush.msra.mxu0 %v6240
    %6526 = vmatpush.msra.mxu0 %v6239
    %6527 = vmatmul.f32.gmra.mxu0 %v6437
    %v6528 = vpop.f32.mrf.mxu0
    %v6529 = vadd.f32 %v6362, %v6528
    %6530 = vmatmul.f32.gmra.mxu0 %v6440
    %v6531 = vpop.f32.mrf.mxu0
    %v6532 = vadd.f32 %v6365, %v6531
    %6533 = vmatmul.f32.gmra.mxu0 %v6443
    %v6534 = vpop.f32.mrf.mxu0
    %v6535 = vadd.f32 %v6368, %v6534
    %6536 = vmatmul.f32.gmra.mxu0 %v6446
    %v6537 = vpop.f32.mrf.mxu0
    %v6538 = vadd.f32 %v6371, %v6537
    %6539 = vmatmul.f32.gmra.mxu0 %v6449
    %v6540 = vpop.f32.mrf.mxu0
    %v6541 = vadd.f32 %v6374, %v6540
    %6542 = vmatmul.f32.gmra.mxu0 %v6452
    %v6543 = vpop.f32.mrf.mxu0
    %v6544 = vadd.f32 %v6377, %v6543
    %6545 = vmatmul.f32.gmra.mxu0 %v6455
    %v6546 = vpop.f32.mrf.mxu0
    %v6547 = vadd.f32 %v6380, %v6546
    %6548 = vmatmul.f32.gmra.mxu0 %v6458
    %v6549 = vpop.f32.mrf.mxu0
    %v6550 = vadd.f32 %v6383, %v6549
    %6551 = vmatmul.f32.gmra.mxu0 %v6461
    %v6552 = vpop.f32.mrf.mxu0
    %v6553 = vadd.f32 %v6386, %v6552
    %6554 = vmatmul.f32.gmra.mxu0 %v6464
    %v6555 = vpop.f32.mrf.mxu0
    %v6556 = vadd.f32 %v6389, %v6555
    %6557 = vmatmul.f32.gmra.mxu0 %v6467
    %v6558 = vpop.f32.mrf.mxu0
    %v6559 = vadd.f32 %v6392, %v6558
    %6560 = vmatmul.f32.gmra.mxu0 %v6470
    %v6561 = vpop.f32.mrf.mxu0
    %v6562 = vadd.f32 %v6395, %v6561
    %6563 = vmatmul.f32.gmra.mxu0 %v6473
    %v6564 = vpop.f32.mrf.mxu0
    %v6565 = vadd.f32 %v6398, %v6564
    %6566 = vmatmul.f32.gmra.mxu0 %v6476
    %v6567 = vpop.f32.mrf.mxu0
    %v6568 = vadd.f32 %v6401, %v6567
    %6569 = vmatmul.f32.gmra.mxu0 %v6479
    %v6570 = vpop.f32.mrf.mxu0
    %v6571 = vadd.f32 %v6404, %v6570
    %6572 = vmatmul.f32.gmra.mxu0 %v6482
    %v6573 = vpop.f32.mrf.mxu0
    %v6574 = vadd.f32 %v6407, %v6573
    %6575 = vmatmul.f32.gmra.mxu0 %v6485
    %v6576 = vpop.f32.mrf.mxu0
    %v6577 = vadd.f32 %v6410, %v6576
    %6578 = vmatmul.f32.gmra.mxu0 %v6488
    %v6579 = vpop.f32.mrf.mxu0
    %v6580 = vadd.f32 %v6413, %v6579
    %6581 = vmatmul.f32.gmra.mxu0 %v6491
    %v6582 = vpop.f32.mrf.mxu0
    %v6583 = vadd.f32 %v6416, %v6582
    %6584 = vmatmul.f32.gmra.mxu0 %v6494
    %v6585 = vpop.f32.mrf.mxu0
    %v6586 = vadd.f32 %v6419, %v6585
    %6587 = vmatmul.f32.gmra.mxu0 %v6497
    %v6588 = vpop.f32.mrf.mxu0
    %v6589 = vadd.f32 %v6422, %v6588
    %6590 = vmatmul.f32.gmra.mxu0 %v6500
    %v6591 = vpop.f32.mrf.mxu0
    %v6592 = vadd.f32 %v6425, %v6591
    %6593 = vmatmul.f32.gmra.mxu0 %v6503
    %v6594 = vpop.f32.mrf.mxu0
    %v6595 = vadd.f32 %v6428, %v6594
    %6596 = vmatmul.f32.gmra.mxu0 %v6506
    %v6597 = vpop.f32.mrf.mxu0
    %v6598 = vadd.f32 %v6431, %v6597
    %6599 = vmatmul.f32.gmra.mxu0 %v6509
    %v6600 = vpop.f32.mrf.mxu0
    %v6601 = vadd.f32 %v6434, %v6600
    %6602 = vdwg.mxu0
    %v6603 = vld [vmem:[#allocation4 + $0x7] sm:$0xff]
    %v6604 = vld [vmem:[#allocation4 + $0xf] sm:$0xff]
    %v6605 = vld [vmem:[#allocation4 + $0x17] sm:$0xff]
    %v6606 = vld [vmem:[#allocation4 + $0x1f] sm:$0xff]
    %v6607 = vld [vmem:[#allocation4 + $0x27] sm:$0xff]
    %v6608 = vld [vmem:[#allocation4 + $0x2f] sm:$0xff]
    %v6609 = vld [vmem:[#allocation4 + $0x37] sm:$0xff]
    %v6610 = vld [vmem:[#allocation4 + $0x3f] sm:$0xff]
    %v6611 = vld [vmem:[#allocation4 + $0x47] sm:$0xff]
    %v6612 = vld [vmem:[#allocation4 + $0x4f] sm:$0xff]
    %v6613 = vld [vmem:[#allocation4 + $0x57] sm:$0xff]
    %v6614 = vld [vmem:[#allocation4 + $0x5f] sm:$0xff]
    %v6615 = vld [vmem:[#allocation4 + $0x67] sm:$0xff]
    %v6616 = vld [vmem:[#allocation4 + $0x6f] sm:$0xff]
    %v6617 = vld [vmem:[#allocation4 + $0x77] sm:$0xff]
    %v6618 = vld [vmem:[#allocation4 + $0x7f] sm:$0xff]
    %v6619 = vld [vmem:[#allocation4 + $0x87] sm:$0xff]
    %v6620 = vld [vmem:[#allocation4 + $0x8f] sm:$0xff]
    %v6621 = vld [vmem:[#allocation4 + $0x97] sm:$0xff]
    %v6622 = vld [vmem:[#allocation4 + $0x9f] sm:$0xff]
    %v6623 = vld [vmem:[#allocation4 + $0xa7] sm:$0xff]
    %v6624 = vld [vmem:[#allocation4 + $0xaf] sm:$0xff]
    %v6625 = vld [vmem:[#allocation4 + $0xb7] sm:$0xff]
    %v6626 = vld [vmem:[#allocation4 + $0xbf] sm:$0xff]
    %v6627 = vld [vmem:[#allocation4 + $0xc7] sm:$0xff]
    %s6628 = scalar_lea.vmem %s7, 32
    %v6629 = vld [vmem:[%s6628] sm:$0xff]
    %v6630 = vld [vmem:[%s6628 + $0x8] sm:$0xff]
    %v6632 = vsel %vm63, %v6603, 0
    %v6635 = vsel %vm63, %v6604, 0
    %v6638 = vsel %vm63, %v6605, 0
    %v6641 = vsel %vm63, %v6606, 0
    %v6644 = vsel %vm63, %v6607, 0
    %v6647 = vsel %vm63, %v6608, 0
    %v6650 = vsel %vm63, %v6609, 0
    %v6653 = vsel %vm63, %v6610, 0
    %v6656 = vsel %vm63, %v6611, 0
    %v6659 = vsel %vm63, %v6612, 0
    %v6662 = vsel %vm63, %v6613, 0
    %v6665 = vsel %vm63, %v6614, 0
    %v6668 = vsel %vm63, %v6615, 0
    %v6671 = vsel %vm63, %v6616, 0
    %v6674 = vsel %vm63, %v6617, 0
    %v6677 = vsel %vm63, %v6618, 0
    %v6680 = vsel %vm63, %v6619, 0
    %v6683 = vsel %vm63, %v6620, 0
    %v6686 = vsel %vm63, %v6621, 0
    %v6689 = vsel %vm63, %v6622, 0
    %v6692 = vsel %vm63, %v6623, 0
    %v6695 = vsel %vm63, %v6624, 0
    %v6698 = vsel %vm63, %v6625, 0
    %v6701 = vsel %vm63, %v6626, 0
    %v6704 = vsel %vm63, %v6627, 0
    %6706 = vmatpush.msra.mxu0 0.0
    %6707 = vmatpush.msra.mxu0 0.0
    %6708 = vmatpush.msra.mxu0 0.0
    %6709 = vmatpush.msra.mxu0 0.0
    %6710 = vmatpush.msra.mxu0 0.0
    %6711 = vmatpush.msra.mxu0 0.0
    %6712 = vmatpush.msra.mxu0 0.0
    %6713 = vmatpush.msra.mxu0 0.0
    %6714 = vmatpush.msra.mxu0 0.0
    %6715 = vmatpush.msra.mxu0 0.0
    %6716 = vmatpush.msra.mxu0 0.0
    %6717 = vmatpush.msra.mxu0 0.0
    %6718 = vmatpush.msra.mxu0 0.0
    %6719 = vmatpush.msra.mxu0 0.0
    %6720 = vmatpush.msra.mxu0 %v6630
    %6721 = vmatpush.msra.mxu0 %v6629
    %6722 = vmatmul.f32.gmra.mxu0 %v6632
    %v6723 = vpop.f32.mrf.mxu0
    %v6724 = vadd.f32 0.0, %v6723
    %6725 = vmatmul.f32.gmra.mxu0 %v6635
    %v6726 = vpop.f32.mrf.mxu0
    %v6727 = vadd.f32 0.0, %v6726
    %6728 = vmatmul.f32.gmra.mxu0 %v6638
    %v6729 = vpop.f32.mrf.mxu0
    %v6730 = vadd.f32 0.0, %v6729
    %6731 = vmatmul.f32.gmra.mxu0 %v6641
    %v6732 = vpop.f32.mrf.mxu0
    %v6733 = vadd.f32 0.0, %v6732
    %6734 = vmatmul.f32.gmra.mxu0 %v6644
    %v6735 = vpop.f32.mrf.mxu0
    %v6736 = vadd.f32 0.0, %v6735
    %6737 = vmatmul.f32.gmra.mxu0 %v6647
    %v6738 = vpop.f32.mrf.mxu0
    %v6739 = vadd.f32 0.0, %v6738
    %6740 = vmatmul.f32.gmra.mxu0 %v6650
    %v6741 = vpop.f32.mrf.mxu0
    %v6742 = vadd.f32 0.0, %v6741
    %6743 = vmatmul.f32.gmra.mxu0 %v6653
    %v6744 = vpop.f32.mrf.mxu0
    %v6745 = vadd.f32 0.0, %v6744
    %6746 = vmatmul.f32.gmra.mxu0 %v6656
    %v6747 = vpop.f32.mrf.mxu0
    %v6748 = vadd.f32 0.0, %v6747
    %6749 = vmatmul.f32.gmra.mxu0 %v6659
    %v6750 = vpop.f32.mrf.mxu0
    %v6751 = vadd.f32 0.0, %v6750
    %6752 = vmatmul.f32.gmra.mxu0 %v6662
    %v6753 = vpop.f32.mrf.mxu0
    %v6754 = vadd.f32 0.0, %v6753
    %6755 = vmatmul.f32.gmra.mxu0 %v6665
    %v6756 = vpop.f32.mrf.mxu0
    %v6757 = vadd.f32 0.0, %v6756
    %6758 = vmatmul.f32.gmra.mxu0 %v6668
    %v6759 = vpop.f32.mrf.mxu0
    %v6760 = vadd.f32 0.0, %v6759
    %6761 = vmatmul.f32.gmra.mxu0 %v6671
    %v6762 = vpop.f32.mrf.mxu0
    %v6763 = vadd.f32 0.0, %v6762
    %6764 = vmatmul.f32.gmra.mxu0 %v6674
    %v6765 = vpop.f32.mrf.mxu0
    %v6766 = vadd.f32 0.0, %v6765
    %6767 = vmatmul.f32.gmra.mxu0 %v6677
    %v6768 = vpop.f32.mrf.mxu0
    %v6769 = vadd.f32 0.0, %v6768
    %6770 = vmatmul.f32.gmra.mxu0 %v6680
    %v6771 = vpop.f32.mrf.mxu0
    %v6772 = vadd.f32 0.0, %v6771
    %6773 = vmatmul.f32.gmra.mxu0 %v6683
    %v6774 = vpop.f32.mrf.mxu0
    %v6775 = vadd.f32 0.0, %v6774
    %6776 = vmatmul.f32.gmra.mxu0 %v6686
    %v6777 = vpop.f32.mrf.mxu0
    %v6778 = vadd.f32 0.0, %v6777
    %6779 = vmatmul.f32.gmra.mxu0 %v6689
    %v6780 = vpop.f32.mrf.mxu0
    %v6781 = vadd.f32 0.0, %v6780
    %6782 = vmatmul.f32.gmra.mxu0 %v6692
    %v6783 = vpop.f32.mrf.mxu0
    %v6784 = vadd.f32 0.0, %v6783
    %6785 = vmatmul.f32.gmra.mxu0 %v6695
    %v6786 = vpop.f32.mrf.mxu0
    %v6787 = vadd.f32 0.0, %v6786
    %6788 = vmatmul.f32.gmra.mxu0 %v6698
    %v6789 = vpop.f32.mrf.mxu0
    %v6790 = vadd.f32 0.0, %v6789
    %6791 = vmatmul.f32.gmra.mxu0 %v6701
    %v6792 = vpop.f32.mrf.mxu0
    %v6793 = vadd.f32 0.0, %v6792
    %6794 = vmatmul.f32.gmra.mxu0 %v6704
    %v6795 = vpop.f32.mrf.mxu0
    %v6796 = vadd.f32 0.0, %v6795
    %6797 = vdwg.mxu0
    %v6798 = vadd.f32 %v6529, %v6724
    %v6799 = vadd.f32 %v6532, %v6727
    %v6800 = vadd.f32 %v6535, %v6730
    %v6801 = vadd.f32 %v6538, %v6733
    %v6802 = vadd.f32 %v6541, %v6736
    %v6803 = vadd.f32 %v6544, %v6739
    %v6804 = vadd.f32 %v6547, %v6742
    %v6805 = vadd.f32 %v6550, %v6745
    %v6806 = vadd.f32 %v6553, %v6748
    %v6807 = vadd.f32 %v6556, %v6751
    %v6808 = vadd.f32 %v6559, %v6754
    %v6809 = vadd.f32 %v6562, %v6757
    %v6810 = vadd.f32 %v6565, %v6760
    %v6811 = vadd.f32 %v6568, %v6763
    %v6812 = vadd.f32 %v6571, %v6766
    %v6813 = vadd.f32 %v6574, %v6769
    %v6814 = vadd.f32 %v6577, %v6772
    %v6815 = vadd.f32 %v6580, %v6775
    %v6816 = vadd.f32 %v6583, %v6778
    %v6817 = vadd.f32 %v6586, %v6781
    %v6818 = vadd.f32 %v6589, %v6784
    %v6819 = vadd.f32 %v6592, %v6787
    %v6820 = vadd.f32 %v6595, %v6790
    %v6821 = vadd.f32 %v6598, %v6793
    %v6822 = vadd.f32 %v6601, %v6796
    %v6823 = vld [vmem:[#allocation4 + $0xf] sm:$0xff]
    %v6824 = vld [vmem:[#allocation4 + $0x17] sm:$0xff]
    %v6825 = vld [vmem:[#allocation4 + $0x1f] sm:$0xff]
    %v6826 = vld [vmem:[#allocation4 + $0x27] sm:$0xff]
    %v6827 = vld [vmem:[#allocation4 + $0x2f] sm:$0xff]
    %v6828 = vld [vmem:[#allocation4 + $0x37] sm:$0xff]
    %v6829 = vld [vmem:[#allocation4 + $0x3f] sm:$0xff]
    %v6830 = vld [vmem:[#allocation4 + $0x47] sm:$0xff]
    %v6831 = vld [vmem:[#allocation4 + $0x4f] sm:$0xff]
    %v6832 = vld [vmem:[#allocation4 + $0x57] sm:$0xff]
    %v6833 = vld [vmem:[#allocation4 + $0x5f] sm:$0xff]
    %v6834 = vld [vmem:[#allocation4 + $0x67] sm:$0xff]
    %v6835 = vld [vmem:[#allocation4 + $0x6f] sm:$0xff]
    %v6836 = vld [vmem:[#allocation4 + $0x77] sm:$0xff]
    %v6837 = vld [vmem:[#allocation4 + $0x7f] sm:$0xff]
    %v6838 = vld [vmem:[#allocation4 + $0x87] sm:$0xff]
    %v6839 = vld [vmem:[#allocation4 + $0x8f] sm:$0xff]
    %v6840 = vld [vmem:[#allocation4 + $0x97] sm:$0xff]
    %v6841 = vld [vmem:[#allocation4 + $0x9f] sm:$0xff]
    %v6842 = vld [vmem:[#allocation4 + $0xa7] sm:$0xff]
    %v6843 = vld [vmem:[#allocation4 + $0xaf] sm:$0xff]
    %v6844 = vld [vmem:[#allocation4 + $0xb7] sm:$0xff]
    %v6845 = vld [vmem:[#allocation4 + $0xbf] sm:$0xff]
    %v6846 = vld [vmem:[#allocation4 + $0xc7] sm:$0xff]
    %v6847 = vld [vmem:[#allocation4 + $0xcf] sm:$0xff]
    %s6848 = scalar_lea.vmem %s7, 48
    %v6849 = vld [vmem:[%s6848] sm:$0xff]
    %v6850 = vld [vmem:[%s6848 + $0x8] sm:$0xff]
    %v6852 = vsel %vm63, %v6823, 0
    %v6855 = vsel %vm63, %v6824, 0
    %v6858 = vsel %vm63, %v6825, 0
    %v6861 = vsel %vm63, %v6826, 0
    %v6864 = vsel %vm63, %v6827, 0
    %v6867 = vsel %vm63, %v6828, 0
    %v6870 = vsel %vm63, %v6829, 0
    %v6873 = vsel %vm63, %v6830, 0
    %v6876 = vsel %vm63, %v6831, 0
    %v6879 = vsel %vm63, %v6832, 0
    %v6882 = vsel %vm63, %v6833, 0
    %v6885 = vsel %vm63, %v6834, 0
    %v6888 = vsel %vm63, %v6835, 0
    %v6891 = vsel %vm63, %v6836, 0
    %v6894 = vsel %vm63, %v6837, 0
    %v6897 = vsel %vm63, %v6838, 0
    %v6900 = vsel %vm63, %v6839, 0
    %v6903 = vsel %vm63, %v6840, 0
    %v6906 = vsel %vm63, %v6841, 0
    %v6909 = vsel %vm63, %v6842, 0
    %v6912 = vsel %vm63, %v6843, 0
    %v6915 = vsel %vm63, %v6844, 0
    %v6918 = vsel %vm63, %v6845, 0
    %v6921 = vsel %vm63, %v6846, 0
    %v6924 = vsel %vm63, %v6847, 0
    %6926 = vmatpush.msra.mxu0 0.0
    %6927 = vmatpush.msra.mxu0 0.0
    %6928 = vmatpush.msra.mxu0 0.0
    %6929 = vmatpush.msra.mxu0 0.0
    %6930 = vmatpush.msra.mxu0 0.0
    %6931 = vmatpush.msra.mxu0 0.0
    %6932 = vmatpush.msra.mxu0 0.0
    %6933 = vmatpush.msra.mxu0 0.0
    %6934 = vmatpush.msra.mxu0 0.0
    %6935 = vmatpush.msra.mxu0 0.0
    %6936 = vmatpush.msra.mxu0 0.0
    %6937 = vmatpush.msra.mxu0 0.0
    %6938 = vmatpush.msra.mxu0 0.0
    %6939 = vmatpush.msra.mxu0 0.0
    %6940 = vmatpush.msra.mxu0 %v6850
    %6941 = vmatpush.msra.mxu0 %v6849
    %6942 = vmatmul.f32.gmra.mxu0 %v6852
    %v6943 = vpop.f32.mrf.mxu0
    %v6944 = vadd.f32 0.0, %v6943
    %6945 = vmatmul.f32.gmra.mxu0 %v6855
    %v6946 = vpop.f32.mrf.mxu0
    %v6947 = vadd.f32 0.0, %v6946
    %6948 = vmatmul.f32.gmra.mxu0 %v6858
    %v6949 = vpop.f32.mrf.mxu0
    %v6950 = vadd.f32 0.0, %v6949
    %6951 = vmatmul.f32.gmra.mxu0 %v6861
    %v6952 = vpop.f32.mrf.mxu0
    %v6953 = vadd.f32 0.0, %v6952
    %6954 = vmatmul.f32.gmra.mxu0 %v6864
    %v6955 = vpop.f32.mrf.mxu0
    %v6956 = vadd.f32 0.0, %v6955
    %6957 = vmatmul.f32.gmra.mxu0 %v6867
    %v6958 = vpop.f32.mrf.mxu0
    %v6959 = vadd.f32 0.0, %v6958
    %6960 = vmatmul.f32.gmra.mxu0 %v6870
    %v6961 = vpop.f32.mrf.mxu0
    %v6962 = vadd.f32 0.0, %v6961
    %6963 = vmatmul.f32.gmra.mxu0 %v6873
    %v6964 = vpop.f32.mrf.mxu0
    %v6965 = vadd.f32 0.0, %v6964
    %6966 = vmatmul.f32.gmra.mxu0 %v6876
    %v6967 = vpop.f32.mrf.mxu0
    %v6968 = vadd.f32 0.0, %v6967
    %6969 = vmatmul.f32.gmra.mxu0 %v6879
    %v6970 = vpop.f32.mrf.mxu0
    %v6971 = vadd.f32 0.0, %v6970
    %6972 = vmatmul.f32.gmra.mxu0 %v6882
    %v6973 = vpop.f32.mrf.mxu0
    %v6974 = vadd.f32 0.0, %v6973
    %6975 = vmatmul.f32.gmra.mxu0 %v6885
    %v6976 = vpop.f32.mrf.mxu0
    %v6977 = vadd.f32 0.0, %v6976
    %6978 = vmatmul.f32.gmra.mxu0 %v6888
    %v6979 = vpop.f32.mrf.mxu0
    %v6980 = vadd.f32 0.0, %v6979
    %6981 = vmatmul.f32.gmra.mxu0 %v6891
    %v6982 = vpop.f32.mrf.mxu0
    %v6983 = vadd.f32 0.0, %v6982
    %6984 = vmatmul.f32.gmra.mxu0 %v6894
    %v6985 = vpop.f32.mrf.mxu0
    %v6986 = vadd.f32 0.0, %v6985
    %6987 = vmatmul.f32.gmra.mxu0 %v6897
    %v6988 = vpop.f32.mrf.mxu0
    %v6989 = vadd.f32 0.0, %v6988
    %6990 = vmatmul.f32.gmra.mxu0 %v6900
    %v6991 = vpop.f32.mrf.mxu0
    %v6992 = vadd.f32 0.0, %v6991
    %6993 = vmatmul.f32.gmra.mxu0 %v6903
    %v6994 = vpop.f32.mrf.mxu0
    %v6995 = vadd.f32 0.0, %v6994
    %6996 = vmatmul.f32.gmra.mxu0 %v6906
    %v6997 = vpop.f32.mrf.mxu0
    %v6998 = vadd.f32 0.0, %v6997
    %6999 = vmatmul.f32.gmra.mxu0 %v6909
    %v7000 = vpop.f32.mrf.mxu0
    %v7001 = vadd.f32 0.0, %v7000
    %7002 = vmatmul.f32.gmra.mxu0 %v6912
    %v7003 = vpop.f32.mrf.mxu0
    %v7004 = vadd.f32 0.0, %v7003
    %7005 = vmatmul.f32.gmra.mxu0 %v6915
    %v7006 = vpop.f32.mrf.mxu0
    %v7007 = vadd.f32 0.0, %v7006
    %7008 = vmatmul.f32.gmra.mxu0 %v6918
    %v7009 = vpop.f32.mrf.mxu0
    %v7010 = vadd.f32 0.0, %v7009
    %7011 = vmatmul.f32.gmra.mxu0 %v6921
    %v7012 = vpop.f32.mrf.mxu0
    %v7013 = vadd.f32 0.0, %v7012
    %7014 = vmatmul.f32.gmra.mxu0 %v6924
    %v7015 = vpop.f32.mrf.mxu0
    %v7016 = vadd.f32 0.0, %v7015
    %7017 = vdwg.mxu0
    %v7018 = vadd.f32 %v6798, %v6944
    %v7019 = vadd.f32 %v6799, %v6947
    %v7020 = vadd.f32 %v6800, %v6950
    %v7021 = vadd.f32 %v6801, %v6953
    %v7022 = vadd.f32 %v6802, %v6956
    %v7023 = vadd.f32 %v6803, %v6959
    %v7024 = vadd.f32 %v6804, %v6962
    %v7025 = vadd.f32 %v6805, %v6965
    %v7026 = vadd.f32 %v6806, %v6968
    %v7027 = vadd.f32 %v6807, %v6971
    %v7028 = vadd.f32 %v6808, %v6974
    %v7029 = vadd.f32 %v6809, %v6977
    %v7030 = vadd.f32 %v6810, %v6980
    %v7031 = vadd.f32 %v6811, %v6983
    %v7032 = vadd.f32 %v6812, %v6986
    %v7033 = vadd.f32 %v6813, %v6989
    %v7034 = vadd.f32 %v6814, %v6992
    %v7035 = vadd.f32 %v6815, %v6995
    %v7036 = vadd.f32 %v6816, %v6998
    %v7037 = vadd.f32 %v6817, %v7001
    %v7038 = vadd.f32 %v6818, %v7004
    %v7039 = vadd.f32 %v6819, %v7007
    %v7040 = vadd.f32 %v6820, %v7010
    %v7041 = vadd.f32 %v6821, %v7013
    %v7042 = vadd.f32 %v6822, %v7016
    %v7043 = vld [vmem:[#allocation4 + $0x10] sm:$0xff]
    %v7044 = vld [vmem:[#allocation4 + $0x18] sm:$0xff]
    %v7045 = vld [vmem:[#allocation4 + $0x20] sm:$0xff]
    %v7046 = vld [vmem:[#allocation4 + $0x28] sm:$0xff]
    %v7047 = vld [vmem:[#allocation4 + $0x30] sm:$0xff]
    %v7048 = vld [vmem:[#allocation4 + $0x38] sm:$0xff]
    %v7049 = vld [vmem:[#allocation4 + $0x40] sm:$0xff]
    %v7050 = vld [vmem:[#allocation4 + $0x48] sm:$0xff]
    %v7051 = vld [vmem:[#allocation4 + $0x50] sm:$0xff]
    %v7052 = vld [vmem:[#allocation4 + $0x58] sm:$0xff]
    %v7053 = vld [vmem:[#allocation4 + $0x60] sm:$0xff]
    %v7054 = vld [vmem:[#allocation4 + $0x68] sm:$0xff]
    %v7055 = vld [vmem:[#allocation4 + $0x70] sm:$0xff]
    %v7056 = vld [vmem:[#allocation4 + $0x78] sm:$0xff]
    %v7057 = vld [vmem:[#allocation4 + $0x80] sm:$0xff]
    %v7058 = vld [vmem:[#allocation4 + $0x88] sm:$0xff]
    %v7059 = vld [vmem:[#allocation4 + $0x90] sm:$0xff]
    %v7060 = vld [vmem:[#allocation4 + $0x98] sm:$0xff]
    %v7061 = vld [vmem:[#allocation4 + $0xa0] sm:$0xff]
    %v7062 = vld [vmem:[#allocation4 + $0xa8] sm:$0xff]
    %v7063 = vld [vmem:[#allocation4 + $0xb0] sm:$0xff]
    %v7064 = vld [vmem:[#allocation4 + $0xb8] sm:$0xff]
    %v7065 = vld [vmem:[#allocation4 + $0xc0] sm:$0xff]
    %v7066 = vld [vmem:[#allocation4 + $0xc8] sm:$0xff]
    %v7067 = vld [vmem:[#allocation4 + $0xd0] sm:$0xff]
    %s7068 = scalar_lea.vmem %s7, 64
    %v7069 = vld [vmem:[%s7068] sm:$0xff]
    %v7070 = vld [vmem:[%s7068 + $0x8] sm:$0xff]
    %v7072 = vsel %vm63, %v7043, 0
    %v7075 = vsel %vm63, %v7044, 0
    %v7078 = vsel %vm63, %v7045, 0
    %v7081 = vsel %vm63, %v7046, 0
    %v7084 = vsel %vm63, %v7047, 0
    %v7087 = vsel %vm63, %v7048, 0
    %v7090 = vsel %vm63, %v7049, 0
    %v7093 = vsel %vm63, %v7050, 0
    %v7096 = vsel %vm63, %v7051, 0
    %v7099 = vsel %vm63, %v7052, 0
    %v7102 = vsel %vm63, %v7053, 0
    %v7105 = vsel %vm63, %v7054, 0
    %v7108 = vsel %vm63, %v7055, 0
    %v7111 = vsel %vm63, %v7056, 0
    %v7114 = vsel %vm63, %v7057, 0
    %v7117 = vsel %vm63, %v7058, 0
    %v7120 = vsel %vm63, %v7059, 0
    %v7123 = vsel %vm63, %v7060, 0
    %v7126 = vsel %vm63, %v7061, 0
    %v7129 = vsel %vm63, %v7062, 0
    %v7132 = vsel %vm63, %v7063, 0
    %v7135 = vsel %vm63, %v7064, 0
    %v7138 = vsel %vm63, %v7065, 0
    %v7141 = vsel %vm63, %v7066, 0
    %v7144 = vsel %vm63, %v7067, 0
    %7146 = vmatpush.msra.mxu0 0.0
    %7147 = vmatpush.msra.mxu0 0.0
    %7148 = vmatpush.msra.mxu0 0.0
    %7149 = vmatpush.msra.mxu0 0.0
    %7150 = vmatpush.msra.mxu0 0.0
    %7151 = vmatpush.msra.mxu0 0.0
    %7152 = vmatpush.msra.mxu0 0.0
    %7153 = vmatpush.msra.mxu0 0.0
    %7154 = vmatpush.msra.mxu0 0.0
    %7155 = vmatpush.msra.mxu0 0.0
    %7156 = vmatpush.msra.mxu0 0.0
    %7157 = vmatpush.msra.mxu0 0.0
    %7158 = vmatpush.msra.mxu0 0.0
    %7159 = vmatpush.msra.mxu0 0.0
    %7160 = vmatpush.msra.mxu0 %v7070
    %7161 = vmatpush.msra.mxu0 %v7069
    %7162 = vmatmul.f32.gmra.mxu0 %v7072
    %v7163 = vpop.f32.mrf.mxu0
    %v7164 = vadd.f32 0.0, %v7163
    %7165 = vmatmul.f32.gmra.mxu0 %v7075
    %v7166 = vpop.f32.mrf.mxu0
    %v7167 = vadd.f32 0.0, %v7166
    %7168 = vmatmul.f32.gmra.mxu0 %v7078
    %v7169 = vpop.f32.mrf.mxu0
    %v7170 = vadd.f32 0.0, %v7169
    %7171 = vmatmul.f32.gmra.mxu0 %v7081
    %v7172 = vpop.f32.mrf.mxu0
    %v7173 = vadd.f32 0.0, %v7172
    %7174 = vmatmul.f32.gmra.mxu0 %v7084
    %v7175 = vpop.f32.mrf.mxu0
    %v7176 = vadd.f32 0.0, %v7175
    %7177 = vmatmul.f32.gmra.mxu0 %v7087
    %v7178 = vpop.f32.mrf.mxu0
    %v7179 = vadd.f32 0.0, %v7178
    %7180 = vmatmul.f32.gmra.mxu0 %v7090
    %v7181 = vpop.f32.mrf.mxu0
    %v7182 = vadd.f32 0.0, %v7181
    %7183 = vmatmul.f32.gmra.mxu0 %v7093
    %v7184 = vpop.f32.mrf.mxu0
    %v7185 = vadd.f32 0.0, %v7184
    %7186 = vmatmul.f32.gmra.mxu0 %v7096
    %v7187 = vpop.f32.mrf.mxu0
    %v7188 = vadd.f32 0.0, %v7187
    %7189 = vmatmul.f32.gmra.mxu0 %v7099
    %v7190 = vpop.f32.mrf.mxu0
    %v7191 = vadd.f32 0.0, %v7190
    %7192 = vmatmul.f32.gmra.mxu0 %v7102
    %v7193 = vpop.f32.mrf.mxu0
    %v7194 = vadd.f32 0.0, %v7193
    %7195 = vmatmul.f32.gmra.mxu0 %v7105
    %v7196 = vpop.f32.mrf.mxu0
    %v7197 = vadd.f32 0.0, %v7196
    %7198 = vmatmul.f32.gmra.mxu0 %v7108
    %v7199 = vpop.f32.mrf.mxu0
    %v7200 = vadd.f32 0.0, %v7199
    %7201 = vmatmul.f32.gmra.mxu0 %v7111
    %v7202 = vpop.f32.mrf.mxu0
    %v7203 = vadd.f32 0.0, %v7202
    %7204 = vmatmul.f32.gmra.mxu0 %v7114
    %v7205 = vpop.f32.mrf.mxu0
    %v7206 = vadd.f32 0.0, %v7205
    %7207 = vmatmul.f32.gmra.mxu0 %v7117
    %v7208 = vpop.f32.mrf.mxu0
    %v7209 = vadd.f32 0.0, %v7208
    %7210 = vmatmul.f32.gmra.mxu0 %v7120
    %v7211 = vpop.f32.mrf.mxu0
    %v7212 = vadd.f32 0.0, %v7211
    %7213 = vmatmul.f32.gmra.mxu0 %v7123
    %v7214 = vpop.f32.mrf.mxu0
    %v7215 = vadd.f32 0.0, %v7214
    %7216 = vmatmul.f32.gmra.mxu0 %v7126
    %v7217 = vpop.f32.mrf.mxu0
    %v7218 = vadd.f32 0.0, %v7217
    %7219 = vmatmul.f32.gmra.mxu0 %v7129
    %v7220 = vpop.f32.mrf.mxu0
    %v7221 = vadd.f32 0.0, %v7220
    %7222 = vmatmul.f32.gmra.mxu0 %v7132
    %v7223 = vpop.f32.mrf.mxu0
    %v7224 = vadd.f32 0.0, %v7223
    %7225 = vmatmul.f32.gmra.mxu0 %v7135
    %v7226 = vpop.f32.mrf.mxu0
    %v7227 = vadd.f32 0.0, %v7226
    %7228 = vmatmul.f32.gmra.mxu0 %v7138
    %v7229 = vpop.f32.mrf.mxu0
    %v7230 = vadd.f32 0.0, %v7229
    %7231 = vmatmul.f32.gmra.mxu0 %v7141
    %v7232 = vpop.f32.mrf.mxu0
    %v7233 = vadd.f32 0.0, %v7232
    %7234 = vmatmul.f32.gmra.mxu0 %v7144
    %v7235 = vpop.f32.mrf.mxu0
    %v7236 = vadd.f32 0.0, %v7235
    %7237 = vdwg.mxu0
    %v7238 = vadd.f32 %v7018, %v7164
    %v7239 = vadd.f32 %v7019, %v7167
    %v7240 = vadd.f32 %v7020, %v7170
    %v7241 = vadd.f32 %v7021, %v7173
    %v7242 = vadd.f32 %v7022, %v7176
    %v7243 = vadd.f32 %v7023, %v7179
    %v7244 = vadd.f32 %v7024, %v7182
    %v7245 = vadd.f32 %v7025, %v7185
    %v7246 = vadd.f32 %v7026, %v7188
    %v7247 = vadd.f32 %v7027, %v7191
    %v7248 = vadd.f32 %v7028, %v7194
    %v7249 = vadd.f32 %v7029, %v7197
    %v7250 = vadd.f32 %v7030, %v7200
    %v7251 = vadd.f32 %v7031, %v7203
    %v7252 = vadd.f32 %v7032, %v7206
    %v7253 = vadd.f32 %v7033, %v7209
    %v7254 = vadd.f32 %v7034, %v7212
    %v7255 = vadd.f32 %v7035, %v7215
    %v7256 = vadd.f32 %v7036, %v7218
    %v7257 = vadd.f32 %v7037, %v7221
    %v7258 = vadd.f32 %v7038, %v7224
    %v7259 = vadd.f32 %v7039, %v7227
    %v7260 = vadd.f32 %v7040, %v7230
    %v7261 = vadd.f32 %v7041, %v7233
    %v7262 = vadd.f32 %v7042, %v7236
    %v7263 = vld [vmem:[#allocation4 + $0x11] sm:$0xff]
    %v7264 = vld [vmem:[#allocation4 + $0x19] sm:$0xff]
    %v7265 = vld [vmem:[#allocation4 + $0x21] sm:$0xff]
    %v7266 = vld [vmem:[#allocation4 + $0x29] sm:$0xff]
    %v7267 = vld [vmem:[#allocation4 + $0x31] sm:$0xff]
    %v7268 = vld [vmem:[#allocation4 + $0x39] sm:$0xff]
    %v7269 = vld [vmem:[#allocation4 + $0x41] sm:$0xff]
    %v7270 = vld [vmem:[#allocation4 + $0x49] sm:$0xff]
    %v7271 = vld [vmem:[#allocation4 + $0x51] sm:$0xff]
    %v7272 = vld [vmem:[#allocation4 + $0x59] sm:$0xff]
    %v7273 = vld [vmem:[#allocation4 + $0x61] sm:$0xff]
    %v7274 = vld [vmem:[#allocation4 + $0x69] sm:$0xff]
    %v7275 = vld [vmem:[#allocation4 + $0x71] sm:$0xff]
    %v7276 = vld [vmem:[#allocation4 + $0x79] sm:$0xff]
    %v7277 = vld [vmem:[#allocation4 + $0x81] sm:$0xff]
    %v7278 = vld [vmem:[#allocation4 + $0x89] sm:$0xff]
    %v7279 = vld [vmem:[#allocation4 + $0x91] sm:$0xff]
    %v7280 = vld [vmem:[#allocation4 + $0x99] sm:$0xff]
    %v7281 = vld [vmem:[#allocation4 + $0xa1] sm:$0xff]
    %v7282 = vld [vmem:[#allocation4 + $0xa9] sm:$0xff]
    %v7283 = vld [vmem:[#allocation4 + $0xb1] sm:$0xff]
    %v7284 = vld [vmem:[#allocation4 + $0xb9] sm:$0xff]
    %v7285 = vld [vmem:[#allocation4 + $0xc1] sm:$0xff]
    %v7286 = vld [vmem:[#allocation4 + $0xc9] sm:$0xff]
    %v7287 = vld [vmem:[#allocation4 + $0xd1] sm:$0xff]
    %s7288 = scalar_lea.vmem %s7, 80
    %v7289 = vld [vmem:[%s7288] sm:$0xff]
    %v7290 = vld [vmem:[%s7288 + $0x8] sm:$0xff]
    %v7292 = vsel %vm63, %v7263, 0
    %v7295 = vsel %vm63, %v7264, 0
    %v7298 = vsel %vm63, %v7265, 0
    %v7301 = vsel %vm63, %v7266, 0
    %v7304 = vsel %vm63, %v7267, 0
    %v7307 = vsel %vm63, %v7268, 0
    %v7310 = vsel %vm63, %v7269, 0
    %v7313 = vsel %vm63, %v7270, 0
    %v7316 = vsel %vm63, %v7271, 0
    %v7319 = vsel %vm63, %v7272, 0
    %v7322 = vsel %vm63, %v7273, 0
    %v7325 = vsel %vm63, %v7274, 0
    %v7328 = vsel %vm63, %v7275, 0
    %v7331 = vsel %vm63, %v7276, 0
    %v7334 = vsel %vm63, %v7277, 0
    %v7337 = vsel %vm63, %v7278, 0
    %v7340 = vsel %vm63, %v7279, 0
    %v7343 = vsel %vm63, %v7280, 0
    %v7346 = vsel %vm63, %v7281, 0
    %v7349 = vsel %vm63, %v7282, 0
    %v7352 = vsel %vm63, %v7283, 0
    %v7355 = vsel %vm63, %v7284, 0
    %v7358 = vsel %vm63, %v7285, 0
    %v7361 = vsel %vm63, %v7286, 0
    %v7364 = vsel %vm63, %v7287, 0
    %7366 = vmatpush.msra.mxu0 0.0
    %7367 = vmatpush.msra.mxu0 0.0
    %7368 = vmatpush.msra.mxu0 0.0
    %7369 = vmatpush.msra.mxu0 0.0
    %7370 = vmatpush.msra.mxu0 0.0
    %7371 = vmatpush.msra.mxu0 0.0
    %7372 = vmatpush.msra.mxu0 0.0
    %7373 = vmatpush.msra.mxu0 0.0
    %7374 = vmatpush.msra.mxu0 0.0
    %7375 = vmatpush.msra.mxu0 0.0
    %7376 = vmatpush.msra.mxu0 0.0
    %7377 = vmatpush.msra.mxu0 0.0
    %7378 = vmatpush.msra.mxu0 0.0
    %7379 = vmatpush.msra.mxu0 0.0
    %7380 = vmatpush.msra.mxu0 %v7290
    %7381 = vmatpush.msra.mxu0 %v7289
    %7382 = vmatmul.f32.gmra.mxu0 %v7292
    %v7383 = vpop.f32.mrf.mxu0
    %v7384 = vadd.f32 0.0, %v7383
    %7385 = vmatmul.f32.gmra.mxu0 %v7295
    %v7386 = vpop.f32.mrf.mxu0
    %v7387 = vadd.f32 0.0, %v7386
    %7388 = vmatmul.f32.gmra.mxu0 %v7298
    %v7389 = vpop.f32.mrf.mxu0
    %v7390 = vadd.f32 0.0, %v7389
    %7391 = vmatmul.f32.gmra.mxu0 %v7301
    %v7392 = vpop.f32.mrf.mxu0
    %v7393 = vadd.f32 0.0, %v7392
    %7394 = vmatmul.f32.gmra.mxu0 %v7304
    %v7395 = vpop.f32.mrf.mxu0
    %v7396 = vadd.f32 0.0, %v7395
    %7397 = vmatmul.f32.gmra.mxu0 %v7307
    %v7398 = vpop.f32.mrf.mxu0
    %v7399 = vadd.f32 0.0, %v7398
    %7400 = vmatmul.f32.gmra.mxu0 %v7310
    %v7401 = vpop.f32.mrf.mxu0
    %v7402 = vadd.f32 0.0, %v7401
    %7403 = vmatmul.f32.gmra.mxu0 %v7313
    %v7404 = vpop.f32.mrf.mxu0
    %v7405 = vadd.f32 0.0, %v7404
    %7406 = vmatmul.f32.gmra.mxu0 %v7316
    %v7407 = vpop.f32.mrf.mxu0
    %v7408 = vadd.f32 0.0, %v7407
    %7409 = vmatmul.f32.gmra.mxu0 %v7319
    %v7410 = vpop.f32.mrf.mxu0
    %v7411 = vadd.f32 0.0, %v7410
    %7412 = vmatmul.f32.gmra.mxu0 %v7322
    %v7413 = vpop.f32.mrf.mxu0
    %v7414 = vadd.f32 0.0, %v7413
    %7415 = vmatmul.f32.gmra.mxu0 %v7325
    %v7416 = vpop.f32.mrf.mxu0
    %v7417 = vadd.f32 0.0, %v7416
    %7418 = vmatmul.f32.gmra.mxu0 %v7328
    %v7419 = vpop.f32.mrf.mxu0
    %v7420 = vadd.f32 0.0, %v7419
    %7421 = vmatmul.f32.gmra.mxu0 %v7331
    %v7422 = vpop.f32.mrf.mxu0
    %v7423 = vadd.f32 0.0, %v7422
    %7424 = vmatmul.f32.gmra.mxu0 %v7334
    %v7425 = vpop.f32.mrf.mxu0
    %v7426 = vadd.f32 0.0, %v7425
    %7427 = vmatmul.f32.gmra.mxu0 %v7337
    %v7428 = vpop.f32.mrf.mxu0
    %v7429 = vadd.f32 0.0, %v7428
    %7430 = vmatmul.f32.gmra.mxu0 %v7340
    %v7431 = vpop.f32.mrf.mxu0
    %v7432 = vadd.f32 0.0, %v7431
    %7433 = vmatmul.f32.gmra.mxu0 %v7343
    %v7434 = vpop.f32.mrf.mxu0
    %v7435 = vadd.f32 0.0, %v7434
    %7436 = vmatmul.f32.gmra.mxu0 %v7346
    %v7437 = vpop.f32.mrf.mxu0
    %v7438 = vadd.f32 0.0, %v7437
    %7439 = vmatmul.f32.gmra.mxu0 %v7349
    %v7440 = vpop.f32.mrf.mxu0
    %v7441 = vadd.f32 0.0, %v7440
    %7442 = vmatmul.f32.gmra.mxu0 %v7352
    %v7443 = vpop.f32.mrf.mxu0
    %v7444 = vadd.f32 0.0, %v7443
    %7445 = vmatmul.f32.gmra.mxu0 %v7355
    %v7446 = vpop.f32.mrf.mxu0
    %v7447 = vadd.f32 0.0, %v7446
    %7448 = vmatmul.f32.gmra.mxu0 %v7358
    %v7449 = vpop.f32.mrf.mxu0
    %v7450 = vadd.f32 0.0, %v7449
    %7451 = vmatmul.f32.gmra.mxu0 %v7361
    %v7452 = vpop.f32.mrf.mxu0
    %v7453 = vadd.f32 0.0, %v7452
    %7454 = vmatmul.f32.gmra.mxu0 %v7364
    %v7455 = vpop.f32.mrf.mxu0
    %v7456 = vadd.f32 0.0, %v7455
    %7457 = vdwg.mxu0
    %v7458 = vadd.f32 %v7238, %v7384
    %v7459 = vadd.f32 %v7239, %v7387
    %v7460 = vadd.f32 %v7240, %v7390
    %v7461 = vadd.f32 %v7241, %v7393
    %v7462 = vadd.f32 %v7242, %v7396
    %v7463 = vadd.f32 %v7243, %v7399
    %v7464 = vadd.f32 %v7244, %v7402
    %v7465 = vadd.f32 %v7245, %v7405
    %v7466 = vadd.f32 %v7246, %v7408
    %v7467 = vadd.f32 %v7247, %v7411
    %v7468 = vadd.f32 %v7248, %v7414
    %v7469 = vadd.f32 %v7249, %v7417
    %v7470 = vadd.f32 %v7250, %v7420
    %v7471 = vadd.f32 %v7251, %v7423
    %v7472 = vadd.f32 %v7252, %v7426
    %v7473 = vadd.f32 %v7253, %v7429
    %v7474 = vadd.f32 %v7254, %v7432
    %v7475 = vadd.f32 %v7255, %v7435
    %v7476 = vadd.f32 %v7256, %v7438
    %v7477 = vadd.f32 %v7257, %v7441
    %v7478 = vadd.f32 %v7258, %v7444
    %v7479 = vadd.f32 %v7259, %v7447
    %v7480 = vadd.f32 %v7260, %v7450
    %v7481 = vadd.f32 %v7261, %v7453
    %v7482 = vadd.f32 %v7262, %v7456
    %v7483 = vld [vmem:[#allocation4 + $0x19] sm:$0xff]
    %v7484 = vld [vmem:[#allocation4 + $0x21] sm:$0xff]
    %v7485 = vld [vmem:[#allocation4 + $0x29] sm:$0xff]
    %v7486 = vld [vmem:[#allocation4 + $0x31] sm:$0xff]
    %v7487 = vld [vmem:[#allocation4 + $0x39] sm:$0xff]
    %v7488 = vld [vmem:[#allocation4 + $0x41] sm:$0xff]
    %v7489 = vld [vmem:[#allocation4 + $0x49] sm:$0xff]
    %v7490 = vld [vmem:[#allocation4 + $0x51] sm:$0xff]
    %v7491 = vld [vmem:[#allocation4 + $0x59] sm:$0xff]
    %v7492 = vld [vmem:[#allocation4 + $0x61] sm:$0xff]
    %v7493 = vld [vmem:[#allocation4 + $0x69] sm:$0xff]
    %v7494 = vld [vmem:[#allocation4 + $0x71] sm:$0xff]
    %v7495 = vld [vmem:[#allocation4 + $0x79] sm:$0xff]
    %v7496 = vld [vmem:[#allocation4 + $0x81] sm:$0xff]
    %v7497 = vld [vmem:[#allocation4 + $0x89] sm:$0xff]
    %v7498 = vld [vmem:[#allocation4 + $0x91] sm:$0xff]
    %v7499 = vld [vmem:[#allocation4 + $0x99] sm:$0xff]
    %v7500 = vld [vmem:[#allocation4 + $0xa1] sm:$0xff]
    %v7501 = vld [vmem:[#allocation4 + $0xa9] sm:$0xff]
    %v7502 = vld [vmem:[#allocation4 + $0xb1] sm:$0xff]
    %v7503 = vld [vmem:[#allocation4 + $0xb9] sm:$0xff]
    %v7504 = vld [vmem:[#allocation4 + $0xc1] sm:$0xff]
    %v7505 = vld [vmem:[#allocation4 + $0xc9] sm:$0xff]
    %v7506 = vld [vmem:[#allocation4 + $0xd1] sm:$0xff]
    %v7507 = vld [vmem:[#allocation4 + $0xd9] sm:$0xff]
    %s7508 = scalar_lea.vmem %s7, 96
    %v7509 = vld [vmem:[%s7508] sm:$0xff]
    %v7510 = vld [vmem:[%s7508 + $0x8] sm:$0xff]
    %v7512 = vsel %vm63, %v7483, 0
    %v7515 = vsel %vm63, %v7484, 0
    %v7518 = vsel %vm63, %v7485, 0
    %v7521 = vsel %vm63, %v7486, 0
    %v7524 = vsel %vm63, %v7487, 0
    %v7527 = vsel %vm63, %v7488, 0
    %v7530 = vsel %vm63, %v7489, 0
    %v7533 = vsel %vm63, %v7490, 0
    %v7536 = vsel %vm63, %v7491, 0
    %v7539 = vsel %vm63, %v7492, 0
    %v7542 = vsel %vm63, %v7493, 0
    %v7545 = vsel %vm63, %v7494, 0
    %v7548 = vsel %vm63, %v7495, 0
    %v7551 = vsel %vm63, %v7496, 0
    %v7554 = vsel %vm63, %v7497, 0
    %v7557 = vsel %vm63, %v7498, 0
    %v7560 = vsel %vm63, %v7499, 0
    %v7563 = vsel %vm63, %v7500, 0
    %v7566 = vsel %vm63, %v7501, 0
    %v7569 = vsel %vm63, %v7502, 0
    %v7572 = vsel %vm63, %v7503, 0
    %v7575 = vsel %vm63, %v7504, 0
    %v7578 = vsel %vm63, %v7505, 0
    %v7581 = vsel %vm63, %v7506, 0
    %v7584 = vsel %vm63, %v7507, 0
    %7586 = vmatpush.msra.mxu0 0.0
    %7587 = vmatpush.msra.mxu0 0.0
    %7588 = vmatpush.msra.mxu0 0.0
    %7589 = vmatpush.msra.mxu0 0.0
    %7590 = vmatpush.msra.mxu0 0.0
    %7591 = vmatpush.msra.mxu0 0.0
    %7592 = vmatpush.msra.mxu0 0.0
    %7593 = vmatpush.msra.mxu0 0.0
    %7594 = vmatpush.msra.mxu0 0.0
    %7595 = vmatpush.msra.mxu0 0.0
    %7596 = vmatpush.msra.mxu0 0.0
    %7597 = vmatpush.msra.mxu0 0.0
    %7598 = vmatpush.msra.mxu0 0.0
    %7599 = vmatpush.msra.mxu0 0.0
    %7600 = vmatpush.msra.mxu0 %v7510
    %7601 = vmatpush.msra.mxu0 %v7509
    %7602 = vmatmul.f32.gmra.mxu0 %v7512
    %v7603 = vpop.f32.mrf.mxu0
    %v7604 = vadd.f32 0.0, %v7603
    %7605 = vmatmul.f32.gmra.mxu0 %v7515
    %v7606 = vpop.f32.mrf.mxu0
    %v7607 = vadd.f32 0.0, %v7606
    %7608 = vmatmul.f32.gmra.mxu0 %v7518
    %v7609 = vpop.f32.mrf.mxu0
    %v7610 = vadd.f32 0.0, %v7609
    %7611 = vmatmul.f32.gmra.mxu0 %v7521
    %v7612 = vpop.f32.mrf.mxu0
    %v7613 = vadd.f32 0.0, %v7612
    %7614 = vmatmul.f32.gmra.mxu0 %v7524
    %v7615 = vpop.f32.mrf.mxu0
    %v7616 = vadd.f32 0.0, %v7615
    %7617 = vmatmul.f32.gmra.mxu0 %v7527
    %v7618 = vpop.f32.mrf.mxu0
    %v7619 = vadd.f32 0.0, %v7618
    %7620 = vmatmul.f32.gmra.mxu0 %v7530
    %v7621 = vpop.f32.mrf.mxu0
    %v7622 = vadd.f32 0.0, %v7621
    %7623 = vmatmul.f32.gmra.mxu0 %v7533
    %v7624 = vpop.f32.mrf.mxu0
    %v7625 = vadd.f32 0.0, %v7624
    %7626 = vmatmul.f32.gmra.mxu0 %v7536
    %v7627 = vpop.f32.mrf.mxu0
    %v7628 = vadd.f32 0.0, %v7627
    %7629 = vmatmul.f32.gmra.mxu0 %v7539
    %v7630 = vpop.f32.mrf.mxu0
    %v7631 = vadd.f32 0.0, %v7630
    %7632 = vmatmul.f32.gmra.mxu0 %v7542
    %v7633 = vpop.f32.mrf.mxu0
    %v7634 = vadd.f32 0.0, %v7633
    %7635 = vmatmul.f32.gmra.mxu0 %v7545
    %v7636 = vpop.f32.mrf.mxu0
    %v7637 = vadd.f32 0.0, %v7636
    %7638 = vmatmul.f32.gmra.mxu0 %v7548
    %v7639 = vpop.f32.mrf.mxu0
    %v7640 = vadd.f32 0.0, %v7639
    %7641 = vmatmul.f32.gmra.mxu0 %v7551
    %v7642 = vpop.f32.mrf.mxu0
    %v7643 = vadd.f32 0.0, %v7642
    %7644 = vmatmul.f32.gmra.mxu0 %v7554
    %v7645 = vpop.f32.mrf.mxu0
    %v7646 = vadd.f32 0.0, %v7645
    %7647 = vmatmul.f32.gmra.mxu0 %v7557
    %v7648 = vpop.f32.mrf.mxu0
    %v7649 = vadd.f32 0.0, %v7648
    %7650 = vmatmul.f32.gmra.mxu0 %v7560
    %v7651 = vpop.f32.mrf.mxu0
    %v7652 = vadd.f32 0.0, %v7651
    %7653 = vmatmul.f32.gmra.mxu0 %v7563
    %v7654 = vpop.f32.mrf.mxu0
    %v7655 = vadd.f32 0.0, %v7654
    %7656 = vmatmul.f32.gmra.mxu0 %v7566
    %v7657 = vpop.f32.mrf.mxu0
    %v7658 = vadd.f32 0.0, %v7657
    %7659 = vmatmul.f32.gmra.mxu0 %v7569
    %v7660 = vpop.f32.mrf.mxu0
    %v7661 = vadd.f32 0.0, %v7660
    %7662 = vmatmul.f32.gmra.mxu0 %v7572
    %v7663 = vpop.f32.mrf.mxu0
    %v7664 = vadd.f32 0.0, %v7663
    %7665 = vmatmul.f32.gmra.mxu0 %v7575
    %v7666 = vpop.f32.mrf.mxu0
    %v7667 = vadd.f32 0.0, %v7666
    %7668 = vmatmul.f32.gmra.mxu0 %v7578
    %v7669 = vpop.f32.mrf.mxu0
    %v7670 = vadd.f32 0.0, %v7669
    %7671 = vmatmul.f32.gmra.mxu0 %v7581
    %v7672 = vpop.f32.mrf.mxu0
    %v7673 = vadd.f32 0.0, %v7672
    %7674 = vmatmul.f32.gmra.mxu0 %v7584
    %v7675 = vpop.f32.mrf.mxu0
    %v7676 = vadd.f32 0.0, %v7675
    %7677 = vdwg.mxu0
    %v7678 = vadd.f32 %v7458, %v7604
    %v7679 = vadd.f32 %v7459, %v7607
    %v7680 = vadd.f32 %v7460, %v7610
    %v7681 = vadd.f32 %v7461, %v7613
    %v7682 = vadd.f32 %v7462, %v7616
    %v7683 = vadd.f32 %v7463, %v7619
    %v7684 = vadd.f32 %v7464, %v7622
    %v7685 = vadd.f32 %v7465, %v7625
    %v7686 = vadd.f32 %v7466, %v7628
    %v7687 = vadd.f32 %v7467, %v7631
    %v7688 = vadd.f32 %v7468, %v7634
    %v7689 = vadd.f32 %v7469, %v7637
    %v7690 = vadd.f32 %v7470, %v7640
    %v7691 = vadd.f32 %v7471, %v7643
    %v7692 = vadd.f32 %v7472, %v7646
    %v7693 = vadd.f32 %v7473, %v7649
    %v7694 = vadd.f32 %v7474, %v7652
    %v7695 = vadd.f32 %v7475, %v7655
    %v7696 = vadd.f32 %v7476, %v7658
    %v7697 = vadd.f32 %v7477, %v7661
    %v7698 = vadd.f32 %v7478, %v7664
    %v7699 = vadd.f32 %v7479, %v7667
    %v7700 = vadd.f32 %v7480, %v7670
    %v7701 = vadd.f32 %v7481, %v7673
    %v7702 = vadd.f32 %v7482, %v7676
    %v7703 = vld [vmem:[#allocation4 + $0x1a] sm:$0xff]
    %v7704 = vld [vmem:[#allocation4 + $0x22] sm:$0xff]
    %v7705 = vld [vmem:[#allocation4 + $0x2a] sm:$0xff]
    %v7706 = vld [vmem:[#allocation4 + $0x32] sm:$0xff]
    %v7707 = vld [vmem:[#allocation4 + $0x3a] sm:$0xff]
    %v7708 = vld [vmem:[#allocation4 + $0x42] sm:$0xff]
    %v7709 = vld [vmem:[#allocation4 + $0x4a] sm:$0xff]
    %v7710 = vld [vmem:[#allocation4 + $0x52] sm:$0xff]
    %v7711 = vld [vmem:[#allocation4 + $0x5a] sm:$0xff]
    %v7712 = vld [vmem:[#allocation4 + $0x62] sm:$0xff]
    %v7713 = vld [vmem:[#allocation4 + $0x6a] sm:$0xff]
    %v7714 = vld [vmem:[#allocation4 + $0x72] sm:$0xff]
    %v7715 = vld [vmem:[#allocation4 + $0x7a] sm:$0xff]
    %v7716 = vld [vmem:[#allocation4 + $0x82] sm:$0xff]
    %v7717 = vld [vmem:[#allocation4 + $0x8a] sm:$0xff]
    %v7718 = vld [vmem:[#allocation4 + $0x92] sm:$0xff]
    %v7719 = vld [vmem:[#allocation4 + $0x9a] sm:$0xff]
    %v7720 = vld [vmem:[#allocation4 + $0xa2] sm:$0xff]
    %v7721 = vld [vmem:[#allocation4 + $0xaa] sm:$0xff]
    %v7722 = vld [vmem:[#allocation4 + $0xb2] sm:$0xff]
    %v7723 = vld [vmem:[#allocation4 + $0xba] sm:$0xff]
    %v7724 = vld [vmem:[#allocation4 + $0xc2] sm:$0xff]
    %v7725 = vld [vmem:[#allocation4 + $0xca] sm:$0xff]
    %v7726 = vld [vmem:[#allocation4 + $0xd2] sm:$0xff]
    %v7727 = vld [vmem:[#allocation4 + $0xda] sm:$0xff]
    %s7728 = scalar_lea.vmem %s7, 112
    %v7729 = vld [vmem:[%s7728] sm:$0xff]
    %v7730 = vld [vmem:[%s7728 + $0x8] sm:$0xff]
    %v7732 = vsel %vm63, %v7703, 0
    %v7735 = vsel %vm63, %v7704, 0
    %v7738 = vsel %vm63, %v7705, 0
    %v7741 = vsel %vm63, %v7706, 0
    %v7744 = vsel %vm63, %v7707, 0
    %v7747 = vsel %vm63, %v7708, 0
    %v7750 = vsel %vm63, %v7709, 0
    %v7753 = vsel %vm63, %v7710, 0
    %v7756 = vsel %vm63, %v7711, 0
    %v7759 = vsel %vm63, %v7712, 0
    %v7762 = vsel %vm63, %v7713, 0
    %v7765 = vsel %vm63, %v7714, 0
    %v7768 = vsel %vm63, %v7715, 0
    %v7771 = vsel %vm63, %v7716, 0
    %v7774 = vsel %vm63, %v7717, 0
    %v7777 = vsel %vm63, %v7718, 0
    %v7780 = vsel %vm63, %v7719, 0
    %v7783 = vsel %vm63, %v7720, 0
    %v7786 = vsel %vm63, %v7721, 0
    %v7789 = vsel %vm63, %v7722, 0
    %v7792 = vsel %vm63, %v7723, 0
    %v7795 = vsel %vm63, %v7724, 0
    %v7798 = vsel %vm63, %v7725, 0
    %v7801 = vsel %vm63, %v7726, 0
    %v7804 = vsel %vm63, %v7727, 0
    %7806 = vmatpush.msra.mxu0 0.0
    %7807 = vmatpush.msra.mxu0 0.0
    %7808 = vmatpush.msra.mxu0 0.0
    %7809 = vmatpush.msra.mxu0 0.0
    %7810 = vmatpush.msra.mxu0 0.0
    %7811 = vmatpush.msra.mxu0 0.0
    %7812 = vmatpush.msra.mxu0 0.0
    %7813 = vmatpush.msra.mxu0 0.0
    %7814 = vmatpush.msra.mxu0 0.0
    %7815 = vmatpush.msra.mxu0 0.0
    %7816 = vmatpush.msra.mxu0 0.0
    %7817 = vmatpush.msra.mxu0 0.0
    %7818 = vmatpush.msra.mxu0 0.0
    %7819 = vmatpush.msra.mxu0 0.0
    %7820 = vmatpush.msra.mxu0 %v7730
    %7821 = vmatpush.msra.mxu0 %v7729
    %7822 = vmatmul.f32.gmra.mxu0 %v7732
    %v7823 = vpop.f32.mrf.mxu0
    %v7824 = vadd.f32 0.0, %v7823
    %7825 = vmatmul.f32.gmra.mxu0 %v7735
    %v7826 = vpop.f32.mrf.mxu0
    %v7827 = vadd.f32 0.0, %v7826
    %7828 = vmatmul.f32.gmra.mxu0 %v7738
    %v7829 = vpop.f32.mrf.mxu0
    %v7830 = vadd.f32 0.0, %v7829
    %7831 = vmatmul.f32.gmra.mxu0 %v7741
    %v7832 = vpop.f32.mrf.mxu0
    %v7833 = vadd.f32 0.0, %v7832
    %7834 = vmatmul.f32.gmra.mxu0 %v7744
    %v7835 = vpop.f32.mrf.mxu0
    %v7836 = vadd.f32 0.0, %v7835
    %7837 = vmatmul.f32.gmra.mxu0 %v7747
    %v7838 = vpop.f32.mrf.mxu0
    %v7839 = vadd.f32 0.0, %v7838
    %7840 = vmatmul.f32.gmra.mxu0 %v7750
    %v7841 = vpop.f32.mrf.mxu0
    %v7842 = vadd.f32 0.0, %v7841
    %7843 = vmatmul.f32.gmra.mxu0 %v7753
    %v7844 = vpop.f32.mrf.mxu0
    %v7845 = vadd.f32 0.0, %v7844
    %7846 = vmatmul.f32.gmra.mxu0 %v7756
    %v7847 = vpop.f32.mrf.mxu0
    %v7848 = vadd.f32 0.0, %v7847
    %7849 = vmatmul.f32.gmra.mxu0 %v7759
    %v7850 = vpop.f32.mrf.mxu0
    %v7851 = vadd.f32 0.0, %v7850
    %7852 = vmatmul.f32.gmra.mxu0 %v7762
    %v7853 = vpop.f32.mrf.mxu0
    %v7854 = vadd.f32 0.0, %v7853
    %7855 = vmatmul.f32.gmra.mxu0 %v7765
    %v7856 = vpop.f32.mrf.mxu0
    %v7857 = vadd.f32 0.0, %v7856
    %7858 = vmatmul.f32.gmra.mxu0 %v7768
    %v7859 = vpop.f32.mrf.mxu0
    %v7860 = vadd.f32 0.0, %v7859
    %7861 = vmatmul.f32.gmra.mxu0 %v7771
    %v7862 = vpop.f32.mrf.mxu0
    %v7863 = vadd.f32 0.0, %v7862
    %7864 = vmatmul.f32.gmra.mxu0 %v7774
    %v7865 = vpop.f32.mrf.mxu0
    %v7866 = vadd.f32 0.0, %v7865
    %7867 = vmatmul.f32.gmra.mxu0 %v7777
    %v7868 = vpop.f32.mrf.mxu0
    %v7869 = vadd.f32 0.0, %v7868
    %7870 = vmatmul.f32.gmra.mxu0 %v7780
    %v7871 = vpop.f32.mrf.mxu0
    %v7872 = vadd.f32 0.0, %v7871
    %7873 = vmatmul.f32.gmra.mxu0 %v7783
    %v7874 = vpop.f32.mrf.mxu0
    %v7875 = vadd.f32 0.0, %v7874
    %7876 = vmatmul.f32.gmra.mxu0 %v7786
    %v7877 = vpop.f32.mrf.mxu0
    %v7878 = vadd.f32 0.0, %v7877
    %7879 = vmatmul.f32.gmra.mxu0 %v7789
    %v7880 = vpop.f32.mrf.mxu0
    %v7881 = vadd.f32 0.0, %v7880
    %7882 = vmatmul.f32.gmra.mxu0 %v7792
    %v7883 = vpop.f32.mrf.mxu0
    %v7884 = vadd.f32 0.0, %v7883
    %7885 = vmatmul.f32.gmra.mxu0 %v7795
    %v7886 = vpop.f32.mrf.mxu0
    %v7887 = vadd.f32 0.0, %v7886
    %7888 = vmatmul.f32.gmra.mxu0 %v7798
    %v7889 = vpop.f32.mrf.mxu0
    %v7890 = vadd.f32 0.0, %v7889
    %7891 = vmatmul.f32.gmra.mxu0 %v7801
    %v7892 = vpop.f32.mrf.mxu0
    %v7893 = vadd.f32 0.0, %v7892
    %7894 = vmatmul.f32.gmra.mxu0 %v7804
    %v7895 = vpop.f32.mrf.mxu0
    %v7896 = vadd.f32 0.0, %v7895
    %7897 = vdwg.mxu0
    %v7898 = vadd.f32 %v7678, %v7824
    %v7899 = vadd.f32 %v7679, %v7827
    %v7900 = vadd.f32 %v7680, %v7830
    %v7901 = vadd.f32 %v7681, %v7833
    %v7902 = vadd.f32 %v7682, %v7836
    %v7903 = vadd.f32 %v7683, %v7839
    %v7904 = vadd.f32 %v7684, %v7842
    %v7905 = vadd.f32 %v7685, %v7845
    %v7906 = vadd.f32 %v7686, %v7848
    %v7907 = vadd.f32 %v7687, %v7851
    %v7908 = vadd.f32 %v7688, %v7854
    %v7909 = vadd.f32 %v7689, %v7857
    %v7910 = vadd.f32 %v7690, %v7860
    %v7911 = vadd.f32 %v7691, %v7863
    %v7912 = vadd.f32 %v7692, %v7866
    %v7913 = vadd.f32 %v7693, %v7869
    %v7914 = vadd.f32 %v7694, %v7872
    %v7915 = vadd.f32 %v7695, %v7875
    %v7916 = vadd.f32 %v7696, %v7878
    %v7917 = vadd.f32 %v7697, %v7881
    %v7918 = vadd.f32 %v7698, %v7884
    %v7919 = vadd.f32 %v7699, %v7887
    %v7920 = vadd.f32 %v7700, %v7890
    %v7921 = vadd.f32 %v7701, %v7893
    %v7922 = vadd.f32 %v7702, %v7896
    %v7923 = vld [vmem:[#allocation4 + $0x1b] sm:$0xff]
    %v7924 = vld [vmem:[#allocation4 + $0x23] sm:$0xff]
    %v7925 = vld [vmem:[#allocation4 + $0x2b] sm:$0xff]
    %v7926 = vld [vmem:[#allocation4 + $0x33] sm:$0xff]
    %v7927 = vld [vmem:[#allocation4 + $0x3b] sm:$0xff]
    %v7928 = vld [vmem:[#allocation4 + $0x43] sm:$0xff]
    %v7929 = vld [vmem:[#allocation4 + $0x4b] sm:$0xff]
    %v7930 = vld [vmem:[#allocation4 + $0x53] sm:$0xff]
    %v7931 = vld [vmem:[#allocation4 + $0x5b] sm:$0xff]
    %v7932 = vld [vmem:[#allocation4 + $0x63] sm:$0xff]
    %v7933 = vld [vmem:[#allocation4 + $0x6b] sm:$0xff]
    %v7934 = vld [vmem:[#allocation4 + $0x73] sm:$0xff]
    %v7935 = vld [vmem:[#allocation4 + $0x7b] sm:$0xff]
    %v7936 = vld [vmem:[#allocation4 + $0x83] sm:$0xff]
    %v7937 = vld [vmem:[#allocation4 + $0x8b] sm:$0xff]
    %v7938 = vld [vmem:[#allocation4 + $0x93] sm:$0xff]
    %v7939 = vld [vmem:[#allocation4 + $0x9b] sm:$0xff]
    %v7940 = vld [vmem:[#allocation4 + $0xa3] sm:$0xff]
    %v7941 = vld [vmem:[#allocation4 + $0xab] sm:$0xff]
    %v7942 = vld [vmem:[#allocation4 + $0xb3] sm:$0xff]
    %v7943 = vld [vmem:[#allocation4 + $0xbb] sm:$0xff]
    %v7944 = vld [vmem:[#allocation4 + $0xc3] sm:$0xff]
    %v7945 = vld [vmem:[#allocation4 + $0xcb] sm:$0xff]
    %v7946 = vld [vmem:[#allocation4 + $0xd3] sm:$0xff]
    %v7947 = vld [vmem:[#allocation4 + $0xdb] sm:$0xff]
    %s7948 = scalar_lea.vmem %s7, 128
    %v7949 = vld [vmem:[%s7948] sm:$0xff]
    %v7950 = vld [vmem:[%s7948 + $0x8] sm:$0xff]
    %v7952 = vsel %vm63, %v7923, 0
    %v7955 = vsel %vm63, %v7924, 0
    %v7958 = vsel %vm63, %v7925, 0
    %v7961 = vsel %vm63, %v7926, 0
    %v7964 = vsel %vm63, %v7927, 0
    %v7967 = vsel %vm63, %v7928, 0
    %v7970 = vsel %vm63, %v7929, 0
    %v7973 = vsel %vm63, %v7930, 0
    %v7976 = vsel %vm63, %v7931, 0
    %v7979 = vsel %vm63, %v7932, 0
    %v7982 = vsel %vm63, %v7933, 0
    %v7985 = vsel %vm63, %v7934, 0
    %v7988 = vsel %vm63, %v7935, 0
    %v7991 = vsel %vm63, %v7936, 0
    %v7994 = vsel %vm63, %v7937, 0
    %v7997 = vsel %vm63, %v7938, 0
    %v8000 = vsel %vm63, %v7939, 0
    %v8003 = vsel %vm63, %v7940, 0
    %v8006 = vsel %vm63, %v7941, 0
    %v8009 = vsel %vm63, %v7942, 0
    %v8012 = vsel %vm63, %v7943, 0
    %v8015 = vsel %vm63, %v7944, 0
    %v8018 = vsel %vm63, %v7945, 0
    %v8021 = vsel %vm63, %v7946, 0
    %v8024 = vsel %vm63, %v7947, 0
    %8026 = vmatpush.msra.mxu0 0.0
    %8027 = vmatpush.msra.mxu0 0.0
    %8028 = vmatpush.msra.mxu0 0.0
    %8029 = vmatpush.msra.mxu0 0.0
    %8030 = vmatpush.msra.mxu0 0.0
    %8031 = vmatpush.msra.mxu0 0.0
    %8032 = vmatpush.msra.mxu0 0.0
    %8033 = vmatpush.msra.mxu0 0.0
    %8034 = vmatpush.msra.mxu0 0.0
    %8035 = vmatpush.msra.mxu0 0.0
    %8036 = vmatpush.msra.mxu0 0.0
    %8037 = vmatpush.msra.mxu0 0.0
    %8038 = vmatpush.msra.mxu0 0.0
    %8039 = vmatpush.msra.mxu0 0.0
    %8040 = vmatpush.msra.mxu0 %v7950
    %8041 = vmatpush.msra.mxu0 %v7949
    %8042 = vmatmul.f32.gmra.mxu0 %v7952
    %v8043 = vpop.f32.mrf.mxu0
    %v8044 = vadd.f32 0.0, %v8043
    %8045 = vmatmul.f32.gmra.mxu0 %v7955
    %v8046 = vpop.f32.mrf.mxu0
    %v8047 = vadd.f32 0.0, %v8046
    %8048 = vmatmul.f32.gmra.mxu0 %v7958
    %v8049 = vpop.f32.mrf.mxu0
    %v8050 = vadd.f32 0.0, %v8049
    %8051 = vmatmul.f32.gmra.mxu0 %v7961
    %v8052 = vpop.f32.mrf.mxu0
    %v8053 = vadd.f32 0.0, %v8052
    %8054 = vmatmul.f32.gmra.mxu0 %v7964
    %v8055 = vpop.f32.mrf.mxu0
    %v8056 = vadd.f32 0.0, %v8055
    %8057 = vmatmul.f32.gmra.mxu0 %v7967
    %v8058 = vpop.f32.mrf.mxu0
    %v8059 = vadd.f32 0.0, %v8058
    %8060 = vmatmul.f32.gmra.mxu0 %v7970
    %v8061 = vpop.f32.mrf.mxu0
    %v8062 = vadd.f32 0.0, %v8061
    %8063 = vmatmul.f32.gmra.mxu0 %v7973
    %v8064 = vpop.f32.mrf.mxu0
    %v8065 = vadd.f32 0.0, %v8064
    %8066 = vmatmul.f32.gmra.mxu0 %v7976
    %v8067 = vpop.f32.mrf.mxu0
    %v8068 = vadd.f32 0.0, %v8067
    %8069 = vmatmul.f32.gmra.mxu0 %v7979
    %v8070 = vpop.f32.mrf.mxu0
    %v8071 = vadd.f32 0.0, %v8070
    %8072 = vmatmul.f32.gmra.mxu0 %v7982
    %v8073 = vpop.f32.mrf.mxu0
    %v8074 = vadd.f32 0.0, %v8073
    %8075 = vmatmul.f32.gmra.mxu0 %v7985
    %v8076 = vpop.f32.mrf.mxu0
    %v8077 = vadd.f32 0.0, %v8076
    %8078 = vmatmul.f32.gmra.mxu0 %v7988
    %v8079 = vpop.f32.mrf.mxu0
    %v8080 = vadd.f32 0.0, %v8079
    %8081 = vmatmul.f32.gmra.mxu0 %v7991
    %v8082 = vpop.f32.mrf.mxu0
    %v8083 = vadd.f32 0.0, %v8082
    %8084 = vmatmul.f32.gmra.mxu0 %v7994
    %v8085 = vpop.f32.mrf.mxu0
    %v8086 = vadd.f32 0.0, %v8085
    %8087 = vmatmul.f32.gmra.mxu0 %v7997
    %v8088 = vpop.f32.mrf.mxu0
    %v8089 = vadd.f32 0.0, %v8088
    %8090 = vmatmul.f32.gmra.mxu0 %v8000
    %v8091 = vpop.f32.mrf.mxu0
    %v8092 = vadd.f32 0.0, %v8091
    %8093 = vmatmul.f32.gmra.mxu0 %v8003
    %v8094 = vpop.f32.mrf.mxu0
    %v8095 = vadd.f32 0.0, %v8094
    %8096 = vmatmul.f32.gmra.mxu0 %v8006
    %v8097 = vpop.f32.mrf.mxu0
    %v8098 = vadd.f32 0.0, %v8097
    %8099 = vmatmul.f32.gmra.mxu0 %v8009
    %v8100 = vpop.f32.mrf.mxu0
    %v8101 = vadd.f32 0.0, %v8100
    %8102 = vmatmul.f32.gmra.mxu0 %v8012
    %v8103 = vpop.f32.mrf.mxu0
    %v8104 = vadd.f32 0.0, %v8103
    %8105 = vmatmul.f32.gmra.mxu0 %v8015
    %v8106 = vpop.f32.mrf.mxu0
    %v8107 = vadd.f32 0.0, %v8106
    %8108 = vmatmul.f32.gmra.mxu0 %v8018
    %v8109 = vpop.f32.mrf.mxu0
    %v8110 = vadd.f32 0.0, %v8109
    %8111 = vmatmul.f32.gmra.mxu0 %v8021
    %v8112 = vpop.f32.mrf.mxu0
    %v8113 = vadd.f32 0.0, %v8112
    %8114 = vmatmul.f32.gmra.mxu0 %v8024
    %v8115 = vpop.f32.mrf.mxu0
    %v8116 = vadd.f32 0.0, %v8115
    %8117 = vdwg.mxu0
    %v8118 = vadd.f32 %v7898, %v8044
    %v8119 = vadd.f32 %v7899, %v8047
    %v8120 = vadd.f32 %v7900, %v8050
    %v8121 = vadd.f32 %v7901, %v8053
    %v8122 = vadd.f32 %v7902, %v8056
    %v8123 = vadd.f32 %v7903, %v8059
    %v8124 = vadd.f32 %v7904, %v8062
    %v8125 = vadd.f32 %v7905, %v8065
    %v8126 = vadd.f32 %v7906, %v8068
    %v8127 = vadd.f32 %v7907, %v8071
    %v8128 = vadd.f32 %v7908, %v8074
    %v8129 = vadd.f32 %v7909, %v8077
    %v8130 = vadd.f32 %v7910, %v8080
    %v8131 = vadd.f32 %v7911, %v8083
    %v8132 = vadd.f32 %v7912, %v8086
    %v8133 = vadd.f32 %v7913, %v8089
    %v8134 = vadd.f32 %v7914, %v8092
    %v8135 = vadd.f32 %v7915, %v8095
    %v8136 = vadd.f32 %v7916, %v8098
    %v8137 = vadd.f32 %v7917, %v8101
    %v8138 = vadd.f32 %v7918, %v8104
    %v8139 = vadd.f32 %v7919, %v8107
    %v8140 = vadd.f32 %v7920, %v8110
    %v8141 = vadd.f32 %v7921, %v8113
    %v8142 = vadd.f32 %v7922, %v8116
    %v8143 = vld [vmem:[%s8] sm:$0x1]
    %v8145 = vperm.slane %v8143, 0
    %v8147 = vadd.f32 %v8118, %v8145
    %v8148 = vadd.f32 %v8119, %v8145
    %v8149 = vadd.f32 %v8120, %v8145
    %v8150 = vadd.f32 %v8121, %v8145
    %v8151 = vadd.f32 %v8122, %v8145
    %v8152 = vadd.f32 %v8123, %v8145
    %v8153 = vadd.f32 %v8124, %v8145
    %v8154 = vadd.f32 %v8125, %v8145
    %v8155 = vadd.f32 %v8126, %v8145
    %v8156 = vadd.f32 %v8127, %v8145
    %v8157 = vadd.f32 %v8128, %v8145
    %v8158 = vadd.f32 %v8129, %v8145
    %v8159 = vadd.f32 %v8130, %v8145
    %v8160 = vadd.f32 %v8131, %v8145
    %v8161 = vadd.f32 %v8132, %v8145
    %v8162 = vadd.f32 %v8133, %v8145
    %v8163 = vadd.f32 %v8134, %v8145
    %v8164 = vadd.f32 %v8135, %v8145
    %v8165 = vadd.f32 %v8136, %v8145
    %v8166 = vadd.f32 %v8137, %v8145
    %v8167 = vadd.f32 %v8138, %v8145
    %v8168 = vadd.f32 %v8139, %v8145
    %v8169 = vadd.f32 %v8140, %v8145
    %v8170 = vadd.f32 %v8141, %v8145
    %v8171 = vadd.f32 %v8142, %v8145
    %v8172 = vld [vmem:[#allocation3 + $0x10] sm:$0xff]
    %v8173 = vld [vmem:[#allocation3 + $0x18] sm:$0xff]
    %v8174 = vld [vmem:[#allocation3 + $0x20] sm:$0xff]
    %v8175 = vld [vmem:[#allocation3 + $0x28] sm:$0xff]
    %v8176 = vld [vmem:[#allocation3 + $0x30] sm:$0xff]
    %v8177 = vld [vmem:[#allocation3 + $0x38] sm:$0xff]
    %v8178 = vld [vmem:[#allocation3 + $0x40] sm:$0xff]
    %v8179 = vld [vmem:[#allocation3 + $0x48] sm:$0xff]
    %v8180 = vld [vmem:[#allocation3 + $0x50] sm:$0xff]
    %v8181 = vld [vmem:[#allocation3 + $0x58] sm:$0xff]
    %v8182 = vld [vmem:[#allocation3 + $0x60] sm:$0xff]
    %v8183 = vld [vmem:[#allocation3 + $0x68] sm:$0xff]
    %v8184 = vld [vmem:[#allocation3 + $0x70] sm:$0xff]
    %v8185 = vld [vmem:[#allocation3 + $0x78] sm:$0xff]
    %v8186 = vld [vmem:[#allocation3 + $0x80] sm:$0xff]
    %v8187 = vld [vmem:[#allocation3 + $0x88] sm:$0xff]
    %v8188 = vld [vmem:[#allocation3 + $0x90] sm:$0xff]
    %v8189 = vld [vmem:[#allocation3 + $0x98] sm:$0xff]
    %v8190 = vld [vmem:[#allocation3 + $0xa0] sm:$0xff]
    %v8191 = vld [vmem:[#allocation3 + $0xa8] sm:$0xff]
    %v8192 = vld [vmem:[#allocation3 + $0xb0] sm:$0xff]
    %v8193 = vld [vmem:[#allocation3 + $0xb8] sm:$0xff]
    %v8194 = vld [vmem:[#allocation3 + $0xc0] sm:$0xff]
    %v8195 = vld [vmem:[#allocation3 + $0xc8] sm:$0xff]
    %v8196 = vld [vmem:[#allocation3 + $0xd0] sm:$0xff]
    %v8197 = vadd.f32 %v8147, %v8172
    %v8198 = vadd.f32 %v8148, %v8173
    %v8199 = vadd.f32 %v8149, %v8174
    %v8200 = vadd.f32 %v8150, %v8175
    %v8201 = vadd.f32 %v8151, %v8176
    %v8202 = vadd.f32 %v8152, %v8177
    %v8203 = vadd.f32 %v8153, %v8178
    %v8204 = vadd.f32 %v8154, %v8179
    %v8205 = vadd.f32 %v8155, %v8180
    %v8206 = vadd.f32 %v8156, %v8181
    %v8207 = vadd.f32 %v8157, %v8182
    %v8208 = vadd.f32 %v8158, %v8183
    %v8209 = vadd.f32 %v8159, %v8184
    %v8210 = vadd.f32 %v8160, %v8185
    %v8211 = vadd.f32 %v8161, %v8186
    %v8212 = vadd.f32 %v8162, %v8187
    %v8213 = vadd.f32 %v8163, %v8188
    %v8214 = vadd.f32 %v8164, %v8189
    %v8215 = vadd.f32 %v8165, %v8190
    %v8216 = vadd.f32 %v8166, %v8191
    %v8217 = vadd.f32 %v8167, %v8192
    %v8218 = vadd.f32 %v8168, %v8193
    %v8219 = vadd.f32 %v8169, %v8194
    %v8220 = vadd.f32 %v8170, %v8195
    %v8221 = vadd.f32 %v8171, %v8196
    %v8222 = vmax.f32 %v8197, 0.0
    %v8223 = vmax.f32 %v8198, 0.0
    %v8224 = vmax.f32 %v8199, 0.0
    %v8225 = vmax.f32 %v8200, 0.0
    %v8226 = vmax.f32 %v8201, 0.0
    %v8227 = vmax.f32 %v8202, 0.0
    %v8228 = vmax.f32 %v8203, 0.0
    %v8229 = vmax.f32 %v8204, 0.0
    %v8230 = vmax.f32 %v8205, 0.0
    %v8231 = vmax.f32 %v8206, 0.0
    %v8232 = vmax.f32 %v8207, 0.0
    %v8233 = vmax.f32 %v8208, 0.0
    %v8234 = vmax.f32 %v8209, 0.0
    %v8235 = vmax.f32 %v8210, 0.0
    %v8236 = vmax.f32 %v8211, 0.0
    %v8237 = vmax.f32 %v8212, 0.0
    %v8238 = vmax.f32 %v8213, 0.0
    %v8239 = vmax.f32 %v8214, 0.0
    %v8240 = vmax.f32 %v8215, 0.0
    %v8241 = vmax.f32 %v8216, 0.0
    %v8242 = vmax.f32 %v8217, 0.0
    %v8243 = vmax.f32 %v8218, 0.0
    %v8244 = vmax.f32 %v8219, 0.0
    %v8245 = vmax.f32 %v8220, 0.0
    %v8246 = vmax.f32 %v8221, 0.0
    %v8247 = vld [vmem:[%s9] sm:$0xff]
    %v8248 = vld [vmem:[%s9 + $0x8] sm:$0xff]
    %v8249 = vld [vmem:[%s9 + $0x10] sm:$0xff]
    %v8250 = vld [vmem:[%s9 + $0x18] sm:$0xff]
    %v8251 = vld [vmem:[%s9 + $0x20] sm:$0xff]
    %v8252 = vld [vmem:[%s9 + $0x28] sm:$0xff]
    %v8253 = vld [vmem:[%s9 + $0x30] sm:$0xff]
    %v8254 = vld [vmem:[%s9 + $0x38] sm:$0xff]
    %v8255 = vld [vmem:[%s9 + $0x40] sm:$0xff]
    %v8256 = vld [vmem:[%s9 + $0x48] sm:$0xff]
    %v8257 = vld [vmem:[%s9 + $0x50] sm:$0xff]
    %v8258 = vld [vmem:[%s9 + $0x58] sm:$0xff]
    %v8259 = vld [vmem:[%s9 + $0x60] sm:$0xff]
    %v8260 = vld [vmem:[%s9 + $0x68] sm:$0xff]
    %v8261 = vld [vmem:[%s9 + $0x70] sm:$0xff]
    %v8262 = vld [vmem:[%s9 + $0x78] sm:$0xff]
    %v8263 = vld [vmem:[%s9 + $0x80] sm:$0xff]
    %v8264 = vld [vmem:[%s9 + $0x88] sm:$0xff]
    %v8265 = vld [vmem:[%s9 + $0x90] sm:$0xff]
    %v8266 = vld [vmem:[%s9 + $0x98] sm:$0xff]
    %v8267 = vld [vmem:[%s9 + $0xa0] sm:$0xff]
    %v8268 = vld [vmem:[%s9 + $0xa8] sm:$0xff]
    %v8269 = vld [vmem:[%s9 + $0xb0] sm:$0xff]
    %v8270 = vld [vmem:[%s9 + $0xb8] sm:$0xff]
    %v8271 = vld [vmem:[%s9 + $0xc0] sm:$0xff]
    %vm8272 = vcmp.gt.f32.partialorder %v8247, 0.5
    %vm8273 = vcmp.gt.f32.partialorder %v8248, 0.5
    %vm8274 = vcmp.gt.f32.partialorder %v8249, 0.5
    %vm8275 = vcmp.gt.f32.partialorder %v8250, 0.5
    %vm8276 = vcmp.gt.f32.partialorder %v8251, 0.5
    %vm8277 = vcmp.gt.f32.partialorder %v8252, 0.5
    %vm8278 = vcmp.gt.f32.partialorder %v8253, 0.5
    %vm8279 = vcmp.gt.f32.partialorder %v8254, 0.5
    %vm8280 = vcmp.gt.f32.partialorder %v8255, 0.5
    %vm8281 = vcmp.gt.f32.partialorder %v8256, 0.5
    %vm8282 = vcmp.gt.f32.partialorder %v8257, 0.5
    %vm8283 = vcmp.gt.f32.partialorder %v8258, 0.5
    %vm8284 = vcmp.gt.f32.partialorder %v8259, 0.5
    %vm8285 = vcmp.gt.f32.partialorder %v8260, 0.5
    %vm8286 = vcmp.gt.f32.partialorder %v8261, 0.5
    %vm8287 = vcmp.gt.f32.partialorder %v8262, 0.5
    %vm8288 = vcmp.gt.f32.partialorder %v8263, 0.5
    %vm8289 = vcmp.gt.f32.partialorder %v8264, 0.5
    %vm8290 = vcmp.gt.f32.partialorder %v8265, 0.5
    %vm8291 = vcmp.gt.f32.partialorder %v8266, 0.5
    %vm8292 = vcmp.gt.f32.partialorder %v8267, 0.5
    %vm8293 = vcmp.gt.f32.partialorder %v8268, 0.5
    %vm8294 = vcmp.gt.f32.partialorder %v8269, 0.5
    %vm8295 = vcmp.gt.f32.partialorder %v8270, 0.5
    %vm8296 = vcmp.gt.f32.partialorder %v8271, 0.5
    %v8297 = vsel %vm8272, 1, 0
    %v8298 = vsel %vm8273, 1, 0
    %v8299 = vsel %vm8274, 1, 0
    %v8300 = vsel %vm8275, 1, 0
    %v8301 = vsel %vm8276, 1, 0
    %v8302 = vsel %vm8277, 1, 0
    %v8303 = vsel %vm8278, 1, 0
    %v8304 = vsel %vm8279, 1, 0
    %v8305 = vsel %vm8280, 1, 0
    %v8306 = vsel %vm8281, 1, 0
    %v8307 = vsel %vm8282, 1, 0
    %v8308 = vsel %vm8283, 1, 0
    %v8309 = vsel %vm8284, 1, 0
    %v8310 = vsel %vm8285, 1, 0
    %v8311 = vsel %vm8286, 1, 0
    %v8312 = vsel %vm8287, 1, 0
    %v8313 = vsel %vm8288, 1, 0
    %v8314 = vsel %vm8289, 1, 0
    %v8315 = vsel %vm8290, 1, 0
    %v8316 = vsel %vm8291, 1, 0
    %v8317 = vsel %vm8292, 1, 0
    %v8318 = vsel %vm8293, 1, 0
    %v8319 = vsel %vm8294, 1, 0
    %v8320 = vsel %vm8295, 1, 0
    %v8321 = vsel %vm8296, 1, 0
    %8322 = vset.pattern.permute.xlu0 0
    %8323 = vperm.xlu0 %8322, %v8297
    %v8324 = vpop.permute.xlu0 %8323
    %8325 = vset.pattern.permute.xlu0 0
    %8326 = vperm.xlu0 %8325, %v8298
    %v8327 = vpop.permute.xlu0 %8326
    %8328 = vset.pattern.permute.xlu0 0
    %8329 = vperm.xlu0 %8328, %v8299
    %v8330 = vpop.permute.xlu0 %8329
    %8331 = vset.pattern.permute.xlu0 0
    %8332 = vperm.xlu0 %8331, %v8300
    %v8333 = vpop.permute.xlu0 %8332
    %8334 = vset.pattern.permute.xlu0 0
    %8335 = vperm.xlu0 %8334, %v8301
    %v8336 = vpop.permute.xlu0 %8335
    %8337 = vset.pattern.permute.xlu0 0
    %8338 = vperm.xlu0 %8337, %v8302
    %v8339 = vpop.permute.xlu0 %8338
    %8340 = vset.pattern.permute.xlu0 0
    %8341 = vperm.xlu0 %8340, %v8303
    %v8342 = vpop.permute.xlu0 %8341
    %8343 = vset.pattern.permute.xlu0 0
    %8344 = vperm.xlu0 %8343, %v8304
    %v8345 = vpop.permute.xlu0 %8344
    %8346 = vset.pattern.permute.xlu0 0
    %8347 = vperm.xlu0 %8346, %v8305
    %v8348 = vpop.permute.xlu0 %8347
    %8349 = vset.pattern.permute.xlu0 0
    %8350 = vperm.xlu0 %8349, %v8306
    %v8351 = vpop.permute.xlu0 %8350
    %8352 = vset.pattern.permute.xlu0 0
    %8353 = vperm.xlu0 %8352, %v8307
    %v8354 = vpop.permute.xlu0 %8353
    %8355 = vset.pattern.permute.xlu0 0
    %8356 = vperm.xlu0 %8355, %v8308
    %v8357 = vpop.permute.xlu0 %8356
    %8358 = vset.pattern.permute.xlu0 0
    %8359 = vperm.xlu0 %8358, %v8309
    %v8360 = vpop.permute.xlu0 %8359
    %8361 = vset.pattern.permute.xlu0 0
    %8362 = vperm.xlu0 %8361, %v8310
    %v8363 = vpop.permute.xlu0 %8362
    %8364 = vset.pattern.permute.xlu0 0
    %8365 = vperm.xlu0 %8364, %v8311
    %v8366 = vpop.permute.xlu0 %8365
    %8367 = vset.pattern.permute.xlu0 0
    %8368 = vperm.xlu0 %8367, %v8312
    %v8369 = vpop.permute.xlu0 %8368
    %8370 = vset.pattern.permute.xlu0 0
    %8371 = vperm.xlu0 %8370, %v8313
    %v8372 = vpop.permute.xlu0 %8371
    %8373 = vset.pattern.permute.xlu0 0
    %8374 = vperm.xlu0 %8373, %v8314
    %v8375 = vpop.permute.xlu0 %8374
    %8376 = vset.pattern.permute.xlu0 0
    %8377 = vperm.xlu0 %8376, %v8315
    %v8378 = vpop.permute.xlu0 %8377
    %8379 = vset.pattern.permute.xlu0 0
    %8380 = vperm.xlu0 %8379, %v8316
    %v8381 = vpop.permute.xlu0 %8380
    %8382 = vset.pattern.permute.xlu0 0
    %8383 = vperm.xlu0 %8382, %v8317
    %v8384 = vpop.permute.xlu0 %8383
    %8385 = vset.pattern.permute.xlu0 0
    %8386 = vperm.xlu0 %8385, %v8318
    %v8387 = vpop.permute.xlu0 %8386
    %8388 = vset.pattern.permute.xlu0 0
    %8389 = vperm.xlu0 %8388, %v8319
    %v8390 = vpop.permute.xlu0 %8389
    %8391 = vset.pattern.permute.xlu0 0
    %8392 = vperm.xlu0 %8391, %v8320
    %v8393 = vpop.permute.xlu0 %8392
    %8394 = vset.pattern.permute.xlu0 0
    %8395 = vperm.xlu0 %8394, %v8321
    %v8396 = vpop.permute.xlu0 %8395
    %vm8397 = vcmp.eq.s32.totalorder %v8324, 1
    %vm8398 = vcmp.eq.s32.totalorder %v8327, 1
    %vm8399 = vcmp.eq.s32.totalorder %v8330, 1
    %vm8400 = vcmp.eq.s32.totalorder %v8333, 1
    %vm8401 = vcmp.eq.s32.totalorder %v8336, 1
    %vm8402 = vcmp.eq.s32.totalorder %v8339, 1
    %vm8403 = vcmp.eq.s32.totalorder %v8342, 1
    %vm8404 = vcmp.eq.s32.totalorder %v8345, 1
    %vm8405 = vcmp.eq.s32.totalorder %v8348, 1
    %vm8406 = vcmp.eq.s32.totalorder %v8351, 1
    %vm8407 = vcmp.eq.s32.totalorder %v8354, 1
    %vm8408 = vcmp.eq.s32.totalorder %v8357, 1
    %vm8409 = vcmp.eq.s32.totalorder %v8360, 1
    %vm8410 = vcmp.eq.s32.totalorder %v8363, 1
    %vm8411 = vcmp.eq.s32.totalorder %v8366, 1
    %vm8412 = vcmp.eq.s32.totalorder %v8369, 1
    %vm8413 = vcmp.eq.s32.totalorder %v8372, 1
    %vm8414 = vcmp.eq.s32.totalorder %v8375, 1
    %vm8415 = vcmp.eq.s32.totalorder %v8378, 1
    %vm8416 = vcmp.eq.s32.totalorder %v8381, 1
    %vm8417 = vcmp.eq.s32.totalorder %v8384, 1
    %vm8418 = vcmp.eq.s32.totalorder %v8387, 1
    %vm8419 = vcmp.eq.s32.totalorder %v8390, 1
    %vm8420 = vcmp.eq.s32.totalorder %v8393, 1
    %vm8421 = vcmp.eq.s32.totalorder %v8396, 1
    %v8422 = vsel %vm8397, %v8222, 0.0
    %v8423 = vsel %vm8398, %v8223, 0.0
    %v8424 = vsel %vm8399, %v8224, 0.0
    %v8425 = vsel %vm8400, %v8225, 0.0
    %v8426 = vsel %vm8401, %v8226, 0.0
    %v8427 = vsel %vm8402, %v8227, 0.0
    %v8428 = vsel %vm8403, %v8228, 0.0
    %v8429 = vsel %vm8404, %v8229, 0.0
    %v8430 = vsel %vm8405, %v8230, 0.0
    %v8431 = vsel %vm8406, %v8231, 0.0
    %v8432 = vsel %vm8407, %v8232, 0.0
    %v8433 = vsel %vm8408, %v8233, 0.0
    %v8434 = vsel %vm8409, %v8234, 0.0
    %v8435 = vsel %vm8410, %v8235, 0.0
    %v8436 = vsel %vm8411, %v8236, 0.0
    %v8437 = vsel %vm8412, %v8237, 0.0
    %v8438 = vsel %vm8413, %v8238, 0.0
    %v8439 = vsel %vm8414, %v8239, 0.0
    %v8440 = vsel %vm8415, %v8240, 0.0
    %v8441 = vsel %vm8416, %v8241, 0.0
    %v8442 = vsel %vm8417, %v8242, 0.0
    %v8443 = vsel %vm8418, %v8243, 0.0
    %v8444 = vsel %vm8419, %v8244, 0.0
    %v8445 = vsel %vm8420, %v8245, 0.0
    %v8446 = vsel %vm8421, %v8246, 0.0
    %8447 = vst.msk [vmem:[#allocation3 + $0x10] sm:$0xff] %vm63, %v8422
    %8448 = vst.msk [vmem:[#allocation3 + $0x18] sm:$0xff] %vm63, %v8423
    %8449 = vst.msk [vmem:[#allocation3 + $0x20] sm:$0xff] %vm63, %v8424
    %8450 = vst.msk [vmem:[#allocation3 + $0x28] sm:$0xff] %vm63, %v8425
    %8451 = vst.msk [vmem:[#allocation3 + $0x30] sm:$0xff] %vm63, %v8426
    %8452 = vst.msk [vmem:[#allocation3 + $0x38] sm:$0xff] %vm63, %v8427
    %8453 = vst.msk [vmem:[#allocation3 + $0x40] sm:$0xff] %vm63, %v8428
    %8454 = vst.msk [vmem:[#allocation3 + $0x48] sm:$0xff] %vm63, %v8429
    %8455 = vst.msk [vmem:[#allocation3 + $0x50] sm:$0xff] %vm63, %v8430
    %8456 = vst.msk [vmem:[#allocation3 + $0x58] sm:$0xff] %vm63, %v8431
    %8457 = vst.msk [vmem:[#allocation3 + $0x60] sm:$0xff] %vm63, %v8432
    %8458 = vst.msk [vmem:[#allocation3 + $0x68] sm:$0xff] %vm63, %v8433
    %8459 = vst.msk [vmem:[#allocation3 + $0x70] sm:$0xff] %vm63, %v8434
    %8460 = vst.msk [vmem:[#allocation3 + $0x78] sm:$0xff] %vm63, %v8435
    %8461 = vst.msk [vmem:[#allocation3 + $0x80] sm:$0xff] %vm63, %v8436
    %8462 = vst.msk [vmem:[#allocation3 + $0x88] sm:$0xff] %vm63, %v8437
    %8463 = vst.msk [vmem:[#allocation3 + $0x90] sm:$0xff] %vm63, %v8438
    %8464 = vst.msk [vmem:[#allocation3 + $0x98] sm:$0xff] %vm63, %v8439
    %8465 = vst.msk [vmem:[#allocation3 + $0xa0] sm:$0xff] %vm63, %v8440
    %8466 = vst.msk [vmem:[#allocation3 + $0xa8] sm:$0xff] %vm63, %v8441
    %8467 = vst.msk [vmem:[#allocation3 + $0xb0] sm:$0xff] %vm63, %v8442
    %8468 = vst.msk [vmem:[#allocation3 + $0xb8] sm:$0xff] %vm63, %v8443
    %8469 = vst.msk [vmem:[#allocation3 + $0xc0] sm:$0xff] %vm63, %v8444
    %8470 = vst.msk [vmem:[#allocation3 + $0xc8] sm:$0xff] %vm63, %v8445
    %8471 = vst.msk [vmem:[#allocation3 + $0xd0] sm:$0xff] %vm63, %v8446
    %v8472 = vld [vmem:[#allocation3 + $0x5] sm:$0xff]
    %v8473 = vld [vmem:[#allocation3 + $0xd] sm:$0xff]
    %v8474 = vld [vmem:[#allocation3 + $0x15] sm:$0xff]
    %v8475 = vld [vmem:[#allocation3 + $0x1d] sm:$0xff]
    %v8476 = vld [vmem:[#allocation3 + $0x25] sm:$0xff]
    %v8477 = vld [vmem:[#allocation3 + $0x2d] sm:$0xff]
    %v8478 = vld [vmem:[#allocation3 + $0x35] sm:$0xff]
    %v8479 = vld [vmem:[#allocation3 + $0x3d] sm:$0xff]
    %v8480 = vld [vmem:[#allocation3 + $0x45] sm:$0xff]
    %v8481 = vld [vmem:[#allocation3 + $0x4d] sm:$0xff]
    %v8482 = vld [vmem:[#allocation3 + $0x55] sm:$0xff]
    %v8483 = vld [vmem:[#allocation3 + $0x5d] sm:$0xff]
    %v8484 = vld [vmem:[#allocation3 + $0x65] sm:$0xff]
    %v8485 = vld [vmem:[#allocation3 + $0x6d] sm:$0xff]
    %v8486 = vld [vmem:[#allocation3 + $0x75] sm:$0xff]
    %v8487 = vld [vmem:[#allocation3 + $0x7d] sm:$0xff]
    %v8488 = vld [vmem:[#allocation3 + $0x85] sm:$0xff]
    %v8489 = vld [vmem:[#allocation3 + $0x8d] sm:$0xff]
    %v8490 = vld [vmem:[#allocation3 + $0x95] sm:$0xff]
    %v8491 = vld [vmem:[#allocation3 + $0x9d] sm:$0xff]
    %v8492 = vld [vmem:[#allocation3 + $0xa5] sm:$0xff]
    %v8493 = vld [vmem:[#allocation3 + $0xad] sm:$0xff]
    %v8494 = vld [vmem:[#allocation3 + $0xb5] sm:$0xff]
    %v8495 = vld [vmem:[#allocation3 + $0xbd] sm:$0xff]
    %v8496 = vld [vmem:[#allocation3 + $0xc5] sm:$0xff]
    %v8497 = vld [vmem:[%s10] sm:$0xff]
    %v8498 = vld [vmem:[%s10 + $0x8] sm:$0xff]
    %v8499 = vld [vmem:[#allocation3 + $0x6] sm:$0xff]
    %v8500 = vld [vmem:[#allocation3 + $0xe] sm:$0xff]
    %v8501 = vld [vmem:[#allocation3 + $0x16] sm:$0xff]
    %v8502 = vld [vmem:[#allocation3 + $0x1e] sm:$0xff]
    %v8503 = vld [vmem:[#allocation3 + $0x26] sm:$0xff]
    %v8504 = vld [vmem:[#allocation3 + $0x2e] sm:$0xff]
    %v8505 = vld [vmem:[#allocation3 + $0x36] sm:$0xff]
    %v8506 = vld [vmem:[#allocation3 + $0x3e] sm:$0xff]
    %v8507 = vld [vmem:[#allocation3 + $0x46] sm:$0xff]
    %v8508 = vld [vmem:[#allocation3 + $0x4e] sm:$0xff]
    %v8509 = vld [vmem:[#allocation3 + $0x56] sm:$0xff]
    %v8510 = vld [vmem:[#allocation3 + $0x5e] sm:$0xff]
    %v8511 = vld [vmem:[#allocation3 + $0x66] sm:$0xff]
    %v8512 = vld [vmem:[#allocation3 + $0x6e] sm:$0xff]
    %v8513 = vld [vmem:[#allocation3 + $0x76] sm:$0xff]
    %v8514 = vld [vmem:[#allocation3 + $0x7e] sm:$0xff]
    %v8515 = vld [vmem:[#allocation3 + $0x86] sm:$0xff]
    %v8516 = vld [vmem:[#allocation3 + $0x8e] sm:$0xff]
    %v8517 = vld [vmem:[#allocation3 + $0x96] sm:$0xff]
    %v8518 = vld [vmem:[#allocation3 + $0x9e] sm:$0xff]
    %v8519 = vld [vmem:[#allocation3 + $0xa6] sm:$0xff]
    %v8520 = vld [vmem:[#allocation3 + $0xae] sm:$0xff]
    %v8521 = vld [vmem:[#allocation3 + $0xb6] sm:$0xff]
    %v8522 = vld [vmem:[#allocation3 + $0xbe] sm:$0xff]
    %v8523 = vld [vmem:[#allocation3 + $0xc6] sm:$0xff]
    %s8524 = scalar_lea.vmem %s10, 16
    %v8525 = vld [vmem:[%s8524] sm:$0xff]
    %v8526 = vld [vmem:[%s8524 + $0x8] sm:$0xff]
    %v8528 = vsel %vm63, %v8499, 0
    %v8531 = vsel %vm63, %v8500, 0
    %v8534 = vsel %vm63, %v8501, 0
    %v8537 = vsel %vm63, %v8502, 0
    %v8540 = vsel %vm63, %v8503, 0
    %v8543 = vsel %vm63, %v8504, 0
    %v8546 = vsel %vm63, %v8505, 0
    %v8549 = vsel %vm63, %v8506, 0
    %v8552 = vsel %vm63, %v8507, 0
    %v8555 = vsel %vm63, %v8508, 0
    %v8558 = vsel %vm63, %v8509, 0
    %v8561 = vsel %vm63, %v8510, 0
    %v8564 = vsel %vm63, %v8511, 0
    %v8567 = vsel %vm63, %v8512, 0
    %v8570 = vsel %vm63, %v8513, 0
    %v8573 = vsel %vm63, %v8514, 0
    %v8576 = vsel %vm63, %v8515, 0
    %v8579 = vsel %vm63, %v8516, 0
    %v8582 = vsel %vm63, %v8517, 0
    %v8585 = vsel %vm63, %v8518, 0
    %v8588 = vsel %vm63, %v8519, 0
    %v8591 = vsel %vm63, %v8520, 0
    %v8594 = vsel %vm63, %v8521, 0
    %v8597 = vsel %vm63, %v8522, 0
    %v8600 = vsel %vm63, %v8523, 0
    %8602 = vmatpush.msra.mxu0 0.0
    %8603 = vmatpush.msra.mxu0 0.0
    %8604 = vmatpush.msra.mxu0 0.0
    %8605 = vmatpush.msra.mxu0 0.0
    %8606 = vmatpush.msra.mxu0 0.0
    %8607 = vmatpush.msra.mxu0 0.0
    %8608 = vmatpush.msra.mxu0 0.0
    %8609 = vmatpush.msra.mxu0 0.0
    %8610 = vmatpush.msra.mxu0 0.0
    %8611 = vmatpush.msra.mxu0 0.0
    %8612 = vmatpush.msra.mxu0 0.0
    %8613 = vmatpush.msra.mxu0 0.0
    %8614 = vmatpush.msra.mxu0 0.0
    %8615 = vmatpush.msra.mxu0 0.0
    %8616 = vmatpush.msra.mxu0 %v8526
    %8617 = vmatpush.msra.mxu0 %v8525
    %8618 = vmatmul.f32.gmra.mxu0 %v8528
    %v8619 = vpop.f32.mrf.mxu0
    %v8620 = vadd.f32 0.0, %v8619
    %8621 = vmatmul.f32.gmra.mxu0 %v8531
    %v8622 = vpop.f32.mrf.mxu0
    %v8623 = vadd.f32 0.0, %v8622
    %8624 = vmatmul.f32.gmra.mxu0 %v8534
    %v8625 = vpop.f32.mrf.mxu0
    %v8626 = vadd.f32 0.0, %v8625
    %8627 = vmatmul.f32.gmra.mxu0 %v8537
    %v8628 = vpop.f32.mrf.mxu0
    %v8629 = vadd.f32 0.0, %v8628
    %8630 = vmatmul.f32.gmra.mxu0 %v8540
    %v8631 = vpop.f32.mrf.mxu0
    %v8632 = vadd.f32 0.0, %v8631
    %8633 = vmatmul.f32.gmra.mxu0 %v8543
    %v8634 = vpop.f32.mrf.mxu0
    %v8635 = vadd.f32 0.0, %v8634
    %8636 = vmatmul.f32.gmra.mxu0 %v8546
    %v8637 = vpop.f32.mrf.mxu0
    %v8638 = vadd.f32 0.0, %v8637
    %8639 = vmatmul.f32.gmra.mxu0 %v8549
    %v8640 = vpop.f32.mrf.mxu0
    %v8641 = vadd.f32 0.0, %v8640
    %8642 = vmatmul.f32.gmra.mxu0 %v8552
    %v8643 = vpop.f32.mrf.mxu0
    %v8644 = vadd.f32 0.0, %v8643
    %8645 = vmatmul.f32.gmra.mxu0 %v8555
    %v8646 = vpop.f32.mrf.mxu0
    %v8647 = vadd.f32 0.0, %v8646
    %8648 = vmatmul.f32.gmra.mxu0 %v8558
    %v8649 = vpop.f32.mrf.mxu0
    %v8650 = vadd.f32 0.0, %v8649
    %8651 = vmatmul.f32.gmra.mxu0 %v8561
    %v8652 = vpop.f32.mrf.mxu0
    %v8653 = vadd.f32 0.0, %v8652
    %8654 = vmatmul.f32.gmra.mxu0 %v8564
    %v8655 = vpop.f32.mrf.mxu0
    %v8656 = vadd.f32 0.0, %v8655
    %8657 = vmatmul.f32.gmra.mxu0 %v8567
    %v8658 = vpop.f32.mrf.mxu0
    %v8659 = vadd.f32 0.0, %v8658
    %8660 = vmatmul.f32.gmra.mxu0 %v8570
    %v8661 = vpop.f32.mrf.mxu0
    %v8662 = vadd.f32 0.0, %v8661
    %8663 = vmatmul.f32.gmra.mxu0 %v8573
    %v8664 = vpop.f32.mrf.mxu0
    %v8665 = vadd.f32 0.0, %v8664
    %8666 = vmatmul.f32.gmra.mxu0 %v8576
    %v8667 = vpop.f32.mrf.mxu0
    %v8668 = vadd.f32 0.0, %v8667
    %8669 = vmatmul.f32.gmra.mxu0 %v8579
    %v8670 = vpop.f32.mrf.mxu0
    %v8671 = vadd.f32 0.0, %v8670
    %8672 = vmatmul.f32.gmra.mxu0 %v8582
    %v8673 = vpop.f32.mrf.mxu0
    %v8674 = vadd.f32 0.0, %v8673
    %8675 = vmatmul.f32.gmra.mxu0 %v8585
    %v8676 = vpop.f32.mrf.mxu0
    %v8677 = vadd.f32 0.0, %v8676
    %8678 = vmatmul.f32.gmra.mxu0 %v8588
    %v8679 = vpop.f32.mrf.mxu0
    %v8680 = vadd.f32 0.0, %v8679
    %8681 = vmatmul.f32.gmra.mxu0 %v8591
    %v8682 = vpop.f32.mrf.mxu0
    %v8683 = vadd.f32 0.0, %v8682
    %8684 = vmatmul.f32.gmra.mxu0 %v8594
    %v8685 = vpop.f32.mrf.mxu0
    %v8686 = vadd.f32 0.0, %v8685
    %8687 = vmatmul.f32.gmra.mxu0 %v8597
    %v8688 = vpop.f32.mrf.mxu0
    %v8689 = vadd.f32 0.0, %v8688
    %8690 = vmatmul.f32.gmra.mxu0 %v8600
    %v8691 = vpop.f32.mrf.mxu0
    %v8692 = vadd.f32 0.0, %v8691
    %8693 = vdwg.mxu0
    %v8695 = vsel %vm63, %v8472, 0
    %v8698 = vsel %vm63, %v8473, 0
    %v8701 = vsel %vm63, %v8474, 0
    %v8704 = vsel %vm63, %v8475, 0
    %v8707 = vsel %vm63, %v8476, 0
    %v8710 = vsel %vm63, %v8477, 0
    %v8713 = vsel %vm63, %v8478, 0
    %v8716 = vsel %vm63, %v8479, 0
    %v8719 = vsel %vm63, %v8480, 0
    %v8722 = vsel %vm63, %v8481, 0
    %v8725 = vsel %vm63, %v8482, 0
    %v8728 = vsel %vm63, %v8483, 0
    %v8731 = vsel %vm63, %v8484, 0
    %v8734 = vsel %vm63, %v8485, 0
    %v8737 = vsel %vm63, %v8486, 0
    %v8740 = vsel %vm63, %v8487, 0
    %v8743 = vsel %vm63, %v8488, 0
    %v8746 = vsel %vm63, %v8489, 0
    %v8749 = vsel %vm63, %v8490, 0
    %v8752 = vsel %vm63, %v8491, 0
    %v8755 = vsel %vm63, %v8492, 0
    %v8758 = vsel %vm63, %v8493, 0
    %v8761 = vsel %vm63, %v8494, 0
    %v8764 = vsel %vm63, %v8495, 0
    %v8767 = vsel %vm63, %v8496, 0
    %8769 = vmatpush.msra.mxu0 0.0
    %8770 = vmatpush.msra.mxu0 0.0
    %8771 = vmatpush.msra.mxu0 0.0
    %8772 = vmatpush.msra.mxu0 0.0
    %8773 = vmatpush.msra.mxu0 0.0
    %8774 = vmatpush.msra.mxu0 0.0
    %8775 = vmatpush.msra.mxu0 0.0
    %8776 = vmatpush.msra.mxu0 0.0
    %8777 = vmatpush.msra.mxu0 0.0
    %8778 = vmatpush.msra.mxu0 0.0
    %8779 = vmatpush.msra.mxu0 0.0
    %8780 = vmatpush.msra.mxu0 0.0
    %8781 = vmatpush.msra.mxu0 0.0
    %8782 = vmatpush.msra.mxu0 0.0
    %8783 = vmatpush.msra.mxu0 %v8498
    %8784 = vmatpush.msra.mxu0 %v8497
    %8785 = vmatmul.f32.gmra.mxu0 %v8695
    %v8786 = vpop.f32.mrf.mxu0
    %v8787 = vadd.f32 %v8620, %v8786
    %8788 = vmatmul.f32.gmra.mxu0 %v8698
    %v8789 = vpop.f32.mrf.mxu0
    %v8790 = vadd.f32 %v8623, %v8789
    %8791 = vmatmul.f32.gmra.mxu0 %v8701
    %v8792 = vpop.f32.mrf.mxu0
    %v8793 = vadd.f32 %v8626, %v8792
    %8794 = vmatmul.f32.gmra.mxu0 %v8704
    %v8795 = vpop.f32.mrf.mxu0
    %v8796 = vadd.f32 %v8629, %v8795
    %8797 = vmatmul.f32.gmra.mxu0 %v8707
    %v8798 = vpop.f32.mrf.mxu0
    %v8799 = vadd.f32 %v8632, %v8798
    %8800 = vmatmul.f32.gmra.mxu0 %v8710
    %v8801 = vpop.f32.mrf.mxu0
    %v8802 = vadd.f32 %v8635, %v8801
    %8803 = vmatmul.f32.gmra.mxu0 %v8713
    %v8804 = vpop.f32.mrf.mxu0
    %v8805 = vadd.f32 %v8638, %v8804
    %8806 = vmatmul.f32.gmra.mxu0 %v8716
    %v8807 = vpop.f32.mrf.mxu0
    %v8808 = vadd.f32 %v8641, %v8807
    %8809 = vmatmul.f32.gmra.mxu0 %v8719
    %v8810 = vpop.f32.mrf.mxu0
    %v8811 = vadd.f32 %v8644, %v8810
    %8812 = vmatmul.f32.gmra.mxu0 %v8722
    %v8813 = vpop.f32.mrf.mxu0
    %v8814 = vadd.f32 %v8647, %v8813
    %8815 = vmatmul.f32.gmra.mxu0 %v8725
    %v8816 = vpop.f32.mrf.mxu0
    %v8817 = vadd.f32 %v8650, %v8816
    %8818 = vmatmul.f32.gmra.mxu0 %v8728
    %v8819 = vpop.f32.mrf.mxu0
    %v8820 = vadd.f32 %v8653, %v8819
    %8821 = vmatmul.f32.gmra.mxu0 %v8731
    %v8822 = vpop.f32.mrf.mxu0
    %v8823 = vadd.f32 %v8656, %v8822
    %8824 = vmatmul.f32.gmra.mxu0 %v8734
    %v8825 = vpop.f32.mrf.mxu0
    %v8826 = vadd.f32 %v8659, %v8825
    %8827 = vmatmul.f32.gmra.mxu0 %v8737
    %v8828 = vpop.f32.mrf.mxu0
    %v8829 = vadd.f32 %v8662, %v8828
    %8830 = vmatmul.f32.gmra.mxu0 %v8740
    %v8831 = vpop.f32.mrf.mxu0
    %v8832 = vadd.f32 %v8665, %v8831
    %8833 = vmatmul.f32.gmra.mxu0 %v8743
    %v8834 = vpop.f32.mrf.mxu0
    %v8835 = vadd.f32 %v8668, %v8834
    %8836 = vmatmul.f32.gmra.mxu0 %v8746
    %v8837 = vpop.f32.mrf.mxu0
    %v8838 = vadd.f32 %v8671, %v8837
    %8839 = vmatmul.f32.gmra.mxu0 %v8749
    %v8840 = vpop.f32.mrf.mxu0
    %v8841 = vadd.f32 %v8674, %v8840
    %8842 = vmatmul.f32.gmra.mxu0 %v8752
    %v8843 = vpop.f32.mrf.mxu0
    %v8844 = vadd.f32 %v8677, %v8843
    %8845 = vmatmul.f32.gmra.mxu0 %v8755
    %v8846 = vpop.f32.mrf.mxu0
    %v8847 = vadd.f32 %v8680, %v8846
    %8848 = vmatmul.f32.gmra.mxu0 %v8758
    %v8849 = vpop.f32.mrf.mxu0
    %v8850 = vadd.f32 %v8683, %v8849
    %8851 = vmatmul.f32.gmra.mxu0 %v8761
    %v8852 = vpop.f32.mrf.mxu0
    %v8853 = vadd.f32 %v8686, %v8852
    %8854 = vmatmul.f32.gmra.mxu0 %v8764
    %v8855 = vpop.f32.mrf.mxu0
    %v8856 = vadd.f32 %v8689, %v8855
    %8857 = vmatmul.f32.gmra.mxu0 %v8767
    %v8858 = vpop.f32.mrf.mxu0
    %v8859 = vadd.f32 %v8692, %v8858
    %8860 = vdwg.mxu0
    %v8861 = vld [vmem:[#allocation3 + $0x7] sm:$0xff]
    %v8862 = vld [vmem:[#allocation3 + $0xf] sm:$0xff]
    %v8863 = vld [vmem:[#allocation3 + $0x17] sm:$0xff]
    %v8864 = vld [vmem:[#allocation3 + $0x1f] sm:$0xff]
    %v8865 = vld [vmem:[#allocation3 + $0x27] sm:$0xff]
    %v8866 = vld [vmem:[#allocation3 + $0x2f] sm:$0xff]
    %v8867 = vld [vmem:[#allocation3 + $0x37] sm:$0xff]
    %v8868 = vld [vmem:[#allocation3 + $0x3f] sm:$0xff]
    %v8869 = vld [vmem:[#allocation3 + $0x47] sm:$0xff]
    %v8870 = vld [vmem:[#allocation3 + $0x4f] sm:$0xff]
    %v8871 = vld [vmem:[#allocation3 + $0x57] sm:$0xff]
    %v8872 = vld [vmem:[#allocation3 + $0x5f] sm:$0xff]
    %v8873 = vld [vmem:[#allocation3 + $0x67] sm:$0xff]
    %v8874 = vld [vmem:[#allocation3 + $0x6f] sm:$0xff]
    %v8875 = vld [vmem:[#allocation3 + $0x77] sm:$0xff]
    %v8876 = vld [vmem:[#allocation3 + $0x7f] sm:$0xff]
    %v8877 = vld [vmem:[#allocation3 + $0x87] sm:$0xff]
    %v8878 = vld [vmem:[#allocation3 + $0x8f] sm:$0xff]
    %v8879 = vld [vmem:[#allocation3 + $0x97] sm:$0xff]
    %v8880 = vld [vmem:[#allocation3 + $0x9f] sm:$0xff]
    %v8881 = vld [vmem:[#allocation3 + $0xa7] sm:$0xff]
    %v8882 = vld [vmem:[#allocation3 + $0xaf] sm:$0xff]
    %v8883 = vld [vmem:[#allocation3 + $0xb7] sm:$0xff]
    %v8884 = vld [vmem:[#allocation3 + $0xbf] sm:$0xff]
    %v8885 = vld [vmem:[#allocation3 + $0xc7] sm:$0xff]
    %s8886 = scalar_lea.vmem %s10, 32
    %v8887 = vld [vmem:[%s8886] sm:$0xff]
    %v8888 = vld [vmem:[%s8886 + $0x8] sm:$0xff]
    %v8890 = vsel %vm63, %v8861, 0
    %v8893 = vsel %vm63, %v8862, 0
    %v8896 = vsel %vm63, %v8863, 0
    %v8899 = vsel %vm63, %v8864, 0
    %v8902 = vsel %vm63, %v8865, 0
    %v8905 = vsel %vm63, %v8866, 0
    %v8908 = vsel %vm63, %v8867, 0
    %v8911 = vsel %vm63, %v8868, 0
    %v8914 = vsel %vm63, %v8869, 0
    %v8917 = vsel %vm63, %v8870, 0
    %v8920 = vsel %vm63, %v8871, 0
    %v8923 = vsel %vm63, %v8872, 0
    %v8926 = vsel %vm63, %v8873, 0
    %v8929 = vsel %vm63, %v8874, 0
    %v8932 = vsel %vm63, %v8875, 0
    %v8935 = vsel %vm63, %v8876, 0
    %v8938 = vsel %vm63, %v8877, 0
    %v8941 = vsel %vm63, %v8878, 0
    %v8944 = vsel %vm63, %v8879, 0
    %v8947 = vsel %vm63, %v8880, 0
    %v8950 = vsel %vm63, %v8881, 0
    %v8953 = vsel %vm63, %v8882, 0
    %v8956 = vsel %vm63, %v8883, 0
    %v8959 = vsel %vm63, %v8884, 0
    %v8962 = vsel %vm63, %v8885, 0
    %8964 = vmatpush.msra.mxu0 0.0
    %8965 = vmatpush.msra.mxu0 0.0
    %8966 = vmatpush.msra.mxu0 0.0
    %8967 = vmatpush.msra.mxu0 0.0
    %8968 = vmatpush.msra.mxu0 0.0
    %8969 = vmatpush.msra.mxu0 0.0
    %8970 = vmatpush.msra.mxu0 0.0
    %8971 = vmatpush.msra.mxu0 0.0
    %8972 = vmatpush.msra.mxu0 0.0
    %8973 = vmatpush.msra.mxu0 0.0
    %8974 = vmatpush.msra.mxu0 0.0
    %8975 = vmatpush.msra.mxu0 0.0
    %8976 = vmatpush.msra.mxu0 0.0
    %8977 = vmatpush.msra.mxu0 0.0
    %8978 = vmatpush.msra.mxu0 %v8888
    %8979 = vmatpush.msra.mxu0 %v8887
    %8980 = vmatmul.f32.gmra.mxu0 %v8890
    %v8981 = vpop.f32.mrf.mxu0
    %v8982 = vadd.f32 0.0, %v8981
    %8983 = vmatmul.f32.gmra.mxu0 %v8893
    %v8984 = vpop.f32.mrf.mxu0
    %v8985 = vadd.f32 0.0, %v8984
    %8986 = vmatmul.f32.gmra.mxu0 %v8896
    %v8987 = vpop.f32.mrf.mxu0
    %v8988 = vadd.f32 0.0, %v8987
    %8989 = vmatmul.f32.gmra.mxu0 %v8899
    %v8990 = vpop.f32.mrf.mxu0
    %v8991 = vadd.f32 0.0, %v8990
    %8992 = vmatmul.f32.gmra.mxu0 %v8902
    %v8993 = vpop.f32.mrf.mxu0
    %v8994 = vadd.f32 0.0, %v8993
    %8995 = vmatmul.f32.gmra.mxu0 %v8905
    %v8996 = vpop.f32.mrf.mxu0
    %v8997 = vadd.f32 0.0, %v8996
    %8998 = vmatmul.f32.gmra.mxu0 %v8908
    %v8999 = vpop.f32.mrf.mxu0
    %v9000 = vadd.f32 0.0, %v8999
    %9001 = vmatmul.f32.gmra.mxu0 %v8911
    %v9002 = vpop.f32.mrf.mxu0
    %v9003 = vadd.f32 0.0, %v9002
    %9004 = vmatmul.f32.gmra.mxu0 %v8914
    %v9005 = vpop.f32.mrf.mxu0
    %v9006 = vadd.f32 0.0, %v9005
    %9007 = vmatmul.f32.gmra.mxu0 %v8917
    %v9008 = vpop.f32.mrf.mxu0
    %v9009 = vadd.f32 0.0, %v9008
    %9010 = vmatmul.f32.gmra.mxu0 %v8920
    %v9011 = vpop.f32.mrf.mxu0
    %v9012 = vadd.f32 0.0, %v9011
    %9013 = vmatmul.f32.gmra.mxu0 %v8923
    %v9014 = vpop.f32.mrf.mxu0
    %v9015 = vadd.f32 0.0, %v9014
    %9016 = vmatmul.f32.gmra.mxu0 %v8926
    %v9017 = vpop.f32.mrf.mxu0
    %v9018 = vadd.f32 0.0, %v9017
    %9019 = vmatmul.f32.gmra.mxu0 %v8929
    %v9020 = vpop.f32.mrf.mxu0
    %v9021 = vadd.f32 0.0, %v9020
    %9022 = vmatmul.f32.gmra.mxu0 %v8932
    %v9023 = vpop.f32.mrf.mxu0
    %v9024 = vadd.f32 0.0, %v9023
    %9025 = vmatmul.f32.gmra.mxu0 %v8935
    %v9026 = vpop.f32.mrf.mxu0
    %v9027 = vadd.f32 0.0, %v9026
    %9028 = vmatmul.f32.gmra.mxu0 %v8938
    %v9029 = vpop.f32.mrf.mxu0
    %v9030 = vadd.f32 0.0, %v9029
    %9031 = vmatmul.f32.gmra.mxu0 %v8941
    %v9032 = vpop.f32.mrf.mxu0
    %v9033 = vadd.f32 0.0, %v9032
    %9034 = vmatmul.f32.gmra.mxu0 %v8944
    %v9035 = vpop.f32.mrf.mxu0
    %v9036 = vadd.f32 0.0, %v9035
    %9037 = vmatmul.f32.gmra.mxu0 %v8947
    %v9038 = vpop.f32.mrf.mxu0
    %v9039 = vadd.f32 0.0, %v9038
    %9040 = vmatmul.f32.gmra.mxu0 %v8950
    %v9041 = vpop.f32.mrf.mxu0
    %v9042 = vadd.f32 0.0, %v9041
    %9043 = vmatmul.f32.gmra.mxu0 %v8953
    %v9044 = vpop.f32.mrf.mxu0
    %v9045 = vadd.f32 0.0, %v9044
    %9046 = vmatmul.f32.gmra.mxu0 %v8956
    %v9047 = vpop.f32.mrf.mxu0
    %v9048 = vadd.f32 0.0, %v9047
    %9049 = vmatmul.f32.gmra.mxu0 %v8959
    %v9050 = vpop.f32.mrf.mxu0
    %v9051 = vadd.f32 0.0, %v9050
    %9052 = vmatmul.f32.gmra.mxu0 %v8962
    %v9053 = vpop.f32.mrf.mxu0
    %v9054 = vadd.f32 0.0, %v9053
    %9055 = vdwg.mxu0
    %v9056 = vadd.f32 %v8787, %v8982
    %v9057 = vadd.f32 %v8790, %v8985
    %v9058 = vadd.f32 %v8793, %v8988
    %v9059 = vadd.f32 %v8796, %v8991
    %v9060 = vadd.f32 %v8799, %v8994
    %v9061 = vadd.f32 %v8802, %v8997
    %v9062 = vadd.f32 %v8805, %v9000
    %v9063 = vadd.f32 %v8808, %v9003
    %v9064 = vadd.f32 %v8811, %v9006
    %v9065 = vadd.f32 %v8814, %v9009
    %v9066 = vadd.f32 %v8817, %v9012
    %v9067 = vadd.f32 %v8820, %v9015
    %v9068 = vadd.f32 %v8823, %v9018
    %v9069 = vadd.f32 %v8826, %v9021
    %v9070 = vadd.f32 %v8829, %v9024
    %v9071 = vadd.f32 %v8832, %v9027
    %v9072 = vadd.f32 %v8835, %v9030
    %v9073 = vadd.f32 %v8838, %v9033
    %v9074 = vadd.f32 %v8841, %v9036
    %v9075 = vadd.f32 %v8844, %v9039
    %v9076 = vadd.f32 %v8847, %v9042
    %v9077 = vadd.f32 %v8850, %v9045
    %v9078 = vadd.f32 %v8853, %v9048
    %v9079 = vadd.f32 %v8856, %v9051
    %v9080 = vadd.f32 %v8859, %v9054
    %v9081 = vld [vmem:[#allocation3 + $0xf] sm:$0xff]
    %v9082 = vld [vmem:[#allocation3 + $0x17] sm:$0xff]
    %v9083 = vld [vmem:[#allocation3 + $0x1f] sm:$0xff]
    %v9084 = vld [vmem:[#allocation3 + $0x27] sm:$0xff]
    %v9085 = vld [vmem:[#allocation3 + $0x2f] sm:$0xff]
    %v9086 = vld [vmem:[#allocation3 + $0x37] sm:$0xff]
    %v9087 = vld [vmem:[#allocation3 + $0x3f] sm:$0xff]
    %v9088 = vld [vmem:[#allocation3 + $0x47] sm:$0xff]
    %v9089 = vld [vmem:[#allocation3 + $0x4f] sm:$0xff]
    %v9090 = vld [vmem:[#allocation3 + $0x57] sm:$0xff]
    %v9091 = vld [vmem:[#allocation3 + $0x5f] sm:$0xff]
    %v9092 = vld [vmem:[#allocation3 + $0x67] sm:$0xff]
    %v9093 = vld [vmem:[#allocation3 + $0x6f] sm:$0xff]
    %v9094 = vld [vmem:[#allocation3 + $0x77] sm:$0xff]
    %v9095 = vld [vmem:[#allocation3 + $0x7f] sm:$0xff]
    %v9096 = vld [vmem:[#allocation3 + $0x87] sm:$0xff]
    %v9097 = vld [vmem:[#allocation3 + $0x8f] sm:$0xff]
    %v9098 = vld [vmem:[#allocation3 + $0x97] sm:$0xff]
    %v9099 = vld [vmem:[#allocation3 + $0x9f] sm:$0xff]
    %v9100 = vld [vmem:[#allocation3 + $0xa7] sm:$0xff]
    %v9101 = vld [vmem:[#allocation3 + $0xaf] sm:$0xff]
    %v9102 = vld [vmem:[#allocation3 + $0xb7] sm:$0xff]
    %v9103 = vld [vmem:[#allocation3 + $0xbf] sm:$0xff]
    %v9104 = vld [vmem:[#allocation3 + $0xc7] sm:$0xff]
    %v9105 = vld [vmem:[#allocation3 + $0xcf] sm:$0xff]
    %s9106 = scalar_lea.vmem %s10, 48
    %v9107 = vld [vmem:[%s9106] sm:$0xff]
    %v9108 = vld [vmem:[%s9106 + $0x8] sm:$0xff]
    %v9110 = vsel %vm63, %v9081, 0
    %v9113 = vsel %vm63, %v9082, 0
    %v9116 = vsel %vm63, %v9083, 0
    %v9119 = vsel %vm63, %v9084, 0
    %v9122 = vsel %vm63, %v9085, 0
    %v9125 = vsel %vm63, %v9086, 0
    %v9128 = vsel %vm63, %v9087, 0
    %v9131 = vsel %vm63, %v9088, 0
    %v9134 = vsel %vm63, %v9089, 0
    %v9137 = vsel %vm63, %v9090, 0
    %v9140 = vsel %vm63, %v9091, 0
    %v9143 = vsel %vm63, %v9092, 0
    %v9146 = vsel %vm63, %v9093, 0
    %v9149 = vsel %vm63, %v9094, 0
    %v9152 = vsel %vm63, %v9095, 0
    %v9155 = vsel %vm63, %v9096, 0
    %v9158 = vsel %vm63, %v9097, 0
    %v9161 = vsel %vm63, %v9098, 0
    %v9164 = vsel %vm63, %v9099, 0
    %v9167 = vsel %vm63, %v9100, 0
    %v9170 = vsel %vm63, %v9101, 0
    %v9173 = vsel %vm63, %v9102, 0
    %v9176 = vsel %vm63, %v9103, 0
    %v9179 = vsel %vm63, %v9104, 0
    %v9182 = vsel %vm63, %v9105, 0
    %9184 = vmatpush.msra.mxu0 0.0
    %9185 = vmatpush.msra.mxu0 0.0
    %9186 = vmatpush.msra.mxu0 0.0
    %9187 = vmatpush.msra.mxu0 0.0
    %9188 = vmatpush.msra.mxu0 0.0
    %9189 = vmatpush.msra.mxu0 0.0
    %9190 = vmatpush.msra.mxu0 0.0
    %9191 = vmatpush.msra.mxu0 0.0
    %9192 = vmatpush.msra.mxu0 0.0
    %9193 = vmatpush.msra.mxu0 0.0
    %9194 = vmatpush.msra.mxu0 0.0
    %9195 = vmatpush.msra.mxu0 0.0
    %9196 = vmatpush.msra.mxu0 0.0
    %9197 = vmatpush.msra.mxu0 0.0
    %9198 = vmatpush.msra.mxu0 %v9108
    %9199 = vmatpush.msra.mxu0 %v9107
    %9200 = vmatmul.f32.gmra.mxu0 %v9110
    %v9201 = vpop.f32.mrf.mxu0
    %v9202 = vadd.f32 0.0, %v9201
    %9203 = vmatmul.f32.gmra.mxu0 %v9113
    %v9204 = vpop.f32.mrf.mxu0
    %v9205 = vadd.f32 0.0, %v9204
    %9206 = vmatmul.f32.gmra.mxu0 %v9116
    %v9207 = vpop.f32.mrf.mxu0
    %v9208 = vadd.f32 0.0, %v9207
    %9209 = vmatmul.f32.gmra.mxu0 %v9119
    %v9210 = vpop.f32.mrf.mxu0
    %v9211 = vadd.f32 0.0, %v9210
    %9212 = vmatmul.f32.gmra.mxu0 %v9122
    %v9213 = vpop.f32.mrf.mxu0
    %v9214 = vadd.f32 0.0, %v9213
    %9215 = vmatmul.f32.gmra.mxu0 %v9125
    %v9216 = vpop.f32.mrf.mxu0
    %v9217 = vadd.f32 0.0, %v9216
    %9218 = vmatmul.f32.gmra.mxu0 %v9128
    %v9219 = vpop.f32.mrf.mxu0
    %v9220 = vadd.f32 0.0, %v9219
    %9221 = vmatmul.f32.gmra.mxu0 %v9131
    %v9222 = vpop.f32.mrf.mxu0
    %v9223 = vadd.f32 0.0, %v9222
    %9224 = vmatmul.f32.gmra.mxu0 %v9134
    %v9225 = vpop.f32.mrf.mxu0
    %v9226 = vadd.f32 0.0, %v9225
    %9227 = vmatmul.f32.gmra.mxu0 %v9137
    %v9228 = vpop.f32.mrf.mxu0
    %v9229 = vadd.f32 0.0, %v9228
    %9230 = vmatmul.f32.gmra.mxu0 %v9140
    %v9231 = vpop.f32.mrf.mxu0
    %v9232 = vadd.f32 0.0, %v9231
    %9233 = vmatmul.f32.gmra.mxu0 %v9143
    %v9234 = vpop.f32.mrf.mxu0
    %v9235 = vadd.f32 0.0, %v9234
    %9236 = vmatmul.f32.gmra.mxu0 %v9146
    %v9237 = vpop.f32.mrf.mxu0
    %v9238 = vadd.f32 0.0, %v9237
    %9239 = vmatmul.f32.gmra.mxu0 %v9149
    %v9240 = vpop.f32.mrf.mxu0
    %v9241 = vadd.f32 0.0, %v9240
    %9242 = vmatmul.f32.gmra.mxu0 %v9152
    %v9243 = vpop.f32.mrf.mxu0
    %v9244 = vadd.f32 0.0, %v9243
    %9245 = vmatmul.f32.gmra.mxu0 %v9155
    %v9246 = vpop.f32.mrf.mxu0
    %v9247 = vadd.f32 0.0, %v9246
    %9248 = vmatmul.f32.gmra.mxu0 %v9158
    %v9249 = vpop.f32.mrf.mxu0
    %v9250 = vadd.f32 0.0, %v9249
    %9251 = vmatmul.f32.gmra.mxu0 %v9161
    %v9252 = vpop.f32.mrf.mxu0
    %v9253 = vadd.f32 0.0, %v9252
    %9254 = vmatmul.f32.gmra.mxu0 %v9164
    %v9255 = vpop.f32.mrf.mxu0
    %v9256 = vadd.f32 0.0, %v9255
    %9257 = vmatmul.f32.gmra.mxu0 %v9167
    %v9258 = vpop.f32.mrf.mxu0
    %v9259 = vadd.f32 0.0, %v9258
    %9260 = vmatmul.f32.gmra.mxu0 %v9170
    %v9261 = vpop.f32.mrf.mxu0
    %v9262 = vadd.f32 0.0, %v9261
    %9263 = vmatmul.f32.gmra.mxu0 %v9173
    %v9264 = vpop.f32.mrf.mxu0
    %v9265 = vadd.f32 0.0, %v9264
    %9266 = vmatmul.f32.gmra.mxu0 %v9176
    %v9267 = vpop.f32.mrf.mxu0
    %v9268 = vadd.f32 0.0, %v9267
    %9269 = vmatmul.f32.gmra.mxu0 %v9179
    %v9270 = vpop.f32.mrf.mxu0
    %v9271 = vadd.f32 0.0, %v9270
    %9272 = vmatmul.f32.gmra.mxu0 %v9182
    %v9273 = vpop.f32.mrf.mxu0
    %v9274 = vadd.f32 0.0, %v9273
    %9275 = vdwg.mxu0
    %v9276 = vadd.f32 %v9056, %v9202
    %v9277 = vadd.f32 %v9057, %v9205
    %v9278 = vadd.f32 %v9058, %v9208
    %v9279 = vadd.f32 %v9059, %v9211
    %v9280 = vadd.f32 %v9060, %v9214
    %v9281 = vadd.f32 %v9061, %v9217
    %v9282 = vadd.f32 %v9062, %v9220
    %v9283 = vadd.f32 %v9063, %v9223
    %v9284 = vadd.f32 %v9064, %v9226
    %v9285 = vadd.f32 %v9065, %v9229
    %v9286 = vadd.f32 %v9066, %v9232
    %v9287 = vadd.f32 %v9067, %v9235
    %v9288 = vadd.f32 %v9068, %v9238
    %v9289 = vadd.f32 %v9069, %v9241
    %v9290 = vadd.f32 %v9070, %v9244
    %v9291 = vadd.f32 %v9071, %v9247
    %v9292 = vadd.f32 %v9072, %v9250
    %v9293 = vadd.f32 %v9073, %v9253
    %v9294 = vadd.f32 %v9074, %v9256
    %v9295 = vadd.f32 %v9075, %v9259
    %v9296 = vadd.f32 %v9076, %v9262
    %v9297 = vadd.f32 %v9077, %v9265
    %v9298 = vadd.f32 %v9078, %v9268
    %v9299 = vadd.f32 %v9079, %v9271
    %v9300 = vadd.f32 %v9080, %v9274
    %v9301 = vld [vmem:[#allocation3 + $0x10] sm:$0xff]
    %v9302 = vld [vmem:[#allocation3 + $0x18] sm:$0xff]
    %v9303 = vld [vmem:[#allocation3 + $0x20] sm:$0xff]
    %v9304 = vld [vmem:[#allocation3 + $0x28] sm:$0xff]
    %v9305 = vld [vmem:[#allocation3 + $0x30] sm:$0xff]
    %v9306 = vld [vmem:[#allocation3 + $0x38] sm:$0xff]
    %v9307 = vld [vmem:[#allocation3 + $0x40] sm:$0xff]
    %v9308 = vld [vmem:[#allocation3 + $0x48] sm:$0xff]
    %v9309 = vld [vmem:[#allocation3 + $0x50] sm:$0xff]
    %v9310 = vld [vmem:[#allocation3 + $0x58] sm:$0xff]
    %v9311 = vld [vmem:[#allocation3 + $0x60] sm:$0xff]
    %v9312 = vld [vmem:[#allocation3 + $0x68] sm:$0xff]
    %v9313 = vld [vmem:[#allocation3 + $0x70] sm:$0xff]
    %v9314 = vld [vmem:[#allocation3 + $0x78] sm:$0xff]
    %v9315 = vld [vmem:[#allocation3 + $0x80] sm:$0xff]
    %v9316 = vld [vmem:[#allocation3 + $0x88] sm:$0xff]
    %v9317 = vld [vmem:[#allocation3 + $0x90] sm:$0xff]
    %v9318 = vld [vmem:[#allocation3 + $0x98] sm:$0xff]
    %v9319 = vld [vmem:[#allocation3 + $0xa0] sm:$0xff]
    %v9320 = vld [vmem:[#allocation3 + $0xa8] sm:$0xff]
    %v9321 = vld [vmem:[#allocation3 + $0xb0] sm:$0xff]
    %v9322 = vld [vmem:[#allocation3 + $0xb8] sm:$0xff]
    %v9323 = vld [vmem:[#allocation3 + $0xc0] sm:$0xff]
    %v9324 = vld [vmem:[#allocation3 + $0xc8] sm:$0xff]
    %v9325 = vld [vmem:[#allocation3 + $0xd0] sm:$0xff]
    %s9326 = scalar_lea.vmem %s10, 64
    %v9327 = vld [vmem:[%s9326] sm:$0xff]
    %v9328 = vld [vmem:[%s9326 + $0x8] sm:$0xff]
    %v9330 = vsel %vm63, %v9301, 0
    %v9333 = vsel %vm63, %v9302, 0
    %v9336 = vsel %vm63, %v9303, 0
    %v9339 = vsel %vm63, %v9304, 0
    %v9342 = vsel %vm63, %v9305, 0
    %v9345 = vsel %vm63, %v9306, 0
    %v9348 = vsel %vm63, %v9307, 0
    %v9351 = vsel %vm63, %v9308, 0
    %v9354 = vsel %vm63, %v9309, 0
    %v9357 = vsel %vm63, %v9310, 0
    %v9360 = vsel %vm63, %v9311, 0
    %v9363 = vsel %vm63, %v9312, 0
    %v9366 = vsel %vm63, %v9313, 0
    %v9369 = vsel %vm63, %v9314, 0
    %v9372 = vsel %vm63, %v9315, 0
    %v9375 = vsel %vm63, %v9316, 0
    %v9378 = vsel %vm63, %v9317, 0
    %v9381 = vsel %vm63, %v9318, 0
    %v9384 = vsel %vm63, %v9319, 0
    %v9387 = vsel %vm63, %v9320, 0
    %v9390 = vsel %vm63, %v9321, 0
    %v9393 = vsel %vm63, %v9322, 0
    %v9396 = vsel %vm63, %v9323, 0
    %v9399 = vsel %vm63, %v9324, 0
    %v9402 = vsel %vm63, %v9325, 0
    %9404 = vmatpush.msra.mxu0 0.0
    %9405 = vmatpush.msra.mxu0 0.0
    %9406 = vmatpush.msra.mxu0 0.0
    %9407 = vmatpush.msra.mxu0 0.0
    %9408 = vmatpush.msra.mxu0 0.0
    %9409 = vmatpush.msra.mxu0 0.0
    %9410 = vmatpush.msra.mxu0 0.0
    %9411 = vmatpush.msra.mxu0 0.0
    %9412 = vmatpush.msra.mxu0 0.0
    %9413 = vmatpush.msra.mxu0 0.0
    %9414 = vmatpush.msra.mxu0 0.0
    %9415 = vmatpush.msra.mxu0 0.0
    %9416 = vmatpush.msra.mxu0 0.0
    %9417 = vmatpush.msra.mxu0 0.0
    %9418 = vmatpush.msra.mxu0 %v9328
    %9419 = vmatpush.msra.mxu0 %v9327
    %9420 = vmatmul.f32.gmra.mxu0 %v9330
    %v9421 = vpop.f32.mrf.mxu0
    %v9422 = vadd.f32 0.0, %v9421
    %9423 = vmatmul.f32.gmra.mxu0 %v9333
    %v9424 = vpop.f32.mrf.mxu0
    %v9425 = vadd.f32 0.0, %v9424
    %9426 = vmatmul.f32.gmra.mxu0 %v9336
    %v9427 = vpop.f32.mrf.mxu0
    %v9428 = vadd.f32 0.0, %v9427
    %9429 = vmatmul.f32.gmra.mxu0 %v9339
    %v9430 = vpop.f32.mrf.mxu0
    %v9431 = vadd.f32 0.0, %v9430
    %9432 = vmatmul.f32.gmra.mxu0 %v9342
    %v9433 = vpop.f32.mrf.mxu0
    %v9434 = vadd.f32 0.0, %v9433
    %9435 = vmatmul.f32.gmra.mxu0 %v9345
    %v9436 = vpop.f32.mrf.mxu0
    %v9437 = vadd.f32 0.0, %v9436
    %9438 = vmatmul.f32.gmra.mxu0 %v9348
    %v9439 = vpop.f32.mrf.mxu0
    %v9440 = vadd.f32 0.0, %v9439
    %9441 = vmatmul.f32.gmra.mxu0 %v9351
    %v9442 = vpop.f32.mrf.mxu0
    %v9443 = vadd.f32 0.0, %v9442
    %9444 = vmatmul.f32.gmra.mxu0 %v9354
    %v9445 = vpop.f32.mrf.mxu0
    %v9446 = vadd.f32 0.0, %v9445
    %9447 = vmatmul.f32.gmra.mxu0 %v9357
    %v9448 = vpop.f32.mrf.mxu0
    %v9449 = vadd.f32 0.0, %v9448
    %9450 = vmatmul.f32.gmra.mxu0 %v9360
    %v9451 = vpop.f32.mrf.mxu0
    %v9452 = vadd.f32 0.0, %v9451
    %9453 = vmatmul.f32.gmra.mxu0 %v9363
    %v9454 = vpop.f32.mrf.mxu0
    %v9455 = vadd.f32 0.0, %v9454
    %9456 = vmatmul.f32.gmra.mxu0 %v9366
    %v9457 = vpop.f32.mrf.mxu0
    %v9458 = vadd.f32 0.0, %v9457
    %9459 = vmatmul.f32.gmra.mxu0 %v9369
    %v9460 = vpop.f32.mrf.mxu0
    %v9461 = vadd.f32 0.0, %v9460
    %9462 = vmatmul.f32.gmra.mxu0 %v9372
    %v9463 = vpop.f32.mrf.mxu0
    %v9464 = vadd.f32 0.0, %v9463
    %9465 = vmatmul.f32.gmra.mxu0 %v9375
    %v9466 = vpop.f32.mrf.mxu0
    %v9467 = vadd.f32 0.0, %v9466
    %9468 = vmatmul.f32.gmra.mxu0 %v9378
    %v9469 = vpop.f32.mrf.mxu0
    %v9470 = vadd.f32 0.0, %v9469
    %9471 = vmatmul.f32.gmra.mxu0 %v9381
    %v9472 = vpop.f32.mrf.mxu0
    %v9473 = vadd.f32 0.0, %v9472
    %9474 = vmatmul.f32.gmra.mxu0 %v9384
    %v9475 = vpop.f32.mrf.mxu0
    %v9476 = vadd.f32 0.0, %v9475
    %9477 = vmatmul.f32.gmra.mxu0 %v9387
    %v9478 = vpop.f32.mrf.mxu0
    %v9479 = vadd.f32 0.0, %v9478
    %9480 = vmatmul.f32.gmra.mxu0 %v9390
    %v9481 = vpop.f32.mrf.mxu0
    %v9482 = vadd.f32 0.0, %v9481
    %9483 = vmatmul.f32.gmra.mxu0 %v9393
    %v9484 = vpop.f32.mrf.mxu0
    %v9485 = vadd.f32 0.0, %v9484
    %9486 = vmatmul.f32.gmra.mxu0 %v9396
    %v9487 = vpop.f32.mrf.mxu0
    %v9488 = vadd.f32 0.0, %v9487
    %9489 = vmatmul.f32.gmra.mxu0 %v9399
    %v9490 = vpop.f32.mrf.mxu0
    %v9491 = vadd.f32 0.0, %v9490
    %9492 = vmatmul.f32.gmra.mxu0 %v9402
    %v9493 = vpop.f32.mrf.mxu0
    %v9494 = vadd.f32 0.0, %v9493
    %9495 = vdwg.mxu0
    %v9496 = vadd.f32 %v9276, %v9422
    %v9497 = vadd.f32 %v9277, %v9425
    %v9498 = vadd.f32 %v9278, %v9428
    %v9499 = vadd.f32 %v9279, %v9431
    %v9500 = vadd.f32 %v9280, %v9434
    %v9501 = vadd.f32 %v9281, %v9437
    %v9502 = vadd.f32 %v9282, %v9440
    %v9503 = vadd.f32 %v9283, %v9443
    %v9504 = vadd.f32 %v9284, %v9446
    %v9505 = vadd.f32 %v9285, %v9449
    %v9506 = vadd.f32 %v9286, %v9452
    %v9507 = vadd.f32 %v9287, %v9455
    %v9508 = vadd.f32 %v9288, %v9458
    %v9509 = vadd.f32 %v9289, %v9461
    %v9510 = vadd.f32 %v9290, %v9464
    %v9511 = vadd.f32 %v9291, %v9467
    %v9512 = vadd.f32 %v9292, %v9470
    %v9513 = vadd.f32 %v9293, %v9473
    %v9514 = vadd.f32 %v9294, %v9476
    %v9515 = vadd.f32 %v9295, %v9479
    %v9516 = vadd.f32 %v9296, %v9482
    %v9517 = vadd.f32 %v9297, %v9485
    %v9518 = vadd.f32 %v9298, %v9488
    %v9519 = vadd.f32 %v9299, %v9491
    %v9520 = vadd.f32 %v9300, %v9494
    %v9521 = vld [vmem:[#allocation3 + $0x11] sm:$0xff]
    %v9522 = vld [vmem:[#allocation3 + $0x19] sm:$0xff]
    %v9523 = vld [vmem:[#allocation3 + $0x21] sm:$0xff]
    %v9524 = vld [vmem:[#allocation3 + $0x29] sm:$0xff]
    %v9525 = vld [vmem:[#allocation3 + $0x31] sm:$0xff]
    %v9526 = vld [vmem:[#allocation3 + $0x39] sm:$0xff]
    %v9527 = vld [vmem:[#allocation3 + $0x41] sm:$0xff]
    %v9528 = vld [vmem:[#allocation3 + $0x49] sm:$0xff]
    %v9529 = vld [vmem:[#allocation3 + $0x51] sm:$0xff]
    %v9530 = vld [vmem:[#allocation3 + $0x59] sm:$0xff]
    %v9531 = vld [vmem:[#allocation3 + $0x61] sm:$0xff]
    %v9532 = vld [vmem:[#allocation3 + $0x69] sm:$0xff]
    %v9533 = vld [vmem:[#allocation3 + $0x71] sm:$0xff]
    %v9534 = vld [vmem:[#allocation3 + $0x79] sm:$0xff]
    %v9535 = vld [vmem:[#allocation3 + $0x81] sm:$0xff]
    %v9536 = vld [vmem:[#allocation3 + $0x89] sm:$0xff]
    %v9537 = vld [vmem:[#allocation3 + $0x91] sm:$0xff]
    %v9538 = vld [vmem:[#allocation3 + $0x99] sm:$0xff]
    %v9539 = vld [vmem:[#allocation3 + $0xa1] sm:$0xff]
    %v9540 = vld [vmem:[#allocation3 + $0xa9] sm:$0xff]
    %v9541 = vld [vmem:[#allocation3 + $0xb1] sm:$0xff]
    %v9542 = vld [vmem:[#allocation3 + $0xb9] sm:$0xff]
    %v9543 = vld [vmem:[#allocation3 + $0xc1] sm:$0xff]
    %v9544 = vld [vmem:[#allocation3 + $0xc9] sm:$0xff]
    %v9545 = vld [vmem:[#allocation3 + $0xd1] sm:$0xff]
    %s9546 = scalar_lea.vmem %s10, 80
    %v9547 = vld [vmem:[%s9546] sm:$0xff]
    %v9548 = vld [vmem:[%s9546 + $0x8] sm:$0xff]
    %v9550 = vsel %vm63, %v9521, 0
    %v9553 = vsel %vm63, %v9522, 0
    %v9556 = vsel %vm63, %v9523, 0
    %v9559 = vsel %vm63, %v9524, 0
    %v9562 = vsel %vm63, %v9525, 0
    %v9565 = vsel %vm63, %v9526, 0
    %v9568 = vsel %vm63, %v9527, 0
    %v9571 = vsel %vm63, %v9528, 0
    %v9574 = vsel %vm63, %v9529, 0
    %v9577 = vsel %vm63, %v9530, 0
    %v9580 = vsel %vm63, %v9531, 0
    %v9583 = vsel %vm63, %v9532, 0
    %v9586 = vsel %vm63, %v9533, 0
    %v9589 = vsel %vm63, %v9534, 0
    %v9592 = vsel %vm63, %v9535, 0
    %v9595 = vsel %vm63, %v9536, 0
    %v9598 = vsel %vm63, %v9537, 0
    %v9601 = vsel %vm63, %v9538, 0
    %v9604 = vsel %vm63, %v9539, 0
    %v9607 = vsel %vm63, %v9540, 0
    %v9610 = vsel %vm63, %v9541, 0
    %v9613 = vsel %vm63, %v9542, 0
    %v9616 = vsel %vm63, %v9543, 0
    %v9619 = vsel %vm63, %v9544, 0
    %v9622 = vsel %vm63, %v9545, 0
    %9624 = vmatpush.msra.mxu0 0.0
    %9625 = vmatpush.msra.mxu0 0.0
    %9626 = vmatpush.msra.mxu0 0.0
    %9627 = vmatpush.msra.mxu0 0.0
    %9628 = vmatpush.msra.mxu0 0.0
    %9629 = vmatpush.msra.mxu0 0.0
    %9630 = vmatpush.msra.mxu0 0.0
    %9631 = vmatpush.msra.mxu0 0.0
    %9632 = vmatpush.msra.mxu0 0.0
    %9633 = vmatpush.msra.mxu0 0.0
    %9634 = vmatpush.msra.mxu0 0.0
    %9635 = vmatpush.msra.mxu0 0.0
    %9636 = vmatpush.msra.mxu0 0.0
    %9637 = vmatpush.msra.mxu0 0.0
    %9638 = vmatpush.msra.mxu0 %v9548
    %9639 = vmatpush.msra.mxu0 %v9547
    %9640 = vmatmul.f32.gmra.mxu0 %v9550
    %v9641 = vpop.f32.mrf.mxu0
    %v9642 = vadd.f32 0.0, %v9641
    %9643 = vmatmul.f32.gmra.mxu0 %v9553
    %v9644 = vpop.f32.mrf.mxu0
    %v9645 = vadd.f32 0.0, %v9644
    %9646 = vmatmul.f32.gmra.mxu0 %v9556
    %v9647 = vpop.f32.mrf.mxu0
    %v9648 = vadd.f32 0.0, %v9647
    %9649 = vmatmul.f32.gmra.mxu0 %v9559
    %v9650 = vpop.f32.mrf.mxu0
    %v9651 = vadd.f32 0.0, %v9650
    %9652 = vmatmul.f32.gmra.mxu0 %v9562
    %v9653 = vpop.f32.mrf.mxu0
    %v9654 = vadd.f32 0.0, %v9653
    %9655 = vmatmul.f32.gmra.mxu0 %v9565
    %v9656 = vpop.f32.mrf.mxu0
    %v9657 = vadd.f32 0.0, %v9656
    %9658 = vmatmul.f32.gmra.mxu0 %v9568
    %v9659 = vpop.f32.mrf.mxu0
    %v9660 = vadd.f32 0.0, %v9659
    %9661 = vmatmul.f32.gmra.mxu0 %v9571
    %v9662 = vpop.f32.mrf.mxu0
    %v9663 = vadd.f32 0.0, %v9662
    %9664 = vmatmul.f32.gmra.mxu0 %v9574
    %v9665 = vpop.f32.mrf.mxu0
    %v9666 = vadd.f32 0.0, %v9665
    %9667 = vmatmul.f32.gmra.mxu0 %v9577
    %v9668 = vpop.f32.mrf.mxu0
    %v9669 = vadd.f32 0.0, %v9668
    %9670 = vmatmul.f32.gmra.mxu0 %v9580
    %v9671 = vpop.f32.mrf.mxu0
    %v9672 = vadd.f32 0.0, %v9671
    %9673 = vmatmul.f32.gmra.mxu0 %v9583
    %v9674 = vpop.f32.mrf.mxu0
    %v9675 = vadd.f32 0.0, %v9674
    %9676 = vmatmul.f32.gmra.mxu0 %v9586
    %v9677 = vpop.f32.mrf.mxu0
    %v9678 = vadd.f32 0.0, %v9677
    %9679 = vmatmul.f32.gmra.mxu0 %v9589
    %v9680 = vpop.f32.mrf.mxu0
    %v9681 = vadd.f32 0.0, %v9680
    %9682 = vmatmul.f32.gmra.mxu0 %v9592
    %v9683 = vpop.f32.mrf.mxu0
    %v9684 = vadd.f32 0.0, %v9683
    %9685 = vmatmul.f32.gmra.mxu0 %v9595
    %v9686 = vpop.f32.mrf.mxu0
    %v9687 = vadd.f32 0.0, %v9686
    %9688 = vmatmul.f32.gmra.mxu0 %v9598
    %v9689 = vpop.f32.mrf.mxu0
    %v9690 = vadd.f32 0.0, %v9689
    %9691 = vmatmul.f32.gmra.mxu0 %v9601
    %v9692 = vpop.f32.mrf.mxu0
    %v9693 = vadd.f32 0.0, %v9692
    %9694 = vmatmul.f32.gmra.mxu0 %v9604
    %v9695 = vpop.f32.mrf.mxu0
    %v9696 = vadd.f32 0.0, %v9695
    %9697 = vmatmul.f32.gmra.mxu0 %v9607
    %v9698 = vpop.f32.mrf.mxu0
    %v9699 = vadd.f32 0.0, %v9698
    %9700 = vmatmul.f32.gmra.mxu0 %v9610
    %v9701 = vpop.f32.mrf.mxu0
    %v9702 = vadd.f32 0.0, %v9701
    %9703 = vmatmul.f32.gmra.mxu0 %v9613
    %v9704 = vpop.f32.mrf.mxu0
    %v9705 = vadd.f32 0.0, %v9704
    %9706 = vmatmul.f32.gmra.mxu0 %v9616
    %v9707 = vpop.f32.mrf.mxu0
    %v9708 = vadd.f32 0.0, %v9707
    %9709 = vmatmul.f32.gmra.mxu0 %v9619
    %v9710 = vpop.f32.mrf.mxu0
    %v9711 = vadd.f32 0.0, %v9710
    %9712 = vmatmul.f32.gmra.mxu0 %v9622
    %v9713 = vpop.f32.mrf.mxu0
    %v9714 = vadd.f32 0.0, %v9713
    %9715 = vdwg.mxu0
    %v9716 = vadd.f32 %v9496, %v9642
    %v9717 = vadd.f32 %v9497, %v9645
    %v9718 = vadd.f32 %v9498, %v9648
    %v9719 = vadd.f32 %v9499, %v9651
    %v9720 = vadd.f32 %v9500, %v9654
    %v9721 = vadd.f32 %v9501, %v9657
    %v9722 = vadd.f32 %v9502, %v9660
    %v9723 = vadd.f32 %v9503, %v9663
    %v9724 = vadd.f32 %v9504, %v9666
    %v9725 = vadd.f32 %v9505, %v9669
    %v9726 = vadd.f32 %v9506, %v9672
    %v9727 = vadd.f32 %v9507, %v9675
    %v9728 = vadd.f32 %v9508, %v9678
    %v9729 = vadd.f32 %v9509, %v9681
    %v9730 = vadd.f32 %v9510, %v9684
    %v9731 = vadd.f32 %v9511, %v9687
    %v9732 = vadd.f32 %v9512, %v9690
    %v9733 = vadd.f32 %v9513, %v9693
    %v9734 = vadd.f32 %v9514, %v9696
    %v9735 = vadd.f32 %v9515, %v9699
    %v9736 = vadd.f32 %v9516, %v9702
    %v9737 = vadd.f32 %v9517, %v9705
    %v9738 = vadd.f32 %v9518, %v9708
    %v9739 = vadd.f32 %v9519, %v9711
    %v9740 = vadd.f32 %v9520, %v9714
    %v9741 = vld [vmem:[#allocation3 + $0x19] sm:$0xff]
    %v9742 = vld [vmem:[#allocation3 + $0x21] sm:$0xff]
    %v9743 = vld [vmem:[#allocation3 + $0x29] sm:$0xff]
    %v9744 = vld [vmem:[#allocation3 + $0x31] sm:$0xff]
    %v9745 = vld [vmem:[#allocation3 + $0x39] sm:$0xff]
    %v9746 = vld [vmem:[#allocation3 + $0x41] sm:$0xff]
    %v9747 = vld [vmem:[#allocation3 + $0x49] sm:$0xff]
    %v9748 = vld [vmem:[#allocation3 + $0x51] sm:$0xff]
    %v9749 = vld [vmem:[#allocation3 + $0x59] sm:$0xff]
    %v9750 = vld [vmem:[#allocation3 + $0x61] sm:$0xff]
    %v9751 = vld [vmem:[#allocation3 + $0x69] sm:$0xff]
    %v9752 = vld [vmem:[#allocation3 + $0x71] sm:$0xff]
    %v9753 = vld [vmem:[#allocation3 + $0x79] sm:$0xff]
    %v9754 = vld [vmem:[#allocation3 + $0x81] sm:$0xff]
    %v9755 = vld [vmem:[#allocation3 + $0x89] sm:$0xff]
    %v9756 = vld [vmem:[#allocation3 + $0x91] sm:$0xff]
    %v9757 = vld [vmem:[#allocation3 + $0x99] sm:$0xff]
    %v9758 = vld [vmem:[#allocation3 + $0xa1] sm:$0xff]
    %v9759 = vld [vmem:[#allocation3 + $0xa9] sm:$0xff]
    %v9760 = vld [vmem:[#allocation3 + $0xb1] sm:$0xff]
    %v9761 = vld [vmem:[#allocation3 + $0xb9] sm:$0xff]
    %v9762 = vld [vmem:[#allocation3 + $0xc1] sm:$0xff]
    %v9763 = vld [vmem:[#allocation3 + $0xc9] sm:$0xff]
    %v9764 = vld [vmem:[#allocation3 + $0xd1] sm:$0xff]
    %v9765 = vld [vmem:[#allocation3 + $0xd9] sm:$0xff]
    %s9766 = scalar_lea.vmem %s10, 96
    %v9767 = vld [vmem:[%s9766] sm:$0xff]
    %v9768 = vld [vmem:[%s9766 + $0x8] sm:$0xff]
    %v9770 = vsel %vm63, %v9741, 0
    %v9773 = vsel %vm63, %v9742, 0
    %v9776 = vsel %vm63, %v9743, 0
    %v9779 = vsel %vm63, %v9744, 0
    %v9782 = vsel %vm63, %v9745, 0
    %v9785 = vsel %vm63, %v9746, 0
    %v9788 = vsel %vm63, %v9747, 0
    %v9791 = vsel %vm63, %v9748, 0
    %v9794 = vsel %vm63, %v9749, 0
    %v9797 = vsel %vm63, %v9750, 0
    %v9800 = vsel %vm63, %v9751, 0
    %v9803 = vsel %vm63, %v9752, 0
    %v9806 = vsel %vm63, %v9753, 0
    %v9809 = vsel %vm63, %v9754, 0
    %v9812 = vsel %vm63, %v9755, 0
    %v9815 = vsel %vm63, %v9756, 0
    %v9818 = vsel %vm63, %v9757, 0
    %v9821 = vsel %vm63, %v9758, 0
    %v9824 = vsel %vm63, %v9759, 0
    %v9827 = vsel %vm63, %v9760, 0
    %v9830 = vsel %vm63, %v9761, 0
    %v9833 = vsel %vm63, %v9762, 0
    %v9836 = vsel %vm63, %v9763, 0
    %v9839 = vsel %vm63, %v9764, 0
    %v9842 = vsel %vm63, %v9765, 0
    %9844 = vmatpush.msra.mxu0 0.0
    %9845 = vmatpush.msra.mxu0 0.0
    %9846 = vmatpush.msra.mxu0 0.0
    %9847 = vmatpush.msra.mxu0 0.0
    %9848 = vmatpush.msra.mxu0 0.0
    %9849 = vmatpush.msra.mxu0 0.0
    %9850 = vmatpush.msra.mxu0 0.0
    %9851 = vmatpush.msra.mxu0 0.0
    %9852 = vmatpush.msra.mxu0 0.0
    %9853 = vmatpush.msra.mxu0 0.0
    %9854 = vmatpush.msra.mxu0 0.0
    %9855 = vmatpush.msra.mxu0 0.0
    %9856 = vmatpush.msra.mxu0 0.0
    %9857 = vmatpush.msra.mxu0 0.0
    %9858 = vmatpush.msra.mxu0 %v9768
    %9859 = vmatpush.msra.mxu0 %v9767
    %9860 = vmatmul.f32.gmra.mxu0 %v9770
    %v9861 = vpop.f32.mrf.mxu0
    %v9862 = vadd.f32 0.0, %v9861
    %9863 = vmatmul.f32.gmra.mxu0 %v9773
    %v9864 = vpop.f32.mrf.mxu0
    %v9865 = vadd.f32 0.0, %v9864
    %9866 = vmatmul.f32.gmra.mxu0 %v9776
    %v9867 = vpop.f32.mrf.mxu0
    %v9868 = vadd.f32 0.0, %v9867
    %9869 = vmatmul.f32.gmra.mxu0 %v9779
    %v9870 = vpop.f32.mrf.mxu0
    %v9871 = vadd.f32 0.0, %v9870
    %9872 = vmatmul.f32.gmra.mxu0 %v9782
    %v9873 = vpop.f32.mrf.mxu0
    %v9874 = vadd.f32 0.0, %v9873
    %9875 = vmatmul.f32.gmra.mxu0 %v9785
    %v9876 = vpop.f32.mrf.mxu0
    %v9877 = vadd.f32 0.0, %v9876
    %9878 = vmatmul.f32.gmra.mxu0 %v9788
    %v9879 = vpop.f32.mrf.mxu0
    %v9880 = vadd.f32 0.0, %v9879
    %9881 = vmatmul.f32.gmra.mxu0 %v9791
    %v9882 = vpop.f32.mrf.mxu0
    %v9883 = vadd.f32 0.0, %v9882
    %9884 = vmatmul.f32.gmra.mxu0 %v9794
    %v9885 = vpop.f32.mrf.mxu0
    %v9886 = vadd.f32 0.0, %v9885
    %9887 = vmatmul.f32.gmra.mxu0 %v9797
    %v9888 = vpop.f32.mrf.mxu0
    %v9889 = vadd.f32 0.0, %v9888
    %9890 = vmatmul.f32.gmra.mxu0 %v9800
    %v9891 = vpop.f32.mrf.mxu0
    %v9892 = vadd.f32 0.0, %v9891
    %9893 = vmatmul.f32.gmra.mxu0 %v9803
    %v9894 = vpop.f32.mrf.mxu0
    %v9895 = vadd.f32 0.0, %v9894
    %9896 = vmatmul.f32.gmra.mxu0 %v9806
    %v9897 = vpop.f32.mrf.mxu0
    %v9898 = vadd.f32 0.0, %v9897
    %9899 = vmatmul.f32.gmra.mxu0 %v9809
    %v9900 = vpop.f32.mrf.mxu0
    %v9901 = vadd.f32 0.0, %v9900
    %9902 = vmatmul.f32.gmra.mxu0 %v9812
    %v9903 = vpop.f32.mrf.mxu0
    %v9904 = vadd.f32 0.0, %v9903
    %9905 = vmatmul.f32.gmra.mxu0 %v9815
    %v9906 = vpop.f32.mrf.mxu0
    %v9907 = vadd.f32 0.0, %v9906
    %9908 = vmatmul.f32.gmra.mxu0 %v9818
    %v9909 = vpop.f32.mrf.mxu0
    %v9910 = vadd.f32 0.0, %v9909
    %9911 = vmatmul.f32.gmra.mxu0 %v9821
    %v9912 = vpop.f32.mrf.mxu0
    %v9913 = vadd.f32 0.0, %v9912
    %9914 = vmatmul.f32.gmra.mxu0 %v9824
    %v9915 = vpop.f32.mrf.mxu0
    %v9916 = vadd.f32 0.0, %v9915
    %9917 = vmatmul.f32.gmra.mxu0 %v9827
    %v9918 = vpop.f32.mrf.mxu0
    %v9919 = vadd.f32 0.0, %v9918
    %9920 = vmatmul.f32.gmra.mxu0 %v9830
    %v9921 = vpop.f32.mrf.mxu0
    %v9922 = vadd.f32 0.0, %v9921
    %9923 = vmatmul.f32.gmra.mxu0 %v9833
    %v9924 = vpop.f32.mrf.mxu0
    %v9925 = vadd.f32 0.0, %v9924
    %9926 = vmatmul.f32.gmra.mxu0 %v9836
    %v9927 = vpop.f32.mrf.mxu0
    %v9928 = vadd.f32 0.0, %v9927
    %9929 = vmatmul.f32.gmra.mxu0 %v9839
    %v9930 = vpop.f32.mrf.mxu0
    %v9931 = vadd.f32 0.0, %v9930
    %9932 = vmatmul.f32.gmra.mxu0 %v9842
    %v9933 = vpop.f32.mrf.mxu0
    %v9934 = vadd.f32 0.0, %v9933
    %9935 = vdwg.mxu0
    %v9936 = vadd.f32 %v9716, %v9862
    %v9937 = vadd.f32 %v9717, %v9865
    %v9938 = vadd.f32 %v9718, %v9868
    %v9939 = vadd.f32 %v9719, %v9871
    %v9940 = vadd.f32 %v9720, %v9874
    %v9941 = vadd.f32 %v9721, %v9877
    %v9942 = vadd.f32 %v9722, %v9880
    %v9943 = vadd.f32 %v9723, %v9883
    %v9944 = vadd.f32 %v9724, %v9886
    %v9945 = vadd.f32 %v9725, %v9889
    %v9946 = vadd.f32 %v9726, %v9892
    %v9947 = vadd.f32 %v9727, %v9895
    %v9948 = vadd.f32 %v9728, %v9898
    %v9949 = vadd.f32 %v9729, %v9901
    %v9950 = vadd.f32 %v9730, %v9904
    %v9951 = vadd.f32 %v9731, %v9907
    %v9952 = vadd.f32 %v9732, %v9910
    %v9953 = vadd.f32 %v9733, %v9913
    %v9954 = vadd.f32 %v9734, %v9916
    %v9955 = vadd.f32 %v9735, %v9919
    %v9956 = vadd.f32 %v9736, %v9922
    %v9957 = vadd.f32 %v9737, %v9925
    %v9958 = vadd.f32 %v9738, %v9928
    %v9959 = vadd.f32 %v9739, %v9931
    %v9960 = vadd.f32 %v9740, %v9934
    %v9961 = vld [vmem:[#allocation3 + $0x1a] sm:$0xff]
    %v9962 = vld [vmem:[#allocation3 + $0x22] sm:$0xff]
    %v9963 = vld [vmem:[#allocation3 + $0x2a] sm:$0xff]
    %v9964 = vld [vmem:[#allocation3 + $0x32] sm:$0xff]
    %v9965 = vld [vmem:[#allocation3 + $0x3a] sm:$0xff]
    %v9966 = vld [vmem:[#allocation3 + $0x42] sm:$0xff]
    %v9967 = vld [vmem:[#allocation3 + $0x4a] sm:$0xff]
    %v9968 = vld [vmem:[#allocation3 + $0x52] sm:$0xff]
    %v9969 = vld [vmem:[#allocation3 + $0x5a] sm:$0xff]
    %v9970 = vld [vmem:[#allocation3 + $0x62] sm:$0xff]
    %v9971 = vld [vmem:[#allocation3 + $0x6a] sm:$0xff]
    %v9972 = vld [vmem:[#allocation3 + $0x72] sm:$0xff]
    %v9973 = vld [vmem:[#allocation3 + $0x7a] sm:$0xff]
    %v9974 = vld [vmem:[#allocation3 + $0x82] sm:$0xff]
    %v9975 = vld [vmem:[#allocation3 + $0x8a] sm:$0xff]
    %v9976 = vld [vmem:[#allocation3 + $0x92] sm:$0xff]
    %v9977 = vld [vmem:[#allocation3 + $0x9a] sm:$0xff]
    %v9978 = vld [vmem:[#allocation3 + $0xa2] sm:$0xff]
    %v9979 = vld [vmem:[#allocation3 + $0xaa] sm:$0xff]
    %v9980 = vld [vmem:[#allocation3 + $0xb2] sm:$0xff]
    %v9981 = vld [vmem:[#allocation3 + $0xba] sm:$0xff]
    %v9982 = vld [vmem:[#allocation3 + $0xc2] sm:$0xff]
    %v9983 = vld [vmem:[#allocation3 + $0xca] sm:$0xff]
    %v9984 = vld [vmem:[#allocation3 + $0xd2] sm:$0xff]
    %v9985 = vld [vmem:[#allocation3 + $0xda] sm:$0xff]
    %s9986 = scalar_lea.vmem %s10, 112
    %v9987 = vld [vmem:[%s9986] sm:$0xff]
    %v9988 = vld [vmem:[%s9986 + $0x8] sm:$0xff]
    %v9990 = vsel %vm63, %v9961, 0
    %v9993 = vsel %vm63, %v9962, 0
    %v9996 = vsel %vm63, %v9963, 0
    %v9999 = vsel %vm63, %v9964, 0
    %v10002 = vsel %vm63, %v9965, 0
    %v10005 = vsel %vm63, %v9966, 0
    %v10008 = vsel %vm63, %v9967, 0
    %v10011 = vsel %vm63, %v9968, 0
    %v10014 = vsel %vm63, %v9969, 0
    %v10017 = vsel %vm63, %v9970, 0
    %v10020 = vsel %vm63, %v9971, 0
    %v10023 = vsel %vm63, %v9972, 0
    %v10026 = vsel %vm63, %v9973, 0
    %v10029 = vsel %vm63, %v9974, 0
    %v10032 = vsel %vm63, %v9975, 0
    %v10035 = vsel %vm63, %v9976, 0
    %v10038 = vsel %vm63, %v9977, 0
    %v10041 = vsel %vm63, %v9978, 0
    %v10044 = vsel %vm63, %v9979, 0
    %v10047 = vsel %vm63, %v9980, 0
    %v10050 = vsel %vm63, %v9981, 0
    %v10053 = vsel %vm63, %v9982, 0
    %v10056 = vsel %vm63, %v9983, 0
    %v10059 = vsel %vm63, %v9984, 0
    %v10062 = vsel %vm63, %v9985, 0
    %10064 = vmatpush.msra.mxu0 0.0
    %10065 = vmatpush.msra.mxu0 0.0
    %10066 = vmatpush.msra.mxu0 0.0
    %10067 = vmatpush.msra.mxu0 0.0
    %10068 = vmatpush.msra.mxu0 0.0
    %10069 = vmatpush.msra.mxu0 0.0
    %10070 = vmatpush.msra.mxu0 0.0
    %10071 = vmatpush.msra.mxu0 0.0
    %10072 = vmatpush.msra.mxu0 0.0
    %10073 = vmatpush.msra.mxu0 0.0
    %10074 = vmatpush.msra.mxu0 0.0
    %10075 = vmatpush.msra.mxu0 0.0
    %10076 = vmatpush.msra.mxu0 0.0
    %10077 = vmatpush.msra.mxu0 0.0
    %10078 = vmatpush.msra.mxu0 %v9988
    %10079 = vmatpush.msra.mxu0 %v9987
    %10080 = vmatmul.f32.gmra.mxu0 %v9990
    %v10081 = vpop.f32.mrf.mxu0
    %v10082 = vadd.f32 0.0, %v10081
    %10083 = vmatmul.f32.gmra.mxu0 %v9993
    %v10084 = vpop.f32.mrf.mxu0
    %v10085 = vadd.f32 0.0, %v10084
    %10086 = vmatmul.f32.gmra.mxu0 %v9996
    %v10087 = vpop.f32.mrf.mxu0
    %v10088 = vadd.f32 0.0, %v10087
    %10089 = vmatmul.f32.gmra.mxu0 %v9999
    %v10090 = vpop.f32.mrf.mxu0
    %v10091 = vadd.f32 0.0, %v10090
    %10092 = vmatmul.f32.gmra.mxu0 %v10002
    %v10093 = vpop.f32.mrf.mxu0
    %v10094 = vadd.f32 0.0, %v10093
    %10095 = vmatmul.f32.gmra.mxu0 %v10005
    %v10096 = vpop.f32.mrf.mxu0
    %v10097 = vadd.f32 0.0, %v10096
    %10098 = vmatmul.f32.gmra.mxu0 %v10008
    %v10099 = vpop.f32.mrf.mxu0
    %v10100 = vadd.f32 0.0, %v10099
    %10101 = vmatmul.f32.gmra.mxu0 %v10011
    %v10102 = vpop.f32.mrf.mxu0
    %v10103 = vadd.f32 0.0, %v10102
    %10104 = vmatmul.f32.gmra.mxu0 %v10014
    %v10105 = vpop.f32.mrf.mxu0
    %v10106 = vadd.f32 0.0, %v10105
    %10107 = vmatmul.f32.gmra.mxu0 %v10017
    %v10108 = vpop.f32.mrf.mxu0
    %v10109 = vadd.f32 0.0, %v10108
    %10110 = vmatmul.f32.gmra.mxu0 %v10020
    %v10111 = vpop.f32.mrf.mxu0
    %v10112 = vadd.f32 0.0, %v10111
    %10113 = vmatmul.f32.gmra.mxu0 %v10023
    %v10114 = vpop.f32.mrf.mxu0
    %v10115 = vadd.f32 0.0, %v10114
    %10116 = vmatmul.f32.gmra.mxu0 %v10026
    %v10117 = vpop.f32.mrf.mxu0
    %v10118 = vadd.f32 0.0, %v10117
    %10119 = vmatmul.f32.gmra.mxu0 %v10029
    %v10120 = vpop.f32.mrf.mxu0
    %v10121 = vadd.f32 0.0, %v10120
    %10122 = vmatmul.f32.gmra.mxu0 %v10032
    %v10123 = vpop.f32.mrf.mxu0
    %v10124 = vadd.f32 0.0, %v10123
    %10125 = vmatmul.f32.gmra.mxu0 %v10035
    %v10126 = vpop.f32.mrf.mxu0
    %v10127 = vadd.f32 0.0, %v10126
    %10128 = vmatmul.f32.gmra.mxu0 %v10038
    %v10129 = vpop.f32.mrf.mxu0
    %v10130 = vadd.f32 0.0, %v10129
    %10131 = vmatmul.f32.gmra.mxu0 %v10041
    %v10132 = vpop.f32.mrf.mxu0
    %v10133 = vadd.f32 0.0, %v10132
    %10134 = vmatmul.f32.gmra.mxu0 %v10044
    %v10135 = vpop.f32.mrf.mxu0
    %v10136 = vadd.f32 0.0, %v10135
    %10137 = vmatmul.f32.gmra.mxu0 %v10047
    %v10138 = vpop.f32.mrf.mxu0
    %v10139 = vadd.f32 0.0, %v10138
    %10140 = vmatmul.f32.gmra.mxu0 %v10050
    %v10141 = vpop.f32.mrf.mxu0
    %v10142 = vadd.f32 0.0, %v10141
    %10143 = vmatmul.f32.gmra.mxu0 %v10053
    %v10144 = vpop.f32.mrf.mxu0
    %v10145 = vadd.f32 0.0, %v10144
    %10146 = vmatmul.f32.gmra.mxu0 %v10056
    %v10147 = vpop.f32.mrf.mxu0
    %v10148 = vadd.f32 0.0, %v10147
    %10149 = vmatmul.f32.gmra.mxu0 %v10059
    %v10150 = vpop.f32.mrf.mxu0
    %v10151 = vadd.f32 0.0, %v10150
    %10152 = vmatmul.f32.gmra.mxu0 %v10062
    %v10153 = vpop.f32.mrf.mxu0
    %v10154 = vadd.f32 0.0, %v10153
    %10155 = vdwg.mxu0
    %v10156 = vadd.f32 %v9936, %v10082
    %v10157 = vadd.f32 %v9937, %v10085
    %v10158 = vadd.f32 %v9938, %v10088
    %v10159 = vadd.f32 %v9939, %v10091
    %v10160 = vadd.f32 %v9940, %v10094
    %v10161 = vadd.f32 %v9941, %v10097
    %v10162 = vadd.f32 %v9942, %v10100
    %v10163 = vadd.f32 %v9943, %v10103
    %v10164 = vadd.f32 %v9944, %v10106
    %v10165 = vadd.f32 %v9945, %v10109
    %v10166 = vadd.f32 %v9946, %v10112
    %v10167 = vadd.f32 %v9947, %v10115
    %v10168 = vadd.f32 %v9948, %v10118
    %v10169 = vadd.f32 %v9949, %v10121
    %v10170 = vadd.f32 %v9950, %v10124
    %v10171 = vadd.f32 %v9951, %v10127
    %v10172 = vadd.f32 %v9952, %v10130
    %v10173 = vadd.f32 %v9953, %v10133
    %v10174 = vadd.f32 %v9954, %v10136
    %v10175 = vadd.f32 %v9955, %v10139
    %v10176 = vadd.f32 %v9956, %v10142
    %v10177 = vadd.f32 %v9957, %v10145
    %v10178 = vadd.f32 %v9958, %v10148
    %v10179 = vadd.f32 %v9959, %v10151
    %v10180 = vadd.f32 %v9960, %v10154
    %v10181 = vld [vmem:[#allocation3 + $0x1b] sm:$0xff]
    %v10182 = vld [vmem:[#allocation3 + $0x23] sm:$0xff]
    %v10183 = vld [vmem:[#allocation3 + $0x2b] sm:$0xff]
    %v10184 = vld [vmem:[#allocation3 + $0x33] sm:$0xff]
    %v10185 = vld [vmem:[#allocation3 + $0x3b] sm:$0xff]
    %v10186 = vld [vmem:[#allocation3 + $0x43] sm:$0xff]
    %v10187 = vld [vmem:[#allocation3 + $0x4b] sm:$0xff]
    %v10188 = vld [vmem:[#allocation3 + $0x53] sm:$0xff]
    %v10189 = vld [vmem:[#allocation3 + $0x5b] sm:$0xff]
    %v10190 = vld [vmem:[#allocation3 + $0x63] sm:$0xff]
    %v10191 = vld [vmem:[#allocation3 + $0x6b] sm:$0xff]
    %v10192 = vld [vmem:[#allocation3 + $0x73] sm:$0xff]
    %v10193 = vld [vmem:[#allocation3 + $0x7b] sm:$0xff]
    %v10194 = vld [vmem:[#allocation3 + $0x83] sm:$0xff]
    %v10195 = vld [vmem:[#allocation3 + $0x8b] sm:$0xff]
    %v10196 = vld [vmem:[#allocation3 + $0x93] sm:$0xff]
    %v10197 = vld [vmem:[#allocation3 + $0x9b] sm:$0xff]
    %v10198 = vld [vmem:[#allocation3 + $0xa3] sm:$0xff]
    %v10199 = vld [vmem:[#allocation3 + $0xab] sm:$0xff]
    %v10200 = vld [vmem:[#allocation3 + $0xb3] sm:$0xff]
    %v10201 = vld [vmem:[#allocation3 + $0xbb] sm:$0xff]
    %v10202 = vld [vmem:[#allocation3 + $0xc3] sm:$0xff]
    %v10203 = vld [vmem:[#allocation3 + $0xcb] sm:$0xff]
    %v10204 = vld [vmem:[#allocation3 + $0xd3] sm:$0xff]
    %v10205 = vld [vmem:[#allocation3 + $0xdb] sm:$0xff]
    %s10206 = scalar_lea.vmem %s10, 128
    %v10207 = vld [vmem:[%s10206] sm:$0xff]
    %v10208 = vld [vmem:[%s10206 + $0x8] sm:$0xff]
    %v10210 = vsel %vm63, %v10181, 0
    %v10213 = vsel %vm63, %v10182, 0
    %v10216 = vsel %vm63, %v10183, 0
    %v10219 = vsel %vm63, %v10184, 0
    %v10222 = vsel %vm63, %v10185, 0
    %v10225 = vsel %vm63, %v10186, 0
    %v10228 = vsel %vm63, %v10187, 0
    %v10231 = vsel %vm63, %v10188, 0
    %v10234 = vsel %vm63, %v10189, 0
    %v10237 = vsel %vm63, %v10190, 0
    %v10240 = vsel %vm63, %v10191, 0
    %v10243 = vsel %vm63, %v10192, 0
    %v10246 = vsel %vm63, %v10193, 0
    %v10249 = vsel %vm63, %v10194, 0
    %v10252 = vsel %vm63, %v10195, 0
    %v10255 = vsel %vm63, %v10196, 0
    %v10258 = vsel %vm63, %v10197, 0
    %v10261 = vsel %vm63, %v10198, 0
    %v10264 = vsel %vm63, %v10199, 0
    %v10267 = vsel %vm63, %v10200, 0
    %v10270 = vsel %vm63, %v10201, 0
    %v10273 = vsel %vm63, %v10202, 0
    %v10276 = vsel %vm63, %v10203, 0
    %v10279 = vsel %vm63, %v10204, 0
    %v10282 = vsel %vm63, %v10205, 0
    %10284 = vmatpush.msra.mxu0 0.0
    %10285 = vmatpush.msra.mxu0 0.0
    %10286 = vmatpush.msra.mxu0 0.0
    %10287 = vmatpush.msra.mxu0 0.0
    %10288 = vmatpush.msra.mxu0 0.0
    %10289 = vmatpush.msra.mxu0 0.0
    %10290 = vmatpush.msra.mxu0 0.0
    %10291 = vmatpush.msra.mxu0 0.0
    %10292 = vmatpush.msra.mxu0 0.0
    %10293 = vmatpush.msra.mxu0 0.0
    %10294 = vmatpush.msra.mxu0 0.0
    %10295 = vmatpush.msra.mxu0 0.0
    %10296 = vmatpush.msra.mxu0 0.0
    %10297 = vmatpush.msra.mxu0 0.0
    %10298 = vmatpush.msra.mxu0 %v10208
    %10299 = vmatpush.msra.mxu0 %v10207
    %10300 = vmatmul.f32.gmra.mxu0 %v10210
    %v10301 = vpop.f32.mrf.mxu0
    %v10302 = vadd.f32 0.0, %v10301
    %10303 = vmatmul.f32.gmra.mxu0 %v10213
    %v10304 = vpop.f32.mrf.mxu0
    %v10305 = vadd.f32 0.0, %v10304
    %10306 = vmatmul.f32.gmra.mxu0 %v10216
    %v10307 = vpop.f32.mrf.mxu0
    %v10308 = vadd.f32 0.0, %v10307
    %10309 = vmatmul.f32.gmra.mxu0 %v10219
    %v10310 = vpop.f32.mrf.mxu0
    %v10311 = vadd.f32 0.0, %v10310
    %10312 = vmatmul.f32.gmra.mxu0 %v10222
    %v10313 = vpop.f32.mrf.mxu0
    %v10314 = vadd.f32 0.0, %v10313
    %10315 = vmatmul.f32.gmra.mxu0 %v10225
    %v10316 = vpop.f32.mrf.mxu0
    %v10317 = vadd.f32 0.0, %v10316
    %10318 = vmatmul.f32.gmra.mxu0 %v10228
    %v10319 = vpop.f32.mrf.mxu0
    %v10320 = vadd.f32 0.0, %v10319
    %10321 = vmatmul.f32.gmra.mxu0 %v10231
    %v10322 = vpop.f32.mrf.mxu0
    %v10323 = vadd.f32 0.0, %v10322
    %10324 = vmatmul.f32.gmra.mxu0 %v10234
    %v10325 = vpop.f32.mrf.mxu0
    %v10326 = vadd.f32 0.0, %v10325
    %10327 = vmatmul.f32.gmra.mxu0 %v10237
    %v10328 = vpop.f32.mrf.mxu0
    %v10329 = vadd.f32 0.0, %v10328
    %10330 = vmatmul.f32.gmra.mxu0 %v10240
    %v10331 = vpop.f32.mrf.mxu0
    %v10332 = vadd.f32 0.0, %v10331
    %10333 = vmatmul.f32.gmra.mxu0 %v10243
    %v10334 = vpop.f32.mrf.mxu0
    %v10335 = vadd.f32 0.0, %v10334
    %10336 = vmatmul.f32.gmra.mxu0 %v10246
    %v10337 = vpop.f32.mrf.mxu0
    %v10338 = vadd.f32 0.0, %v10337
    %10339 = vmatmul.f32.gmra.mxu0 %v10249
    %v10340 = vpop.f32.mrf.mxu0
    %v10341 = vadd.f32 0.0, %v10340
    %10342 = vmatmul.f32.gmra.mxu0 %v10252
    %v10343 = vpop.f32.mrf.mxu0
    %v10344 = vadd.f32 0.0, %v10343
    %10345 = vmatmul.f32.gmra.mxu0 %v10255
    %v10346 = vpop.f32.mrf.mxu0
    %v10347 = vadd.f32 0.0, %v10346
    %10348 = vmatmul.f32.gmra.mxu0 %v10258
    %v10349 = vpop.f32.mrf.mxu0
    %v10350 = vadd.f32 0.0, %v10349
    %10351 = vmatmul.f32.gmra.mxu0 %v10261
    %v10352 = vpop.f32.mrf.mxu0
    %v10353 = vadd.f32 0.0, %v10352
    %10354 = vmatmul.f32.gmra.mxu0 %v10264
    %v10355 = vpop.f32.mrf.mxu0
    %v10356 = vadd.f32 0.0, %v10355
    %10357 = vmatmul.f32.gmra.mxu0 %v10267
    %v10358 = vpop.f32.mrf.mxu0
    %v10359 = vadd.f32 0.0, %v10358
    %10360 = vmatmul.f32.gmra.mxu0 %v10270
    %v10361 = vpop.f32.mrf.mxu0
    %v10362 = vadd.f32 0.0, %v10361
    %10363 = vmatmul.f32.gmra.mxu0 %v10273
    %v10364 = vpop.f32.mrf.mxu0
    %v10365 = vadd.f32 0.0, %v10364
    %10366 = vmatmul.f32.gmra.mxu0 %v10276
    %v10367 = vpop.f32.mrf.mxu0
    %v10368 = vadd.f32 0.0, %v10367
    %10369 = vmatmul.f32.gmra.mxu0 %v10279
    %v10370 = vpop.f32.mrf.mxu0
    %v10371 = vadd.f32 0.0, %v10370
    %10372 = vmatmul.f32.gmra.mxu0 %v10282
    %v10373 = vpop.f32.mrf.mxu0
    %v10374 = vadd.f32 0.0, %v10373
    %10375 = vdwg.mxu0
    %v10376 = vadd.f32 %v10156, %v10302
    %v10377 = vadd.f32 %v10157, %v10305
    %v10378 = vadd.f32 %v10158, %v10308
    %v10379 = vadd.f32 %v10159, %v10311
    %v10380 = vadd.f32 %v10160, %v10314
    %v10381 = vadd.f32 %v10161, %v10317
    %v10382 = vadd.f32 %v10162, %v10320
    %v10383 = vadd.f32 %v10163, %v10323
    %v10384 = vadd.f32 %v10164, %v10326
    %v10385 = vadd.f32 %v10165, %v10329
    %v10386 = vadd.f32 %v10166, %v10332
    %v10387 = vadd.f32 %v10167, %v10335
    %v10388 = vadd.f32 %v10168, %v10338
    %v10389 = vadd.f32 %v10169, %v10341
    %v10390 = vadd.f32 %v10170, %v10344
    %v10391 = vadd.f32 %v10171, %v10347
    %v10392 = vadd.f32 %v10172, %v10350
    %v10393 = vadd.f32 %v10173, %v10353
    %v10394 = vadd.f32 %v10174, %v10356
    %v10395 = vadd.f32 %v10175, %v10359
    %v10396 = vadd.f32 %v10176, %v10362
    %v10397 = vadd.f32 %v10177, %v10365
    %v10398 = vadd.f32 %v10178, %v10368
    %v10399 = vadd.f32 %v10179, %v10371
    %v10400 = vadd.f32 %v10180, %v10374
    %v10401 = vld [vmem:[%s12] sm:$0xff]
    %v10402 = vld [vmem:[%s12 + $0x8] sm:$0xff]
    %v10403 = vld [vmem:[%s12 + $0x10] sm:$0xff]
    %v10404 = vld [vmem:[%s12 + $0x18] sm:$0xff]
    %v10405 = vld [vmem:[%s12 + $0x20] sm:$0xff]
    %v10406 = vld [vmem:[%s12 + $0x28] sm:$0xff]
    %v10407 = vld [vmem:[%s12 + $0x30] sm:$0xff]
    %v10408 = vld [vmem:[%s12 + $0x38] sm:$0xff]
    %v10409 = vld [vmem:[%s12 + $0x40] sm:$0xff]
    %v10410 = vld [vmem:[%s12 + $0x48] sm:$0xff]
    %v10411 = vld [vmem:[%s12 + $0x50] sm:$0xff]
    %v10412 = vld [vmem:[%s12 + $0x58] sm:$0xff]
    %v10413 = vld [vmem:[%s12 + $0x60] sm:$0xff]
    %v10414 = vld [vmem:[%s12 + $0x68] sm:$0xff]
    %v10415 = vld [vmem:[%s12 + $0x70] sm:$0xff]
    %v10416 = vld [vmem:[%s12 + $0x78] sm:$0xff]
    %v10417 = vld [vmem:[%s12 + $0x80] sm:$0xff]
    %v10418 = vld [vmem:[%s12 + $0x88] sm:$0xff]
    %v10419 = vld [vmem:[%s11] sm:$0x1]
    %v10421 = vperm.slane %v10419, 0
    %vm10423 = vcmask 588800
    %v10425 = vsel %vm10423, %v10402, 0
    %v10428 = vsel %vm10423, %v10404, 0
    %v10431 = vsel %vm10423, %v10406, 0
    %v10434 = vsel %vm10423, %v10408, 0
    %v10437 = vsel %vm10423, %v10410, 0
    %v10440 = vsel %vm10423, %v10412, 0
    %v10443 = vsel %vm10423, %v10414, 0
    %v10446 = vsel %vm10423, %v10416, 0
    %v10449 = vsel %vm10423, %v10418, 0
    %10451 = vmatpush.msra.mxu0 %v10391
    %10452 = vmatpush.msra.mxu0 %v10390
    %10453 = vmatpush.msra.mxu0 %v10389
    %10454 = vmatpush.msra.mxu0 %v10388
    %10455 = vmatpush.msra.mxu0 %v10387
    %10456 = vmatpush.msra.mxu0 %v10386
    %10457 = vmatpush.msra.mxu0 %v10385
    %10458 = vmatpush.msra.mxu0 %v10384
    %10459 = vmatpush.msra.mxu0 %v10383
    %10460 = vmatpush.msra.mxu0 %v10382
    %10461 = vmatpush.msra.mxu0 %v10381
    %10462 = vmatpush.msra.mxu0 %v10380
    %10463 = vmatpush.msra.mxu0 %v10379
    %10464 = vmatpush.msra.mxu0 %v10378
    %10465 = vmatpush.msra.mxu0 %v10377
    %10466 = vmatpush.msra.mxu0 %v10376
    %10467 = vmatmul.f32.gmra.mxu0 %v10401
    %v10468 = vpop.f32.mrf.mxu0
    %v10469 = vadd.f32 %v10421, %v10468
    %10470 = vmatmul.f32.gmra.mxu0 %v10403
    %v10471 = vpop.f32.mrf.mxu0
    %v10472 = vadd.f32 %v10421, %v10471
    %10473 = vmatmul.f32.gmra.mxu0 %v10405
    %v10474 = vpop.f32.mrf.mxu0
    %v10475 = vadd.f32 %v10421, %v10474
    %10476 = vmatmul.f32.gmra.mxu0 %v10407
    %v10477 = vpop.f32.mrf.mxu0
    %v10478 = vadd.f32 %v10421, %v10477
    %10479 = vmatmul.f32.gmra.mxu0 %v10409
    %v10480 = vpop.f32.mrf.mxu0
    %v10481 = vadd.f32 %v10421, %v10480
    %10482 = vmatmul.f32.gmra.mxu0 %v10411
    %v10483 = vpop.f32.mrf.mxu0
    %v10484 = vadd.f32 %v10421, %v10483
    %10485 = vmatmul.f32.gmra.mxu0 %v10413
    %v10486 = vpop.f32.mrf.mxu0
    %v10487 = vadd.f32 %v10421, %v10486
    %10488 = vmatmul.f32.gmra.mxu0 %v10415
    %v10489 = vpop.f32.mrf.mxu0
    %v10490 = vadd.f32 %v10421, %v10489
    %10491 = vmatmul.f32.gmra.mxu0 %v10417
    %v10492 = vpop.f32.mrf.mxu0
    %v10493 = vadd.f32 %v10421, %v10492
    %10494 = vdwg.mxu0
    %10495 = vmatpush.msra.mxu0 0.0
    %10496 = vmatpush.msra.mxu0 0.0
    %10497 = vmatpush.msra.mxu0 0.0
    %10498 = vmatpush.msra.mxu0 0.0
    %10499 = vmatpush.msra.mxu0 0.0
    %10500 = vmatpush.msra.mxu0 0.0
    %10501 = vmatpush.msra.mxu0 0.0
    %10502 = vmatpush.msra.mxu0 %v10400
    %10503 = vmatpush.msra.mxu0 %v10399
    %10504 = vmatpush.msra.mxu0 %v10398
    %10505 = vmatpush.msra.mxu0 %v10397
    %10506 = vmatpush.msra.mxu0 %v10396
    %10507 = vmatpush.msra.mxu0 %v10395
    %10508 = vmatpush.msra.mxu0 %v10394
    %10509 = vmatpush.msra.mxu0 %v10393
    %10510 = vmatpush.msra.mxu0 %v10392
    %10511 = vmatmul.f32.gmra.mxu0 %v10425
    %v10512 = vpop.f32.mrf.mxu0
    %v10513 = vadd.f32 %v10469, %v10512
    %10514 = vmatmul.f32.gmra.mxu0 %v10428
    %v10515 = vpop.f32.mrf.mxu0
    %v10516 = vadd.f32 %v10472, %v10515
    %10517 = vmatmul.f32.gmra.mxu0 %v10431
    %v10518 = vpop.f32.mrf.mxu0
    %v10519 = vadd.f32 %v10475, %v10518
    %10520 = vmatmul.f32.gmra.mxu0 %v10434
    %v10521 = vpop.f32.mrf.mxu0
    %v10522 = vadd.f32 %v10478, %v10521
    %10523 = vmatmul.f32.gmra.mxu0 %v10437
    %v10524 = vpop.f32.mrf.mxu0
    %v10525 = vadd.f32 %v10481, %v10524
    %10526 = vmatmul.f32.gmra.mxu0 %v10440
    %v10527 = vpop.f32.mrf.mxu0
    %v10528 = vadd.f32 %v10484, %v10527
    %10529 = vmatmul.f32.gmra.mxu0 %v10443
    %v10530 = vpop.f32.mrf.mxu0
    %v10531 = vadd.f32 %v10487, %v10530
    %10532 = vmatmul.f32.gmra.mxu0 %v10446
    %v10533 = vpop.f32.mrf.mxu0
    %v10534 = vadd.f32 %v10490, %v10533
    %10535 = vmatmul.f32.gmra.mxu0 %v10449
    %v10536 = vpop.f32.mrf.mxu0
    %v10537 = vadd.f32 %v10493, %v10536
    %10538 = vdwg.mxu0
    %v10539 = vmax.f32 %v10513, 0.0
    %v10540 = vmax.f32 %v10516, 0.0
    %v10541 = vmax.f32 %v10519, 0.0
    %v10542 = vmax.f32 %v10522, 0.0
    %v10543 = vmax.f32 %v10525, 0.0
    %v10544 = vmax.f32 %v10528, 0.0
    %v10545 = vmax.f32 %v10531, 0.0
    %v10546 = vmax.f32 %v10534, 0.0
    %v10547 = vmax.f32 %v10537, 0.0
    %v10548 = vld [vmem:[%s13] sm:$0xff]
    %v10549 = vld [vmem:[%s13 + $0x8] sm:$0xff]
    %v10550 = vld [vmem:[%s13 + $0x10] sm:$0xff]
    %v10551 = vld [vmem:[%s13 + $0x18] sm:$0xff]
    %v10552 = vld [vmem:[%s13 + $0x20] sm:$0xff]
    %v10553 = vld [vmem:[%s13 + $0x28] sm:$0xff]
    %v10554 = vld [vmem:[%s13 + $0x30] sm:$0xff]
    %v10555 = vld [vmem:[%s13 + $0x38] sm:$0xff]
    %v10556 = vld [vmem:[%s13 + $0x40] sm:$0xff]
    %vm10557 = vcmp.gt.f32.partialorder %v10548, 0.5
    %vm10558 = vcmp.gt.f32.partialorder %v10549, 0.5
    %vm10559 = vcmp.gt.f32.partialorder %v10550, 0.5
    %vm10560 = vcmp.gt.f32.partialorder %v10551, 0.5
    %vm10561 = vcmp.gt.f32.partialorder %v10552, 0.5
    %vm10562 = vcmp.gt.f32.partialorder %v10553, 0.5
    %vm10563 = vcmp.gt.f32.partialorder %v10554, 0.5
    %vm10564 = vcmp.gt.f32.partialorder %v10555, 0.5
    %vm10565 = vcmp.gt.f32.partialorder %v10556, 0.5
    %v10566 = vsel %vm10557, 1, 0
    %v10567 = vsel %vm10558, 1, 0
    %v10568 = vsel %vm10559, 1, 0
    %v10569 = vsel %vm10560, 1, 0
    %v10570 = vsel %vm10561, 1, 0
    %v10571 = vsel %vm10562, 1, 0
    %v10572 = vsel %vm10563, 1, 0
    %v10573 = vsel %vm10564, 1, 0
    %v10574 = vsel %vm10565, 1, 0
    %10575 = vset.pattern.permute.xlu0 0
    %10576 = vperm.xlu0 %10575, %v10566
    %v10577 = vpop.permute.xlu0 %10576
    %10578 = vset.pattern.permute.xlu0 0
    %10579 = vperm.xlu0 %10578, %v10567
    %v10580 = vpop.permute.xlu0 %10579
    %10581 = vset.pattern.permute.xlu0 0
    %10582 = vperm.xlu0 %10581, %v10568
    %v10583 = vpop.permute.xlu0 %10582
    %10584 = vset.pattern.permute.xlu0 0
    %10585 = vperm.xlu0 %10584, %v10569
    %v10586 = vpop.permute.xlu0 %10585
    %10587 = vset.pattern.permute.xlu0 0
    %10588 = vperm.xlu0 %10587, %v10570
    %v10589 = vpop.permute.xlu0 %10588
    %10590 = vset.pattern.permute.xlu0 0
    %10591 = vperm.xlu0 %10590, %v10571
    %v10592 = vpop.permute.xlu0 %10591
    %10593 = vset.pattern.permute.xlu0 0
    %10594 = vperm.xlu0 %10593, %v10572
    %v10595 = vpop.permute.xlu0 %10594
    %10596 = vset.pattern.permute.xlu0 0
    %10597 = vperm.xlu0 %10596, %v10573
    %v10598 = vpop.permute.xlu0 %10597
    %10599 = vset.pattern.permute.xlu0 0
    %10600 = vperm.xlu0 %10599, %v10574
    %v10601 = vpop.permute.xlu0 %10600
    %vm10602 = vcmp.eq.s32.totalorder %v10577, 1
    %vm10603 = vcmp.eq.s32.totalorder %v10580, 1
    %vm10604 = vcmp.eq.s32.totalorder %v10583, 1
    %vm10605 = vcmp.eq.s32.totalorder %v10586, 1
    %vm10606 = vcmp.eq.s32.totalorder %v10589, 1
    %vm10607 = vcmp.eq.s32.totalorder %v10592, 1
    %vm10608 = vcmp.eq.s32.totalorder %v10595, 1
    %vm10609 = vcmp.eq.s32.totalorder %v10598, 1
    %vm10610 = vcmp.eq.s32.totalorder %v10601, 1
    %v10611 = vsel %vm10602, %v10539, 0.0
    %v10612 = vsel %vm10603, %v10540, 0.0
    %v10613 = vsel %vm10604, %v10541, 0.0
    %v10614 = vsel %vm10605, %v10542, 0.0
    %v10615 = vsel %vm10606, %v10543, 0.0
    %v10616 = vsel %vm10607, %v10544, 0.0
    %v10617 = vsel %vm10608, %v10545, 0.0
    %v10618 = vsel %vm10609, %v10546, 0.0
    %v10619 = vsel %vm10610, %v10547, 0.0
    %10620 = vst.msk [vmem:[#allocation5 + $0x8] sm:$0xff] %vm209, %v10611
    %10621 = vst.msk [vmem:[#allocation5 + $0x10] sm:$0xff] %vm209, %v10612
    %10622 = vst.msk [vmem:[#allocation5 + $0x18] sm:$0xff] %vm209, %v10613
    %10623 = vst.msk [vmem:[#allocation5 + $0x20] sm:$0xff] %vm209, %v10614
    %10624 = vst.msk [vmem:[#allocation5 + $0x28] sm:$0xff] %vm209, %v10615
    %10625 = vst.msk [vmem:[#allocation5 + $0x30] sm:$0xff] %vm209, %v10616
    %10626 = vst.msk [vmem:[#allocation5 + $0x38] sm:$0xff] %vm209, %v10617
    %10627 = vst.msk [vmem:[#allocation5 + $0x40] sm:$0xff] %vm209, %v10618
    %10628 = vst.msk [vmem:[#allocation5 + $0x48] sm:$0xff] %vm209, %v10619
    %v10629 = vld [vmem:[#allocation3 + $0x10] sm:$0xff]
    %v10630 = vld [vmem:[#allocation3 + $0x18] sm:$0xff]
    %v10631 = vld [vmem:[#allocation3 + $0x20] sm:$0xff]
    %v10632 = vld [vmem:[#allocation3 + $0x28] sm:$0xff]
    %v10633 = vld [vmem:[#allocation3 + $0x30] sm:$0xff]
    %v10634 = vld [vmem:[#allocation3 + $0x38] sm:$0xff]
    %v10635 = vld [vmem:[#allocation3 + $0x40] sm:$0xff]
    %v10636 = vld [vmem:[#allocation3 + $0x48] sm:$0xff]
    %v10637 = vld [vmem:[#allocation3 + $0x50] sm:$0xff]
    %v10638 = vld [vmem:[#allocation3 + $0x58] sm:$0xff]
    %v10639 = vld [vmem:[#allocation3 + $0x60] sm:$0xff]
    %v10640 = vld [vmem:[#allocation3 + $0x68] sm:$0xff]
    %v10641 = vld [vmem:[#allocation3 + $0x70] sm:$0xff]
    %v10642 = vld [vmem:[#allocation3 + $0x78] sm:$0xff]
    %v10643 = vld [vmem:[#allocation3 + $0x80] sm:$0xff]
    %v10644 = vld [vmem:[#allocation3 + $0x88] sm:$0xff]
    %v10645 = vld [vmem:[#allocation3 + $0x90] sm:$0xff]
    %v10646 = vld [vmem:[#allocation3 + $0x98] sm:$0xff]
    %v10647 = vld [vmem:[#allocation3 + $0xa0] sm:$0xff]
    %v10648 = vld [vmem:[#allocation3 + $0xa8] sm:$0xff]
    %v10649 = vld [vmem:[#allocation3 + $0xb0] sm:$0xff]
    %v10650 = vld [vmem:[#allocation3 + $0xb8] sm:$0xff]
    %v10651 = vld [vmem:[#allocation3 + $0xc0] sm:$0xff]
    %v10652 = vld [vmem:[#allocation3 + $0xc8] sm:$0xff]
    %v10653 = vld [vmem:[#allocation3 + $0xd0] sm:$0xff]
    %v10654 = vld [vmem:[%s16] sm:$0xff]
    %v10655 = vld [vmem:[%s16 + $0x8] sm:$0xff]
    %v10657 = vsel %vm63, %v10629, 0
    %v10660 = vsel %vm63, %v10630, 0
    %v10663 = vsel %vm63, %v10631, 0
    %v10666 = vsel %vm63, %v10632, 0
    %v10669 = vsel %vm63, %v10633, 0
    %v10672 = vsel %vm63, %v10634, 0
    %v10675 = vsel %vm63, %v10635, 0
    %v10678 = vsel %vm63, %v10636, 0
    %v10681 = vsel %vm63, %v10637, 0
    %v10684 = vsel %vm63, %v10638, 0
    %v10687 = vsel %vm63, %v10639, 0
    %v10690 = vsel %vm63, %v10640, 0
    %v10693 = vsel %vm63, %v10641, 0
    %v10696 = vsel %vm63, %v10642, 0
    %v10699 = vsel %vm63, %v10643, 0
    %v10702 = vsel %vm63, %v10644, 0
    %v10705 = vsel %vm63, %v10645, 0
    %v10708 = vsel %vm63, %v10646, 0
    %v10711 = vsel %vm63, %v10647, 0
    %v10714 = vsel %vm63, %v10648, 0
    %v10717 = vsel %vm63, %v10649, 0
    %v10720 = vsel %vm63, %v10650, 0
    %v10723 = vsel %vm63, %v10651, 0
    %v10726 = vsel %vm63, %v10652, 0
    %v10729 = vsel %vm63, %v10653, 0
    %10731 = vmatpush.msra.mxu0 0.0
    %10732 = vmatpush.msra.mxu0 0.0
    %10733 = vmatpush.msra.mxu0 0.0
    %10734 = vmatpush.msra.mxu0 0.0
    %10735 = vmatpush.msra.mxu0 0.0
    %10736 = vmatpush.msra.mxu0 0.0
    %10737 = vmatpush.msra.mxu0 0.0
    %10738 = vmatpush.msra.mxu0 0.0
    %10739 = vmatpush.msra.mxu0 0.0
    %10740 = vmatpush.msra.mxu0 0.0
    %10741 = vmatpush.msra.mxu0 0.0
    %10742 = vmatpush.msra.mxu0 0.0
    %10743 = vmatpush.msra.mxu0 0.0
    %10744 = vmatpush.msra.mxu0 0.0
    %10745 = vmatpush.msra.mxu0 %v10655
    %10746 = vmatpush.msra.mxu0 %v10654
    %10747 = vmatmul.f32.gmra.mxu0 %v10657
    %v10748 = vpop.f32.mrf.mxu0
    %v10749 = vadd.f32 0.0, %v10748
    %10750 = vmatmul.f32.gmra.mxu0 %v10660
    %v10751 = vpop.f32.mrf.mxu0
    %v10752 = vadd.f32 0.0, %v10751
    %10753 = vmatmul.f32.gmra.mxu0 %v10663
    %v10754 = vpop.f32.mrf.mxu0
    %v10755 = vadd.f32 0.0, %v10754
    %10756 = vmatmul.f32.gmra.mxu0 %v10666
    %v10757 = vpop.f32.mrf.mxu0
    %v10758 = vadd.f32 0.0, %v10757
    %10759 = vmatmul.f32.gmra.mxu0 %v10669
    %v10760 = vpop.f32.mrf.mxu0
    %v10761 = vadd.f32 0.0, %v10760
    %10762 = vmatmul.f32.gmra.mxu0 %v10672
    %v10763 = vpop.f32.mrf.mxu0
    %v10764 = vadd.f32 0.0, %v10763
    %10765 = vmatmul.f32.gmra.mxu0 %v10675
    %v10766 = vpop.f32.mrf.mxu0
    %v10767 = vadd.f32 0.0, %v10766
    %10768 = vmatmul.f32.gmra.mxu0 %v10678
    %v10769 = vpop.f32.mrf.mxu0
    %v10770 = vadd.f32 0.0, %v10769
    %10771 = vmatmul.f32.gmra.mxu0 %v10681
    %v10772 = vpop.f32.mrf.mxu0
    %v10773 = vadd.f32 0.0, %v10772
    %10774 = vmatmul.f32.gmra.mxu0 %v10684
    %v10775 = vpop.f32.mrf.mxu0
    %v10776 = vadd.f32 0.0, %v10775
    %10777 = vmatmul.f32.gmra.mxu0 %v10687
    %v10778 = vpop.f32.mrf.mxu0
    %v10779 = vadd.f32 0.0, %v10778
    %10780 = vmatmul.f32.gmra.mxu0 %v10690
    %v10781 = vpop.f32.mrf.mxu0
    %v10782 = vadd.f32 0.0, %v10781
    %10783 = vmatmul.f32.gmra.mxu0 %v10693
    %v10784 = vpop.f32.mrf.mxu0
    %v10785 = vadd.f32 0.0, %v10784
    %10786 = vmatmul.f32.gmra.mxu0 %v10696
    %v10787 = vpop.f32.mrf.mxu0
    %v10788 = vadd.f32 0.0, %v10787
    %10789 = vmatmul.f32.gmra.mxu0 %v10699
    %v10790 = vpop.f32.mrf.mxu0
    %v10791 = vadd.f32 0.0, %v10790
    %10792 = vmatmul.f32.gmra.mxu0 %v10702
    %v10793 = vpop.f32.mrf.mxu0
    %v10794 = vadd.f32 0.0, %v10793
    %10795 = vmatmul.f32.gmra.mxu0 %v10705
    %v10796 = vpop.f32.mrf.mxu0
    %v10797 = vadd.f32 0.0, %v10796
    %10798 = vmatmul.f32.gmra.mxu0 %v10708
    %v10799 = vpop.f32.mrf.mxu0
    %v10800 = vadd.f32 0.0, %v10799
    %10801 = vmatmul.f32.gmra.mxu0 %v10711
    %v10802 = vpop.f32.mrf.mxu0
    %v10803 = vadd.f32 0.0, %v10802
    %10804 = vmatmul.f32.gmra.mxu0 %v10714
    %v10805 = vpop.f32.mrf.mxu0
    %v10806 = vadd.f32 0.0, %v10805
    %10807 = vmatmul.f32.gmra.mxu0 %v10717
    %v10808 = vpop.f32.mrf.mxu0
    %v10809 = vadd.f32 0.0, %v10808
    %10810 = vmatmul.f32.gmra.mxu0 %v10720
    %v10811 = vpop.f32.mrf.mxu0
    %v10812 = vadd.f32 0.0, %v10811
    %10813 = vmatmul.f32.gmra.mxu0 %v10723
    %v10814 = vpop.f32.mrf.mxu0
    %v10815 = vadd.f32 0.0, %v10814
    %10816 = vmatmul.f32.gmra.mxu0 %v10726
    %v10817 = vpop.f32.mrf.mxu0
    %v10818 = vadd.f32 0.0, %v10817
    %10819 = vmatmul.f32.gmra.mxu0 %v10729
    %v10820 = vpop.f32.mrf.mxu0
    %v10821 = vadd.f32 0.0, %v10820
    %10822 = vdwg.mxu0
    %v10823 = vld [vmem:[%s12] sm:$0xff]
    %v10824 = vld [vmem:[%s12 + $0x8] sm:$0xff]
    %v10825 = vld [vmem:[%s12 + $0x10] sm:$0xff]
    %v10826 = vld [vmem:[%s12 + $0x18] sm:$0xff]
    %v10827 = vld [vmem:[%s12 + $0x20] sm:$0xff]
    %v10828 = vld [vmem:[%s12 + $0x28] sm:$0xff]
    %v10829 = vld [vmem:[%s12 + $0x30] sm:$0xff]
    %v10830 = vld [vmem:[%s12 + $0x38] sm:$0xff]
    %v10831 = vld [vmem:[%s12 + $0x40] sm:$0xff]
    %v10832 = vld [vmem:[%s12 + $0x48] sm:$0xff]
    %v10833 = vld [vmem:[%s12 + $0x50] sm:$0xff]
    %v10834 = vld [vmem:[%s12 + $0x58] sm:$0xff]
    %v10835 = vld [vmem:[%s12 + $0x60] sm:$0xff]
    %v10836 = vld [vmem:[%s12 + $0x68] sm:$0xff]
    %v10837 = vld [vmem:[%s12 + $0x70] sm:$0xff]
    %v10838 = vld [vmem:[%s12 + $0x78] sm:$0xff]
    %v10839 = vld [vmem:[%s12 + $0x80] sm:$0xff]
    %v10840 = vld [vmem:[%s12 + $0x88] sm:$0xff]
    %v10841 = vld [vmem:[%s17] sm:$0x1]
    %v10843 = vperm.slane %v10841, 0
    %v10846 = vsel %vm10423, %v10824, 0
    %v10849 = vsel %vm10423, %v10826, 0
    %v10852 = vsel %vm10423, %v10828, 0
    %v10855 = vsel %vm10423, %v10830, 0
    %v10858 = vsel %vm10423, %v10832, 0
    %v10861 = vsel %vm10423, %v10834, 0
    %v10864 = vsel %vm10423, %v10836, 0
    %v10867 = vsel %vm10423, %v10838, 0
    %v10870 = vsel %vm10423, %v10840, 0
    %10872 = vmatpush.msra.mxu0 %v10794
    %10873 = vmatpush.msra.mxu0 %v10791
    %10874 = vmatpush.msra.mxu0 %v10788
    %10875 = vmatpush.msra.mxu0 %v10785
    %10876 = vmatpush.msra.mxu0 %v10782
    %10877 = vmatpush.msra.mxu0 %v10779
    %10878 = vmatpush.msra.mxu0 %v10776
    %10879 = vmatpush.msra.mxu0 %v10773
    %10880 = vmatpush.msra.mxu0 %v10770
    %10881 = vmatpush.msra.mxu0 %v10767
    %10882 = vmatpush.msra.mxu0 %v10764
    %10883 = vmatpush.msra.mxu0 %v10761
    %10884 = vmatpush.msra.mxu0 %v10758
    %10885 = vmatpush.msra.mxu0 %v10755
    %10886 = vmatpush.msra.mxu0 %v10752
    %10887 = vmatpush.msra.mxu0 %v10749
    %10888 = vmatmul.f32.gmra.mxu0 %v10823
    %v10889 = vpop.f32.mrf.mxu0
    %v10890 = vadd.f32 %v10843, %v10889
    %10891 = vmatmul.f32.gmra.mxu0 %v10825
    %v10892 = vpop.f32.mrf.mxu0
    %v10893 = vadd.f32 %v10843, %v10892
    %10894 = vmatmul.f32.gmra.mxu0 %v10827
    %v10895 = vpop.f32.mrf.mxu0
    %v10896 = vadd.f32 %v10843, %v10895
    %10897 = vmatmul.f32.gmra.mxu0 %v10829
    %v10898 = vpop.f32.mrf.mxu0
    %v10899 = vadd.f32 %v10843, %v10898
    %10900 = vmatmul.f32.gmra.mxu0 %v10831
    %v10901 = vpop.f32.mrf.mxu0
    %v10902 = vadd.f32 %v10843, %v10901
    %10903 = vmatmul.f32.gmra.mxu0 %v10833
    %v10904 = vpop.f32.mrf.mxu0
    %v10905 = vadd.f32 %v10843, %v10904
    %10906 = vmatmul.f32.gmra.mxu0 %v10835
    %v10907 = vpop.f32.mrf.mxu0
    %v10908 = vadd.f32 %v10843, %v10907
    %10909 = vmatmul.f32.gmra.mxu0 %v10837
    %v10910 = vpop.f32.mrf.mxu0
    %v10911 = vadd.f32 %v10843, %v10910
    %10912 = vmatmul.f32.gmra.mxu0 %v10839
    %v10913 = vpop.f32.mrf.mxu0
    %v10914 = vadd.f32 %v10843, %v10913
    %10915 = vdwg.mxu0
    %10916 = vmatpush.msra.mxu0 0.0
    %10917 = vmatpush.msra.mxu0 0.0
    %10918 = vmatpush.msra.mxu0 0.0
    %10919 = vmatpush.msra.mxu0 0.0
    %10920 = vmatpush.msra.mxu0 0.0
    %10921 = vmatpush.msra.mxu0 0.0
    %10922 = vmatpush.msra.mxu0 0.0
    %10923 = vmatpush.msra.mxu0 %v10821
    %10924 = vmatpush.msra.mxu0 %v10818
    %10925 = vmatpush.msra.mxu0 %v10815
    %10926 = vmatpush.msra.mxu0 %v10812
    %10927 = vmatpush.msra.mxu0 %v10809
    %10928 = vmatpush.msra.mxu0 %v10806
    %10929 = vmatpush.msra.mxu0 %v10803
    %10930 = vmatpush.msra.mxu0 %v10800
    %10931 = vmatpush.msra.mxu0 %v10797
    %10932 = vmatmul.f32.gmra.mxu0 %v10846
    %v10933 = vpop.f32.mrf.mxu0
    %v10934 = vadd.f32 %v10890, %v10933
    %10935 = vmatmul.f32.gmra.mxu0 %v10849
    %v10936 = vpop.f32.mrf.mxu0
    %v10937 = vadd.f32 %v10893, %v10936
    %10938 = vmatmul.f32.gmra.mxu0 %v10852
    %v10939 = vpop.f32.mrf.mxu0
    %v10940 = vadd.f32 %v10896, %v10939
    %10941 = vmatmul.f32.gmra.mxu0 %v10855
    %v10942 = vpop.f32.mrf.mxu0
    %v10943 = vadd.f32 %v10899, %v10942
    %10944 = vmatmul.f32.gmra.mxu0 %v10858
    %v10945 = vpop.f32.mrf.mxu0
    %v10946 = vadd.f32 %v10902, %v10945
    %10947 = vmatmul.f32.gmra.mxu0 %v10861
    %v10948 = vpop.f32.mrf.mxu0
    %v10949 = vadd.f32 %v10905, %v10948
    %10950 = vmatmul.f32.gmra.mxu0 %v10864
    %v10951 = vpop.f32.mrf.mxu0
    %v10952 = vadd.f32 %v10908, %v10951
    %10953 = vmatmul.f32.gmra.mxu0 %v10867
    %v10954 = vpop.f32.mrf.mxu0
    %v10955 = vadd.f32 %v10911, %v10954
    %10956 = vmatmul.f32.gmra.mxu0 %v10870
    %v10957 = vpop.f32.mrf.mxu0
    %v10958 = vadd.f32 %v10914, %v10957
    %10959 = vdwg.mxu0
    %v10960 = vld [vmem:[#allocation5 + $0x1] sm:$0xff]
    %v10961 = vld [vmem:[#allocation5 + $0x9] sm:$0xff]
    %v10962 = vld [vmem:[#allocation5 + $0x11] sm:$0xff]
    %v10963 = vld [vmem:[#allocation5 + $0x19] sm:$0xff]
    %v10964 = vld [vmem:[#allocation5 + $0x21] sm:$0xff]
    %v10965 = vld [vmem:[#allocation5 + $0x29] sm:$0xff]
    %v10966 = vld [vmem:[#allocation5 + $0x31] sm:$0xff]
    %v10967 = vld [vmem:[#allocation5 + $0x39] sm:$0xff]
    %v10968 = vld [vmem:[#allocation5 + $0x41] sm:$0xff]
    %v10969 = vld [vmem:[%s14] sm:$0xff]
    %v10970 = vld [vmem:[%s14 + $0x8] sm:$0xff]
    %v10971 = vld [vmem:[%s14 + $0x10] sm:$0xff]
    %v10972 = vld [vmem:[%s14 + $0x18] sm:$0xff]
    %v10973 = vld [vmem:[#allocation5 + $0x2] sm:$0xff]
    %v10974 = vld [vmem:[#allocation5 + $0xa] sm:$0xff]
    %v10975 = vld [vmem:[#allocation5 + $0x12] sm:$0xff]
    %v10976 = vld [vmem:[#allocation5 + $0x1a] sm:$0xff]
    %v10977 = vld [vmem:[#allocation5 + $0x22] sm:$0xff]
    %v10978 = vld [vmem:[#allocation5 + $0x2a] sm:$0xff]
    %v10979 = vld [vmem:[#allocation5 + $0x32] sm:$0xff]
    %v10980 = vld [vmem:[#allocation5 + $0x3a] sm:$0xff]
    %v10981 = vld [vmem:[#allocation5 + $0x42] sm:$0xff]
    %s10982 = scalar_lea.vmem %s14, 32
    %v10983 = vld [vmem:[%s10982] sm:$0xff]
    %v10984 = vld [vmem:[%s10982 + $0x8] sm:$0xff]
    %v10985 = vld [vmem:[%s10982 + $0x10] sm:$0xff]
    %v10986 = vld [vmem:[%s10982 + $0x18] sm:$0xff]
    %v10988 = vsel %vm209, %v10973, 0
    %v10991 = vsel %vm209, %v10974, 0
    %v10994 = vsel %vm209, %v10975, 0
    %v10997 = vsel %vm209, %v10976, 0
    %v11000 = vsel %vm209, %v10977, 0
    %v11003 = vsel %vm209, %v10978, 0
    %v11006 = vsel %vm209, %v10979, 0
    %v11009 = vsel %vm209, %v10980, 0
    %v11012 = vsel %vm209, %v10981, 0
    %11014 = vmatpush.msra.mxu0 0.0
    %11015 = vmatpush.msra.mxu0 0.0
    %11016 = vmatpush.msra.mxu0 0.0
    %11017 = vmatpush.msra.mxu0 0.0
    %11018 = vmatpush.msra.mxu0 0.0
    %11019 = vmatpush.msra.mxu0 0.0
    %11020 = vmatpush.msra.mxu0 0.0
    %11021 = vmatpush.msra.mxu0 0.0
    %11022 = vmatpush.msra.mxu0 0.0
    %11023 = vmatpush.msra.mxu0 0.0
    %11024 = vmatpush.msra.mxu0 0.0
    %11025 = vmatpush.msra.mxu0 0.0
    %11026 = vmatpush.msra.mxu0 %v10986
    %11027 = vmatpush.msra.mxu0 %v10985
    %11028 = vmatpush.msra.mxu0 %v10984
    %11029 = vmatpush.msra.mxu0 %v10983
    %11030 = vmatmul.f32.gmra.mxu0 %v10988
    %v11031 = vpop.f32.mrf.mxu0
    %v11032 = vadd.f32 0.0, %v11031
    %11033 = vmatmul.f32.gmra.mxu0 %v10991
    %v11034 = vpop.f32.mrf.mxu0
    %v11035 = vadd.f32 0.0, %v11034
    %11036 = vmatmul.f32.gmra.mxu0 %v10994
    %v11037 = vpop.f32.mrf.mxu0
    %v11038 = vadd.f32 0.0, %v11037
    %11039 = vmatmul.f32.gmra.mxu0 %v10997
    %v11040 = vpop.f32.mrf.mxu0
    %v11041 = vadd.f32 0.0, %v11040
    %11042 = vmatmul.f32.gmra.mxu0 %v11000
    %v11043 = vpop.f32.mrf.mxu0
    %v11044 = vadd.f32 0.0, %v11043
    %11045 = vmatmul.f32.gmra.mxu0 %v11003
    %v11046 = vpop.f32.mrf.mxu0
    %v11047 = vadd.f32 0.0, %v11046
    %11048 = vmatmul.f32.gmra.mxu0 %v11006
    %v11049 = vpop.f32.mrf.mxu0
    %v11050 = vadd.f32 0.0, %v11049
    %11051 = vmatmul.f32.gmra.mxu0 %v11009
    %v11052 = vpop.f32.mrf.mxu0
    %v11053 = vadd.f32 0.0, %v11052
    %11054 = vmatmul.f32.gmra.mxu0 %v11012
    %v11055 = vpop.f32.mrf.mxu0
    %v11056 = vadd.f32 0.0, %v11055
    %11057 = vdwg.mxu0
    %v11059 = vsel %vm209, %v10960, 0
    %v11062 = vsel %vm209, %v10961, 0
    %v11065 = vsel %vm209, %v10962, 0
    %v11068 = vsel %vm209, %v10963, 0
    %v11071 = vsel %vm209, %v10964, 0
    %v11074 = vsel %vm209, %v10965, 0
    %v11077 = vsel %vm209, %v10966, 0
    %v11080 = vsel %vm209, %v10967, 0
    %v11083 = vsel %vm209, %v10968, 0
    %11085 = vmatpush.msra.mxu0 0.0
    %11086 = vmatpush.msra.mxu0 0.0
    %11087 = vmatpush.msra.mxu0 0.0
    %11088 = vmatpush.msra.mxu0 0.0
    %11089 = vmatpush.msra.mxu0 0.0
    %11090 = vmatpush.msra.mxu0 0.0
    %11091 = vmatpush.msra.mxu0 0.0
    %11092 = vmatpush.msra.mxu0 0.0
    %11093 = vmatpush.msra.mxu0 0.0
    %11094 = vmatpush.msra.mxu0 0.0
    %11095 = vmatpush.msra.mxu0 0.0
    %11096 = vmatpush.msra.mxu0 0.0
    %11097 = vmatpush.msra.mxu0 %v10972
    %11098 = vmatpush.msra.mxu0 %v10971
    %11099 = vmatpush.msra.mxu0 %v10970
    %11100 = vmatpush.msra.mxu0 %v10969
    %11101 = vmatmul.f32.gmra.mxu0 %v11059
    %v11102 = vpop.f32.mrf.mxu0
    %v11103 = vadd.f32 %v11032, %v11102
    %11104 = vmatmul.f32.gmra.mxu0 %v11062
    %v11105 = vpop.f32.mrf.mxu0
    %v11106 = vadd.f32 %v11035, %v11105
    %11107 = vmatmul.f32.gmra.mxu0 %v11065
    %v11108 = vpop.f32.mrf.mxu0
    %v11109 = vadd.f32 %v11038, %v11108
    %11110 = vmatmul.f32.gmra.mxu0 %v11068
    %v11111 = vpop.f32.mrf.mxu0
    %v11112 = vadd.f32 %v11041, %v11111
    %11113 = vmatmul.f32.gmra.mxu0 %v11071
    %v11114 = vpop.f32.mrf.mxu0
    %v11115 = vadd.f32 %v11044, %v11114
    %11116 = vmatmul.f32.gmra.mxu0 %v11074
    %v11117 = vpop.f32.mrf.mxu0
    %v11118 = vadd.f32 %v11047, %v11117
    %11119 = vmatmul.f32.gmra.mxu0 %v11077
    %v11120 = vpop.f32.mrf.mxu0
    %v11121 = vadd.f32 %v11050, %v11120
    %11122 = vmatmul.f32.gmra.mxu0 %v11080
    %v11123 = vpop.f32.mrf.mxu0
    %v11124 = vadd.f32 %v11053, %v11123
    %11125 = vmatmul.f32.gmra.mxu0 %v11083
    %v11126 = vpop.f32.mrf.mxu0
    %v11127 = vadd.f32 %v11056, %v11126
    %11128 = vdwg.mxu0
    %v11129 = vld [vmem:[#allocation5 + $0x3] sm:$0xff]
    %v11130 = vld [vmem:[#allocation5 + $0xb] sm:$0xff]
    %v11131 = vld [vmem:[#allocation5 + $0x13] sm:$0xff]
    %v11132 = vld [vmem:[#allocation5 + $0x1b] sm:$0xff]
    %v11133 = vld [vmem:[#allocation5 + $0x23] sm:$0xff]
    %v11134 = vld [vmem:[#allocation5 + $0x2b] sm:$0xff]
    %v11135 = vld [vmem:[#allocation5 + $0x33] sm:$0xff]
    %v11136 = vld [vmem:[#allocation5 + $0x3b] sm:$0xff]
    %v11137 = vld [vmem:[#allocation5 + $0x43] sm:$0xff]
    %s11138 = scalar_lea.vmem %s14, 64
    %v11139 = vld [vmem:[%s11138] sm:$0xff]
    %v11140 = vld [vmem:[%s11138 + $0x8] sm:$0xff]
    %v11141 = vld [vmem:[%s11138 + $0x10] sm:$0xff]
    %v11142 = vld [vmem:[%s11138 + $0x18] sm:$0xff]
    %v11144 = vsel %vm209, %v11129, 0
    %v11147 = vsel %vm209, %v11130, 0
    %v11150 = vsel %vm209, %v11131, 0
    %v11153 = vsel %vm209, %v11132, 0
    %v11156 = vsel %vm209, %v11133, 0
    %v11159 = vsel %vm209, %v11134, 0
    %v11162 = vsel %vm209, %v11135, 0
    %v11165 = vsel %vm209, %v11136, 0
    %v11168 = vsel %vm209, %v11137, 0
    %11170 = vmatpush.msra.mxu0 0.0
    %11171 = vmatpush.msra.mxu0 0.0
    %11172 = vmatpush.msra.mxu0 0.0
    %11173 = vmatpush.msra.mxu0 0.0
    %11174 = vmatpush.msra.mxu0 0.0
    %11175 = vmatpush.msra.mxu0 0.0
    %11176 = vmatpush.msra.mxu0 0.0
    %11177 = vmatpush.msra.mxu0 0.0
    %11178 = vmatpush.msra.mxu0 0.0
    %11179 = vmatpush.msra.mxu0 0.0
    %11180 = vmatpush.msra.mxu0 0.0
    %11181 = vmatpush.msra.mxu0 0.0
    %11182 = vmatpush.msra.mxu0 %v11142
    %11183 = vmatpush.msra.mxu0 %v11141
    %11184 = vmatpush.msra.mxu0 %v11140
    %11185 = vmatpush.msra.mxu0 %v11139
    %11186 = vmatmul.f32.gmra.mxu0 %v11144
    %v11187 = vpop.f32.mrf.mxu0
    %v11188 = vadd.f32 0.0, %v11187
    %11189 = vmatmul.f32.gmra.mxu0 %v11147
    %v11190 = vpop.f32.mrf.mxu0
    %v11191 = vadd.f32 0.0, %v11190
    %11192 = vmatmul.f32.gmra.mxu0 %v11150
    %v11193 = vpop.f32.mrf.mxu0
    %v11194 = vadd.f32 0.0, %v11193
    %11195 = vmatmul.f32.gmra.mxu0 %v11153
    %v11196 = vpop.f32.mrf.mxu0
    %v11197 = vadd.f32 0.0, %v11196
    %11198 = vmatmul.f32.gmra.mxu0 %v11156
    %v11199 = vpop.f32.mrf.mxu0
    %v11200 = vadd.f32 0.0, %v11199
    %11201 = vmatmul.f32.gmra.mxu0 %v11159
    %v11202 = vpop.f32.mrf.mxu0
    %v11203 = vadd.f32 0.0, %v11202
    %11204 = vmatmul.f32.gmra.mxu0 %v11162
    %v11205 = vpop.f32.mrf.mxu0
    %v11206 = vadd.f32 0.0, %v11205
    %11207 = vmatmul.f32.gmra.mxu0 %v11165
    %v11208 = vpop.f32.mrf.mxu0
    %v11209 = vadd.f32 0.0, %v11208
    %11210 = vmatmul.f32.gmra.mxu0 %v11168
    %v11211 = vpop.f32.mrf.mxu0
    %v11212 = vadd.f32 0.0, %v11211
    %11213 = vdwg.mxu0
    %v11214 = vadd.f32 %v11103, %v11188
    %v11215 = vadd.f32 %v11106, %v11191
    %v11216 = vadd.f32 %v11109, %v11194
    %v11217 = vadd.f32 %v11112, %v11197
    %v11218 = vadd.f32 %v11115, %v11200
    %v11219 = vadd.f32 %v11118, %v11203
    %v11220 = vadd.f32 %v11121, %v11206
    %v11221 = vadd.f32 %v11124, %v11209
    %v11222 = vadd.f32 %v11127, %v11212
    %v11223 = vld [vmem:[#allocation5 + $0x7] sm:$0xff]
    %v11224 = vld [vmem:[#allocation5 + $0xf] sm:$0xff]
    %v11225 = vld [vmem:[#allocation5 + $0x17] sm:$0xff]
    %v11226 = vld [vmem:[#allocation5 + $0x1f] sm:$0xff]
    %v11227 = vld [vmem:[#allocation5 + $0x27] sm:$0xff]
    %v11228 = vld [vmem:[#allocation5 + $0x2f] sm:$0xff]
    %v11229 = vld [vmem:[#allocation5 + $0x37] sm:$0xff]
    %v11230 = vld [vmem:[#allocation5 + $0x3f] sm:$0xff]
    %v11231 = vld [vmem:[#allocation5 + $0x47] sm:$0xff]
    %s11232 = scalar_lea.vmem %s14, 96
    %v11233 = vld [vmem:[%s11232] sm:$0xff]
    %v11234 = vld [vmem:[%s11232 + $0x8] sm:$0xff]
    %v11235 = vld [vmem:[%s11232 + $0x10] sm:$0xff]
    %v11236 = vld [vmem:[%s11232 + $0x18] sm:$0xff]
    %v11238 = vsel %vm209, %v11223, 0
    %v11241 = vsel %vm209, %v11224, 0
    %v11244 = vsel %vm209, %v11225, 0
    %v11247 = vsel %vm209, %v11226, 0
    %v11250 = vsel %vm209, %v11227, 0
    %v11253 = vsel %vm209, %v11228, 0
    %v11256 = vsel %vm209, %v11229, 0
    %v11259 = vsel %vm209, %v11230, 0
    %v11262 = vsel %vm209, %v11231, 0
    %11264 = vmatpush.msra.mxu0 0.0
    %11265 = vmatpush.msra.mxu0 0.0
    %11266 = vmatpush.msra.mxu0 0.0
    %11267 = vmatpush.msra.mxu0 0.0
    %11268 = vmatpush.msra.mxu0 0.0
    %11269 = vmatpush.msra.mxu0 0.0
    %11270 = vmatpush.msra.mxu0 0.0
    %11271 = vmatpush.msra.mxu0 0.0
    %11272 = vmatpush.msra.mxu0 0.0
    %11273 = vmatpush.msra.mxu0 0.0
    %11274 = vmatpush.msra.mxu0 0.0
    %11275 = vmatpush.msra.mxu0 0.0
    %11276 = vmatpush.msra.mxu0 %v11236
    %11277 = vmatpush.msra.mxu0 %v11235
    %11278 = vmatpush.msra.mxu0 %v11234
    %11279 = vmatpush.msra.mxu0 %v11233
    %11280 = vmatmul.f32.gmra.mxu0 %v11238
    %v11281 = vpop.f32.mrf.mxu0
    %v11282 = vadd.f32 0.0, %v11281
    %11283 = vmatmul.f32.gmra.mxu0 %v11241
    %v11284 = vpop.f32.mrf.mxu0
    %v11285 = vadd.f32 0.0, %v11284
    %11286 = vmatmul.f32.gmra.mxu0 %v11244
    %v11287 = vpop.f32.mrf.mxu0
    %v11288 = vadd.f32 0.0, %v11287
    %11289 = vmatmul.f32.gmra.mxu0 %v11247
    %v11290 = vpop.f32.mrf.mxu0
    %v11291 = vadd.f32 0.0, %v11290
    %11292 = vmatmul.f32.gmra.mxu0 %v11250
    %v11293 = vpop.f32.mrf.mxu0
    %v11294 = vadd.f32 0.0, %v11293
    %11295 = vmatmul.f32.gmra.mxu0 %v11253
    %v11296 = vpop.f32.mrf.mxu0
    %v11297 = vadd.f32 0.0, %v11296
    %11298 = vmatmul.f32.gmra.mxu0 %v11256
    %v11299 = vpop.f32.mrf.mxu0
    %v11300 = vadd.f32 0.0, %v11299
    %11301 = vmatmul.f32.gmra.mxu0 %v11259
    %v11302 = vpop.f32.mrf.mxu0
    %v11303 = vadd.f32 0.0, %v11302
    %11304 = vmatmul.f32.gmra.mxu0 %v11262
    %v11305 = vpop.f32.mrf.mxu0
    %v11306 = vadd.f32 0.0, %v11305
    %11307 = vdwg.mxu0
    %v11308 = vadd.f32 %v11214, %v11282
    %v11309 = vadd.f32 %v11215, %v11285
    %v11310 = vadd.f32 %v11216, %v11288
    %v11311 = vadd.f32 %v11217, %v11291
    %v11312 = vadd.f32 %v11218, %v11294
    %v11313 = vadd.f32 %v11219, %v11297
    %v11314 = vadd.f32 %v11220, %v11300
    %v11315 = vadd.f32 %v11221, %v11303
    %v11316 = vadd.f32 %v11222, %v11306
    %v11317 = vld [vmem:[#allocation5 + $0x8] sm:$0xff]
    %v11318 = vld [vmem:[#allocation5 + $0x10] sm:$0xff]
    %v11319 = vld [vmem:[#allocation5 + $0x18] sm:$0xff]
    %v11320 = vld [vmem:[#allocation5 + $0x20] sm:$0xff]
    %v11321 = vld [vmem:[#allocation5 + $0x28] sm:$0xff]
    %v11322 = vld [vmem:[#allocation5 + $0x30] sm:$0xff]
    %v11323 = vld [vmem:[#allocation5 + $0x38] sm:$0xff]
    %v11324 = vld [vmem:[#allocation5 + $0x40] sm:$0xff]
    %v11325 = vld [vmem:[#allocation5 + $0x48] sm:$0xff]
    %s11326 = scalar_lea.vmem %s14, 128
    %v11327 = vld [vmem:[%s11326] sm:$0xff]
    %v11328 = vld [vmem:[%s11326 + $0x8] sm:$0xff]
    %v11329 = vld [vmem:[%s11326 + $0x10] sm:$0xff]
    %v11330 = vld [vmem:[%s11326 + $0x18] sm:$0xff]
    %v11332 = vsel %vm209, %v11317, 0
    %v11335 = vsel %vm209, %v11318, 0
    %v11338 = vsel %vm209, %v11319, 0
    %v11341 = vsel %vm209, %v11320, 0
    %v11344 = vsel %vm209, %v11321, 0
    %v11347 = vsel %vm209, %v11322, 0
    %v11350 = vsel %vm209, %v11323, 0
    %v11353 = vsel %vm209, %v11324, 0
    %v11356 = vsel %vm209, %v11325, 0
    %11358 = vmatpush.msra.mxu0 0.0
    %11359 = vmatpush.msra.mxu0 0.0
    %11360 = vmatpush.msra.mxu0 0.0
    %11361 = vmatpush.msra.mxu0 0.0
    %11362 = vmatpush.msra.mxu0 0.0
    %11363 = vmatpush.msra.mxu0 0.0
    %11364 = vmatpush.msra.mxu0 0.0
    %11365 = vmatpush.msra.mxu0 0.0
    %11366 = vmatpush.msra.mxu0 0.0
    %11367 = vmatpush.msra.mxu0 0.0
    %11368 = vmatpush.msra.mxu0 0.0
    %11369 = vmatpush.msra.mxu0 0.0
    %11370 = vmatpush.msra.mxu0 %v11330
    %11371 = vmatpush.msra.mxu0 %v11329
    %11372 = vmatpush.msra.mxu0 %v11328
    %11373 = vmatpush.msra.mxu0 %v11327
    %11374 = vmatmul.f32.gmra.mxu0 %v11332
    %v11375 = vpop.f32.mrf.mxu0
    %v11376 = vadd.f32 0.0, %v11375
    %11377 = vmatmul.f32.gmra.mxu0 %v11335
    %v11378 = vpop.f32.mrf.mxu0
    %v11379 = vadd.f32 0.0, %v11378
    %11380 = vmatmul.f32.gmra.mxu0 %v11338
    %v11381 = vpop.f32.mrf.mxu0
    %v11382 = vadd.f32 0.0, %v11381
    %11383 = vmatmul.f32.gmra.mxu0 %v11341
    %v11384 = vpop.f32.mrf.mxu0
    %v11385 = vadd.f32 0.0, %v11384
    %11386 = vmatmul.f32.gmra.mxu0 %v11344
    %v11387 = vpop.f32.mrf.mxu0
    %v11388 = vadd.f32 0.0, %v11387
    %11389 = vmatmul.f32.gmra.mxu0 %v11347
    %v11390 = vpop.f32.mrf.mxu0
    %v11391 = vadd.f32 0.0, %v11390
    %11392 = vmatmul.f32.gmra.mxu0 %v11350
    %v11393 = vpop.f32.mrf.mxu0
    %v11394 = vadd.f32 0.0, %v11393
    %11395 = vmatmul.f32.gmra.mxu0 %v11353
    %v11396 = vpop.f32.mrf.mxu0
    %v11397 = vadd.f32 0.0, %v11396
    %11398 = vmatmul.f32.gmra.mxu0 %v11356
    %v11399 = vpop.f32.mrf.mxu0
    %v11400 = vadd.f32 0.0, %v11399
    %11401 = vdwg.mxu0
    %v11402 = vadd.f32 %v11308, %v11376
    %v11403 = vadd.f32 %v11309, %v11379
    %v11404 = vadd.f32 %v11310, %v11382
    %v11405 = vadd.f32 %v11311, %v11385
    %v11406 = vadd.f32 %v11312, %v11388
    %v11407 = vadd.f32 %v11313, %v11391
    %v11408 = vadd.f32 %v11314, %v11394
    %v11409 = vadd.f32 %v11315, %v11397
    %v11410 = vadd.f32 %v11316, %v11400
    %v11411 = vld [vmem:[#allocation5 + $0x9] sm:$0xff]
    %v11412 = vld [vmem:[#allocation5 + $0x11] sm:$0xff]
    %v11413 = vld [vmem:[#allocation5 + $0x19] sm:$0xff]
    %v11414 = vld [vmem:[#allocation5 + $0x21] sm:$0xff]
    %v11415 = vld [vmem:[#allocation5 + $0x29] sm:$0xff]
    %v11416 = vld [vmem:[#allocation5 + $0x31] sm:$0xff]
    %v11417 = vld [vmem:[#allocation5 + $0x39] sm:$0xff]
    %v11418 = vld [vmem:[#allocation5 + $0x41] sm:$0xff]
    %v11419 = vld [vmem:[#allocation5 + $0x49] sm:$0xff]
    %s11420 = scalar_lea.vmem %s14, 160
    %v11421 = vld [vmem:[%s11420] sm:$0xff]
    %v11422 = vld [vmem:[%s11420 + $0x8] sm:$0xff]
    %v11423 = vld [vmem:[%s11420 + $0x10] sm:$0xff]
    %v11424 = vld [vmem:[%s11420 + $0x18] sm:$0xff]
    %v11426 = vsel %vm209, %v11411, 0
    %v11429 = vsel %vm209, %v11412, 0
    %v11432 = vsel %vm209, %v11413, 0
    %v11435 = vsel %vm209, %v11414, 0
    %v11438 = vsel %vm209, %v11415, 0
    %v11441 = vsel %vm209, %v11416, 0
    %v11444 = vsel %vm209, %v11417, 0
    %v11447 = vsel %vm209, %v11418, 0
    %v11450 = vsel %vm209, %v11419, 0
    %11452 = vmatpush.msra.mxu0 0.0
    %11453 = vmatpush.msra.mxu0 0.0
    %11454 = vmatpush.msra.mxu0 0.0
    %11455 = vmatpush.msra.mxu0 0.0
    %11456 = vmatpush.msra.mxu0 0.0
    %11457 = vmatpush.msra.mxu0 0.0
    %11458 = vmatpush.msra.mxu0 0.0
    %11459 = vmatpush.msra.mxu0 0.0
    %11460 = vmatpush.msra.mxu0 0.0
    %11461 = vmatpush.msra.mxu0 0.0
    %11462 = vmatpush.msra.mxu0 0.0
    %11463 = vmatpush.msra.mxu0 0.0
    %11464 = vmatpush.msra.mxu0 %v11424
    %11465 = vmatpush.msra.mxu0 %v11423
    %11466 = vmatpush.msra.mxu0 %v11422
    %11467 = vmatpush.msra.mxu0 %v11421
    %11468 = vmatmul.f32.gmra.mxu0 %v11426
    %v11469 = vpop.f32.mrf.mxu0
    %v11470 = vadd.f32 0.0, %v11469
    %11471 = vmatmul.f32.gmra.mxu0 %v11429
    %v11472 = vpop.f32.mrf.mxu0
    %v11473 = vadd.f32 0.0, %v11472
    %11474 = vmatmul.f32.gmra.mxu0 %v11432
    %v11475 = vpop.f32.mrf.mxu0
    %v11476 = vadd.f32 0.0, %v11475
    %11477 = vmatmul.f32.gmra.mxu0 %v11435
    %v11478 = vpop.f32.mrf.mxu0
    %v11479 = vadd.f32 0.0, %v11478
    %11480 = vmatmul.f32.gmra.mxu0 %v11438
    %v11481 = vpop.f32.mrf.mxu0
    %v11482 = vadd.f32 0.0, %v11481
    %11483 = vmatmul.f32.gmra.mxu0 %v11441
    %v11484 = vpop.f32.mrf.mxu0
    %v11485 = vadd.f32 0.0, %v11484
    %11486 = vmatmul.f32.gmra.mxu0 %v11444
    %v11487 = vpop.f32.mrf.mxu0
    %v11488 = vadd.f32 0.0, %v11487
    %11489 = vmatmul.f32.gmra.mxu0 %v11447
    %v11490 = vpop.f32.mrf.mxu0
    %v11491 = vadd.f32 0.0, %v11490
    %11492 = vmatmul.f32.gmra.mxu0 %v11450
    %v11493 = vpop.f32.mrf.mxu0
    %v11494 = vadd.f32 0.0, %v11493
    %11495 = vdwg.mxu0
    %v11496 = vadd.f32 %v11402, %v11470
    %v11497 = vadd.f32 %v11403, %v11473
    %v11498 = vadd.f32 %v11404, %v11476
    %v11499 = vadd.f32 %v11405, %v11479
    %v11500 = vadd.f32 %v11406, %v11482
    %v11501 = vadd.f32 %v11407, %v11485
    %v11502 = vadd.f32 %v11408, %v11488
    %v11503 = vadd.f32 %v11409, %v11491
    %v11504 = vadd.f32 %v11410, %v11494
    %v11505 = vld [vmem:[#allocation5 + $0xd] sm:$0xff]
    %v11506 = vld [vmem:[#allocation5 + $0x15] sm:$0xff]
    %v11507 = vld [vmem:[#allocation5 + $0x1d] sm:$0xff]
    %v11508 = vld [vmem:[#allocation5 + $0x25] sm:$0xff]
    %v11509 = vld [vmem:[#allocation5 + $0x2d] sm:$0xff]
    %v11510 = vld [vmem:[#allocation5 + $0x35] sm:$0xff]
    %v11511 = vld [vmem:[#allocation5 + $0x3d] sm:$0xff]
    %v11512 = vld [vmem:[#allocation5 + $0x45] sm:$0xff]
    %v11513 = vld [vmem:[#allocation5 + $0x4d] sm:$0xff]
    %s11514 = scalar_lea.vmem %s14, 192
    %v11515 = vld [vmem:[%s11514] sm:$0xff]
    %v11516 = vld [vmem:[%s11514 + $0x8] sm:$0xff]
    %v11517 = vld [vmem:[%s11514 + $0x10] sm:$0xff]
    %v11518 = vld [vmem:[%s11514 + $0x18] sm:$0xff]
    %v11520 = vsel %vm209, %v11505, 0
    %v11523 = vsel %vm209, %v11506, 0
    %v11526 = vsel %vm209, %v11507, 0
    %v11529 = vsel %vm209, %v11508, 0
    %v11532 = vsel %vm209, %v11509, 0
    %v11535 = vsel %vm209, %v11510, 0
    %v11538 = vsel %vm209, %v11511, 0
    %v11541 = vsel %vm209, %v11512, 0
    %v11544 = vsel %vm209, %v11513, 0
    %11546 = vmatpush.msra.mxu0 0.0
    %11547 = vmatpush.msra.mxu0 0.0
    %11548 = vmatpush.msra.mxu0 0.0
    %11549 = vmatpush.msra.mxu0 0.0
    %11550 = vmatpush.msra.mxu0 0.0
    %11551 = vmatpush.msra.mxu0 0.0
    %11552 = vmatpush.msra.mxu0 0.0
    %11553 = vmatpush.msra.mxu0 0.0
    %11554 = vmatpush.msra.mxu0 0.0
    %11555 = vmatpush.msra.mxu0 0.0
    %11556 = vmatpush.msra.mxu0 0.0
    %11557 = vmatpush.msra.mxu0 0.0
    %11558 = vmatpush.msra.mxu0 %v11518
    %11559 = vmatpush.msra.mxu0 %v11517
    %11560 = vmatpush.msra.mxu0 %v11516
    %11561 = vmatpush.msra.mxu0 %v11515
    %11562 = vmatmul.f32.gmra.mxu0 %v11520
    %v11563 = vpop.f32.mrf.mxu0
    %v11564 = vadd.f32 0.0, %v11563
    %11565 = vmatmul.f32.gmra.mxu0 %v11523
    %v11566 = vpop.f32.mrf.mxu0
    %v11567 = vadd.f32 0.0, %v11566
    %11568 = vmatmul.f32.gmra.mxu0 %v11526
    %v11569 = vpop.f32.mrf.mxu0
    %v11570 = vadd.f32 0.0, %v11569
    %11571 = vmatmul.f32.gmra.mxu0 %v11529
    %v11572 = vpop.f32.mrf.mxu0
    %v11573 = vadd.f32 0.0, %v11572
    %11574 = vmatmul.f32.gmra.mxu0 %v11532
    %v11575 = vpop.f32.mrf.mxu0
    %v11576 = vadd.f32 0.0, %v11575
    %11577 = vmatmul.f32.gmra.mxu0 %v11535
    %v11578 = vpop.f32.mrf.mxu0
    %v11579 = vadd.f32 0.0, %v11578
    %11580 = vmatmul.f32.gmra.mxu0 %v11538
    %v11581 = vpop.f32.mrf.mxu0
    %v11582 = vadd.f32 0.0, %v11581
    %11583 = vmatmul.f32.gmra.mxu0 %v11541
    %v11584 = vpop.f32.mrf.mxu0
    %v11585 = vadd.f32 0.0, %v11584
    %11586 = vmatmul.f32.gmra.mxu0 %v11544
    %v11587 = vpop.f32.mrf.mxu0
    %v11588 = vadd.f32 0.0, %v11587
    %11589 = vdwg.mxu0
    %v11590 = vadd.f32 %v11496, %v11564
    %v11591 = vadd.f32 %v11497, %v11567
    %v11592 = vadd.f32 %v11498, %v11570
    %v11593 = vadd.f32 %v11499, %v11573
    %v11594 = vadd.f32 %v11500, %v11576
    %v11595 = vadd.f32 %v11501, %v11579
    %v11596 = vadd.f32 %v11502, %v11582
    %v11597 = vadd.f32 %v11503, %v11585
    %v11598 = vadd.f32 %v11504, %v11588
    %v11599 = vld [vmem:[#allocation5 + $0xe] sm:$0xff]
    %v11600 = vld [vmem:[#allocation5 + $0x16] sm:$0xff]
    %v11601 = vld [vmem:[#allocation5 + $0x1e] sm:$0xff]
    %v11602 = vld [vmem:[#allocation5 + $0x26] sm:$0xff]
    %v11603 = vld [vmem:[#allocation5 + $0x2e] sm:$0xff]
    %v11604 = vld [vmem:[#allocation5 + $0x36] sm:$0xff]
    %v11605 = vld [vmem:[#allocation5 + $0x3e] sm:$0xff]
    %v11606 = vld [vmem:[#allocation5 + $0x46] sm:$0xff]
    %v11607 = vld [vmem:[#allocation5 + $0x4e] sm:$0xff]
    %s11608 = scalar_lea.vmem %s14, 224
    %v11609 = vld [vmem:[%s11608] sm:$0xff]
    %v11610 = vld [vmem:[%s11608 + $0x8] sm:$0xff]
    %v11611 = vld [vmem:[%s11608 + $0x10] sm:$0xff]
    %v11612 = vld [vmem:[%s11608 + $0x18] sm:$0xff]
    %v11614 = vsel %vm209, %v11599, 0
    %v11617 = vsel %vm209, %v11600, 0
    %v11620 = vsel %vm209, %v11601, 0
    %v11623 = vsel %vm209, %v11602, 0
    %v11626 = vsel %vm209, %v11603, 0
    %v11629 = vsel %vm209, %v11604, 0
    %v11632 = vsel %vm209, %v11605, 0
    %v11635 = vsel %vm209, %v11606, 0
    %v11638 = vsel %vm209, %v11607, 0
    %11640 = vmatpush.msra.mxu0 0.0
    %11641 = vmatpush.msra.mxu0 0.0
    %11642 = vmatpush.msra.mxu0 0.0
    %11643 = vmatpush.msra.mxu0 0.0
    %11644 = vmatpush.msra.mxu0 0.0
    %11645 = vmatpush.msra.mxu0 0.0
    %11646 = vmatpush.msra.mxu0 0.0
    %11647 = vmatpush.msra.mxu0 0.0
    %11648 = vmatpush.msra.mxu0 0.0
    %11649 = vmatpush.msra.mxu0 0.0
    %11650 = vmatpush.msra.mxu0 0.0
    %11651 = vmatpush.msra.mxu0 0.0
    %11652 = vmatpush.msra.mxu0 %v11612
    %11653 = vmatpush.msra.mxu0 %v11611
    %11654 = vmatpush.msra.mxu0 %v11610
    %11655 = vmatpush.msra.mxu0 %v11609
    %11656 = vmatmul.f32.gmra.mxu0 %v11614
    %v11657 = vpop.f32.mrf.mxu0
    %v11658 = vadd.f32 0.0, %v11657
    %11659 = vmatmul.f32.gmra.mxu0 %v11617
    %v11660 = vpop.f32.mrf.mxu0
    %v11661 = vadd.f32 0.0, %v11660
    %11662 = vmatmul.f32.gmra.mxu0 %v11620
    %v11663 = vpop.f32.mrf.mxu0
    %v11664 = vadd.f32 0.0, %v11663
    %11665 = vmatmul.f32.gmra.mxu0 %v11623
    %v11666 = vpop.f32.mrf.mxu0
    %v11667 = vadd.f32 0.0, %v11666
    %11668 = vmatmul.f32.gmra.mxu0 %v11626
    %v11669 = vpop.f32.mrf.mxu0
    %v11670 = vadd.f32 0.0, %v11669
    %11671 = vmatmul.f32.gmra.mxu0 %v11629
    %v11672 = vpop.f32.mrf.mxu0
    %v11673 = vadd.f32 0.0, %v11672
    %11674 = vmatmul.f32.gmra.mxu0 %v11632
    %v11675 = vpop.f32.mrf.mxu0
    %v11676 = vadd.f32 0.0, %v11675
    %11677 = vmatmul.f32.gmra.mxu0 %v11635
    %v11678 = vpop.f32.mrf.mxu0
    %v11679 = vadd.f32 0.0, %v11678
    %11680 = vmatmul.f32.gmra.mxu0 %v11638
    %v11681 = vpop.f32.mrf.mxu0
    %v11682 = vadd.f32 0.0, %v11681
    %11683 = vdwg.mxu0
    %v11684 = vadd.f32 %v11590, %v11658
    %v11685 = vadd.f32 %v11591, %v11661
    %v11686 = vadd.f32 %v11592, %v11664
    %v11687 = vadd.f32 %v11593, %v11667
    %v11688 = vadd.f32 %v11594, %v11670
    %v11689 = vadd.f32 %v11595, %v11673
    %v11690 = vadd.f32 %v11596, %v11676
    %v11691 = vadd.f32 %v11597, %v11679
    %v11692 = vadd.f32 %v11598, %v11682
    %v11693 = vld [vmem:[#allocation5 + $0xf] sm:$0xff]
    %v11694 = vld [vmem:[#allocation5 + $0x17] sm:$0xff]
    %v11695 = vld [vmem:[#allocation5 + $0x1f] sm:$0xff]
    %v11696 = vld [vmem:[#allocation5 + $0x27] sm:$0xff]
    %v11697 = vld [vmem:[#allocation5 + $0x2f] sm:$0xff]
    %v11698 = vld [vmem:[#allocation5 + $0x37] sm:$0xff]
    %v11699 = vld [vmem:[#allocation5 + $0x3f] sm:$0xff]
    %v11700 = vld [vmem:[#allocation5 + $0x47] sm:$0xff]
    %v11701 = vld [vmem:[#allocation5 + $0x4f] sm:$0xff]
    %s11702 = scalar_lea.vmem %s14, 256
    %v11703 = vld [vmem:[%s11702] sm:$0xff]
    %v11704 = vld [vmem:[%s11702 + $0x8] sm:$0xff]
    %v11705 = vld [vmem:[%s11702 + $0x10] sm:$0xff]
    %v11706 = vld [vmem:[%s11702 + $0x18] sm:$0xff]
    %v11708 = vsel %vm209, %v11693, 0
    %v11711 = vsel %vm209, %v11694, 0
    %v11714 = vsel %vm209, %v11695, 0
    %v11717 = vsel %vm209, %v11696, 0
    %v11720 = vsel %vm209, %v11697, 0
    %v11723 = vsel %vm209, %v11698, 0
    %v11726 = vsel %vm209, %v11699, 0
    %v11729 = vsel %vm209, %v11700, 0
    %v11732 = vsel %vm209, %v11701, 0
    %11734 = vmatpush.msra.mxu0 0.0
    %11735 = vmatpush.msra.mxu0 0.0
    %11736 = vmatpush.msra.mxu0 0.0
    %11737 = vmatpush.msra.mxu0 0.0
    %11738 = vmatpush.msra.mxu0 0.0
    %11739 = vmatpush.msra.mxu0 0.0
    %11740 = vmatpush.msra.mxu0 0.0
    %11741 = vmatpush.msra.mxu0 0.0
    %11742 = vmatpush.msra.mxu0 0.0
    %11743 = vmatpush.msra.mxu0 0.0
    %11744 = vmatpush.msra.mxu0 0.0
    %11745 = vmatpush.msra.mxu0 0.0
    %11746 = vmatpush.msra.mxu0 %v11706
    %11747 = vmatpush.msra.mxu0 %v11705
    %11748 = vmatpush.msra.mxu0 %v11704
    %11749 = vmatpush.msra.mxu0 %v11703
    %11750 = vmatmul.f32.gmra.mxu0 %v11708
    %v11751 = vpop.f32.mrf.mxu0
    %v11752 = vadd.f32 0.0, %v11751
    %11753 = vmatmul.f32.gmra.mxu0 %v11711
    %v11754 = vpop.f32.mrf.mxu0
    %v11755 = vadd.f32 0.0, %v11754
    %11756 = vmatmul.f32.gmra.mxu0 %v11714
    %v11757 = vpop.f32.mrf.mxu0
    %v11758 = vadd.f32 0.0, %v11757
    %11759 = vmatmul.f32.gmra.mxu0 %v11717
    %v11760 = vpop.f32.mrf.mxu0
    %v11761 = vadd.f32 0.0, %v11760
    %11762 = vmatmul.f32.gmra.mxu0 %v11720
    %v11763 = vpop.f32.mrf.mxu0
    %v11764 = vadd.f32 0.0, %v11763
    %11765 = vmatmul.f32.gmra.mxu0 %v11723
    %v11766 = vpop.f32.mrf.mxu0
    %v11767 = vadd.f32 0.0, %v11766
    %11768 = vmatmul.f32.gmra.mxu0 %v11726
    %v11769 = vpop.f32.mrf.mxu0
    %v11770 = vadd.f32 0.0, %v11769
    %11771 = vmatmul.f32.gmra.mxu0 %v11729
    %v11772 = vpop.f32.mrf.mxu0
    %v11773 = vadd.f32 0.0, %v11772
    %11774 = vmatmul.f32.gmra.mxu0 %v11732
    %v11775 = vpop.f32.mrf.mxu0
    %v11776 = vadd.f32 0.0, %v11775
    %11777 = vdwg.mxu0
    %v11778 = vadd.f32 %v11684, %v11752
    %v11779 = vadd.f32 %v11685, %v11755
    %v11780 = vadd.f32 %v11686, %v11758
    %v11781 = vadd.f32 %v11687, %v11761
    %v11782 = vadd.f32 %v11688, %v11764
    %v11783 = vadd.f32 %v11689, %v11767
    %v11784 = vadd.f32 %v11690, %v11770
    %v11785 = vadd.f32 %v11691, %v11773
    %v11786 = vadd.f32 %v11692, %v11776
    %v11787 = vld [vmem:[%s15] sm:$0x1]
    %v11789 = vperm.slane %v11787, 0
    %v11791 = vadd.f32 %v11778, %v11789
    %v11792 = vadd.f32 %v11779, %v11789
    %v11793 = vadd.f32 %v11780, %v11789
    %v11794 = vadd.f32 %v11781, %v11789
    %v11795 = vadd.f32 %v11782, %v11789
    %v11796 = vadd.f32 %v11783, %v11789
    %v11797 = vadd.f32 %v11784, %v11789
    %v11798 = vadd.f32 %v11785, %v11789
    %v11799 = vadd.f32 %v11786, %v11789
    %v11800 = vadd.f32 %v11791, %v10934
    %v11801 = vadd.f32 %v11792, %v10937
    %v11802 = vadd.f32 %v11793, %v10940
    %v11803 = vadd.f32 %v11794, %v10943
    %v11804 = vadd.f32 %v11795, %v10946
    %v11805 = vadd.f32 %v11796, %v10949
    %v11806 = vadd.f32 %v11797, %v10952
    %v11807 = vadd.f32 %v11798, %v10955
    %v11808 = vadd.f32 %v11799, %v10958
    %v11809 = vmax.f32 %v11800, 0.0
    %v11810 = vmax.f32 %v11801, 0.0
    %v11811 = vmax.f32 %v11802, 0.0
    %v11812 = vmax.f32 %v11803, 0.0
    %v11813 = vmax.f32 %v11804, 0.0
    %v11814 = vmax.f32 %v11805, 0.0
    %v11815 = vmax.f32 %v11806, 0.0
    %v11816 = vmax.f32 %v11807, 0.0
    %v11817 = vmax.f32 %v11808, 0.0
    %v11818 = vld [vmem:[%s18] sm:$0x3]
    %v11820 = vsel %vm10423, %v11818, 0
    %11822 = vmatpush.msra.mxu0 0.0
    %11823 = vmatpush.msra.mxu0 0.0
    %11824 = vmatpush.msra.mxu0 0.0
    %11825 = vmatpush.msra.mxu0 0.0
    %11826 = vmatpush.msra.mxu0 0.0
    %11827 = vmatpush.msra.mxu0 0.0
    %11828 = vmatpush.msra.mxu0 0.0
    %11829 = vmatpush.msra.mxu0 %v11817
    %11830 = vmatpush.msra.mxu0 %v11816
    %11831 = vmatpush.msra.mxu0 %v11815
    %11832 = vmatpush.msra.mxu0 %v11814
    %11833 = vmatpush.msra.mxu0 %v11813
    %11834 = vmatpush.msra.mxu0 %v11812
    %11835 = vmatpush.msra.mxu0 %v11811
    %11836 = vmatpush.msra.mxu0 %v11810
    %11837 = vmatpush.msra.mxu0 %v11809
    %11838 = vmatmul.f32.gmra.mxu0 %v11820
    %v11839 = vpop.f32.mrf.mxu0
    %v11840 = vadd.f32 0.0, %v11839
    %11841 = vdwg.mxu0
    %vm11842 = vcmask 254976
    %11843 = vst.msk [vmem:[#allocation6] sm:$0x3] %vm11842, %v11840
    // Predicated region
    $region78: #{resnet_fe_forward.1} parent=1 // pred_check
      _
    $region79: #{resnet_fe_forward.1} parent=1 // pred_check_branch
      %11845 = sbr.rel (0) target = $region81
    $region80: #{resnet_fe_forward.1} parent=1 // pred_region
      %11847 = vsyncadd [#allocation7], 0
      %s11849 = sshll.u32 [#allocation6], 4
      %s11850 = int_to_ptr.vmem [resolvable:$true] %s11849
      %s11851 = sshll.u32 %s19, 4
      %s11852 = int_to_ptr.hbm [resolvable:$true] %s11851
      %11854 = dma.vmem_to_hbm [thread:$0]  %s11850, 32, %s11852, [#allocation7]
    $region81: #{resnet_fe_forward.1} parent=1 // pred_fallthru
      _
    // Predicated region
    $region82: #{resnet_fe_forward.1} parent=1 // pred_check
      _
    $region83: #{resnet_fe_forward.1} parent=1 // pred_check_branch
      %11856 = sbr.rel (0) target = $region85
    $region84: #{resnet_fe_forward.1} parent=1 // pred_region
      %11858 = dma.done [#allocation7], 32
    $region85: #{resnet_fe_forward.1} parent=1 // pred_fallthru
      _
    %11859 = vsyncpa [#allocation7], 1

</llo_original>
